<compile_context>
chip_gen: v6e
topology: v6e:2x2x1
jax: 0.10.0
libtpu: 0.0.40
codegen_flags: <defaults>
</compile_context>

<pallas_src>
import jax
import jax.numpy as jnp
from jax.experimental import pallas as pl
from jax.experimental.pallas import tpu as pltpu


def _round_up(x, m):
    return (x + m - 1) // m * m


def conv3x3_relu_kernel(x_hbm, w_ref, b_ref, o_ref, x_vmem, dma_sem):
    """One (batch, row-tile) step of 3x3 same-padding conv + bias + ReLU.

    x_hbm : (B, (H+2)*Wp, Cp)   flattened zero-padded input (HBM, pl.ANY)
    w_ref : (9, Cp, Cp)         HWIO weights, taps flattened, channel-padded
    b_ref : (1, C)              bias (real channels only)
    o_ref : (1, tile_h, W, C)   output block (real channels only)
    x_vmem: ((tile_h+3)*Wp, Cp) VMEM halo scratch (+1 slack row-group)
    """
    _, tile_h, w_dim, c_real = o_ref.shape
    n_rows, cp = x_vmem.shape
    wp = n_rows // (tile_h + 3)

    b = pl.program_id(0)
    i = pl.program_id(1)

    # Slack rows are only read by taps feeding discarded junk columns; zero
    # them so every value in flight is deterministic.
    rows_copy = (tile_h + 2) * wp
    x_vmem[rows_copy:, :] = jnp.zeros((wp, cp), x_vmem.dtype)

    # Manual halo DMA: padded-image rows [i*tile_h, i*tile_h + tile_h + 2),
    # i.e. one contiguous slab of the flattened (row*Wp) layout.
    start = pl.multiple_of(i * (tile_h * wp), 8)
    copy = pltpu.make_async_copy(x_hbm.at[b, pl.ds(start, rows_copy)],
                                 x_vmem.at[:rows_copy], dma_sem)
    copy.start()
    copy.wait()

    bias = b_ref[...].astype(jnp.float32).reshape(1, 1, c_real)

    # Compute in chunks of `hc` output rows so the f32 accumulator stays at
    # ~128 flat rows (vreg-resident -> no unscheduled VMEM spills).
    hc = max(1, 128 // wp)
    for h0 in range(0, tile_h, hc):
        rows = min(hc, tile_h - h0)
        m = rows * wp
        acc = None
        for kh in range(3):
            for kw in range(3):
                s = (h0 + kh) * wp + kw
                # Sublane-offset view of the flat scratch -- no repack copy.
                patch = x_vmem[s:s + m, :]
                # Perf note (v6e/v7x): lane-concat the 3 kw taps (K=3*Cp) or
                # all 9 (K=9*Cp) to better fill the 256-deep MXU; optional
                # bf16 cast of patch/weights halves DMA + VMEM when allowed.
                p = jnp.dot(patch, w_ref[kh * 3 + kw],
                            preferred_element_type=jnp.float32)
                acc = p if acc is None else acc + p
        # Drop the wide junk columns and the channel padding once, then the
        # f32 epilogue (bias + ReLU) and a single cast at the store.
        acc = acc.reshape(rows, wp, cp)[:, :w_dim, :c_real]
        y = jnp.maximum(acc + bias, 0.0)
        o_ref[0, h0:h0 + rows] = y.astype(o_ref.dtype)


def _vmem_budget_bytes():
    cap = 64 * 1024 * 1024
    try:
        cap = int(getattr(pltpu.get_tpu_info(), "vmem_capacity_bytes", cap))
    except Exception:
        pass
    # ~3/8 of physical VMEM: 24 MiB on v7x (64 MiB/core), capped at 48 MiB on
    # v5e/v6e (128 MiB) -- leaves room for compiler scratch + double buffers.
    return min(cap * 3 // 8, 48 * 1024 * 1024)


def _pick_tile_h(h, w, wp, batch, c, cp, x_item, w_item, budget):
    """Largest divisor of H whose per-step VMEM footprint fits `budget`,
    preferring tiles that keep M = tile_h*W >= 256 (MXU fill / per-step
    overhead) while still giving >= 4 grid steps (v7x dual-core + overlap)."""
    fixed = 2 * 9 * cp * cp * w_item + 2 * cp * 4       # double-buffered weights+bias

    def step_bytes(th):
        return ((th + 3) * wp * cp * x_item              # halo scratch (single copy)
                + 2 * th * w * c * x_item                 # double-buffered out block
                + fixed)

    divs = sorted((d for d in range(1, h + 1) if h % d == 0), reverse=True)
    fits = [d for d in divs if step_bytes(d) <= budget]
    if not fits:
        return 1  # degenerate but correct; caller raises vmem_limit_bytes
    for d in fits:  # descending: largest tile_h satisfying both preferences
        if d * w >= 256 and batch * (h // d) >= 4:
            return d
    return fits[0]


def conv_block_forward(x_nchw, weight, bias):
    """ConvBlock forward: Conv2d(dim, dim, 3, stride=1, padding=1) + ReLU.

    x_nchw: (B, C, H, W); weight: (C, C, 3, 3) [OIHW]; bias: (C,).
    """
    B, C, H, W = x_nchw.shape
    Cp = _round_up(C, 128)          # MXU operand channel padding (K and N dims)
    Wp = _round_up(W + 2, 8)        # conv halo + sublane-aligned flat row pitch

    # NCHW -> NHWC; one pad covers the spatial halo, the width-alignment pad
    # and the channel pad.  cols: 0 = left halo, 1..W = data, W+1 = right halo,
    # W+2..Wp-1 = alignment zeros (never touched by valid outputs).
    x_nhwc = jnp.transpose(x_nchw, (0, 2, 3, 1))
    x_pad = jnp.pad(x_nhwc, ((0, 0), (1, 1), (1, Wp - W - 1), (0, Cp - C)))
    # Flatten (row, col) so halo slabs are contiguous and the 9 taps become
    # row-offset views (free reshape: HBM is row-major).
    x_flat = x_pad.reshape(B, (H + 2) * Wp, Cp)

    # OIHW -> HWIO, channel-padded, taps flattened onto the leading axis.
    w_hwio = jnp.transpose(weight, (2, 3, 1, 0))
    w_hwio = jnp.pad(w_hwio, ((0, 0), (0, 0), (0, Cp - C), (0, Cp - C)))
    w_flat = w_hwio.reshape(9, Cp, Cp)
    b_2d = bias.reshape(1, C)

    x_item = jnp.dtype(x_nchw.dtype).itemsize
    w_item = jnp.dtype(weight.dtype).itemsize
    tile_h = _pick_tile_h(H, W, Wp, B, C, Cp, x_item, w_item,
                          _vmem_budget_bytes())
    n_h_tiles = H // tile_h

    est = ((tile_h + 3) * Wp * Cp * x_item + 2 * tile_h * W * C * x_item
           + 2 * 9 * Cp * Cp * w_item)
    vmem_limit = (int(min(est + (8 << 20), 96 << 20))
                  if est > (16 << 20) else None)

    out_nhwc = pl.pallas_call(
        conv3x3_relu_kernel,
        out_shape=jax.ShapeDtypeStruct((B, H, W, C), x_nchw.dtype),
        grid_spec=pltpu.PrefetchScalarGridSpec(
            num_scalar_prefetch=0,
            grid=(B, n_h_tiles),
            in_specs=[
                pl.BlockSpec(memory_space=pl.ANY),      # padded input, manual DMA
                # Grid-invariant: stays resident (pl.Buffered(1) would drop the
                # second buffer; left at default for portability).
                pl.BlockSpec((9, Cp, Cp), lambda b, i: (0, 0, 0)),
                pl.BlockSpec((1, C), lambda b, i: (0, 0)),
            ],
            out_specs=pl.BlockSpec((1, tile_h, W, C),
                                   lambda b, i: (b, i, 0, 0)),
            scratch_shapes=[
                pltpu.VMEM(((tile_h + 3) * Wp, Cp), x_nchw.dtype),
                pltpu.SemaphoreType.DMA,
            ],
        ),
        compiler_params=pltpu.CompilerParams(
            dimension_semantics=("parallel", "parallel"),
            vmem_limit_bytes=vmem_limit,
        ),
    )(x_flat, w_flat, b_2d)

    # Only the C real channels were written; NHWC -> NCHW for the PyTorch
    # convention (cheap: B*H*W*C bytes, no padded-channel round trip).
    return jnp.transpose(out_nhwc, (0, 3, 1, 2))


def _reference(x_nchw, weight, bias):
    out = jax.lax.conv_general_dilated(
        x_nchw.astype(jnp.float32),
        weight.astype(jnp.float32),
        window_strides=(1, 1),
        padding=((1, 1), (1, 1)),
        dimension_numbers=("NCHW", "OIHW", "NCHW"),
    )
    out = out + bias.reshape(1, -1, 1, 1)
    return jnp.maximum(out, 0.0)


if __name__ == "__main__":
    B, C, H, W = 2, 4, 16, 16
    key = jax.random.PRNGKey(0)
    kx, kw_key, kb = jax.random.split(key, 3)

    x = jax.random.normal(kx, (B, C, H, W), dtype=jnp.float32)
    # Deterministic parameters (shapes from nn.Conv2d(dim, dim, 3, 1, 1)).
    weight = jax.random.normal(kw_key, (C, C, 3, 3), dtype=jnp.float32) * 0.1
    bias = jax.random.normal(kb, (C,), dtype=jnp.float32) * 0.1

    out = jax.jit(conv_block_forward)(x, weight, bias)
    out = jax.block_until_ready(out)

    ref = _reference(x, weight, bias)
    assert out.shape == (B, C, H, W)
    max_err = float(jnp.max(jnp.abs(out - ref)))
    assert max_err < 1e-3, max_err

    print("KERNEL_OK")
</pallas_src>

<mosaic_0001>
module attributes {stable_mosaic.version = 11 : i64} {
  func.func @conv3x3_relu_kernel(%arg0: i32, %arg1: i32, %arg2: memref<2x432x128xf32, #tpu.memory_space<any>>, %arg3: memref<9x128x128xf32, #tpu.memory_space<vmem>>, %arg4: memref<1x4xf32, #tpu.memory_space<vmem>>, %arg5: memref<1x16x16x4xf32, #tpu.memory_space<vmem>>, %arg6: memref<456x128xf32, #tpu.memory_space<vmem>>, %arg7: memref<!tpu.dma_semaphore, #tpu.memory_space<semaphore_mem>>) attributes {dimension_semantics = [#tpu.dimension_semantics<parallel>, #tpu.dimension_semantics<parallel>], iteration_bounds = array<i64: 2, 1>, scalar_prefetch = 0 : i64, scratch_operands = 2 : i64, tpu.core_type = #tpu.core_type<tc>, window_params = [{}, {pipeline_mode = #tpu.pipeline_mode<synchronous>, transform_indices = @transform_1, window_bounds = array<i64: 9, 128, 128>}, {pipeline_mode = #tpu.pipeline_mode<synchronous>, transform_indices = @transform_2, window_bounds = array<i64: 1, 4>}, {transform_indices = @transform_3, window_bounds = array<i64: 1, 16, 16, 4>}]} {
    %cst = arith.constant 0.000000e+00 : f32
    %0 = vector.broadcast %cst : f32 to vector<24x128xf32>
    %c432 = arith.constant 432 : index
    %c0 = arith.constant 0 : index
    %1 = vector.load %arg6[%c432, %c0] : memref<456x128xf32, #tpu.memory_space<vmem>>, vector<24x128xf32>
    tpu.vector_store %arg6[%c432, %c0], %0 {strides = array<i32>} : memref<456x128xf32, #tpu.memory_space<vmem>>, vector<24x128xf32>,
    %c384_i32 = arith.constant 384 : i32
    %2 = arith.muli %arg1, %c384_i32 : i32
    %3 = tpu.assume_multiple %2, 8 : i32
    %c0_i32 = arith.constant 0 : i32
    %4 = tpu.memref_slice %arg2[%arg0, %3, %c0_i32] : memref<2x432x128xf32, #tpu.memory_space<any>> -> memref<1x432x128xf32, #tpu.memory_space<any>>
    %5 = tpu.memref_squeeze %4 : memref<1x432x128xf32, #tpu.memory_space<any>> -> memref<432x128xf32, #tpu.memory_space<any>>
    %c0_i32_0 = arith.constant 0 : i32
    %c0_i32_1 = arith.constant 0 : i32
    %6 = tpu.memref_slice %arg6[%c0_i32_0, %c0_i32_1] : memref<456x128xf32, #tpu.memory_space<vmem>> -> memref<432x128xf32, #tpu.memory_space<vmem>>
    tpu.enqueue_dma source(%5 : memref<432x128xf32, #tpu.memory_space<any>>) target(%6 : memref<432x128xf32, #tpu.memory_space<vmem>>) target_semaphore(%arg7 : memref<!tpu.dma_semaphore, #tpu.memory_space<semaphore_mem>>)
    %c0_i32_2 = arith.constant 0 : i32
    %7 = tpu.memref_slice %arg2[%arg0, %3, %c0_i32_2] : memref<2x432x128xf32, #tpu.memory_space<any>> -> memref<1x432x128xf32, #tpu.memory_space<any>>
    %8 = tpu.memref_squeeze %7 : memref<1x432x128xf32, #tpu.memory_space<any>> -> memref<432x128xf32, #tpu.memory_space<any>>
    %c0_i32_3 = arith.constant 0 : i32
    %c0_i32_4 = arith.constant 0 : i32
    %9 = tpu.memref_slice %arg6[%c0_i32_3, %c0_i32_4] : memref<456x128xf32, #tpu.memory_space<vmem>> -> memref<432x128xf32, #tpu.memory_space<vmem>>
    tpu.wait_dma2 semaphore(%arg7 : memref<!tpu.dma_semaphore, #tpu.memory_space<semaphore_mem>>) src(%8 : memref<432x128xf32, #tpu.memory_space<any>>) dst(%9 : memref<432x128xf32, #tpu.memory_space<vmem>>)
    %c0_5 = arith.constant 0 : index
    %c0_6 = arith.constant 0 : index
    %10 = vector.load %arg4[%c0_5, %c0_6] : memref<1x4xf32, #tpu.memory_space<vmem>>, vector<1x4xf32>
    %11 = vector.shape_cast %10 : vector<1x4xf32> to vector<1x1x4xf32>
    %c0_7 = arith.constant 0 : index
    %c0_8 = arith.constant 0 : index
    %12 = vector.load %arg6[%c0_7, %c0_8] : memref<456x128xf32, #tpu.memory_space<vmem>>, vector<120x128xf32>
    %c0_9 = arith.constant 0 : index
    %c0_10 = arith.constant 0 : index
    %c0_11 = arith.constant 0 : index
    %13 = vector.load %arg3[%c0_9, %c0_10, %c0_11] : memref<9x128x128xf32, #tpu.memory_space<vmem>>, vector<1x128x128xf32>
    %14 = vector.shape_cast %13 : vector<1x128x128xf32> to vector<128x128xf32>
    %cst_12 = arith.constant dense<0.000000e+00> : vector<120x128xf32>
    %15 = tpu.matmul %12, %14, %cst_12 {dimension_numbers = #tpu.dot_dimension_numbers<[1], [0], [0], [1], [0, 0, 1, 1], [], []>} : vector<120x128xf32>, vector<128x128xf32>, vector<120x128xf32> -> vector<120x128xf32>
    %c1 = arith.constant 1 : index
    %c0_13 = arith.constant 0 : index
    %16 = vector.load %arg6[%c1, %c0_13] : memref<456x128xf32, #tpu.memory_space<vmem>>, vector<120x128xf32>
    %c1_14 = arith.constant 1 : index
    %c0_15 = arith.constant 0 : index
    %c0_16 = arith.constant 0 : index
    %17 = vector.load %arg3[%c1_14, %c0_15, %c0_16] : memref<9x128x128xf32, #tpu.memory_space<vmem>>, vector<1x128x128xf32>
    %18 = vector.shape_cast %17 : vector<1x128x128xf32> to vector<128x128xf32>
    %cst_17 = arith.constant dense<0.000000e+00> : vector<120x128xf32>
    %19 = tpu.matmul %16, %18, %cst_17 {dimension_numbers = #tpu.dot_dimension_numbers<[1], [0], [0], [1], [0, 0, 1, 1], [], []>} : vector<120x128xf32>, vector<128x128xf32>, vector<120x128xf32> -> vector<120x128xf32>
    %20 = arith.addf %15, %19 : vector<120x128xf32>
    %c2 = arith.constant 2 : index
    %c0_18 = arith.constant 0 : index
    %21 = vector.load %arg6[%c2, %c0_18] : memref<456x128xf32, #tpu.memory_space<vmem>>, vector<120x128xf32>
    %c2_19 = arith.constant 2 : index
    %c0_20 = arith.constant 0 : index
    %c0_21 = arith.constant 0 : index
    %22 = vector.load %arg3[%c2_19, %c0_20, %c0_21] : memref<9x128x128xf32, #tpu.memory_space<vmem>>, vector<1x128x128xf32>
    %23 = vector.shape_cast %22 : vector<1x128x128xf32> to vector<128x128xf32>
    %cst_22 = arith.constant dense<0.000000e+00> : vector<120x128xf32>
    %24 = tpu.matmul %21, %23, %cst_22 {dimension_numbers = #tpu.dot_dimension_numbers<[1], [0], [0], [1], [0, 0, 1, 1], [], []>} : vector<120x128xf32>, vector<128x128xf32>, vector<120x128xf32> -> vector<120x128xf32>
    %25 = arith.addf %20, %24 : vector<120x128xf32>
    %c24 = arith.constant 24 : index
    %c0_23 = arith.constant 0 : index
    %26 = vector.load %arg6[%c24, %c0_23] : memref<456x128xf32, #tpu.memory_space<vmem>>, vector<120x128xf32>
    %c3 = arith.constant 3 : index
    %c0_24 = arith.constant 0 : index
    %c0_25 = arith.constant 0 : index
    %27 = vector.load %arg3[%c3, %c0_24, %c0_25] : memref<9x128x128xf32, #tpu.memory_space<vmem>>, vector<1x128x128xf32>
    %28 = vector.shape_cast %27 : vector<1x128x128xf32> to vector<128x128xf32>
    %cst_26 = arith.constant dense<0.000000e+00> : vector<120x128xf32>
    %29 = tpu.matmul %26, %28, %cst_26 {dimension_numbers = #tpu.dot_dimension_numbers<[1], [0], [0], [1], [0, 0, 1, 1], [], []>} : vector<120x128xf32>, vector<128x128xf32>, vector<120x128xf32> -> vector<120x128xf32>
    %30 = arith.addf %25, %29 : vector<120x128xf32>
    %c25 = arith.constant 25 : index
    %c0_27 = arith.constant 0 : index
    %31 = vector.load %arg6[%c25, %c0_27] : memref<456x128xf32, #tpu.memory_space<vmem>>, vector<120x128xf32>
    %c4 = arith.constant 4 : index
    %c0_28 = arith.constant 0 : index
    %c0_29 = arith.constant 0 : index
    %32 = vector.load %arg3[%c4, %c0_28, %c0_29] : memref<9x128x128xf32, #tpu.memory_space<vmem>>, vector<1x128x128xf32>
    %33 = vector.shape_cast %32 : vector<1x128x128xf32> to vector<128x128xf32>
    %cst_30 = arith.constant dense<0.000000e+00> : vector<120x128xf32>
    %34 = tpu.matmul %31, %33, %cst_30 {dimension_numbers = #tpu.dot_dimension_numbers<[1], [0], [0], [1], [0, 0, 1, 1], [], []>} : vector<120x128xf32>, vector<128x128xf32>, vector<120x128xf32> -> vector<120x128xf32>
    %35 = arith.addf %30, %34 : vector<120x128xf32>
    %c26 = arith.constant 26 : index
    %c0_31 = arith.constant 0 : index
    %36 = vector.load %arg6[%c26, %c0_31] : memref<456x128xf32, #tpu.memory_space<vmem>>, vector<120x128xf32>
    %c5 = arith.constant 5 : index
    %c0_32 = arith.constant 0 : index
    %c0_33 = arith.constant 0 : index
    %37 = vector.load %arg3[%c5, %c0_32, %c0_33] : memref<9x128x128xf32, #tpu.memory_space<vmem>>, vector<1x128x128xf32>
    %38 = vector.shape_cast %37 : vector<1x128x128xf32> to vector<128x128xf32>
    %cst_34 = arith.constant dense<0.000000e+00> : vector<120x128xf32>
    %39 = tpu.matmul %36, %38, %cst_34 {dimension_numbers = #tpu.dot_dimension_numbers<[1], [0], [0], [1], [0, 0, 1, 1], [], []>} : vector<120x128xf32>, vector<128x128xf32>, vector<120x128xf32> -> vector<120x128xf32>
    %40 = arith.addf %35, %39 : vector<120x128xf32>
    %c48 = arith.constant 48 : index
    %c0_35 = arith.constant 0 : index
    %41 = vector.load %arg6[%c48, %c0_35] : memref<456x128xf32, #tpu.memory_space<vmem>>, vector<120x128xf32>
    %c6 = arith.constant 6 : index
    %c0_36 = arith.constant 0 : index
    %c0_37 = arith.constant 0 : index
    %42 = vector.load %arg3[%c6, %c0_36, %c0_37] : memref<9x128x128xf32, #tpu.memory_space<vmem>>, vector<1x128x128xf32>
    %43 = vector.shape_cast %42 : vector<1x128x128xf32> to vector<128x128xf32>
    %cst_38 = arith.constant dense<0.000000e+00> : vector<120x128xf32>
    %44 = tpu.matmul %41, %43, %cst_38 {dimension_numbers = #tpu.dot_dimension_numbers<[1], [0], [0], [1], [0, 0, 1, 1], [], []>} : vector<120x128xf32>, vector<128x128xf32>, vector<120x128xf32> -> vector<120x128xf32>
    %45 = arith.addf %40, %44 : vector<120x128xf32>
    %c49 = arith.constant 49 : index
    %c0_39 = arith.constant 0 : index
    %46 = vector.load %arg6[%c49, %c0_39] : memref<456x128xf32, #tpu.memory_space<vmem>>, vector<120x128xf32>
    %c7 = arith.constant 7 : index
    %c0_40 = arith.constant 0 : index
    %c0_41 = arith.constant 0 : index
    %47 = vector.load %arg3[%c7, %c0_40, %c0_41] : memref<9x128x128xf32, #tpu.memory_space<vmem>>, vector<1x128x128xf32>
    %48 = vector.shape_cast %47 : vector<1x128x128xf32> to vector<128x128xf32>
    %cst_42 = arith.constant dense<0.000000e+00> : vector<120x128xf32>
    %49 = tpu.matmul %46, %48, %cst_42 {dimension_numbers = #tpu.dot_dimension_numbers<[1], [0], [0], [1], [0, 0, 1, 1], [], []>} : vector<120x128xf32>, vector<128x128xf32>, vector<120x128xf32> -> vector<120x128xf32>
    %50 = arith.addf %45, %49 : vector<120x128xf32>
    %c50 = arith.constant 50 : index
    %c0_43 = arith.constant 0 : index
    %51 = vector.load %arg6[%c50, %c0_43] : memref<456x128xf32, #tpu.memory_space<vmem>>, vector<120x128xf32>
    %c8 = arith.constant 8 : index
    %c0_44 = arith.constant 0 : index
    %c0_45 = arith.constant 0 : index
    %52 = vector.load %arg3[%c8, %c0_44, %c0_45] : memref<9x128x128xf32, #tpu.memory_space<vmem>>, vector<1x128x128xf32>
    %53 = vector.shape_cast %52 : vector<1x128x128xf32> to vector<128x128xf32>
    %cst_46 = arith.constant dense<0.000000e+00> : vector<120x128xf32>
    %54 = tpu.matmul %51, %53, %cst_46 {dimension_numbers = #tpu.dot_dimension_numbers<[1], [0], [0], [1], [0, 0, 1, 1], [], []>} : vector<120x128xf32>, vector<128x128xf32>, vector<120x128xf32> -> vector<120x128xf32>
    %55 = arith.addf %50, %54 : vector<120x128xf32>
    %56 = vector.shape_cast %55 : vector<120x128xf32> to vector<5x24x128xf32>
    %57 = vector.extract_strided_slice %56 {offsets = [0, 0, 0], sizes = [5, 16, 4], strides = [1, 1, 1]} : vector<5x24x128xf32> to vector<5x16x4xf32>
    %58 = vector.broadcast %11 : vector<1x1x4xf32> to vector<5x16x4xf32>
    %59 = arith.addf %57, %58 : vector<5x16x4xf32>
    %cst_47 = arith.constant 0.000000e+00 : f32
    %60 = vector.broadcast %cst_47 : f32 to vector<5x16x4xf32>
    %61 = arith.maximumf %59, %60 : vector<5x16x4xf32>
    %c0_48 = arith.constant 0 : index
    %c0_49 = arith.constant 0 : index
    %c0_50 = arith.constant 0 : index
    %c0_51 = arith.constant 0 : index
    %62 = vector.load %arg5[%c0_48, %c0_49, %c0_50, %c0_51] : memref<1x16x16x4xf32, #tpu.memory_space<vmem>>, vector<1x5x16x4xf32>
    %63 = vector.shape_cast %62 : vector<1x5x16x4xf32> to vector<5x16x4xf32>
    %64 = vector.shape_cast %61 : vector<5x16x4xf32> to vector<1x5x16x4xf32>
    tpu.vector_store %arg5[%c0_48, %c0_49, %c0_50, %c0_51], %64 {strides = array<i32>} : memref<1x16x16x4xf32, #tpu.memory_space<vmem>>, vector<1x5x16x4xf32>,
    %c120 = arith.constant 120 : index
    %c0_52 = arith.constant 0 : index
    %65 = vector.load %arg6[%c120, %c0_52] : memref<456x128xf32, #tpu.memory_space<vmem>>, vector<120x128xf32>
    %c0_53 = arith.constant 0 : index
    %c0_54 = arith.constant 0 : index
    %c0_55 = arith.constant 0 : index
    %66 = vector.load %arg3[%c0_53, %c0_54, %c0_55] : memref<9x128x128xf32, #tpu.memory_space<vmem>>, vector<1x128x128xf32>
    %67 = vector.shape_cast %66 : vector<1x128x128xf32> to vector<128x128xf32>
    %cst_56 = arith.constant dense<0.000000e+00> : vector<120x128xf32>
    %68 = tpu.matmul %65, %67, %cst_56 {dimension_numbers = #tpu.dot_dimension_numbers<[1], [0], [0], [1], [0, 0, 1, 1], [], []>} : vector<120x128xf32>, vector<128x128xf32>, vector<120x128xf32> -> vector<120x128xf32>
    %c121 = arith.constant 121 : index
    %c0_57 = arith.constant 0 : index
    %69 = vector.load %arg6[%c121, %c0_57] : memref<456x128xf32, #tpu.memory_space<vmem>>, vector<120x128xf32>
    %c1_58 = arith.constant 1 : index
    %c0_59 = arith.constant 0 : index
    %c0_60 = arith.constant 0 : index
    %70 = vector.load %arg3[%c1_58, %c0_59, %c0_60] : memref<9x128x128xf32, #tpu.memory_space<vmem>>, vector<1x128x128xf32>
    %71 = vector.shape_cast %70 : vector<1x128x128xf32> to vector<128x128xf32>
    %cst_61 = arith.constant dense<0.000000e+00> : vector<120x128xf32>
    %72 = tpu.matmul %69, %71, %cst_61 {dimension_numbers = #tpu.dot_dimension_numbers<[1], [0], [0], [1], [0, 0, 1, 1], [], []>} : vector<120x128xf32>, vector<128x128xf32>, vector<120x128xf32> -> vector<120x128xf32>
    %73 = arith.addf %68, %72 : vector<120x128xf32>
    %c122 = arith.constant 122 : index
    %c0_62 = arith.constant 0 : index
    %74 = vector.load %arg6[%c122, %c0_62] : memref<456x128xf32, #tpu.memory_space<vmem>>, vector<120x128xf32>
    %c2_63 = arith.constant 2 : index
    %c0_64 = arith.constant 0 : index
    %c0_65 = arith.constant 0 : index
    %75 = vector.load %arg3[%c2_63, %c0_64, %c0_65] : memref<9x128x128xf32, #tpu.memory_space<vmem>>, vector<1x128x128xf32>
    %76 = vector.shape_cast %75 : vector<1x128x128xf32> to vector<128x128xf32>
    %cst_66 = arith.constant dense<0.000000e+00> : vector<120x128xf32>
    %77 = tpu.matmul %74, %76, %cst_66 {dimension_numbers = #tpu.dot_dimension_numbers<[1], [0], [0], [1], [0, 0, 1, 1], [], []>} : vector<120x128xf32>, vector<128x128xf32>, vector<120x128xf32> -> vector<120x128xf32>
    %78 = arith.addf %73, %77 : vector<120x128xf32>
    %c144 = arith.constant 144 : index
    %c0_67 = arith.constant 0 : index
    %79 = vector.load %arg6[%c144, %c0_67] : memref<456x128xf32, #tpu.memory_space<vmem>>, vector<120x128xf32>
    %c3_68 = arith.constant 3 : index
    %c0_69 = arith.constant 0 : index
    %c0_70 = arith.constant 0 : index
    %80 = vector.load %arg3[%c3_68, %c0_69, %c0_70] : memref<9x128x128xf32, #tpu.memory_space<vmem>>, vector<1x128x128xf32>
    %81 = vector.shape_cast %80 : vector<1x128x128xf32> to vector<128x128xf32>
    %cst_71 = arith.constant dense<0.000000e+00> : vector<120x128xf32>
    %82 = tpu.matmul %79, %81, %cst_71 {dimension_numbers = #tpu.dot_dimension_numbers<[1], [0], [0], [1], [0, 0, 1, 1], [], []>} : vector<120x128xf32>, vector<128x128xf32>, vector<120x128xf32> -> vector<120x128xf32>
    %83 = arith.addf %78, %82 : vector<120x128xf32>
    %c145 = arith.constant 145 : index
    %c0_72 = arith.constant 0 : index
    %84 = vector.load %arg6[%c145, %c0_72] : memref<456x128xf32, #tpu.memory_space<vmem>>, vector<120x128xf32>
    %c4_73 = arith.constant 4 : index
    %c0_74 = arith.constant 0 : index
    %c0_75 = arith.constant 0 : index
    %85 = vector.load %arg3[%c4_73, %c0_74, %c0_75] : memref<9x128x128xf32, #tpu.memory_space<vmem>>, vector<1x128x128xf32>
    %86 = vector.shape_cast %85 : vector<1x128x128xf32> to vector<128x128xf32>
    %cst_76 = arith.constant dense<0.000000e+00> : vector<120x128xf32>
    %87 = tpu.matmul %84, %86, %cst_76 {dimension_numbers = #tpu.dot_dimension_numbers<[1], [0], [0], [1], [0, 0, 1, 1], [], []>} : vector<120x128xf32>, vector<128x128xf32>, vector<120x128xf32> -> vector<120x128xf32>
    %88 = arith.addf %83, %87 : vector<120x128xf32>
    %c146 = arith.constant 146 : index
    %c0_77 = arith.constant 0 : index
    %89 = vector.load %arg6[%c146, %c0_77] : memref<456x128xf32, #tpu.memory_space<vmem>>, vector<120x128xf32>
    %c5_78 = arith.constant 5 : index
    %c0_79 = arith.constant 0 : index
    %c0_80 = arith.constant 0 : index
    %90 = vector.load %arg3[%c5_78, %c0_79, %c0_80] : memref<9x128x128xf32, #tpu.memory_space<vmem>>, vector<1x128x128xf32>
    %91 = vector.shape_cast %90 : vector<1x128x128xf32> to vector<128x128xf32>
    %cst_81 = arith.constant dense<0.000000e+00> : vector<120x128xf32>
    %92 = tpu.matmul %89, %91, %cst_81 {dimension_numbers = #tpu.dot_dimension_numbers<[1], [0], [0], [1], [0, 0, 1, 1], [], []>} : vector<120x128xf32>, vector<128x128xf32>, vector<120x128xf32> -> vector<120x128xf32>
    %93 = arith.addf %88, %92 : vector<120x128xf32>
    %c168 = arith.constant 168 : index
    %c0_82 = arith.constant 0 : index
    %94 = vector.load %arg6[%c168, %c0_82] : memref<456x128xf32, #tpu.memory_space<vmem>>, vector<120x128xf32>
    %c6_83 = arith.constant 6 : index
    %c0_84 = arith.constant 0 : index
    %c0_85 = arith.constant 0 : index
    %95 = vector.load %arg3[%c6_83, %c0_84, %c0_85] : memref<9x128x128xf32, #tpu.memory_space<vmem>>, vector<1x128x128xf32>
    %96 = vector.shape_cast %95 : vector<1x128x128xf32> to vector<128x128xf32>
    %cst_86 = arith.constant dense<0.000000e+00> : vector<120x128xf32>
    %97 = tpu.matmul %94, %96, %cst_86 {dimension_numbers = #tpu.dot_dimension_numbers<[1], [0], [0], [1], [0, 0, 1, 1], [], []>} : vector<120x128xf32>, vector<128x128xf32>, vector<120x128xf32> -> vector<120x128xf32>
    %98 = arith.addf %93, %97 : vector<120x128xf32>
    %c169 = arith.constant 169 : index
    %c0_87 = arith.constant 0 : index
    %99 = vector.load %arg6[%c169, %c0_87] : memref<456x128xf32, #tpu.memory_space<vmem>>, vector<120x128xf32>
    %c7_88 = arith.constant 7 : index
    %c0_89 = arith.constant 0 : index
    %c0_90 = arith.constant 0 : index
    %100 = vector.load %arg3[%c7_88, %c0_89, %c0_90] : memref<9x128x128xf32, #tpu.memory_space<vmem>>, vector<1x128x128xf32>
    %101 = vector.shape_cast %100 : vector<1x128x128xf32> to vector<128x128xf32>
    %cst_91 = arith.constant dense<0.000000e+00> : vector<120x128xf32>
    %102 = tpu.matmul %99, %101, %cst_91 {dimension_numbers = #tpu.dot_dimension_numbers<[1], [0], [0], [1], [0, 0, 1, 1], [], []>} : vector<120x128xf32>, vector<128x128xf32>, vector<120x128xf32> -> vector<120x128xf32>
    %103 = arith.addf %98, %102 : vector<120x128xf32>
    %c170 = arith.constant 170 : index
    %c0_92 = arith.constant 0 : index
    %104 = vector.load %arg6[%c170, %c0_92] : memref<456x128xf32, #tpu.memory_space<vmem>>, vector<120x128xf32>
    %c8_93 = arith.constant 8 : index
    %c0_94 = arith.constant 0 : index
    %c0_95 = arith.constant 0 : index
    %105 = vector.load %arg3[%c8_93, %c0_94, %c0_95] : memref<9x128x128xf32, #tpu.memory_space<vmem>>, vector<1x128x128xf32>
    %106 = vector.shape_cast %105 : vector<1x128x128xf32> to vector<128x128xf32>
    %cst_96 = arith.constant dense<0.000000e+00> : vector<120x128xf32>
    %107 = tpu.matmul %104, %106, %cst_96 {dimension_numbers = #tpu.dot_dimension_numbers<[1], [0], [0], [1], [0, 0, 1, 1], [], []>} : vector<120x128xf32>, vector<128x128xf32>, vector<120x128xf32> -> vector<120x128xf32>
    %108 = arith.addf %103, %107 : vector<120x128xf32>
    %109 = vector.shape_cast %108 : vector<120x128xf32> to vector<5x24x128xf32>
    %110 = vector.extract_strided_slice %109 {offsets = [0, 0, 0], sizes = [5, 16, 4], strides = [1, 1, 1]} : vector<5x24x128xf32> to vector<5x16x4xf32>
    %111 = vector.broadcast %11 : vector<1x1x4xf32> to vector<5x16x4xf32>
    %112 = arith.addf %110, %111 : vector<5x16x4xf32>
    %cst_97 = arith.constant 0.000000e+00 : f32
    %113 = vector.broadcast %cst_97 : f32 to vector<5x16x4xf32>
    %114 = arith.maximumf %112, %113 : vector<5x16x4xf32>
    %c0_98 = arith.constant 0 : index
    %c5_99 = arith.constant 5 : index
    %c0_100 = arith.constant 0 : index
    %c0_101 = arith.constant 0 : index
    %115 = vector.load %arg5[%c0_98, %c5_99, %c0_100, %c0_101] : memref<1x16x16x4xf32, #tpu.memory_space<vmem>>, vector<1x5x16x4xf32>
    %116 = vector.shape_cast %115 : vector<1x5x16x4xf32> to vector<5x16x4xf32>
    %117 = vector.shape_cast %114 : vector<5x16x4xf32> to vector<1x5x16x4xf32>
    tpu.vector_store %arg5[%c0_98, %c5_99, %c0_100, %c0_101], %117 {strides = array<i32>} : memref<1x16x16x4xf32, #tpu.memory_space<vmem>>, vector<1x5x16x4xf32>,
    %c240 = arith.constant 240 : index
    %c0_102 = arith.constant 0 : index
    %118 = vector.load %arg6[%c240, %c0_102] : memref<456x128xf32, #tpu.memory_space<vmem>>, vector<120x128xf32>
    %c0_103 = arith.constant 0 : index
    %c0_104 = arith.constant 0 : index
    %c0_105 = arith.constant 0 : index
    %119 = vector.load %arg3[%c0_103, %c0_104, %c0_105] : memref<9x128x128xf32, #tpu.memory_space<vmem>>, vector<1x128x128xf32>
    %120 = vector.shape_cast %119 : vector<1x128x128xf32> to vector<128x128xf32>
    %cst_106 = arith.constant dense<0.000000e+00> : vector<120x128xf32>
    %121 = tpu.matmul %118, %120, %cst_106 {dimension_numbers = #tpu.dot_dimension_numbers<[1], [0], [0], [1], [0, 0, 1, 1], [], []>} : vector<120x128xf32>, vector<128x128xf32>, vector<120x128xf32> -> vector<120x128xf32>
    %c241 = arith.constant 241 : index
    %c0_107 = arith.constant 0 : index
    %122 = vector.load %arg6[%c241, %c0_107] : memref<456x128xf32, #tpu.memory_space<vmem>>, vector<120x128xf32>
    %c1_108 = arith.constant 1 : index
    %c0_109 = arith.constant 0 : index
    %c0_110 = arith.constant 0 : index
    %123 = vector.load %arg3[%c1_108, %c0_109, %c0_110] : memref<9x128x128xf32, #tpu.memory_space<vmem>>, vector<1x128x128xf32>
    %124 = vector.shape_cast %123 : vector<1x128x128xf32> to vector<128x128xf32>
    %cst_111 = arith.constant dense<0.000000e+00> : vector<120x128xf32>
    %125 = tpu.matmul %122, %124, %cst_111 {dimension_numbers = #tpu.dot_dimension_numbers<[1], [0], [0], [1], [0, 0, 1, 1], [], []>} : vector<120x128xf32>, vector<128x128xf32>, vector<120x128xf32> -> vector<120x128xf32>
    %126 = arith.addf %121, %125 : vector<120x128xf32>
    %c242 = arith.constant 242 : index
    %c0_112 = arith.constant 0 : index
    %127 = vector.load %arg6[%c242, %c0_112] : memref<456x128xf32, #tpu.memory_space<vmem>>, vector<120x128xf32>
    %c2_113 = arith.constant 2 : index
    %c0_114 = arith.constant 0 : index
    %c0_115 = arith.constant 0 : index
    %128 = vector.load %arg3[%c2_113, %c0_114, %c0_115] : memref<9x128x128xf32, #tpu.memory_space<vmem>>, vector<1x128x128xf32>
    %129 = vector.shape_cast %128 : vector<1x128x128xf32> to vector<128x128xf32>
    %cst_116 = arith.constant dense<0.000000e+00> : vector<120x128xf32>
    %130 = tpu.matmul %127, %129, %cst_116 {dimension_numbers = #tpu.dot_dimension_numbers<[1], [0], [0], [1], [0, 0, 1, 1], [], []>} : vector<120x128xf32>, vector<128x128xf32>, vector<120x128xf32> -> vector<120x128xf32>
    %131 = arith.addf %126, %130 : vector<120x128xf32>
    %c264 = arith.constant 264 : index
    %c0_117 = arith.constant 0 : index
    %132 = vector.load %arg6[%c264, %c0_117] : memref<456x128xf32, #tpu.memory_space<vmem>>, vector<120x128xf32>
    %c3_118 = arith.constant 3 : index
    %c0_119 = arith.constant 0 : index
    %c0_120 = arith.constant 0 : index
    %133 = vector.load %arg3[%c3_118, %c0_119, %c0_120] : memref<9x128x128xf32, #tpu.memory_space<vmem>>, vector<1x128x128xf32>
    %134 = vector.shape_cast %133 : vector<1x128x128xf32> to vector<128x128xf32>
    %cst_121 = arith.constant dense<0.000000e+00> : vector<120x128xf32>
    %135 = tpu.matmul %132, %134, %cst_121 {dimension_numbers = #tpu.dot_dimension_numbers<[1], [0], [0], [1], [0, 0, 1, 1], [], []>} : vector<120x128xf32>, vector<128x128xf32>, vector<120x128xf32> -> vector<120x128xf32>
    %136 = arith.addf %131, %135 : vector<120x128xf32>
    %c265 = arith.constant 265 : index
    %c0_122 = arith.constant 0 : index
    %137 = vector.load %arg6[%c265, %c0_122] : memref<456x128xf32, #tpu.memory_space<vmem>>, vector<120x128xf32>
    %c4_123 = arith.constant 4 : index
    %c0_124 = arith.constant 0 : index
    %c0_125 = arith.constant 0 : index
    %138 = vector.load %arg3[%c4_123, %c0_124, %c0_125] : memref<9x128x128xf32, #tpu.memory_space<vmem>>, vector<1x128x128xf32>
    %139 = vector.shape_cast %138 : vector<1x128x128xf32> to vector<128x128xf32>
    %cst_126 = arith.constant dense<0.000000e+00> : vector<120x128xf32>
    %140 = tpu.matmul %137, %139, %cst_126 {dimension_numbers = #tpu.dot_dimension_numbers<[1], [0], [0], [1], [0, 0, 1, 1], [], []>} : vector<120x128xf32>, vector<128x128xf32>, vector<120x128xf32> -> vector<120x128xf32>
    %141 = arith.addf %136, %140 : vector<120x128xf32>
    %c266 = arith.constant 266 : index
    %c0_127 = arith.constant 0 : index
    %142 = vector.load %arg6[%c266, %c0_127] : memref<456x128xf32, #tpu.memory_space<vmem>>, vector<120x128xf32>
    %c5_128 = arith.constant 5 : index
    %c0_129 = arith.constant 0 : index
    %c0_130 = arith.constant 0 : index
    %143 = vector.load %arg3[%c5_128, %c0_129, %c0_130] : memref<9x128x128xf32, #tpu.memory_space<vmem>>, vector<1x128x128xf32>
    %144 = vector.shape_cast %143 : vector<1x128x128xf32> to vector<128x128xf32>
    %cst_131 = arith.constant dense<0.000000e+00> : vector<120x128xf32>
    %145 = tpu.matmul %142, %144, %cst_131 {dimension_numbers = #tpu.dot_dimension_numbers<[1], [0], [0], [1], [0, 0, 1, 1], [], []>} : vector<120x128xf32>, vector<128x128xf32>, vector<120x128xf32> -> vector<120x128xf32>
    %146 = arith.addf %141, %145 : vector<120x128xf32>
    %c288 = arith.constant 288 : index
    %c0_132 = arith.constant 0 : index
    %147 = vector.load %arg6[%c288, %c0_132] : memref<456x128xf32, #tpu.memory_space<vmem>>, vector<120x128xf32>
    %c6_133 = arith.constant 6 : index
    %c0_134 = arith.constant 0 : index
    %c0_135 = arith.constant 0 : index
    %148 = vector.load %arg3[%c6_133, %c0_134, %c0_135] : memref<9x128x128xf32, #tpu.memory_space<vmem>>, vector<1x128x128xf32>
    %149 = vector.shape_cast %148 : vector<1x128x128xf32> to vector<128x128xf32>
    %cst_136 = arith.constant dense<0.000000e+00> : vector<120x128xf32>
    %150 = tpu.matmul %147, %149, %cst_136 {dimension_numbers = #tpu.dot_dimension_numbers<[1], [0], [0], [1], [0, 0, 1, 1], [], []>} : vector<120x128xf32>, vector<128x128xf32>, vector<120x128xf32> -> vector<120x128xf32>
    %151 = arith.addf %146, %150 : vector<120x128xf32>
    %c289 = arith.constant 289 : index
    %c0_137 = arith.constant 0 : index
    %152 = vector.load %arg6[%c289, %c0_137] : memref<456x128xf32, #tpu.memory_space<vmem>>, vector<120x128xf32>
    %c7_138 = arith.constant 7 : index
    %c0_139 = arith.constant 0 : index
    %c0_140 = arith.constant 0 : index
    %153 = vector.load %arg3[%c7_138, %c0_139, %c0_140] : memref<9x128x128xf32, #tpu.memory_space<vmem>>, vector<1x128x128xf32>
    %154 = vector.shape_cast %153 : vector<1x128x128xf32> to vector<128x128xf32>
    %cst_141 = arith.constant dense<0.000000e+00> : vector<120x128xf32>
    %155 = tpu.matmul %152, %154, %cst_141 {dimension_numbers = #tpu.dot_dimension_numbers<[1], [0], [0], [1], [0, 0, 1, 1], [], []>} : vector<120x128xf32>, vector<128x128xf32>, vector<120x128xf32> -> vector<120x128xf32>
    %156 = arith.addf %151, %155 : vector<120x128xf32>
    %c290 = arith.constant 290 : index
    %c0_142 = arith.constant 0 : index
    %157 = vector.load %arg6[%c290, %c0_142] : memref<456x128xf32, #tpu.memory_space<vmem>>, vector<120x128xf32>
    %c8_143 = arith.constant 8 : index
    %c0_144 = arith.constant 0 : index
    %c0_145 = arith.constant 0 : index
    %158 = vector.load %arg3[%c8_143, %c0_144, %c0_145] : memref<9x128x128xf32, #tpu.memory_space<vmem>>, vector<1x128x128xf32>
    %159 = vector.shape_cast %158 : vector<1x128x128xf32> to vector<128x128xf32>
    %cst_146 = arith.constant dense<0.000000e+00> : vector<120x128xf32>
    %160 = tpu.matmul %157, %159, %cst_146 {dimension_numbers = #tpu.dot_dimension_numbers<[1], [0], [0], [1], [0, 0, 1, 1], [], []>} : vector<120x128xf32>, vector<128x128xf32>, vector<120x128xf32> -> vector<120x128xf32>
    %161 = arith.addf %156, %160 : vector<120x128xf32>
    %162 = vector.shape_cast %161 : vector<120x128xf32> to vector<5x24x128xf32>
    %163 = vector.extract_strided_slice %162 {offsets = [0, 0, 0], sizes = [5, 16, 4], strides = [1, 1, 1]} : vector<5x24x128xf32> to vector<5x16x4xf32>
    %164 = vector.broadcast %11 : vector<1x1x4xf32> to vector<5x16x4xf32>
    %165 = arith.addf %163, %164 : vector<5x16x4xf32>
    %cst_147 = arith.constant 0.000000e+00 : f32
    %166 = vector.broadcast %cst_147 : f32 to vector<5x16x4xf32>
    %167 = arith.maximumf %165, %166 : vector<5x16x4xf32>
    %c0_148 = arith.constant 0 : index
    %c10 = arith.constant 10 : index
    %c0_149 = arith.constant 0 : index
    %c0_150 = arith.constant 0 : index
    %168 = vector.load %arg5[%c0_148, %c10, %c0_149, %c0_150] : memref<1x16x16x4xf32, #tpu.memory_space<vmem>>, vector<1x5x16x4xf32>
    %169 = vector.shape_cast %168 : vector<1x5x16x4xf32> to vector<5x16x4xf32>
    %170 = vector.shape_cast %167 : vector<5x16x4xf32> to vector<1x5x16x4xf32>
    tpu.vector_store %arg5[%c0_148, %c10, %c0_149, %c0_150], %170 {strides = array<i32>} : memref<1x16x16x4xf32, #tpu.memory_space<vmem>>, vector<1x5x16x4xf32>,
    %c360 = arith.constant 360 : index
    %c0_151 = arith.constant 0 : index
    %171 = vector.load %arg6[%c360, %c0_151] : memref<456x128xf32, #tpu.memory_space<vmem>>, vector<24x128xf32>
    %c0_152 = arith.constant 0 : index
    %c0_153 = arith.constant 0 : index
    %c0_154 = arith.constant 0 : index
    %172 = vector.load %arg3[%c0_152, %c0_153, %c0_154] : memref<9x128x128xf32, #tpu.memory_space<vmem>>, vector<1x128x128xf32>
    %173 = vector.shape_cast %172 : vector<1x128x128xf32> to vector<128x128xf32>
    %cst_155 = arith.constant dense<0.000000e+00> : vector<24x128xf32>
    %174 = tpu.matmul %171, %173, %cst_155 {dimension_numbers = #tpu.dot_dimension_numbers<[1], [0], [0], [1], [0, 0, 1, 1], [], []>} : vector<24x128xf32>, vector<128x128xf32>, vector<24x128xf32> -> vector<24x128xf32>
    %c361 = arith.constant 361 : index
    %c0_156 = arith.constant 0 : index
    %175 = vector.load %arg6[%c361, %c0_156] : memref<456x128xf32, #tpu.memory_space<vmem>>, vector<24x128xf32>
    %c1_157 = arith.constant 1 : index
    %c0_158 = arith.constant 0 : index
    %c0_159 = arith.constant 0 : index
    %176 = vector.load %arg3[%c1_157, %c0_158, %c0_159] : memref<9x128x128xf32, #tpu.memory_space<vmem>>, vector<1x128x128xf32>
    %177 = vector.shape_cast %176 : vector<1x128x128xf32> to vector<128x128xf32>
    %cst_160 = arith.constant dense<0.000000e+00> : vector<24x128xf32>
    %178 = tpu.matmul %175, %177, %cst_160 {dimension_numbers = #tpu.dot_dimension_numbers<[1], [0], [0], [1], [0, 0, 1, 1], [], []>} : vector<24x128xf32>, vector<128x128xf32>, vector<24x128xf32> -> vector<24x128xf32>
    %179 = arith.addf %174, %178 : vector<24x128xf32>
    %c362 = arith.constant 362 : index
    %c0_161 = arith.constant 0 : index
    %180 = vector.load %arg6[%c362, %c0_161] : memref<456x128xf32, #tpu.memory_space<vmem>>, vector<24x128xf32>
    %c2_162 = arith.constant 2 : index
    %c0_163 = arith.constant 0 : index
    %c0_164 = arith.constant 0 : index
    %181 = vector.load %arg3[%c2_162, %c0_163, %c0_164] : memref<9x128x128xf32, #tpu.memory_space<vmem>>, vector<1x128x128xf32>
    %182 = vector.shape_cast %181 : vector<1x128x128xf32> to vector<128x128xf32>
    %cst_165 = arith.constant dense<0.000000e+00> : vector<24x128xf32>
    %183 = tpu.matmul %180, %182, %cst_165 {dimension_numbers = #tpu.dot_dimension_numbers<[1], [0], [0], [1], [0, 0, 1, 1], [], []>} : vector<24x128xf32>, vector<128x128xf32>, vector<24x128xf32> -> vector<24x128xf32>
    %184 = arith.addf %179, %183 : vector<24x128xf32>
    %c384 = arith.constant 384 : index
    %c0_166 = arith.constant 0 : index
    %185 = vector.load %arg6[%c384, %c0_166] : memref<456x128xf32, #tpu.memory_space<vmem>>, vector<24x128xf32>
    %c3_167 = arith.constant 3 : index
    %c0_168 = arith.constant 0 : index
    %c0_169 = arith.constant 0 : index
    %186 = vector.load %arg3[%c3_167, %c0_168, %c0_169] : memref<9x128x128xf32, #tpu.memory_space<vmem>>, vector<1x128x128xf32>
    %187 = vector.shape_cast %186 : vector<1x128x128xf32> to vector<128x128xf32>
    %cst_170 = arith.constant dense<0.000000e+00> : vector<24x128xf32>
    %188 = tpu.matmul %185, %187, %cst_170 {dimension_numbers = #tpu.dot_dimension_numbers<[1], [0], [0], [1], [0, 0, 1, 1], [], []>} : vector<24x128xf32>, vector<128x128xf32>, vector<24x128xf32> -> vector<24x128xf32>
    %189 = arith.addf %184, %188 : vector<24x128xf32>
    %c385 = arith.constant 385 : index
    %c0_171 = arith.constant 0 : index
    %190 = vector.load %arg6[%c385, %c0_171] : memref<456x128xf32, #tpu.memory_space<vmem>>, vector<24x128xf32>
    %c4_172 = arith.constant 4 : index
    %c0_173 = arith.constant 0 : index
    %c0_174 = arith.constant 0 : index
    %191 = vector.load %arg3[%c4_172, %c0_173, %c0_174] : memref<9x128x128xf32, #tpu.memory_space<vmem>>, vector<1x128x128xf32>
    %192 = vector.shape_cast %191 : vector<1x128x128xf32> to vector<128x128xf32>
    %cst_175 = arith.constant dense<0.000000e+00> : vector<24x128xf32>
    %193 = tpu.matmul %190, %192, %cst_175 {dimension_numbers = #tpu.dot_dimension_numbers<[1], [0], [0], [1], [0, 0, 1, 1], [], []>} : vector<24x128xf32>, vector<128x128xf32>, vector<24x128xf32> -> vector<24x128xf32>
    %194 = arith.addf %189, %193 : vector<24x128xf32>
    %c386 = arith.constant 386 : index
    %c0_176 = arith.constant 0 : index
    %195 = vector.load %arg6[%c386, %c0_176] : memref<456x128xf32, #tpu.memory_space<vmem>>, vector<24x128xf32>
    %c5_177 = arith.constant 5 : index
    %c0_178 = arith.constant 0 : index
    %c0_179 = arith.constant 0 : index
    %196 = vector.load %arg3[%c5_177, %c0_178, %c0_179] : memref<9x128x128xf32, #tpu.memory_space<vmem>>, vector<1x128x128xf32>
    %197 = vector.shape_cast %196 : vector<1x128x128xf32> to vector<128x128xf32>
    %cst_180 = arith.constant dense<0.000000e+00> : vector<24x128xf32>
    %198 = tpu.matmul %195, %197, %cst_180 {dimension_numbers = #tpu.dot_dimension_numbers<[1], [0], [0], [1], [0, 0, 1, 1], [], []>} : vector<24x128xf32>, vector<128x128xf32>, vector<24x128xf32> -> vector<24x128xf32>
    %199 = arith.addf %194, %198 : vector<24x128xf32>
    %c408 = arith.constant 408 : index
    %c0_181 = arith.constant 0 : index
    %200 = vector.load %arg6[%c408, %c0_181] : memref<456x128xf32, #tpu.memory_space<vmem>>, vector<24x128xf32>
    %c6_182 = arith.constant 6 : index
    %c0_183 = arith.constant 0 : index
    %c0_184 = arith.constant 0 : index
    %201 = vector.load %arg3[%c6_182, %c0_183, %c0_184] : memref<9x128x128xf32, #tpu.memory_space<vmem>>, vector<1x128x128xf32>
    %202 = vector.shape_cast %201 : vector<1x128x128xf32> to vector<128x128xf32>
    %cst_185 = arith.constant dense<0.000000e+00> : vector<24x128xf32>
    %203 = tpu.matmul %200, %202, %cst_185 {dimension_numbers = #tpu.dot_dimension_numbers<[1], [0], [0], [1], [0, 0, 1, 1], [], []>} : vector<24x128xf32>, vector<128x128xf32>, vector<24x128xf32> -> vector<24x128xf32>
    %204 = arith.addf %199, %203 : vector<24x128xf32>
    %c409 = arith.constant 409 : index
    %c0_186 = arith.constant 0 : index
    %205 = vector.load %arg6[%c409, %c0_186] : memref<456x128xf32, #tpu.memory_space<vmem>>, vector<24x128xf32>
    %c7_187 = arith.constant 7 : index
    %c0_188 = arith.constant 0 : index
    %c0_189 = arith.constant 0 : index
    %206 = vector.load %arg3[%c7_187, %c0_188, %c0_189] : memref<9x128x128xf32, #tpu.memory_space<vmem>>, vector<1x128x128xf32>
    %207 = vector.shape_cast %206 : vector<1x128x128xf32> to vector<128x128xf32>
    %cst_190 = arith.constant dense<0.000000e+00> : vector<24x128xf32>
    %208 = tpu.matmul %205, %207, %cst_190 {dimension_numbers = #tpu.dot_dimension_numbers<[1], [0], [0], [1], [0, 0, 1, 1], [], []>} : vector<24x128xf32>, vector<128x128xf32>, vector<24x128xf32> -> vector<24x128xf32>
    %209 = arith.addf %204, %208 : vector<24x128xf32>
    %c410 = arith.constant 410 : index
    %c0_191 = arith.constant 0 : index
    %210 = vector.load %arg6[%c410, %c0_191] : memref<456x128xf32, #tpu.memory_space<vmem>>, vector<24x128xf32>
    %c8_192 = arith.constant 8 : index
    %c0_193 = arith.constant 0 : index
    %c0_194 = arith.constant 0 : index
    %211 = vector.load %arg3[%c8_192, %c0_193, %c0_194] : memref<9x128x128xf32, #tpu.memory_space<vmem>>, vector<1x128x128xf32>
    %212 = vector.shape_cast %211 : vector<1x128x128xf32> to vector<128x128xf32>
    %cst_195 = arith.constant dense<0.000000e+00> : vector<24x128xf32>
    %213 = tpu.matmul %210, %212, %cst_195 {dimension_numbers = #tpu.dot_dimension_numbers<[1], [0], [0], [1], [0, 0, 1, 1], [], []>} : vector<24x128xf32>, vector<128x128xf32>, vector<24x128xf32> -> vector<24x128xf32>
    %214 = arith.addf %209, %213 : vector<24x128xf32>
    %215 = vector.shape_cast %214 : vector<24x128xf32> to vector<1x24x128xf32>
    %216 = vector.extract_strided_slice %215 {offsets = [0, 0, 0], sizes = [1, 16, 4], strides = [1, 1, 1]} : vector<1x24x128xf32> to vector<1x16x4xf32>
    %217 = vector.broadcast %11 : vector<1x1x4xf32> to vector<1x16x4xf32>
    %218 = arith.addf %216, %217 : vector<1x16x4xf32>
    %cst_196 = arith.constant 0.000000e+00 : f32
    %219 = vector.broadcast %cst_196 : f32 to vector<1x16x4xf32>
    %220 = arith.maximumf %218, %219 : vector<1x16x4xf32>
    %c0_197 = arith.constant 0 : index
    %c15 = arith.constant 15 : index
    %c0_198 = arith.constant 0 : index
    %c0_199 = arith.constant 0 : index
    %221 = vector.load %arg5[%c0_197, %c15, %c0_198, %c0_199] : memref<1x16x16x4xf32, #tpu.memory_space<vmem>>, vector<1x1x16x4xf32>
    %222 = vector.shape_cast %221 : vector<1x1x16x4xf32> to vector<1x16x4xf32>
    %223 = vector.shape_cast %220 : vector<1x16x4xf32> to vector<1x1x16x4xf32>
    tpu.vector_store %arg5[%c0_197, %c15, %c0_198, %c0_199], %223 {strides = array<i32>} : memref<1x16x16x4xf32, #tpu.memory_space<vmem>>, vector<1x1x16x4xf32>,
    return
  }
  func.func @transform_1(%arg0: i32, %arg1: i32) -> (i32, i32, i32) {
    %c0_i32 = arith.constant 0 : i32
    %c0_i32_0 = arith.constant 0 : i32
    %c0_i32_1 = arith.constant 0 : i32
    %c0_i32_2 = arith.constant 0 : i32
    return %c0_i32, %c0_i32_0, %c0_i32_1 : i32, i32, i32
  }
  func.func @transform_2(%arg0: i32, %arg1: i32) -> (i32, i32) {
    %c0_i32 = arith.constant 0 : i32
    %c0_i32_0 = arith.constant 0 : i32
    %c0_i32_1 = arith.constant 0 : i32
    return %c0_i32, %c0_i32_0 : i32, i32
  }
  func.func @transform_3(%arg0: i32, %arg1: i32) -> (i32, i32, i32, i32) {
    %c0_i32 = arith.constant 0 : i32
    %c0_i32_0 = arith.constant 0 : i32
    %c0_i32_1 = arith.constant 0 : i32
    return %arg0, %arg1, %c0_i32, %c0_i32_0 : i32, i32, i32, i32
  }
}

</mosaic_0001>

<llo_original>
// kernel: conv_block_forward.1
$region0: #{conv_block_forward.1}
  #allocation0 [shape = 'u32[]', space=smem, size = 0x4, offset = 0x4, fixed_abs, tag = 'smem constant byte address 0x4 - core index']
  #allocation1 [shape = 'u32[144,128]{1,0:T(1,128)}', space=vmem, size = 0x12000, scoped, tag = 'internal scratch']
  #allocation2 [shape = 'f32[456,128]{1,0:T(8,128)}', space=vmem, size = 0x39000, scoped, tag = 'scratch operand']
  #allocation3 [shape = 's32[1]{0}', space=sflag, size = 0x4, scoped, tag = 'scratch operand']
  #allocation4 [shape = 's32[]', space=sflag, size = 0x4, offset = 0, fixed_abs, tag = 'sflag constant byte address 0x0 - dummy sync flag']
  %s0 = inlined_call_operand.vmem [shape: f32[2,432,128], index: 0, kind: input, shape index: {}]
  %s1 = inlined_call_operand.vmem [shape: f32[9,128,128], index: 1, kind: input, shape index: {}]
  %s2 = inlined_call_operand.vmem [shape: f32[1,4], index: 2, kind: input, shape index: {}]
  %s3 = inlined_call_operand.vmem [shape: f32[2,16,16,4], index: 3, kind: output, shape index: {}]
  %s4 = sld [smem:[#allocation0]]
  $region75: #{conv_block_forward.1} parent=0
    _
  %s6 = ssub.s32 1, %s4
  %s7 = scalar_select 0, %s6, %s4
  loop: start=0, step=1, limit=4
  $region2: #{conv_block_forward.1} parent=0 // loop_pre_header
    _
  $region3: #{conv_block_forward.1} parent=0 // loop_header
    %s9 = sphi 0, %s13
    %p10 = scmp.ge.s32.totalorder %s9, 4
    %s16 = sphi 0, %s28
    %s17 = sphi 0, %s24
    %s18 = sphi 0, %s16
    %s19 = sphi 0, %s17
    %s20 = sphi 0, %s18
    %s21 = sphi 0, %s19
    %s29 = sphi 0, %s29
    %s31 = sphi 0, %s29
    %s32 = sphi 0, %s31
    %s46 = sphi 0, %s32
    %s50 = sphi 0, %s50
    %s52 = sphi 0, %s50
    %s53 = sphi 0, %s52
    %s67 = sphi 0, %s53
    %s75 = sphi 0, %s77
    %s78 = sphi 0, %s75
    %s79 = sphi 0, %s78
    %s95 = sphi 0, %s79
  $region4: #{conv_block_forward.1} parent=0 // loop_header_branch
    %12 = sbr.rel (%p10) target = $region8
  $region5: #{conv_block_forward.1} parent=0 // loop_body
    %s14 = ssub.s32 %s9, 1
    %s15 = ssub.s32 %s9, 2
    %s22 = sadd.s32 1, %s17
    %p23 = scmp.ge.s32.totalorder %s22, 1
    %s24 = scalar_select %p23, 0, %s22
    %s25 = sadd.s32 1, %s16
    %s26 = scalar_select %p23, %s25, %s16
    %p27 = scmp.ge.s32.totalorder %s26, 2
    %s28 = scalar_select %p27, 0, %s26
    %s30 = sadd.s32 %s29, 1
    %p33 = scmp.eq.s32.totalorder %s9, 1
    %p34 = scmp.ne.s32.totalorder %s29, %s31
    %p35 = scmp.eq.s32.totalorder %s9, 0
    %p36 = por %p34, %p35
    %p37 = scmp.ne.s32.totalorder %s29, %s31
    %p38 = scmp.eq.s32.totalorder %s14, 1
    %p39 = por %p37, %p38
    %p40 = scmp.ne.s32.totalorder %s31, %s32
    %p41 = scmp.eq.s32.totalorder %s14, 0
    %p42 = por %p40, %p41
    %p43 = scmp.ne.s32.totalorder %s31, %s32
    %p44 = scmp.eq.s32.totalorder %s15, 1
    %p45 = por %p43, %p44
    %p47 = scmp.ne.s32.totalorder %s32, %s46
    %p48 = scmp.eq.s32.totalorder %s15, 0
    %p49 = por %p47, %p48
    %s51 = sadd.s32 %s50, 1
    %p54 = scmp.eq.s32.totalorder %s9, 1
    %p55 = scmp.ne.s32.totalorder %s50, %s52
    %p56 = scmp.eq.s32.totalorder %s9, 0
    %p57 = por %p55, %p56
    %p58 = scmp.ne.s32.totalorder %s50, %s52
    %p59 = scmp.eq.s32.totalorder %s14, 1
    %p60 = por %p58, %p59
    %p61 = scmp.ne.s32.totalorder %s52, %s53
    %p62 = scmp.eq.s32.totalorder %s14, 0
    %p63 = por %p61, %p62
    %p64 = scmp.ne.s32.totalorder %s52, %s53
    %p65 = scmp.eq.s32.totalorder %s15, 1
    %p66 = por %p64, %p65
    %p68 = scmp.ne.s32.totalorder %s53, %s67
    %p69 = scmp.eq.s32.totalorder %s15, 0
    %p70 = por %p68, %p69
    %s71 = ssub.s32 %s16, %s28
    %s72 = ssub.s32 %s17, %s24
    %s73 = sor.u32 %s71, %s72
    %p74 = scmp.eq.s32.totalorder %s73, 0
    %s76 = sadd.s32 %s75, 1
    %s77 = scalar_select %p74, %s75, %s76
    %p80 = pneg %p74
    %p81 = scmp.eq.s32.totalorder %s9, 1
    %p82 = por %p80, %p81
    %p83 = scmp.ne.s32.totalorder %s75, %s78
    %p84 = scmp.eq.s32.totalorder %s9, 0
    %p85 = por %p83, %p84
    %p86 = scmp.ne.s32.totalorder %s75, %s78
    %p87 = scmp.eq.s32.totalorder %s14, 1
    %p88 = por %p86, %p87
    %p89 = scmp.ne.s32.totalorder %s78, %s79
    %p90 = scmp.eq.s32.totalorder %s14, 0
    %p91 = por %p89, %p90
    %p92 = scmp.ne.s32.totalorder %s78, %s79
    %p93 = scmp.eq.s32.totalorder %s15, 1
    %p94 = por %p92, %p93
    %p96 = scmp.ne.s32.totalorder %s79, %s95
    %p97 = scmp.eq.s32.totalorder %s15, 0
    %p98 = por %p96, %p97
    %p99 = scmp.le.s32.totalorder 1, %s9
    %p100 = scmp.lt.s32.totalorder %s9, 3
    %p101 = pnand %p99, %p100
    %p102 = pneg %p101
    // Predicated region
    $region9: #{conv_block_forward.1} parent=5 // pred_check
      _
    $region10: #{conv_block_forward.1} parent=5 // pred_check_branch
      %104 = sbr.rel (%p101) target = $region12
    $region11: #{conv_block_forward.1} parent=5 // pred_region
      %s105 = ssub.s32 %s9, 1
      // Predicated region
      $region13: #{conv_block_forward.1} parent=11 // pred_check
        %p106 = pneg %p42
      $region14: #{conv_block_forward.1} parent=11 // pred_check_branch
        %108 = sbr.rel (%p106) target = $region16
      $region15: #{conv_block_forward.1} parent=11 // pred_region
        _
      $region16: #{conv_block_forward.1} parent=11 // pred_fallthru
        _
      // Predicated region
      $region17: #{conv_block_forward.1} parent=11 // pred_check
        %p109 = pneg %p63
      $region18: #{conv_block_forward.1} parent=11 // pred_check_branch
        %111 = sbr.rel (%p109) target = $region20
      $region19: #{conv_block_forward.1} parent=11 // pred_region
        _
      $region20: #{conv_block_forward.1} parent=11 // pred_fallthru
        _
    $region12: #{conv_block_forward.1} parent=5 // pred_fallthru
      _
    %p112 = scmp.lt.s32.totalorder %s9, 2
    // Predicated region
    $region21: #{conv_block_forward.1} parent=5 // pred_check
      %p113 = pneg %p112
    $region22: #{conv_block_forward.1} parent=5 // pred_check_branch
      %115 = sbr.rel (%p113) target = $region24
    $region23: #{conv_block_forward.1} parent=5 // pred_region
      _
    $region24: #{conv_block_forward.1} parent=5 // pred_fallthru
      _
    %p116 = scmp.le.s32.totalorder 1, %s9
    %p117 = scmp.lt.s32.totalorder %s9, 3
    %p118 = pnand %p116, %p117
    %p119 = pneg %p118
    // Predicated region
    $region25: #{conv_block_forward.1} parent=5 // pred_check
      _
    $region26: #{conv_block_forward.1} parent=5 // pred_check_branch
      %121 = sbr.rel (%p118) target = $region28
    $region27: #{conv_block_forward.1} parent=5 // pred_region
      %s122 = ssub.s32 %s9, 1
      %p123 = pneg %p42
      %p124 = pneg %p39
      %p125 = pneg %p63
      %p126 = pneg %p60
      %p127 = pneg %p91
      %p128 = pneg %p88
      %s129 = smul.u32 16, %s19
      %p130 = scmp.lt.s32.totalorder %s18, 1
      %s131 = scalar_select %p130, %s18, 1
      %p132 = scmp.lt.s32.totalorder %s129, 15
      %s133 = scalar_select %p132, %s129, 15
      %s134 = smul.addr %s133, 2
      %s135 = smul.addr %s131, 32
      %s136 = sadd.s32 %s134, %s135
      %s137 = smul.addr %s136, 8
      %s138 = scalar_lea.vmem %s3, %s137
      %s139 = smul.u32 16, %s19
      %p140 = scmp.lt.s32.totalorder %s18, 1
      %s141 = scalar_select %p140, %s18, 1
      %p142 = scmp.lt.s32.totalorder %s139, 15
      %s143 = scalar_select %p142, %s139, 15
      %s144 = smul.addr %s143, 2
      %s145 = smul.addr %s141, 32
      %s146 = sadd.s32 %s144, %s145
      %s147 = smul.addr %s146, 8
      %s148 = scalar_lea.vmem %s3, %s147
      %s149 = smul.u32 16, %s19
      %150 = vst [vmem:[#allocation2 + $0x1b0] sm:$0xff] 0.0
      %151 = vst [vmem:[#allocation2 + $0x1b8] sm:$0xff] 0.0
      %152 = vst [vmem:[#allocation2 + $0x1c0] sm:$0xff] 0.0
      %s153 = smul.u32 %s19, 384
      %s154 = smul.u32 %s18, 432
      %s155 = sadd.s32 %s153, %s154
      %s156 = scalar_lea.vmem %s0, %s155
      %p158 = scmp.lt.u32.totalorder 432, 8
      %p159 = pneg %p158
      // Predicated region
      $region29: #{conv_block_forward.1} parent=27 // pred_check
        _
      $region30: #{conv_block_forward.1} parent=27 // pred_check_branch
        %161 = sbr.rel (%p158) target = $region32
      $region31: #{conv_block_forward.1} parent=27 // pred_region
        %s177 = sand.u32 432, 7
        %p178 = scmp.eq.s32.totalorder %s177, 0
        // Predicated region
        $region44: #{conv_block_forward.1} parent=31 // pred_check
          %p179 = pneg %p178
        $region45: #{conv_block_forward.1} parent=31 // pred_check_branch
          %181 = sbr.rel (%p179) target = $region47
        $region46: #{conv_block_forward.1} parent=31 // pred_region
          loop: start=0, step=1, limit=1
          $region48: #{conv_block_forward.1} parent=46 // loop_pre_header
            _
          $region49: #{conv_block_forward.1} parent=46 // loop_header
            %s183 = sphi 0, %s187
            %p184 = scmp.ge.s32.totalorder %s183, 1
            %s188 = sphi %s156, %s156
            %s189 = sphi [#allocation2], [#allocation2]
          $region50: #{conv_block_forward.1} parent=46 // loop_header_branch
            %186 = sbr.rel (%p184) target = $region54
          $region51: #{conv_block_forward.1} parent=46 // loop_body
            %v190 = vld [vmem:[%s188] sm:$0xff]
            %191 = vst [vmem:[%s189] sm:$0xff] %v190
            %v192 = vld [vmem:[%s188 + $0x8] sm:$0xff]
            %193 = vst [vmem:[%s189 + $0x8] sm:$0xff] %v192
            %v194 = vld [vmem:[%s188 + $0x10] sm:$0xff]
            %195 = vst [vmem:[%s189 + $0x10] sm:$0xff] %v194
            %v196 = vld [vmem:[%s188 + $0x18] sm:$0xff]
            %197 = vst [vmem:[%s189 + $0x18] sm:$0xff] %v196
            %v198 = vld [vmem:[%s188 + $0x20] sm:$0xff]
            %199 = vst [vmem:[%s189 + $0x20] sm:$0xff] %v198
            %v200 = vld [vmem:[%s188 + $0x28] sm:$0xff]
            %201 = vst [vmem:[%s189 + $0x28] sm:$0xff] %v200
            %v202 = vld [vmem:[%s188 + $0x30] sm:$0xff]
            %203 = vst [vmem:[%s189 + $0x30] sm:$0xff] %v202
            %v204 = vld [vmem:[%s188 + $0x38] sm:$0xff]
            %205 = vst [vmem:[%s189 + $0x38] sm:$0xff] %v204
            %v206 = vld [vmem:[%s188 + $0x40] sm:$0xff]
            %207 = vst [vmem:[%s189 + $0x40] sm:$0xff] %v206
            %v208 = vld [vmem:[%s188 + $0x48] sm:$0xff]
            %209 = vst [vmem:[%s189 + $0x48] sm:$0xff] %v208
            %v210 = vld [vmem:[%s188 + $0x50] sm:$0xff]
            %211 = vst [vmem:[%s189 + $0x50] sm:$0xff] %v210
            %v212 = vld [vmem:[%s188 + $0x58] sm:$0xff]
            %213 = vst [vmem:[%s189 + $0x58] sm:$0xff] %v212
            %v214 = vld [vmem:[%s188 + $0x60] sm:$0xff]
            %215 = vst [vmem:[%s189 + $0x60] sm:$0xff] %v214
            %v216 = vld [vmem:[%s188 + $0x68] sm:$0xff]
            %217 = vst [vmem:[%s189 + $0x68] sm:$0xff] %v216
            %v218 = vld [vmem:[%s188 + $0x70] sm:$0xff]
            %219 = vst [vmem:[%s189 + $0x70] sm:$0xff] %v218
            %v220 = vld [vmem:[%s188 + $0x78] sm:$0xff]
            %221 = vst [vmem:[%s189 + $0x78] sm:$0xff] %v220
            %v222 = vld [vmem:[%s188 + $0x80] sm:$0xff]
            %223 = vst [vmem:[%s189 + $0x80] sm:$0xff] %v222
            %v224 = vld [vmem:[%s188 + $0x88] sm:$0xff]
            %225 = vst [vmem:[%s189 + $0x88] sm:$0xff] %v224
            %v226 = vld [vmem:[%s188 + $0x90] sm:$0xff]
            %227 = vst [vmem:[%s189 + $0x90] sm:$0xff] %v226
            %v228 = vld [vmem:[%s188 + $0x98] sm:$0xff]
            %229 = vst [vmem:[%s189 + $0x98] sm:$0xff] %v228
            %v230 = vld [vmem:[%s188 + $0xa0] sm:$0xff]
            %231 = vst [vmem:[%s189 + $0xa0] sm:$0xff] %v230
            %v232 = vld [vmem:[%s188 + $0xa8] sm:$0xff]
            %233 = vst [vmem:[%s189 + $0xa8] sm:$0xff] %v232
            %v234 = vld [vmem:[%s188 + $0xb0] sm:$0xff]
            %235 = vst [vmem:[%s189 + $0xb0] sm:$0xff] %v234
            %v236 = vld [vmem:[%s188 + $0xb8] sm:$0xff]
            %237 = vst [vmem:[%s189 + $0xb8] sm:$0xff] %v236
            %v238 = vld [vmem:[%s188 + $0xc0] sm:$0xff]
            %239 = vst [vmem:[%s189 + $0xc0] sm:$0xff] %v238
            %v240 = vld [vmem:[%s188 + $0xc8] sm:$0xff]
            %241 = vst [vmem:[%s189 + $0xc8] sm:$0xff] %v240
            %v242 = vld [vmem:[%s188 + $0xd0] sm:$0xff]
            %243 = vst [vmem:[%s189 + $0xd0] sm:$0xff] %v242
            %v244 = vld [vmem:[%s188 + $0xd8] sm:$0xff]
            %245 = vst [vmem:[%s189 + $0xd8] sm:$0xff] %v244
            %v246 = vld [vmem:[%s188 + $0xe0] sm:$0xff]
            %247 = vst [vmem:[%s189 + $0xe0] sm:$0xff] %v246
            %v248 = vld [vmem:[%s188 + $0xe8] sm:$0xff]
            %249 = vst [vmem:[%s189 + $0xe8] sm:$0xff] %v248
            %v250 = vld [vmem:[%s188 + $0xf0] sm:$0xff]
            %251 = vst [vmem:[%s189 + $0xf0] sm:$0xff] %v250
            %v252 = vld [vmem:[%s188 + $0xf8] sm:$0xff]
            %253 = vst [vmem:[%s189 + $0xf8] sm:$0xff] %v252
            %v254 = vld [vmem:[%s188 + $0x100] sm:$0xff]
            %255 = vst [vmem:[%s189 + $0x100] sm:$0xff] %v254
            %v256 = vld [vmem:[%s188 + $0x108] sm:$0xff]
            %257 = vst [vmem:[%s189 + $0x108] sm:$0xff] %v256
            %v258 = vld [vmem:[%s188 + $0x110] sm:$0xff]
            %259 = vst [vmem:[%s189 + $0x110] sm:$0xff] %v258
            %v260 = vld [vmem:[%s188 + $0x118] sm:$0xff]
            %261 = vst [vmem:[%s189 + $0x118] sm:$0xff] %v260
            %v262 = vld [vmem:[%s188 + $0x120] sm:$0xff]
            %263 = vst [vmem:[%s189 + $0x120] sm:$0xff] %v262
            %v264 = vld [vmem:[%s188 + $0x128] sm:$0xff]
            %265 = vst [vmem:[%s189 + $0x128] sm:$0xff] %v264
            %v266 = vld [vmem:[%s188 + $0x130] sm:$0xff]
            %267 = vst [vmem:[%s189 + $0x130] sm:$0xff] %v266
            %v268 = vld [vmem:[%s188 + $0x138] sm:$0xff]
            %269 = vst [vmem:[%s189 + $0x138] sm:$0xff] %v268
            %v270 = vld [vmem:[%s188 + $0x140] sm:$0xff]
            %271 = vst [vmem:[%s189 + $0x140] sm:$0xff] %v270
            %v272 = vld [vmem:[%s188 + $0x148] sm:$0xff]
            %273 = vst [vmem:[%s189 + $0x148] sm:$0xff] %v272
            %v274 = vld [vmem:[%s188 + $0x150] sm:$0xff]
            %275 = vst [vmem:[%s189 + $0x150] sm:$0xff] %v274
            %v276 = vld [vmem:[%s188 + $0x158] sm:$0xff]
            %277 = vst [vmem:[%s189 + $0x158] sm:$0xff] %v276
            %v278 = vld [vmem:[%s188 + $0x160] sm:$0xff]
            %279 = vst [vmem:[%s189 + $0x160] sm:$0xff] %v278
            %v280 = vld [vmem:[%s188 + $0x168] sm:$0xff]
            %281 = vst [vmem:[%s189 + $0x168] sm:$0xff] %v280
            %v282 = vld [vmem:[%s188 + $0x170] sm:$0xff]
            %283 = vst [vmem:[%s189 + $0x170] sm:$0xff] %v282
            %v284 = vld [vmem:[%s188 + $0x178] sm:$0xff]
            %285 = vst [vmem:[%s189 + $0x178] sm:$0xff] %v284
            %v286 = vld [vmem:[%s188 + $0x180] sm:$0xff]
            %287 = vst [vmem:[%s189 + $0x180] sm:$0xff] %v286
            %v288 = vld [vmem:[%s188 + $0x188] sm:$0xff]
            %289 = vst [vmem:[%s189 + $0x188] sm:$0xff] %v288
            %v290 = vld [vmem:[%s188 + $0x190] sm:$0xff]
            %291 = vst [vmem:[%s189 + $0x190] sm:$0xff] %v290
            %v292 = vld [vmem:[%s188 + $0x198] sm:$0xff]
            %293 = vst [vmem:[%s189 + $0x198] sm:$0xff] %v292
            %v294 = vld [vmem:[%s188 + $0x1a0] sm:$0xff]
            %295 = vst [vmem:[%s189 + $0x1a0] sm:$0xff] %v294
            %v296 = vld [vmem:[%s188 + $0x1a8] sm:$0xff]
            %297 = vst [vmem:[%s189 + $0x1a8] sm:$0xff] %v296
          $region52: #{conv_block_forward.1} parent=46 // loop_footer
            %s187 = sadd.s32 1, %s183
          $region53: #{conv_block_forward.1} parent=46 // loop_footer_branch
            %182 = sbr.rel target = $region49
          $region54: #{conv_block_forward.1} parent=46 // loop_exit
            _
        $region47: #{conv_block_forward.1} parent=31 // pred_fallthru
          _
        %p298 = pneg %p178
        // Predicated region
        $region55: #{conv_block_forward.1} parent=31 // pred_check
          _
        $region56: #{conv_block_forward.1} parent=31 // pred_check_branch
          %300 = sbr.rel (%p178) target = $region58
        $region57: #{conv_block_forward.1} parent=31 // pred_region
          %s301 = sand.u32 432, 7
        $region58: #{conv_block_forward.1} parent=31 // pred_fallthru
          _
      $region32: #{conv_block_forward.1} parent=27 // pred_fallthru
        _
      // Predicated region
      $region33: #{conv_block_forward.1} parent=27 // pred_check
        %p162 = pneg %p158
      $region34: #{conv_block_forward.1} parent=27 // pred_check_branch
        %164 = sbr.rel (%p162) target = $region36
      $region35: #{conv_block_forward.1} parent=27 // pred_region
        %s165 = sshll.u32 1, 432
        %s166 = ssub.s32 %s165, 1
        loop: start=0, step=1, limit=1
        $region37: #{conv_block_forward.1} parent=35 // loop_pre_header
          _
        $region38: #{conv_block_forward.1} parent=35 // loop_header
          %s168 = sphi 0, %s172
          %p169 = scmp.ge.s32.totalorder %s168, 1
          %s173 = sphi %s156, %s156
          %s174 = sphi [#allocation2], [#allocation2]
        $region39: #{conv_block_forward.1} parent=35 // loop_header_branch
          %171 = sbr.rel (%p169) target = $region43
        $region40: #{conv_block_forward.1} parent=35 // loop_body
          %v175 = vld [vmem:[%s173] sm:%s166]
          %176 = vst [vmem:[%s174] sm:%s166] %v175
        $region41: #{conv_block_forward.1} parent=35 // loop_footer
          %s172 = sadd.s32 1, %s168
        $region42: #{conv_block_forward.1} parent=35 // loop_footer_branch
          %167 = sbr.rel target = $region38
        $region43: #{conv_block_forward.1} parent=35 // loop_exit
          _
      $region36: #{conv_block_forward.1} parent=27 // pred_fallthru
        _
      // Predicated region
      $region59: #{conv_block_forward.1} parent=27 // pred_check
        _
      $region60: #{conv_block_forward.1} parent=27 // pred_check_branch
        %304 = sbr.rel (0) target = $region62
      $region61: #{conv_block_forward.1} parent=27 // pred_region
        %305 = vsyncadd [#allocation3], 6912
      $region62: #{conv_block_forward.1} parent=27 // pred_fallthru
        _
      %s306 = smul.u32 432, 1
      %s307 = sshll.u32 %s306, 4
      %308 = dma.done [#allocation3], %s307
      %v309 = vld [vmem:[%s2] sm:$0x1]
      %v310 = vld [vmem:[#allocation2] sm:$0xff]
      %v311 = vld [vmem:[#allocation2 + $0x8] sm:$0xff]
      %v312 = vld [vmem:[#allocation2 + $0x10] sm:$0xff]
      %v313 = vld [vmem:[#allocation2 + $0x18] sm:$0xff]
      %v314 = vld [vmem:[#allocation2 + $0x20] sm:$0xff]
      %v315 = vld [vmem:[#allocation2 + $0x28] sm:$0xff]
      %v316 = vld [vmem:[#allocation2 + $0x30] sm:$0xff]
      %v317 = vld [vmem:[#allocation2 + $0x38] sm:$0xff]
      %v318 = vld [vmem:[#allocation2 + $0x40] sm:$0xff]
      %v319 = vld [vmem:[#allocation2 + $0x48] sm:$0xff]
      %v320 = vld [vmem:[#allocation2 + $0x50] sm:$0xff]
      %v321 = vld [vmem:[#allocation2 + $0x58] sm:$0xff]
      %v322 = vld [vmem:[#allocation2 + $0x60] sm:$0xff]
      %v323 = vld [vmem:[#allocation2 + $0x68] sm:$0xff]
      %v324 = vld [vmem:[#allocation2 + $0x70] sm:$0xff]
      %v325 = vld [vmem:[%s1] sm:$0xff]
      %v326 = vld [vmem:[%s1 + $0x8] sm:$0xff]
      %v327 = vld [vmem:[%s1 + $0x10] sm:$0xff]
      %v328 = vld [vmem:[%s1 + $0x18] sm:$0xff]
      %v329 = vld [vmem:[%s1 + $0x20] sm:$0xff]
      %v330 = vld [vmem:[%s1 + $0x28] sm:$0xff]
      %v331 = vld [vmem:[%s1 + $0x30] sm:$0xff]
      %v332 = vld [vmem:[%s1 + $0x38] sm:$0xff]
      %v333 = vld [vmem:[%s1 + $0x40] sm:$0xff]
      %v334 = vld [vmem:[%s1 + $0x48] sm:$0xff]
      %v335 = vld [vmem:[%s1 + $0x50] sm:$0xff]
      %v336 = vld [vmem:[%s1 + $0x58] sm:$0xff]
      %v337 = vld [vmem:[%s1 + $0x60] sm:$0xff]
      %v338 = vld [vmem:[%s1 + $0x68] sm:$0xff]
      %v339 = vld [vmem:[%s1 + $0x70] sm:$0xff]
      %v340 = vld [vmem:[%s1 + $0x78] sm:$0xff]
      %v341 = vld [vmem:[#allocation2 + $0x1] sm:$0xff]
      %v342 = vld [vmem:[#allocation2 + $0x9] sm:$0xff]
      %v343 = vld [vmem:[#allocation2 + $0x11] sm:$0xff]
      %v344 = vld [vmem:[#allocation2 + $0x19] sm:$0xff]
      %v345 = vld [vmem:[#allocation2 + $0x21] sm:$0xff]
      %v346 = vld [vmem:[#allocation2 + $0x29] sm:$0xff]
      %v347 = vld [vmem:[#allocation2 + $0x31] sm:$0xff]
      %v348 = vld [vmem:[#allocation2 + $0x39] sm:$0xff]
      %v349 = vld [vmem:[#allocation2 + $0x41] sm:$0xff]
      %v350 = vld [vmem:[#allocation2 + $0x49] sm:$0xff]
      %v351 = vld [vmem:[#allocation2 + $0x51] sm:$0xff]
      %v352 = vld [vmem:[#allocation2 + $0x59] sm:$0xff]
      %v353 = vld [vmem:[#allocation2 + $0x61] sm:$0xff]
      %v354 = vld [vmem:[#allocation2 + $0x69] sm:$0xff]
      %v355 = vld [vmem:[#allocation2 + $0x71] sm:$0xff]
      %s356 = scalar_lea.vmem %s1, 128
      %v357 = vld [vmem:[%s356] sm:$0xff]
      %v358 = vld [vmem:[%s356 + $0x8] sm:$0xff]
      %v359 = vld [vmem:[%s356 + $0x10] sm:$0xff]
      %v360 = vld [vmem:[%s356 + $0x18] sm:$0xff]
      %v361 = vld [vmem:[%s356 + $0x20] sm:$0xff]
      %v362 = vld [vmem:[%s356 + $0x28] sm:$0xff]
      %v363 = vld [vmem:[%s356 + $0x30] sm:$0xff]
      %v364 = vld [vmem:[%s356 + $0x38] sm:$0xff]
      %v365 = vld [vmem:[%s356 + $0x40] sm:$0xff]
      %v366 = vld [vmem:[%s356 + $0x48] sm:$0xff]
      %v367 = vld [vmem:[%s356 + $0x50] sm:$0xff]
      %v368 = vld [vmem:[%s356 + $0x58] sm:$0xff]
      %v369 = vld [vmem:[%s356 + $0x60] sm:$0xff]
      %v370 = vld [vmem:[%s356 + $0x68] sm:$0xff]
      %v371 = vld [vmem:[%s356 + $0x70] sm:$0xff]
      %v372 = vld [vmem:[%s356 + $0x78] sm:$0xff]
      %373 = vmatprep.subr.mxu0 0.0
      %374 = vmatpush1.msra.mxu0 %v372
      %375 = vmatprep.subr.mxu0 0.0
      %376 = vmatpush1.msra.mxu0 %v371
      %377 = vmatprep.subr.mxu0 0.0
      %378 = vmatpush1.msra.mxu0 %v370
      %379 = vmatprep.subr.mxu0 0.0
      %380 = vmatpush1.msra.mxu0 %v369
      %381 = vmatprep.subr.mxu0 0.0
      %382 = vmatpush1.msra.mxu0 %v368
      %383 = vmatprep.subr.mxu0 0.0
      %384 = vmatpush1.msra.mxu0 %v367
      %385 = vmatprep.subr.mxu0 0.0
      %386 = vmatpush1.msra.mxu0 %v366
      %387 = vmatprep.subr.mxu0 0.0
      %388 = vmatpush1.msra.mxu0 %v365
      %389 = vmatprep.subr.mxu0 0.0
      %390 = vmatpush1.msra.mxu0 %v364
      %391 = vmatprep.subr.mxu0 0.0
      %392 = vmatpush1.msra.mxu0 %v363
      %393 = vmatprep.subr.mxu0 0.0
      %394 = vmatpush1.msra.mxu0 %v362
      %395 = vmatprep.subr.mxu0 0.0
      %396 = vmatpush1.msra.mxu0 %v361
      %397 = vmatprep.subr.mxu0 0.0
      %398 = vmatpush1.msra.mxu0 %v360
      %399 = vmatprep.subr.mxu0 0.0
      %400 = vmatpush1.msra.mxu0 %v359
      %401 = vmatprep.subr.mxu0 0.0
      %402 = vmatpush1.msra.mxu0 %v358
      %403 = vmatprep.subr.mxu0 0.0
      %404 = vmatpush1.msra.mxu0 %v357
      %405 = vmatprep.subr.mxu0 0.0
      %406 = vmatpush2.msra.mxu0 0.0
      %407 = vmatprep.subr.mxu0 0.0
      %408 = vmatpush2.msra.mxu0 0.0
      %409 = vmatprep.subr.mxu0 0.0
      %410 = vmatpush2.msra.mxu0 0.0
      %411 = vmatprep.subr.mxu0 0.0
      %412 = vmatpush2.msra.mxu0 0.0
      %413 = vmatprep.subr.mxu0 0.0
      %414 = vmatpush2.msra.mxu0 0.0
      %415 = vmatprep.subr.mxu0 0.0
      %416 = vmatpush2.msra.mxu0 0.0
      %417 = vmatprep.subr.mxu0 0.0
      %418 = vmatpush2.msra.mxu0 0.0
      %419 = vmatprep.subr.mxu0 0.0
      %420 = vmatpush2.msra.mxu0 0.0
      %421 = vmatprep.subr.mxu0 0.0
      %422 = vmatpush2.msra.mxu0 0.0
      %423 = vmatprep.subr.mxu0 0.0
      %424 = vmatpush2.msra.mxu0 0.0
      %425 = vmatprep.subr.mxu0 0.0
      %426 = vmatpush2.msra.mxu0 0.0
      %427 = vmatprep.subr.mxu0 0.0
      %428 = vmatpush2.msra.mxu0 0.0
      %429 = vmatprep.subr.mxu0 0.0
      %430 = vmatpush2.msra.mxu0 0.0
      %431 = vmatprep.subr.mxu0 0.0
      %432 = vmatpush2.msra.mxu0 0.0
      %433 = vmatprep.subr.mxu0 0.0
      %434 = vmatpush2.msra.mxu0 0.0
      %435 = vmatprep.subr.mxu0 0.0
      %436 = vmatpush2.msra.mxu0 0.0
      %437 = vmatprep.mubr.f32.mxu0 0.0
      %438 = vmatmul.mubr.f32.gmra.mxu0 %v341
      %v439 = vpop.f32.mrf.mxu0
      %v440 = vadd.f32 0.0, %v439
      %v441 = vpop.f32.mrf.mxu0
      %442 = vmatprep.mubr.f32.mxu0 0.0
      %443 = vmatmul.mubr.f32.gmra.mxu0 %v342
      %v444 = vpop.f32.mrf.mxu0
      %v445 = vadd.f32 0.0, %v444
      %v446 = vpop.f32.mrf.mxu0
      %447 = vmatprep.mubr.f32.mxu0 0.0
      %448 = vmatmul.mubr.f32.gmra.mxu0 %v343
      %v449 = vpop.f32.mrf.mxu0
      %v450 = vpop.f32.mrf.mxu0
      %451 = vmatprep.mubr.f32.mxu0 0.0
      %452 = vmatmul.mubr.f32.gmra.mxu0 %v344
      %v453 = vpop.f32.mrf.mxu0
      %v454 = vadd.f32 0.0, %v453
      %v455 = vpop.f32.mrf.mxu0
      %456 = vmatprep.mubr.f32.mxu0 0.0
      %457 = vmatmul.mubr.f32.gmra.mxu0 %v345
      %v458 = vpop.f32.mrf.mxu0
      %v459 = vadd.f32 0.0, %v458
      %v460 = vpop.f32.mrf.mxu0
      %461 = vmatprep.mubr.f32.mxu0 0.0
      %462 = vmatmul.mubr.f32.gmra.mxu0 %v346
      %v463 = vpop.f32.mrf.mxu0
      %v464 = vpop.f32.mrf.mxu0
      %465 = vmatprep.mubr.f32.mxu0 0.0
      %466 = vmatmul.mubr.f32.gmra.mxu0 %v347
      %v467 = vpop.f32.mrf.mxu0
      %v468 = vadd.f32 0.0, %v467
      %v469 = vpop.f32.mrf.mxu0
      %470 = vmatprep.mubr.f32.mxu0 0.0
      %471 = vmatmul.mubr.f32.gmra.mxu0 %v348
      %v472 = vpop.f32.mrf.mxu0
      %v473 = vadd.f32 0.0, %v472
      %v474 = vpop.f32.mrf.mxu0
      %475 = vmatprep.mubr.f32.mxu0 0.0
      %476 = vmatmul.mubr.f32.gmra.mxu0 %v349
      %v477 = vpop.f32.mrf.mxu0
      %v478 = vpop.f32.mrf.mxu0
      %479 = vmatprep.mubr.f32.mxu0 0.0
      %480 = vmatmul.mubr.f32.gmra.mxu0 %v350
      %v481 = vpop.f32.mrf.mxu0
      %v482 = vadd.f32 0.0, %v481
      %v483 = vpop.f32.mrf.mxu0
      %484 = vmatprep.mubr.f32.mxu0 0.0
      %485 = vmatmul.mubr.f32.gmra.mxu0 %v351
      %v486 = vpop.f32.mrf.mxu0
      %v487 = vadd.f32 0.0, %v486
      %v488 = vpop.f32.mrf.mxu0
      %489 = vmatprep.mubr.f32.mxu0 0.0
      %490 = vmatmul.mubr.f32.gmra.mxu0 %v352
      %v491 = vpop.f32.mrf.mxu0
      %v492 = vpop.f32.mrf.mxu0
      %493 = vmatprep.mubr.f32.mxu0 0.0
      %494 = vmatmul.mubr.f32.gmra.mxu0 %v353
      %v495 = vpop.f32.mrf.mxu0
      %v496 = vadd.f32 0.0, %v495
      %v497 = vpop.f32.mrf.mxu0
      %498 = vmatprep.mubr.f32.mxu0 0.0
      %499 = vmatmul.mubr.f32.gmra.mxu0 %v354
      %v500 = vpop.f32.mrf.mxu0
      %v501 = vadd.f32 0.0, %v500
      %v502 = vpop.f32.mrf.mxu0
      %503 = vmatprep.mubr.f32.mxu0 0.0
      %504 = vmatmul.mubr.f32.gmra.mxu0 %v355
      %v505 = vpop.f32.mrf.mxu0
      %v506 = vpop.f32.mrf.mxu0
      %507 = vdwg.mxu0
      %508 = vmatprep.subr.mxu0 0.0
      %509 = vmatpush1.msra.mxu0 %v340
      %510 = vmatprep.subr.mxu0 0.0
      %511 = vmatpush1.msra.mxu0 %v339
      %512 = vmatprep.subr.mxu0 0.0
      %513 = vmatpush1.msra.mxu0 %v338
      %514 = vmatprep.subr.mxu0 0.0
      %515 = vmatpush1.msra.mxu0 %v337
      %516 = vmatprep.subr.mxu0 0.0
      %517 = vmatpush1.msra.mxu0 %v336
      %518 = vmatprep.subr.mxu0 0.0
      %519 = vmatpush1.msra.mxu0 %v335
      %520 = vmatprep.subr.mxu0 0.0
      %521 = vmatpush1.msra.mxu0 %v334
      %522 = vmatprep.subr.mxu0 0.0
      %523 = vmatpush1.msra.mxu0 %v333
      %524 = vmatprep.subr.mxu0 0.0
      %525 = vmatpush1.msra.mxu0 %v332
      %526 = vmatprep.subr.mxu0 0.0
      %527 = vmatpush1.msra.mxu0 %v331
      %528 = vmatprep.subr.mxu0 0.0
      %529 = vmatpush1.msra.mxu0 %v330
      %530 = vmatprep.subr.mxu0 0.0
      %531 = vmatpush1.msra.mxu0 %v329
      %532 = vmatprep.subr.mxu0 0.0
      %533 = vmatpush1.msra.mxu0 %v328
      %534 = vmatprep.subr.mxu0 0.0
      %535 = vmatpush1.msra.mxu0 %v327
      %536 = vmatprep.subr.mxu0 0.0
      %537 = vmatpush1.msra.mxu0 %v326
      %538 = vmatprep.subr.mxu0 0.0
      %539 = vmatpush1.msra.mxu0 %v325
      %540 = vmatprep.subr.mxu0 0.0
      %541 = vmatpush2.msra.mxu0 0.0
      %542 = vmatprep.subr.mxu0 0.0
      %543 = vmatpush2.msra.mxu0 0.0
      %544 = vmatprep.subr.mxu0 0.0
      %545 = vmatpush2.msra.mxu0 0.0
      %546 = vmatprep.subr.mxu0 0.0
      %547 = vmatpush2.msra.mxu0 0.0
      %548 = vmatprep.subr.mxu0 0.0
      %549 = vmatpush2.msra.mxu0 0.0
      %550 = vmatprep.subr.mxu0 0.0
      %551 = vmatpush2.msra.mxu0 0.0
      %552 = vmatprep.subr.mxu0 0.0
      %553 = vmatpush2.msra.mxu0 0.0
      %554 = vmatprep.subr.mxu0 0.0
      %555 = vmatpush2.msra.mxu0 0.0
      %556 = vmatprep.subr.mxu0 0.0
      %557 = vmatpush2.msra.mxu0 0.0
      %558 = vmatprep.subr.mxu0 0.0
      %559 = vmatpush2.msra.mxu0 0.0
      %560 = vmatprep.subr.mxu0 0.0
      %561 = vmatpush2.msra.mxu0 0.0
      %562 = vmatprep.subr.mxu0 0.0
      %563 = vmatpush2.msra.mxu0 0.0
      %564 = vmatprep.subr.mxu0 0.0
      %565 = vmatpush2.msra.mxu0 0.0
      %566 = vmatprep.subr.mxu0 0.0
      %567 = vmatpush2.msra.mxu0 0.0
      %568 = vmatprep.subr.mxu0 0.0
      %569 = vmatpush2.msra.mxu0 0.0
      %570 = vmatprep.subr.mxu0 0.0
      %571 = vmatpush2.msra.mxu0 0.0
      %572 = vmatprep.mubr.f32.mxu0 0.0
      %573 = vmatmul.mubr.f32.gmra.mxu0 %v310
      %v574 = vpop.f32.mrf.mxu0
      %v575 = vadd.f32 %v440, %v574
      %v576 = vpop.f32.mrf.mxu0
      %577 = vmatprep.mubr.f32.mxu0 0.0
      %578 = vmatmul.mubr.f32.gmra.mxu0 %v311
      %v579 = vpop.f32.mrf.mxu0
      %v580 = vadd.f32 %v445, %v579
      %v581 = vpop.f32.mrf.mxu0
      %582 = vmatprep.mubr.f32.mxu0 0.0
      %583 = vmatmul.mubr.f32.gmra.mxu0 %v312
      %v584 = vpop.f32.mrf.mxu0
      %v585 = vpop.f32.mrf.mxu0
      %586 = vmatprep.mubr.f32.mxu0 0.0
      %587 = vmatmul.mubr.f32.gmra.mxu0 %v313
      %v588 = vpop.f32.mrf.mxu0
      %v589 = vadd.f32 %v454, %v588
      %v590 = vpop.f32.mrf.mxu0
      %591 = vmatprep.mubr.f32.mxu0 0.0
      %592 = vmatmul.mubr.f32.gmra.mxu0 %v314
      %v593 = vpop.f32.mrf.mxu0
      %v594 = vadd.f32 %v459, %v593
      %v595 = vpop.f32.mrf.mxu0
      %596 = vmatprep.mubr.f32.mxu0 0.0
      %597 = vmatmul.mubr.f32.gmra.mxu0 %v315
      %v598 = vpop.f32.mrf.mxu0
      %v599 = vpop.f32.mrf.mxu0
      %600 = vmatprep.mubr.f32.mxu0 0.0
      %601 = vmatmul.mubr.f32.gmra.mxu0 %v316
      %v602 = vpop.f32.mrf.mxu0
      %v603 = vadd.f32 %v468, %v602
      %v604 = vpop.f32.mrf.mxu0
      %605 = vmatprep.mubr.f32.mxu0 0.0
      %606 = vmatmul.mubr.f32.gmra.mxu0 %v317
      %v607 = vpop.f32.mrf.mxu0
      %v608 = vadd.f32 %v473, %v607
      %v609 = vpop.f32.mrf.mxu0
      %610 = vmatprep.mubr.f32.mxu0 0.0
      %611 = vmatmul.mubr.f32.gmra.mxu0 %v318
      %v612 = vpop.f32.mrf.mxu0
      %v613 = vpop.f32.mrf.mxu0
      %614 = vmatprep.mubr.f32.mxu0 0.0
      %615 = vmatmul.mubr.f32.gmra.mxu0 %v319
      %v616 = vpop.f32.mrf.mxu0
      %v617 = vadd.f32 %v482, %v616
      %v618 = vpop.f32.mrf.mxu0
      %619 = vmatprep.mubr.f32.mxu0 0.0
      %620 = vmatmul.mubr.f32.gmra.mxu0 %v320
      %v621 = vpop.f32.mrf.mxu0
      %v622 = vadd.f32 %v487, %v621
      %v623 = vpop.f32.mrf.mxu0
      %624 = vmatprep.mubr.f32.mxu0 0.0
      %625 = vmatmul.mubr.f32.gmra.mxu0 %v321
      %v626 = vpop.f32.mrf.mxu0
      %v627 = vpop.f32.mrf.mxu0
      %628 = vmatprep.mubr.f32.mxu0 0.0
      %629 = vmatmul.mubr.f32.gmra.mxu0 %v322
      %v630 = vpop.f32.mrf.mxu0
      %v631 = vadd.f32 %v496, %v630
      %v632 = vpop.f32.mrf.mxu0
      %633 = vmatprep.mubr.f32.mxu0 0.0
      %634 = vmatmul.mubr.f32.gmra.mxu0 %v323
      %v635 = vpop.f32.mrf.mxu0
      %v636 = vadd.f32 %v501, %v635
      %v637 = vpop.f32.mrf.mxu0
      %638 = vmatprep.mubr.f32.mxu0 0.0
      %639 = vmatmul.mubr.f32.gmra.mxu0 %v324
      %v640 = vpop.f32.mrf.mxu0
      %v641 = vpop.f32.mrf.mxu0
      %642 = vdwg.mxu0
      %v643 = vld [vmem:[#allocation2 + $0x2] sm:$0xff]
      %v644 = vld [vmem:[#allocation2 + $0xa] sm:$0xff]
      %v645 = vld [vmem:[#allocation2 + $0x12] sm:$0xff]
      %v646 = vld [vmem:[#allocation2 + $0x1a] sm:$0xff]
      %v647 = vld [vmem:[#allocation2 + $0x22] sm:$0xff]
      %v648 = vld [vmem:[#allocation2 + $0x2a] sm:$0xff]
      %v649 = vld [vmem:[#allocation2 + $0x32] sm:$0xff]
      %v650 = vld [vmem:[#allocation2 + $0x3a] sm:$0xff]
      %v651 = vld [vmem:[#allocation2 + $0x42] sm:$0xff]
      %v652 = vld [vmem:[#allocation2 + $0x4a] sm:$0xff]
      %v653 = vld [vmem:[#allocation2 + $0x52] sm:$0xff]
      %v654 = vld [vmem:[#allocation2 + $0x5a] sm:$0xff]
      %v655 = vld [vmem:[#allocation2 + $0x62] sm:$0xff]
      %v656 = vld [vmem:[#allocation2 + $0x6a] sm:$0xff]
      %v657 = vld [vmem:[#allocation2 + $0x72] sm:$0xff]
      %s658 = scalar_lea.vmem %s1, 256
      %v659 = vld [vmem:[%s658] sm:$0xff]
      %v660 = vld [vmem:[%s658 + $0x8] sm:$0xff]
      %v661 = vld [vmem:[%s658 + $0x10] sm:$0xff]
      %v662 = vld [vmem:[%s658 + $0x18] sm:$0xff]
      %v663 = vld [vmem:[%s658 + $0x20] sm:$0xff]
      %v664 = vld [vmem:[%s658 + $0x28] sm:$0xff]
      %v665 = vld [vmem:[%s658 + $0x30] sm:$0xff]
      %v666 = vld [vmem:[%s658 + $0x38] sm:$0xff]
      %v667 = vld [vmem:[%s658 + $0x40] sm:$0xff]
      %v668 = vld [vmem:[%s658 + $0x48] sm:$0xff]
      %v669 = vld [vmem:[%s658 + $0x50] sm:$0xff]
      %v670 = vld [vmem:[%s658 + $0x58] sm:$0xff]
      %v671 = vld [vmem:[%s658 + $0x60] sm:$0xff]
      %v672 = vld [vmem:[%s658 + $0x68] sm:$0xff]
      %v673 = vld [vmem:[%s658 + $0x70] sm:$0xff]
      %v674 = vld [vmem:[%s658 + $0x78] sm:$0xff]
      %675 = vmatprep.subr.mxu0 0.0
      %676 = vmatpush1.msra.mxu0 %v674
      %677 = vmatprep.subr.mxu0 0.0
      %678 = vmatpush1.msra.mxu0 %v673
      %679 = vmatprep.subr.mxu0 0.0
      %680 = vmatpush1.msra.mxu0 %v672
      %681 = vmatprep.subr.mxu0 0.0
      %682 = vmatpush1.msra.mxu0 %v671
      %683 = vmatprep.subr.mxu0 0.0
      %684 = vmatpush1.msra.mxu0 %v670
      %685 = vmatprep.subr.mxu0 0.0
      %686 = vmatpush1.msra.mxu0 %v669
      %687 = vmatprep.subr.mxu0 0.0
      %688 = vmatpush1.msra.mxu0 %v668
      %689 = vmatprep.subr.mxu0 0.0
      %690 = vmatpush1.msra.mxu0 %v667
      %691 = vmatprep.subr.mxu0 0.0
      %692 = vmatpush1.msra.mxu0 %v666
      %693 = vmatprep.subr.mxu0 0.0
      %694 = vmatpush1.msra.mxu0 %v665
      %695 = vmatprep.subr.mxu0 0.0
      %696 = vmatpush1.msra.mxu0 %v664
      %697 = vmatprep.subr.mxu0 0.0
      %698 = vmatpush1.msra.mxu0 %v663
      %699 = vmatprep.subr.mxu0 0.0
      %700 = vmatpush1.msra.mxu0 %v662
      %701 = vmatprep.subr.mxu0 0.0
      %702 = vmatpush1.msra.mxu0 %v661
      %703 = vmatprep.subr.mxu0 0.0
      %704 = vmatpush1.msra.mxu0 %v660
      %705 = vmatprep.subr.mxu0 0.0
      %706 = vmatpush1.msra.mxu0 %v659
      %707 = vmatprep.subr.mxu0 0.0
      %708 = vmatpush2.msra.mxu0 0.0
      %709 = vmatprep.subr.mxu0 0.0
      %710 = vmatpush2.msra.mxu0 0.0
      %711 = vmatprep.subr.mxu0 0.0
      %712 = vmatpush2.msra.mxu0 0.0
      %713 = vmatprep.subr.mxu0 0.0
      %714 = vmatpush2.msra.mxu0 0.0
      %715 = vmatprep.subr.mxu0 0.0
      %716 = vmatpush2.msra.mxu0 0.0
      %717 = vmatprep.subr.mxu0 0.0
      %718 = vmatpush2.msra.mxu0 0.0
      %719 = vmatprep.subr.mxu0 0.0
      %720 = vmatpush2.msra.mxu0 0.0
      %721 = vmatprep.subr.mxu0 0.0
      %722 = vmatpush2.msra.mxu0 0.0
      %723 = vmatprep.subr.mxu0 0.0
      %724 = vmatpush2.msra.mxu0 0.0
      %725 = vmatprep.subr.mxu0 0.0
      %726 = vmatpush2.msra.mxu0 0.0
      %727 = vmatprep.subr.mxu0 0.0
      %728 = vmatpush2.msra.mxu0 0.0
      %729 = vmatprep.subr.mxu0 0.0
      %730 = vmatpush2.msra.mxu0 0.0
      %731 = vmatprep.subr.mxu0 0.0
      %732 = vmatpush2.msra.mxu0 0.0
      %733 = vmatprep.subr.mxu0 0.0
      %734 = vmatpush2.msra.mxu0 0.0
      %735 = vmatprep.subr.mxu0 0.0
      %736 = vmatpush2.msra.mxu0 0.0
      %737 = vmatprep.subr.mxu0 0.0
      %738 = vmatpush2.msra.mxu0 0.0
      %739 = vmatprep.mubr.f32.mxu0 0.0
      %740 = vmatmul.mubr.f32.gmra.mxu0 %v643
      %v741 = vpop.f32.mrf.mxu0
      %v742 = vadd.f32 0.0, %v741
      %v743 = vpop.f32.mrf.mxu0
      %744 = vmatprep.mubr.f32.mxu0 0.0
      %745 = vmatmul.mubr.f32.gmra.mxu0 %v644
      %v746 = vpop.f32.mrf.mxu0
      %v747 = vadd.f32 0.0, %v746
      %v748 = vpop.f32.mrf.mxu0
      %749 = vmatprep.mubr.f32.mxu0 0.0
      %750 = vmatmul.mubr.f32.gmra.mxu0 %v645
      %v751 = vpop.f32.mrf.mxu0
      %v752 = vpop.f32.mrf.mxu0
      %753 = vmatprep.mubr.f32.mxu0 0.0
      %754 = vmatmul.mubr.f32.gmra.mxu0 %v646
      %v755 = vpop.f32.mrf.mxu0
      %v756 = vadd.f32 0.0, %v755
      %v757 = vpop.f32.mrf.mxu0
      %758 = vmatprep.mubr.f32.mxu0 0.0
      %759 = vmatmul.mubr.f32.gmra.mxu0 %v647
      %v760 = vpop.f32.mrf.mxu0
      %v761 = vadd.f32 0.0, %v760
      %v762 = vpop.f32.mrf.mxu0
      %763 = vmatprep.mubr.f32.mxu0 0.0
      %764 = vmatmul.mubr.f32.gmra.mxu0 %v648
      %v765 = vpop.f32.mrf.mxu0
      %v766 = vpop.f32.mrf.mxu0
      %767 = vmatprep.mubr.f32.mxu0 0.0
      %768 = vmatmul.mubr.f32.gmra.mxu0 %v649
      %v769 = vpop.f32.mrf.mxu0
      %v770 = vadd.f32 0.0, %v769
      %v771 = vpop.f32.mrf.mxu0
      %772 = vmatprep.mubr.f32.mxu0 0.0
      %773 = vmatmul.mubr.f32.gmra.mxu0 %v650
      %v774 = vpop.f32.mrf.mxu0
      %v775 = vadd.f32 0.0, %v774
      %v776 = vpop.f32.mrf.mxu0
      %777 = vmatprep.mubr.f32.mxu0 0.0
      %778 = vmatmul.mubr.f32.gmra.mxu0 %v651
      %v779 = vpop.f32.mrf.mxu0
      %v780 = vpop.f32.mrf.mxu0
      %781 = vmatprep.mubr.f32.mxu0 0.0
      %782 = vmatmul.mubr.f32.gmra.mxu0 %v652
      %v783 = vpop.f32.mrf.mxu0
      %v784 = vadd.f32 0.0, %v783
      %v785 = vpop.f32.mrf.mxu0
      %786 = vmatprep.mubr.f32.mxu0 0.0
      %787 = vmatmul.mubr.f32.gmra.mxu0 %v653
      %v788 = vpop.f32.mrf.mxu0
      %v789 = vadd.f32 0.0, %v788
      %v790 = vpop.f32.mrf.mxu0
      %791 = vmatprep.mubr.f32.mxu0 0.0
      %792 = vmatmul.mubr.f32.gmra.mxu0 %v654
      %v793 = vpop.f32.mrf.mxu0
      %v794 = vpop.f32.mrf.mxu0
      %795 = vmatprep.mubr.f32.mxu0 0.0
      %796 = vmatmul.mubr.f32.gmra.mxu0 %v655
      %v797 = vpop.f32.mrf.mxu0
      %v798 = vadd.f32 0.0, %v797
      %v799 = vpop.f32.mrf.mxu0
      %800 = vmatprep.mubr.f32.mxu0 0.0
      %801 = vmatmul.mubr.f32.gmra.mxu0 %v656
      %v802 = vpop.f32.mrf.mxu0
      %v803 = vadd.f32 0.0, %v802
      %v804 = vpop.f32.mrf.mxu0
      %805 = vmatprep.mubr.f32.mxu0 0.0
      %806 = vmatmul.mubr.f32.gmra.mxu0 %v657
      %v807 = vpop.f32.mrf.mxu0
      %v808 = vpop.f32.mrf.mxu0
      %809 = vdwg.mxu0
      %v810 = vadd.f32 %v575, %v742
      %v811 = vadd.f32 %v580, %v747
      %v812 = vadd.f32 %v589, %v756
      %v813 = vadd.f32 %v594, %v761
      %v814 = vadd.f32 %v603, %v770
      %v815 = vadd.f32 %v608, %v775
      %v816 = vadd.f32 %v617, %v784
      %v817 = vadd.f32 %v622, %v789
      %v818 = vadd.f32 %v631, %v798
      %v819 = vadd.f32 %v636, %v803
      %v820 = vld [vmem:[#allocation2 + $0x18] sm:$0xff]
      %v821 = vld [vmem:[#allocation2 + $0x20] sm:$0xff]
      %v822 = vld [vmem:[#allocation2 + $0x28] sm:$0xff]
      %v823 = vld [vmem:[#allocation2 + $0x30] sm:$0xff]
      %v824 = vld [vmem:[#allocation2 + $0x38] sm:$0xff]
      %v825 = vld [vmem:[#allocation2 + $0x40] sm:$0xff]
      %v826 = vld [vmem:[#allocation2 + $0x48] sm:$0xff]
      %v827 = vld [vmem:[#allocation2 + $0x50] sm:$0xff]
      %v828 = vld [vmem:[#allocation2 + $0x58] sm:$0xff]
      %v829 = vld [vmem:[#allocation2 + $0x60] sm:$0xff]
      %v830 = vld [vmem:[#allocation2 + $0x68] sm:$0xff]
      %v831 = vld [vmem:[#allocation2 + $0x70] sm:$0xff]
      %v832 = vld [vmem:[#allocation2 + $0x78] sm:$0xff]
      %v833 = vld [vmem:[#allocation2 + $0x80] sm:$0xff]
      %v834 = vld [vmem:[#allocation2 + $0x88] sm:$0xff]
      %s835 = scalar_lea.vmem %s1, 384
      %v836 = vld [vmem:[%s835] sm:$0xff]
      %v837 = vld [vmem:[%s835 + $0x8] sm:$0xff]
      %v838 = vld [vmem:[%s835 + $0x10] sm:$0xff]
      %v839 = vld [vmem:[%s835 + $0x18] sm:$0xff]
      %v840 = vld [vmem:[%s835 + $0x20] sm:$0xff]
      %v841 = vld [vmem:[%s835 + $0x28] sm:$0xff]
      %v842 = vld [vmem:[%s835 + $0x30] sm:$0xff]
      %v843 = vld [vmem:[%s835 + $0x38] sm:$0xff]
      %v844 = vld [vmem:[%s835 + $0x40] sm:$0xff]
      %v845 = vld [vmem:[%s835 + $0x48] sm:$0xff]
      %v846 = vld [vmem:[%s835 + $0x50] sm:$0xff]
      %v847 = vld [vmem:[%s835 + $0x58] sm:$0xff]
      %v848 = vld [vmem:[%s835 + $0x60] sm:$0xff]
      %v849 = vld [vmem:[%s835 + $0x68] sm:$0xff]
      %v850 = vld [vmem:[%s835 + $0x70] sm:$0xff]
      %v851 = vld [vmem:[%s835 + $0x78] sm:$0xff]
      %852 = vmatprep.subr.mxu0 0.0
      %853 = vmatpush1.msra.mxu0 %v851
      %854 = vmatprep.subr.mxu0 0.0
      %855 = vmatpush1.msra.mxu0 %v850
      %856 = vmatprep.subr.mxu0 0.0
      %857 = vmatpush1.msra.mxu0 %v849
      %858 = vmatprep.subr.mxu0 0.0
      %859 = vmatpush1.msra.mxu0 %v848
      %860 = vmatprep.subr.mxu0 0.0
      %861 = vmatpush1.msra.mxu0 %v847
      %862 = vmatprep.subr.mxu0 0.0
      %863 = vmatpush1.msra.mxu0 %v846
      %864 = vmatprep.subr.mxu0 0.0
      %865 = vmatpush1.msra.mxu0 %v845
      %866 = vmatprep.subr.mxu0 0.0
      %867 = vmatpush1.msra.mxu0 %v844
      %868 = vmatprep.subr.mxu0 0.0
      %869 = vmatpush1.msra.mxu0 %v843
      %870 = vmatprep.subr.mxu0 0.0
      %871 = vmatpush1.msra.mxu0 %v842
      %872 = vmatprep.subr.mxu0 0.0
      %873 = vmatpush1.msra.mxu0 %v841
      %874 = vmatprep.subr.mxu0 0.0
      %875 = vmatpush1.msra.mxu0 %v840
      %876 = vmatprep.subr.mxu0 0.0
      %877 = vmatpush1.msra.mxu0 %v839
      %878 = vmatprep.subr.mxu0 0.0
      %879 = vmatpush1.msra.mxu0 %v838
      %880 = vmatprep.subr.mxu0 0.0
      %881 = vmatpush1.msra.mxu0 %v837
      %882 = vmatprep.subr.mxu0 0.0
      %883 = vmatpush1.msra.mxu0 %v836
      %884 = vmatprep.subr.mxu0 0.0
      %885 = vmatpush2.msra.mxu0 0.0
      %886 = vmatprep.subr.mxu0 0.0
      %887 = vmatpush2.msra.mxu0 0.0
      %888 = vmatprep.subr.mxu0 0.0
      %889 = vmatpush2.msra.mxu0 0.0
      %890 = vmatprep.subr.mxu0 0.0
      %891 = vmatpush2.msra.mxu0 0.0
      %892 = vmatprep.subr.mxu0 0.0
      %893 = vmatpush2.msra.mxu0 0.0
      %894 = vmatprep.subr.mxu0 0.0
      %895 = vmatpush2.msra.mxu0 0.0
      %896 = vmatprep.subr.mxu0 0.0
      %897 = vmatpush2.msra.mxu0 0.0
      %898 = vmatprep.subr.mxu0 0.0
      %899 = vmatpush2.msra.mxu0 0.0
      %900 = vmatprep.subr.mxu0 0.0
      %901 = vmatpush2.msra.mxu0 0.0
      %902 = vmatprep.subr.mxu0 0.0
      %903 = vmatpush2.msra.mxu0 0.0
      %904 = vmatprep.subr.mxu0 0.0
      %905 = vmatpush2.msra.mxu0 0.0
      %906 = vmatprep.subr.mxu0 0.0
      %907 = vmatpush2.msra.mxu0 0.0
      %908 = vmatprep.subr.mxu0 0.0
      %909 = vmatpush2.msra.mxu0 0.0
      %910 = vmatprep.subr.mxu0 0.0
      %911 = vmatpush2.msra.mxu0 0.0
      %912 = vmatprep.subr.mxu0 0.0
      %913 = vmatpush2.msra.mxu0 0.0
      %914 = vmatprep.subr.mxu0 0.0
      %915 = vmatpush2.msra.mxu0 0.0
      %916 = vmatprep.mubr.f32.mxu0 0.0
      %917 = vmatmul.mubr.f32.gmra.mxu0 %v820
      %v918 = vpop.f32.mrf.mxu0
      %v919 = vadd.f32 0.0, %v918
      %v920 = vpop.f32.mrf.mxu0
      %921 = vmatprep.mubr.f32.mxu0 0.0
      %922 = vmatmul.mubr.f32.gmra.mxu0 %v821
      %v923 = vpop.f32.mrf.mxu0
      %v924 = vadd.f32 0.0, %v923
      %v925 = vpop.f32.mrf.mxu0
      %926 = vmatprep.mubr.f32.mxu0 0.0
      %927 = vmatmul.mubr.f32.gmra.mxu0 %v822
      %v928 = vpop.f32.mrf.mxu0
      %v929 = vpop.f32.mrf.mxu0
      %930 = vmatprep.mubr.f32.mxu0 0.0
      %931 = vmatmul.mubr.f32.gmra.mxu0 %v823
      %v932 = vpop.f32.mrf.mxu0
      %v933 = vadd.f32 0.0, %v932
      %v934 = vpop.f32.mrf.mxu0
      %935 = vmatprep.mubr.f32.mxu0 0.0
      %936 = vmatmul.mubr.f32.gmra.mxu0 %v824
      %v937 = vpop.f32.mrf.mxu0
      %v938 = vadd.f32 0.0, %v937
      %v939 = vpop.f32.mrf.mxu0
      %940 = vmatprep.mubr.f32.mxu0 0.0
      %941 = vmatmul.mubr.f32.gmra.mxu0 %v825
      %v942 = vpop.f32.mrf.mxu0
      %v943 = vpop.f32.mrf.mxu0
      %944 = vmatprep.mubr.f32.mxu0 0.0
      %945 = vmatmul.mubr.f32.gmra.mxu0 %v826
      %v946 = vpop.f32.mrf.mxu0
      %v947 = vadd.f32 0.0, %v946
      %v948 = vpop.f32.mrf.mxu0
      %949 = vmatprep.mubr.f32.mxu0 0.0
      %950 = vmatmul.mubr.f32.gmra.mxu0 %v827
      %v951 = vpop.f32.mrf.mxu0
      %v952 = vadd.f32 0.0, %v951
      %v953 = vpop.f32.mrf.mxu0
      %954 = vmatprep.mubr.f32.mxu0 0.0
      %955 = vmatmul.mubr.f32.gmra.mxu0 %v828
      %v956 = vpop.f32.mrf.mxu0
      %v957 = vpop.f32.mrf.mxu0
      %958 = vmatprep.mubr.f32.mxu0 0.0
      %959 = vmatmul.mubr.f32.gmra.mxu0 %v829
      %v960 = vpop.f32.mrf.mxu0
      %v961 = vadd.f32 0.0, %v960
      %v962 = vpop.f32.mrf.mxu0
      %963 = vmatprep.mubr.f32.mxu0 0.0
      %964 = vmatmul.mubr.f32.gmra.mxu0 %v830
      %v965 = vpop.f32.mrf.mxu0
      %v966 = vadd.f32 0.0, %v965
      %v967 = vpop.f32.mrf.mxu0
      %968 = vmatprep.mubr.f32.mxu0 0.0
      %969 = vmatmul.mubr.f32.gmra.mxu0 %v831
      %v970 = vpop.f32.mrf.mxu0
      %v971 = vpop.f32.mrf.mxu0
      %972 = vmatprep.mubr.f32.mxu0 0.0
      %973 = vmatmul.mubr.f32.gmra.mxu0 %v832
      %v974 = vpop.f32.mrf.mxu0
      %v975 = vadd.f32 0.0, %v974
      %v976 = vpop.f32.mrf.mxu0
      %977 = vmatprep.mubr.f32.mxu0 0.0
      %978 = vmatmul.mubr.f32.gmra.mxu0 %v833
      %v979 = vpop.f32.mrf.mxu0
      %v980 = vadd.f32 0.0, %v979
      %v981 = vpop.f32.mrf.mxu0
      %982 = vmatprep.mubr.f32.mxu0 0.0
      %983 = vmatmul.mubr.f32.gmra.mxu0 %v834
      %v984 = vpop.f32.mrf.mxu0
      %v985 = vpop.f32.mrf.mxu0
      %986 = vdwg.mxu0
      %v987 = vadd.f32 %v810, %v919
      %v988 = vadd.f32 %v811, %v924
      %v989 = vadd.f32 %v812, %v933
      %v990 = vadd.f32 %v813, %v938
      %v991 = vadd.f32 %v814, %v947
      %v992 = vadd.f32 %v815, %v952
      %v993 = vadd.f32 %v816, %v961
      %v994 = vadd.f32 %v817, %v966
      %v995 = vadd.f32 %v818, %v975
      %v996 = vadd.f32 %v819, %v980
      %v997 = vld [vmem:[#allocation2 + $0x19] sm:$0xff]
      %v998 = vld [vmem:[#allocation2 + $0x21] sm:$0xff]
      %v999 = vld [vmem:[#allocation2 + $0x29] sm:$0xff]
      %v1000 = vld [vmem:[#allocation2 + $0x31] sm:$0xff]
      %v1001 = vld [vmem:[#allocation2 + $0x39] sm:$0xff]
      %v1002 = vld [vmem:[#allocation2 + $0x41] sm:$0xff]
      %v1003 = vld [vmem:[#allocation2 + $0x49] sm:$0xff]
      %v1004 = vld [vmem:[#allocation2 + $0x51] sm:$0xff]
      %v1005 = vld [vmem:[#allocation2 + $0x59] sm:$0xff]
      %v1006 = vld [vmem:[#allocation2 + $0x61] sm:$0xff]
      %v1007 = vld [vmem:[#allocation2 + $0x69] sm:$0xff]
      %v1008 = vld [vmem:[#allocation2 + $0x71] sm:$0xff]
      %v1009 = vld [vmem:[#allocation2 + $0x79] sm:$0xff]
      %v1010 = vld [vmem:[#allocation2 + $0x81] sm:$0xff]
      %v1011 = vld [vmem:[#allocation2 + $0x89] sm:$0xff]
      %s1012 = scalar_lea.vmem %s1, 512
      %v1013 = vld [vmem:[%s1012] sm:$0xff]
      %v1014 = vld [vmem:[%s1012 + $0x8] sm:$0xff]
      %v1015 = vld [vmem:[%s1012 + $0x10] sm:$0xff]
      %v1016 = vld [vmem:[%s1012 + $0x18] sm:$0xff]
      %v1017 = vld [vmem:[%s1012 + $0x20] sm:$0xff]
      %v1018 = vld [vmem:[%s1012 + $0x28] sm:$0xff]
      %v1019 = vld [vmem:[%s1012 + $0x30] sm:$0xff]
      %v1020 = vld [vmem:[%s1012 + $0x38] sm:$0xff]
      %v1021 = vld [vmem:[%s1012 + $0x40] sm:$0xff]
      %v1022 = vld [vmem:[%s1012 + $0x48] sm:$0xff]
      %v1023 = vld [vmem:[%s1012 + $0x50] sm:$0xff]
      %v1024 = vld [vmem:[%s1012 + $0x58] sm:$0xff]
      %v1025 = vld [vmem:[%s1012 + $0x60] sm:$0xff]
      %v1026 = vld [vmem:[%s1012 + $0x68] sm:$0xff]
      %v1027 = vld [vmem:[%s1012 + $0x70] sm:$0xff]
      %v1028 = vld [vmem:[%s1012 + $0x78] sm:$0xff]
      %1029 = vmatprep.subr.mxu0 0.0
      %1030 = vmatpush1.msra.mxu0 %v1028
      %1031 = vmatprep.subr.mxu0 0.0
      %1032 = vmatpush1.msra.mxu0 %v1027
      %1033 = vmatprep.subr.mxu0 0.0
      %1034 = vmatpush1.msra.mxu0 %v1026
      %1035 = vmatprep.subr.mxu0 0.0
      %1036 = vmatpush1.msra.mxu0 %v1025
      %1037 = vmatprep.subr.mxu0 0.0
      %1038 = vmatpush1.msra.mxu0 %v1024
      %1039 = vmatprep.subr.mxu0 0.0
      %1040 = vmatpush1.msra.mxu0 %v1023
      %1041 = vmatprep.subr.mxu0 0.0
      %1042 = vmatpush1.msra.mxu0 %v1022
      %1043 = vmatprep.subr.mxu0 0.0
      %1044 = vmatpush1.msra.mxu0 %v1021
      %1045 = vmatprep.subr.mxu0 0.0
      %1046 = vmatpush1.msra.mxu0 %v1020
      %1047 = vmatprep.subr.mxu0 0.0
      %1048 = vmatpush1.msra.mxu0 %v1019
      %1049 = vmatprep.subr.mxu0 0.0
      %1050 = vmatpush1.msra.mxu0 %v1018
      %1051 = vmatprep.subr.mxu0 0.0
      %1052 = vmatpush1.msra.mxu0 %v1017
      %1053 = vmatprep.subr.mxu0 0.0
      %1054 = vmatpush1.msra.mxu0 %v1016
      %1055 = vmatprep.subr.mxu0 0.0
      %1056 = vmatpush1.msra.mxu0 %v1015
      %1057 = vmatprep.subr.mxu0 0.0
      %1058 = vmatpush1.msra.mxu0 %v1014
      %1059 = vmatprep.subr.mxu0 0.0
      %1060 = vmatpush1.msra.mxu0 %v1013
      %1061 = vmatprep.subr.mxu0 0.0
      %1062 = vmatpush2.msra.mxu0 0.0
      %1063 = vmatprep.subr.mxu0 0.0
      %1064 = vmatpush2.msra.mxu0 0.0
      %1065 = vmatprep.subr.mxu0 0.0
      %1066 = vmatpush2.msra.mxu0 0.0
      %1067 = vmatprep.subr.mxu0 0.0
      %1068 = vmatpush2.msra.mxu0 0.0
      %1069 = vmatprep.subr.mxu0 0.0
      %1070 = vmatpush2.msra.mxu0 0.0
      %1071 = vmatprep.subr.mxu0 0.0
      %1072 = vmatpush2.msra.mxu0 0.0
      %1073 = vmatprep.subr.mxu0 0.0
      %1074 = vmatpush2.msra.mxu0 0.0
      %1075 = vmatprep.subr.mxu0 0.0
      %1076 = vmatpush2.msra.mxu0 0.0
      %1077 = vmatprep.subr.mxu0 0.0
      %1078 = vmatpush2.msra.mxu0 0.0
      %1079 = vmatprep.subr.mxu0 0.0
      %1080 = vmatpush2.msra.mxu0 0.0
      %1081 = vmatprep.subr.mxu0 0.0
      %1082 = vmatpush2.msra.mxu0 0.0
      %1083 = vmatprep.subr.mxu0 0.0
      %1084 = vmatpush2.msra.mxu0 0.0
      %1085 = vmatprep.subr.mxu0 0.0
      %1086 = vmatpush2.msra.mxu0 0.0
      %1087 = vmatprep.subr.mxu0 0.0
      %1088 = vmatpush2.msra.mxu0 0.0
      %1089 = vmatprep.subr.mxu0 0.0
      %1090 = vmatpush2.msra.mxu0 0.0
      %1091 = vmatprep.subr.mxu0 0.0
      %1092 = vmatpush2.msra.mxu0 0.0
      %1093 = vmatprep.mubr.f32.mxu0 0.0
      %1094 = vmatmul.mubr.f32.gmra.mxu0 %v997
      %v1095 = vpop.f32.mrf.mxu0
      %v1096 = vadd.f32 0.0, %v1095
      %v1097 = vpop.f32.mrf.mxu0
      %1098 = vmatprep.mubr.f32.mxu0 0.0
      %1099 = vmatmul.mubr.f32.gmra.mxu0 %v998
      %v1100 = vpop.f32.mrf.mxu0
      %v1101 = vadd.f32 0.0, %v1100
      %v1102 = vpop.f32.mrf.mxu0
      %1103 = vmatprep.mubr.f32.mxu0 0.0
      %1104 = vmatmul.mubr.f32.gmra.mxu0 %v999
      %v1105 = vpop.f32.mrf.mxu0
      %v1106 = vpop.f32.mrf.mxu0
      %1107 = vmatprep.mubr.f32.mxu0 0.0
      %1108 = vmatmul.mubr.f32.gmra.mxu0 %v1000
      %v1109 = vpop.f32.mrf.mxu0
      %v1110 = vadd.f32 0.0, %v1109
      %v1111 = vpop.f32.mrf.mxu0
      %1112 = vmatprep.mubr.f32.mxu0 0.0
      %1113 = vmatmul.mubr.f32.gmra.mxu0 %v1001
      %v1114 = vpop.f32.mrf.mxu0
      %v1115 = vadd.f32 0.0, %v1114
      %v1116 = vpop.f32.mrf.mxu0
      %1117 = vmatprep.mubr.f32.mxu0 0.0
      %1118 = vmatmul.mubr.f32.gmra.mxu0 %v1002
      %v1119 = vpop.f32.mrf.mxu0
      %v1120 = vpop.f32.mrf.mxu0
      %1121 = vmatprep.mubr.f32.mxu0 0.0
      %1122 = vmatmul.mubr.f32.gmra.mxu0 %v1003
      %v1123 = vpop.f32.mrf.mxu0
      %v1124 = vadd.f32 0.0, %v1123
      %v1125 = vpop.f32.mrf.mxu0
      %1126 = vmatprep.mubr.f32.mxu0 0.0
      %1127 = vmatmul.mubr.f32.gmra.mxu0 %v1004
      %v1128 = vpop.f32.mrf.mxu0
      %v1129 = vadd.f32 0.0, %v1128
      %v1130 = vpop.f32.mrf.mxu0
      %1131 = vmatprep.mubr.f32.mxu0 0.0
      %1132 = vmatmul.mubr.f32.gmra.mxu0 %v1005
      %v1133 = vpop.f32.mrf.mxu0
      %v1134 = vpop.f32.mrf.mxu0
      %1135 = vmatprep.mubr.f32.mxu0 0.0
      %1136 = vmatmul.mubr.f32.gmra.mxu0 %v1006
      %v1137 = vpop.f32.mrf.mxu0
      %v1138 = vadd.f32 0.0, %v1137
      %v1139 = vpop.f32.mrf.mxu0
      %1140 = vmatprep.mubr.f32.mxu0 0.0
      %1141 = vmatmul.mubr.f32.gmra.mxu0 %v1007
      %v1142 = vpop.f32.mrf.mxu0
      %v1143 = vadd.f32 0.0, %v1142
      %v1144 = vpop.f32.mrf.mxu0
      %1145 = vmatprep.mubr.f32.mxu0 0.0
      %1146 = vmatmul.mubr.f32.gmra.mxu0 %v1008
      %v1147 = vpop.f32.mrf.mxu0
      %v1148 = vpop.f32.mrf.mxu0
      %1149 = vmatprep.mubr.f32.mxu0 0.0
      %1150 = vmatmul.mubr.f32.gmra.mxu0 %v1009
      %v1151 = vpop.f32.mrf.mxu0
      %v1152 = vadd.f32 0.0, %v1151
      %v1153 = vpop.f32.mrf.mxu0
      %1154 = vmatprep.mubr.f32.mxu0 0.0
      %1155 = vmatmul.mubr.f32.gmra.mxu0 %v1010
      %v1156 = vpop.f32.mrf.mxu0
      %v1157 = vadd.f32 0.0, %v1156
      %v1158 = vpop.f32.mrf.mxu0
      %1159 = vmatprep.mubr.f32.mxu0 0.0
      %1160 = vmatmul.mubr.f32.gmra.mxu0 %v1011
      %v1161 = vpop.f32.mrf.mxu0
      %v1162 = vpop.f32.mrf.mxu0
      %1163 = vdwg.mxu0
      %v1164 = vadd.f32 %v987, %v1096
      %v1165 = vadd.f32 %v988, %v1101
      %v1166 = vadd.f32 %v989, %v1110
      %v1167 = vadd.f32 %v990, %v1115
      %v1168 = vadd.f32 %v991, %v1124
      %v1169 = vadd.f32 %v992, %v1129
      %v1170 = vadd.f32 %v993, %v1138
      %v1171 = vadd.f32 %v994, %v1143
      %v1172 = vadd.f32 %v995, %v1152
      %v1173 = vadd.f32 %v996, %v1157
      %v1174 = vld [vmem:[#allocation2 + $0x1a] sm:$0xff]
      %v1175 = vld [vmem:[#allocation2 + $0x22] sm:$0xff]
      %v1176 = vld [vmem:[#allocation2 + $0x2a] sm:$0xff]
      %v1177 = vld [vmem:[#allocation2 + $0x32] sm:$0xff]
      %v1178 = vld [vmem:[#allocation2 + $0x3a] sm:$0xff]
      %v1179 = vld [vmem:[#allocation2 + $0x42] sm:$0xff]
      %v1180 = vld [vmem:[#allocation2 + $0x4a] sm:$0xff]
      %v1181 = vld [vmem:[#allocation2 + $0x52] sm:$0xff]
      %v1182 = vld [vmem:[#allocation2 + $0x5a] sm:$0xff]
      %v1183 = vld [vmem:[#allocation2 + $0x62] sm:$0xff]
      %v1184 = vld [vmem:[#allocation2 + $0x6a] sm:$0xff]
      %v1185 = vld [vmem:[#allocation2 + $0x72] sm:$0xff]
      %v1186 = vld [vmem:[#allocation2 + $0x7a] sm:$0xff]
      %v1187 = vld [vmem:[#allocation2 + $0x82] sm:$0xff]
      %v1188 = vld [vmem:[#allocation2 + $0x8a] sm:$0xff]
      %s1189 = scalar_lea.vmem %s1, 640
      %v1190 = vld [vmem:[%s1189] sm:$0xff]
      %v1191 = vld [vmem:[%s1189 + $0x8] sm:$0xff]
      %v1192 = vld [vmem:[%s1189 + $0x10] sm:$0xff]
      %v1193 = vld [vmem:[%s1189 + $0x18] sm:$0xff]
      %v1194 = vld [vmem:[%s1189 + $0x20] sm:$0xff]
      %v1195 = vld [vmem:[%s1189 + $0x28] sm:$0xff]
      %v1196 = vld [vmem:[%s1189 + $0x30] sm:$0xff]
      %v1197 = vld [vmem:[%s1189 + $0x38] sm:$0xff]
      %v1198 = vld [vmem:[%s1189 + $0x40] sm:$0xff]
      %v1199 = vld [vmem:[%s1189 + $0x48] sm:$0xff]
      %v1200 = vld [vmem:[%s1189 + $0x50] sm:$0xff]
      %v1201 = vld [vmem:[%s1189 + $0x58] sm:$0xff]
      %v1202 = vld [vmem:[%s1189 + $0x60] sm:$0xff]
      %v1203 = vld [vmem:[%s1189 + $0x68] sm:$0xff]
      %v1204 = vld [vmem:[%s1189 + $0x70] sm:$0xff]
      %v1205 = vld [vmem:[%s1189 + $0x78] sm:$0xff]
      %1206 = vmatprep.subr.mxu0 0.0
      %1207 = vmatpush1.msra.mxu0 %v1205
      %1208 = vmatprep.subr.mxu0 0.0
      %1209 = vmatpush1.msra.mxu0 %v1204
      %1210 = vmatprep.subr.mxu0 0.0
      %1211 = vmatpush1.msra.mxu0 %v1203
      %1212 = vmatprep.subr.mxu0 0.0
      %1213 = vmatpush1.msra.mxu0 %v1202
      %1214 = vmatprep.subr.mxu0 0.0
      %1215 = vmatpush1.msra.mxu0 %v1201
      %1216 = vmatprep.subr.mxu0 0.0
      %1217 = vmatpush1.msra.mxu0 %v1200
      %1218 = vmatprep.subr.mxu0 0.0
      %1219 = vmatpush1.msra.mxu0 %v1199
      %1220 = vmatprep.subr.mxu0 0.0
      %1221 = vmatpush1.msra.mxu0 %v1198
      %1222 = vmatprep.subr.mxu0 0.0
      %1223 = vmatpush1.msra.mxu0 %v1197
      %1224 = vmatprep.subr.mxu0 0.0
      %1225 = vmatpush1.msra.mxu0 %v1196
      %1226 = vmatprep.subr.mxu0 0.0
      %1227 = vmatpush1.msra.mxu0 %v1195
      %1228 = vmatprep.subr.mxu0 0.0
      %1229 = vmatpush1.msra.mxu0 %v1194
      %1230 = vmatprep.subr.mxu0 0.0
      %1231 = vmatpush1.msra.mxu0 %v1193
      %1232 = vmatprep.subr.mxu0 0.0
      %1233 = vmatpush1.msra.mxu0 %v1192
      %1234 = vmatprep.subr.mxu0 0.0
      %1235 = vmatpush1.msra.mxu0 %v1191
      %1236 = vmatprep.subr.mxu0 0.0
      %1237 = vmatpush1.msra.mxu0 %v1190
      %1238 = vmatprep.subr.mxu0 0.0
      %1239 = vmatpush2.msra.mxu0 0.0
      %1240 = vmatprep.subr.mxu0 0.0
      %1241 = vmatpush2.msra.mxu0 0.0
      %1242 = vmatprep.subr.mxu0 0.0
      %1243 = vmatpush2.msra.mxu0 0.0
      %1244 = vmatprep.subr.mxu0 0.0
      %1245 = vmatpush2.msra.mxu0 0.0
      %1246 = vmatprep.subr.mxu0 0.0
      %1247 = vmatpush2.msra.mxu0 0.0
      %1248 = vmatprep.subr.mxu0 0.0
      %1249 = vmatpush2.msra.mxu0 0.0
      %1250 = vmatprep.subr.mxu0 0.0
      %1251 = vmatpush2.msra.mxu0 0.0
      %1252 = vmatprep.subr.mxu0 0.0
      %1253 = vmatpush2.msra.mxu0 0.0
      %1254 = vmatprep.subr.mxu0 0.0
      %1255 = vmatpush2.msra.mxu0 0.0
      %1256 = vmatprep.subr.mxu0 0.0
      %1257 = vmatpush2.msra.mxu0 0.0
      %1258 = vmatprep.subr.mxu0 0.0
      %1259 = vmatpush2.msra.mxu0 0.0
      %1260 = vmatprep.subr.mxu0 0.0
      %1261 = vmatpush2.msra.mxu0 0.0
      %1262 = vmatprep.subr.mxu0 0.0
      %1263 = vmatpush2.msra.mxu0 0.0
      %1264 = vmatprep.subr.mxu0 0.0
      %1265 = vmatpush2.msra.mxu0 0.0
      %1266 = vmatprep.subr.mxu0 0.0
      %1267 = vmatpush2.msra.mxu0 0.0
      %1268 = vmatprep.subr.mxu0 0.0
      %1269 = vmatpush2.msra.mxu0 0.0
      %1270 = vmatprep.mubr.f32.mxu0 0.0
      %1271 = vmatmul.mubr.f32.gmra.mxu0 %v1174
      %v1272 = vpop.f32.mrf.mxu0
      %v1273 = vadd.f32 0.0, %v1272
      %v1274 = vpop.f32.mrf.mxu0
      %1275 = vmatprep.mubr.f32.mxu0 0.0
      %1276 = vmatmul.mubr.f32.gmra.mxu0 %v1175
      %v1277 = vpop.f32.mrf.mxu0
      %v1278 = vadd.f32 0.0, %v1277
      %v1279 = vpop.f32.mrf.mxu0
      %1280 = vmatprep.mubr.f32.mxu0 0.0
      %1281 = vmatmul.mubr.f32.gmra.mxu0 %v1176
      %v1282 = vpop.f32.mrf.mxu0
      %v1283 = vpop.f32.mrf.mxu0
      %1284 = vmatprep.mubr.f32.mxu0 0.0
      %1285 = vmatmul.mubr.f32.gmra.mxu0 %v1177
      %v1286 = vpop.f32.mrf.mxu0
      %v1287 = vadd.f32 0.0, %v1286
      %v1288 = vpop.f32.mrf.mxu0
      %1289 = vmatprep.mubr.f32.mxu0 0.0
      %1290 = vmatmul.mubr.f32.gmra.mxu0 %v1178
      %v1291 = vpop.f32.mrf.mxu0
      %v1292 = vadd.f32 0.0, %v1291
      %v1293 = vpop.f32.mrf.mxu0
      %1294 = vmatprep.mubr.f32.mxu0 0.0
      %1295 = vmatmul.mubr.f32.gmra.mxu0 %v1179
      %v1296 = vpop.f32.mrf.mxu0
      %v1297 = vpop.f32.mrf.mxu0
      %1298 = vmatprep.mubr.f32.mxu0 0.0
      %1299 = vmatmul.mubr.f32.gmra.mxu0 %v1180
      %v1300 = vpop.f32.mrf.mxu0
      %v1301 = vadd.f32 0.0, %v1300
      %v1302 = vpop.f32.mrf.mxu0
      %1303 = vmatprep.mubr.f32.mxu0 0.0
      %1304 = vmatmul.mubr.f32.gmra.mxu0 %v1181
      %v1305 = vpop.f32.mrf.mxu0
      %v1306 = vadd.f32 0.0, %v1305
      %v1307 = vpop.f32.mrf.mxu0
      %1308 = vmatprep.mubr.f32.mxu0 0.0
      %1309 = vmatmul.mubr.f32.gmra.mxu0 %v1182
      %v1310 = vpop.f32.mrf.mxu0
      %v1311 = vpop.f32.mrf.mxu0
      %1312 = vmatprep.mubr.f32.mxu0 0.0
      %1313 = vmatmul.mubr.f32.gmra.mxu0 %v1183
      %v1314 = vpop.f32.mrf.mxu0
      %v1315 = vadd.f32 0.0, %v1314
      %v1316 = vpop.f32.mrf.mxu0
      %1317 = vmatprep.mubr.f32.mxu0 0.0
      %1318 = vmatmul.mubr.f32.gmra.mxu0 %v1184
      %v1319 = vpop.f32.mrf.mxu0
      %v1320 = vadd.f32 0.0, %v1319
      %v1321 = vpop.f32.mrf.mxu0
      %1322 = vmatprep.mubr.f32.mxu0 0.0
      %1323 = vmatmul.mubr.f32.gmra.mxu0 %v1185
      %v1324 = vpop.f32.mrf.mxu0
      %v1325 = vpop.f32.mrf.mxu0
      %1326 = vmatprep.mubr.f32.mxu0 0.0
      %1327 = vmatmul.mubr.f32.gmra.mxu0 %v1186
      %v1328 = vpop.f32.mrf.mxu0
      %v1329 = vadd.f32 0.0, %v1328
      %v1330 = vpop.f32.mrf.mxu0
      %1331 = vmatprep.mubr.f32.mxu0 0.0
      %1332 = vmatmul.mubr.f32.gmra.mxu0 %v1187
      %v1333 = vpop.f32.mrf.mxu0
      %v1334 = vadd.f32 0.0, %v1333
      %v1335 = vpop.f32.mrf.mxu0
      %1336 = vmatprep.mubr.f32.mxu0 0.0
      %1337 = vmatmul.mubr.f32.gmra.mxu0 %v1188
      %v1338 = vpop.f32.mrf.mxu0
      %v1339 = vpop.f32.mrf.mxu0
      %1340 = vdwg.mxu0
      %v1341 = vadd.f32 %v1164, %v1273
      %v1342 = vadd.f32 %v1165, %v1278
      %v1343 = vadd.f32 %v1166, %v1287
      %v1344 = vadd.f32 %v1167, %v1292
      %v1345 = vadd.f32 %v1168, %v1301
      %v1346 = vadd.f32 %v1169, %v1306
      %v1347 = vadd.f32 %v1170, %v1315
      %v1348 = vadd.f32 %v1171, %v1320
      %v1349 = vadd.f32 %v1172, %v1329
      %v1350 = vadd.f32 %v1173, %v1334
      %v1351 = vld [vmem:[#allocation2 + $0x30] sm:$0xff]
      %v1352 = vld [vmem:[#allocation2 + $0x38] sm:$0xff]
      %v1353 = vld [vmem:[#allocation2 + $0x40] sm:$0xff]
      %v1354 = vld [vmem:[#allocation2 + $0x48] sm:$0xff]
      %v1355 = vld [vmem:[#allocation2 + $0x50] sm:$0xff]
      %v1356 = vld [vmem:[#allocation2 + $0x58] sm:$0xff]
      %v1357 = vld [vmem:[#allocation2 + $0x60] sm:$0xff]
      %v1358 = vld [vmem:[#allocation2 + $0x68] sm:$0xff]
      %v1359 = vld [vmem:[#allocation2 + $0x70] sm:$0xff]
      %v1360 = vld [vmem:[#allocation2 + $0x78] sm:$0xff]
      %v1361 = vld [vmem:[#allocation2 + $0x80] sm:$0xff]
      %v1362 = vld [vmem:[#allocation2 + $0x88] sm:$0xff]
      %v1363 = vld [vmem:[#allocation2 + $0x90] sm:$0xff]
      %v1364 = vld [vmem:[#allocation2 + $0x98] sm:$0xff]
      %v1365 = vld [vmem:[#allocation2 + $0xa0] sm:$0xff]
      %s1366 = scalar_lea.vmem %s1, 768
      %v1367 = vld [vmem:[%s1366] sm:$0xff]
      %v1368 = vld [vmem:[%s1366 + $0x8] sm:$0xff]
      %v1369 = vld [vmem:[%s1366 + $0x10] sm:$0xff]
      %v1370 = vld [vmem:[%s1366 + $0x18] sm:$0xff]
      %v1371 = vld [vmem:[%s1366 + $0x20] sm:$0xff]
      %v1372 = vld [vmem:[%s1366 + $0x28] sm:$0xff]
      %v1373 = vld [vmem:[%s1366 + $0x30] sm:$0xff]
      %v1374 = vld [vmem:[%s1366 + $0x38] sm:$0xff]
      %v1375 = vld [vmem:[%s1366 + $0x40] sm:$0xff]
      %v1376 = vld [vmem:[%s1366 + $0x48] sm:$0xff]
      %v1377 = vld [vmem:[%s1366 + $0x50] sm:$0xff]
      %v1378 = vld [vmem:[%s1366 + $0x58] sm:$0xff]
      %v1379 = vld [vmem:[%s1366 + $0x60] sm:$0xff]
      %v1380 = vld [vmem:[%s1366 + $0x68] sm:$0xff]
      %v1381 = vld [vmem:[%s1366 + $0x70] sm:$0xff]
      %v1382 = vld [vmem:[%s1366 + $0x78] sm:$0xff]
      %1383 = vmatprep.subr.mxu0 0.0
      %1384 = vmatpush1.msra.mxu0 %v1382
      %1385 = vmatprep.subr.mxu0 0.0
      %1386 = vmatpush1.msra.mxu0 %v1381
      %1387 = vmatprep.subr.mxu0 0.0
      %1388 = vmatpush1.msra.mxu0 %v1380
      %1389 = vmatprep.subr.mxu0 0.0
      %1390 = vmatpush1.msra.mxu0 %v1379
      %1391 = vmatprep.subr.mxu0 0.0
      %1392 = vmatpush1.msra.mxu0 %v1378
      %1393 = vmatprep.subr.mxu0 0.0
      %1394 = vmatpush1.msra.mxu0 %v1377
      %1395 = vmatprep.subr.mxu0 0.0
      %1396 = vmatpush1.msra.mxu0 %v1376
      %1397 = vmatprep.subr.mxu0 0.0
      %1398 = vmatpush1.msra.mxu0 %v1375
      %1399 = vmatprep.subr.mxu0 0.0
      %1400 = vmatpush1.msra.mxu0 %v1374
      %1401 = vmatprep.subr.mxu0 0.0
      %1402 = vmatpush1.msra.mxu0 %v1373
      %1403 = vmatprep.subr.mxu0 0.0
      %1404 = vmatpush1.msra.mxu0 %v1372
      %1405 = vmatprep.subr.mxu0 0.0
      %1406 = vmatpush1.msra.mxu0 %v1371
      %1407 = vmatprep.subr.mxu0 0.0
      %1408 = vmatpush1.msra.mxu0 %v1370
      %1409 = vmatprep.subr.mxu0 0.0
      %1410 = vmatpush1.msra.mxu0 %v1369
      %1411 = vmatprep.subr.mxu0 0.0
      %1412 = vmatpush1.msra.mxu0 %v1368
      %1413 = vmatprep.subr.mxu0 0.0
      %1414 = vmatpush1.msra.mxu0 %v1367
      %1415 = vmatprep.subr.mxu0 0.0
      %1416 = vmatpush2.msra.mxu0 0.0
      %1417 = vmatprep.subr.mxu0 0.0
      %1418 = vmatpush2.msra.mxu0 0.0
      %1419 = vmatprep.subr.mxu0 0.0
      %1420 = vmatpush2.msra.mxu0 0.0
      %1421 = vmatprep.subr.mxu0 0.0
      %1422 = vmatpush2.msra.mxu0 0.0
      %1423 = vmatprep.subr.mxu0 0.0
      %1424 = vmatpush2.msra.mxu0 0.0
      %1425 = vmatprep.subr.mxu0 0.0
      %1426 = vmatpush2.msra.mxu0 0.0
      %1427 = vmatprep.subr.mxu0 0.0
      %1428 = vmatpush2.msra.mxu0 0.0
      %1429 = vmatprep.subr.mxu0 0.0
      %1430 = vmatpush2.msra.mxu0 0.0
      %1431 = vmatprep.subr.mxu0 0.0
      %1432 = vmatpush2.msra.mxu0 0.0
      %1433 = vmatprep.subr.mxu0 0.0
      %1434 = vmatpush2.msra.mxu0 0.0
      %1435 = vmatprep.subr.mxu0 0.0
      %1436 = vmatpush2.msra.mxu0 0.0
      %1437 = vmatprep.subr.mxu0 0.0
      %1438 = vmatpush2.msra.mxu0 0.0
      %1439 = vmatprep.subr.mxu0 0.0
      %1440 = vmatpush2.msra.mxu0 0.0
      %1441 = vmatprep.subr.mxu0 0.0
      %1442 = vmatpush2.msra.mxu0 0.0
      %1443 = vmatprep.subr.mxu0 0.0
      %1444 = vmatpush2.msra.mxu0 0.0
      %1445 = vmatprep.subr.mxu0 0.0
      %1446 = vmatpush2.msra.mxu0 0.0
      %1447 = vmatprep.mubr.f32.mxu0 0.0
      %1448 = vmatmul.mubr.f32.gmra.mxu0 %v1351
      %v1449 = vpop.f32.mrf.mxu0
      %v1450 = vadd.f32 0.0, %v1449
      %v1451 = vpop.f32.mrf.mxu0
      %1452 = vmatprep.mubr.f32.mxu0 0.0
      %1453 = vmatmul.mubr.f32.gmra.mxu0 %v1352
      %v1454 = vpop.f32.mrf.mxu0
      %v1455 = vadd.f32 0.0, %v1454
      %v1456 = vpop.f32.mrf.mxu0
      %1457 = vmatprep.mubr.f32.mxu0 0.0
      %1458 = vmatmul.mubr.f32.gmra.mxu0 %v1353
      %v1459 = vpop.f32.mrf.mxu0
      %v1460 = vpop.f32.mrf.mxu0
      %1461 = vmatprep.mubr.f32.mxu0 0.0
      %1462 = vmatmul.mubr.f32.gmra.mxu0 %v1354
      %v1463 = vpop.f32.mrf.mxu0
      %v1464 = vadd.f32 0.0, %v1463
      %v1465 = vpop.f32.mrf.mxu0
      %1466 = vmatprep.mubr.f32.mxu0 0.0
      %1467 = vmatmul.mubr.f32.gmra.mxu0 %v1355
      %v1468 = vpop.f32.mrf.mxu0
      %v1469 = vadd.f32 0.0, %v1468
      %v1470 = vpop.f32.mrf.mxu0
      %1471 = vmatprep.mubr.f32.mxu0 0.0
      %1472 = vmatmul.mubr.f32.gmra.mxu0 %v1356
      %v1473 = vpop.f32.mrf.mxu0
      %v1474 = vpop.f32.mrf.mxu0
      %1475 = vmatprep.mubr.f32.mxu0 0.0
      %1476 = vmatmul.mubr.f32.gmra.mxu0 %v1357
      %v1477 = vpop.f32.mrf.mxu0
      %v1478 = vadd.f32 0.0, %v1477
      %v1479 = vpop.f32.mrf.mxu0
      %1480 = vmatprep.mubr.f32.mxu0 0.0
      %1481 = vmatmul.mubr.f32.gmra.mxu0 %v1358
      %v1482 = vpop.f32.mrf.mxu0
      %v1483 = vadd.f32 0.0, %v1482
      %v1484 = vpop.f32.mrf.mxu0
      %1485 = vmatprep.mubr.f32.mxu0 0.0
      %1486 = vmatmul.mubr.f32.gmra.mxu0 %v1359
      %v1487 = vpop.f32.mrf.mxu0
      %v1488 = vpop.f32.mrf.mxu0
      %1489 = vmatprep.mubr.f32.mxu0 0.0
      %1490 = vmatmul.mubr.f32.gmra.mxu0 %v1360
      %v1491 = vpop.f32.mrf.mxu0
      %v1492 = vadd.f32 0.0, %v1491
      %v1493 = vpop.f32.mrf.mxu0
      %1494 = vmatprep.mubr.f32.mxu0 0.0
      %1495 = vmatmul.mubr.f32.gmra.mxu0 %v1361
      %v1496 = vpop.f32.mrf.mxu0
      %v1497 = vadd.f32 0.0, %v1496
      %v1498 = vpop.f32.mrf.mxu0
      %1499 = vmatprep.mubr.f32.mxu0 0.0
      %1500 = vmatmul.mubr.f32.gmra.mxu0 %v1362
      %v1501 = vpop.f32.mrf.mxu0
      %v1502 = vpop.f32.mrf.mxu0
      %1503 = vmatprep.mubr.f32.mxu0 0.0
      %1504 = vmatmul.mubr.f32.gmra.mxu0 %v1363
      %v1505 = vpop.f32.mrf.mxu0
      %v1506 = vadd.f32 0.0, %v1505
      %v1507 = vpop.f32.mrf.mxu0
      %1508 = vmatprep.mubr.f32.mxu0 0.0
      %1509 = vmatmul.mubr.f32.gmra.mxu0 %v1364
      %v1510 = vpop.f32.mrf.mxu0
      %v1511 = vadd.f32 0.0, %v1510
      %v1512 = vpop.f32.mrf.mxu0
      %1513 = vmatprep.mubr.f32.mxu0 0.0
      %1514 = vmatmul.mubr.f32.gmra.mxu0 %v1365
      %v1515 = vpop.f32.mrf.mxu0
      %v1516 = vpop.f32.mrf.mxu0
      %1517 = vdwg.mxu0
      %v1518 = vadd.f32 %v1341, %v1450
      %v1519 = vadd.f32 %v1342, %v1455
      %v1520 = vadd.f32 %v1343, %v1464
      %v1521 = vadd.f32 %v1344, %v1469
      %v1522 = vadd.f32 %v1345, %v1478
      %v1523 = vadd.f32 %v1346, %v1483
      %v1524 = vadd.f32 %v1347, %v1492
      %v1525 = vadd.f32 %v1348, %v1497
      %v1526 = vadd.f32 %v1349, %v1506
      %v1527 = vadd.f32 %v1350, %v1511
      %v1528 = vld [vmem:[#allocation2 + $0x31] sm:$0xff]
      %v1529 = vld [vmem:[#allocation2 + $0x39] sm:$0xff]
      %v1530 = vld [vmem:[#allocation2 + $0x41] sm:$0xff]
      %v1531 = vld [vmem:[#allocation2 + $0x49] sm:$0xff]
      %v1532 = vld [vmem:[#allocation2 + $0x51] sm:$0xff]
      %v1533 = vld [vmem:[#allocation2 + $0x59] sm:$0xff]
      %v1534 = vld [vmem:[#allocation2 + $0x61] sm:$0xff]
      %v1535 = vld [vmem:[#allocation2 + $0x69] sm:$0xff]
      %v1536 = vld [vmem:[#allocation2 + $0x71] sm:$0xff]
      %v1537 = vld [vmem:[#allocation2 + $0x79] sm:$0xff]
      %v1538 = vld [vmem:[#allocation2 + $0x81] sm:$0xff]
      %v1539 = vld [vmem:[#allocation2 + $0x89] sm:$0xff]
      %v1540 = vld [vmem:[#allocation2 + $0x91] sm:$0xff]
      %v1541 = vld [vmem:[#allocation2 + $0x99] sm:$0xff]
      %v1542 = vld [vmem:[#allocation2 + $0xa1] sm:$0xff]
      %s1543 = scalar_lea.vmem %s1, 896
      %v1544 = vld [vmem:[%s1543] sm:$0xff]
      %v1545 = vld [vmem:[%s1543 + $0x8] sm:$0xff]
      %v1546 = vld [vmem:[%s1543 + $0x10] sm:$0xff]
      %v1547 = vld [vmem:[%s1543 + $0x18] sm:$0xff]
      %v1548 = vld [vmem:[%s1543 + $0x20] sm:$0xff]
      %v1549 = vld [vmem:[%s1543 + $0x28] sm:$0xff]
      %v1550 = vld [vmem:[%s1543 + $0x30] sm:$0xff]
      %v1551 = vld [vmem:[%s1543 + $0x38] sm:$0xff]
      %v1552 = vld [vmem:[%s1543 + $0x40] sm:$0xff]
      %v1553 = vld [vmem:[%s1543 + $0x48] sm:$0xff]
      %v1554 = vld [vmem:[%s1543 + $0x50] sm:$0xff]
      %v1555 = vld [vmem:[%s1543 + $0x58] sm:$0xff]
      %v1556 = vld [vmem:[%s1543 + $0x60] sm:$0xff]
      %v1557 = vld [vmem:[%s1543 + $0x68] sm:$0xff]
      %v1558 = vld [vmem:[%s1543 + $0x70] sm:$0xff]
      %v1559 = vld [vmem:[%s1543 + $0x78] sm:$0xff]
      %1560 = vmatprep.subr.mxu0 0.0
      %1561 = vmatpush1.msra.mxu0 %v1559
      %1562 = vmatprep.subr.mxu0 0.0
      %1563 = vmatpush1.msra.mxu0 %v1558
      %1564 = vmatprep.subr.mxu0 0.0
      %1565 = vmatpush1.msra.mxu0 %v1557
      %1566 = vmatprep.subr.mxu0 0.0
      %1567 = vmatpush1.msra.mxu0 %v1556
      %1568 = vmatprep.subr.mxu0 0.0
      %1569 = vmatpush1.msra.mxu0 %v1555
      %1570 = vmatprep.subr.mxu0 0.0
      %1571 = vmatpush1.msra.mxu0 %v1554
      %1572 = vmatprep.subr.mxu0 0.0
      %1573 = vmatpush1.msra.mxu0 %v1553
      %1574 = vmatprep.subr.mxu0 0.0
      %1575 = vmatpush1.msra.mxu0 %v1552
      %1576 = vmatprep.subr.mxu0 0.0
      %1577 = vmatpush1.msra.mxu0 %v1551
      %1578 = vmatprep.subr.mxu0 0.0
      %1579 = vmatpush1.msra.mxu0 %v1550
      %1580 = vmatprep.subr.mxu0 0.0
      %1581 = vmatpush1.msra.mxu0 %v1549
      %1582 = vmatprep.subr.mxu0 0.0
      %1583 = vmatpush1.msra.mxu0 %v1548
      %1584 = vmatprep.subr.mxu0 0.0
      %1585 = vmatpush1.msra.mxu0 %v1547
      %1586 = vmatprep.subr.mxu0 0.0
      %1587 = vmatpush1.msra.mxu0 %v1546
      %1588 = vmatprep.subr.mxu0 0.0
      %1589 = vmatpush1.msra.mxu0 %v1545
      %1590 = vmatprep.subr.mxu0 0.0
      %1591 = vmatpush1.msra.mxu0 %v1544
      %1592 = vmatprep.subr.mxu0 0.0
      %1593 = vmatpush2.msra.mxu0 0.0
      %1594 = vmatprep.subr.mxu0 0.0
      %1595 = vmatpush2.msra.mxu0 0.0
      %1596 = vmatprep.subr.mxu0 0.0
      %1597 = vmatpush2.msra.mxu0 0.0
      %1598 = vmatprep.subr.mxu0 0.0
      %1599 = vmatpush2.msra.mxu0 0.0
      %1600 = vmatprep.subr.mxu0 0.0
      %1601 = vmatpush2.msra.mxu0 0.0
      %1602 = vmatprep.subr.mxu0 0.0
      %1603 = vmatpush2.msra.mxu0 0.0
      %1604 = vmatprep.subr.mxu0 0.0
      %1605 = vmatpush2.msra.mxu0 0.0
      %1606 = vmatprep.subr.mxu0 0.0
      %1607 = vmatpush2.msra.mxu0 0.0
      %1608 = vmatprep.subr.mxu0 0.0
      %1609 = vmatpush2.msra.mxu0 0.0
      %1610 = vmatprep.subr.mxu0 0.0
      %1611 = vmatpush2.msra.mxu0 0.0
      %1612 = vmatprep.subr.mxu0 0.0
      %1613 = vmatpush2.msra.mxu0 0.0
      %1614 = vmatprep.subr.mxu0 0.0
      %1615 = vmatpush2.msra.mxu0 0.0
      %1616 = vmatprep.subr.mxu0 0.0
      %1617 = vmatpush2.msra.mxu0 0.0
      %1618 = vmatprep.subr.mxu0 0.0
      %1619 = vmatpush2.msra.mxu0 0.0
      %1620 = vmatprep.subr.mxu0 0.0
      %1621 = vmatpush2.msra.mxu0 0.0
      %1622 = vmatprep.subr.mxu0 0.0
      %1623 = vmatpush2.msra.mxu0 0.0
      %1624 = vmatprep.mubr.f32.mxu0 0.0
      %1625 = vmatmul.mubr.f32.gmra.mxu0 %v1528
      %v1626 = vpop.f32.mrf.mxu0
      %v1627 = vadd.f32 0.0, %v1626
      %v1628 = vpop.f32.mrf.mxu0
      %1629 = vmatprep.mubr.f32.mxu0 0.0
      %1630 = vmatmul.mubr.f32.gmra.mxu0 %v1529
      %v1631 = vpop.f32.mrf.mxu0
      %v1632 = vadd.f32 0.0, %v1631
      %v1633 = vpop.f32.mrf.mxu0
      %1634 = vmatprep.mubr.f32.mxu0 0.0
      %1635 = vmatmul.mubr.f32.gmra.mxu0 %v1530
      %v1636 = vpop.f32.mrf.mxu0
      %v1637 = vpop.f32.mrf.mxu0
      %1638 = vmatprep.mubr.f32.mxu0 0.0
      %1639 = vmatmul.mubr.f32.gmra.mxu0 %v1531
      %v1640 = vpop.f32.mrf.mxu0
      %v1641 = vadd.f32 0.0, %v1640
      %v1642 = vpop.f32.mrf.mxu0
      %1643 = vmatprep.mubr.f32.mxu0 0.0
      %1644 = vmatmul.mubr.f32.gmra.mxu0 %v1532
      %v1645 = vpop.f32.mrf.mxu0
      %v1646 = vadd.f32 0.0, %v1645
      %v1647 = vpop.f32.mrf.mxu0
      %1648 = vmatprep.mubr.f32.mxu0 0.0
      %1649 = vmatmul.mubr.f32.gmra.mxu0 %v1533
      %v1650 = vpop.f32.mrf.mxu0
      %v1651 = vpop.f32.mrf.mxu0
      %1652 = vmatprep.mubr.f32.mxu0 0.0
      %1653 = vmatmul.mubr.f32.gmra.mxu0 %v1534
      %v1654 = vpop.f32.mrf.mxu0
      %v1655 = vadd.f32 0.0, %v1654
      %v1656 = vpop.f32.mrf.mxu0
      %1657 = vmatprep.mubr.f32.mxu0 0.0
      %1658 = vmatmul.mubr.f32.gmra.mxu0 %v1535
      %v1659 = vpop.f32.mrf.mxu0
      %v1660 = vadd.f32 0.0, %v1659
      %v1661 = vpop.f32.mrf.mxu0
      %1662 = vmatprep.mubr.f32.mxu0 0.0
      %1663 = vmatmul.mubr.f32.gmra.mxu0 %v1536
      %v1664 = vpop.f32.mrf.mxu0
      %v1665 = vpop.f32.mrf.mxu0
      %1666 = vmatprep.mubr.f32.mxu0 0.0
      %1667 = vmatmul.mubr.f32.gmra.mxu0 %v1537
      %v1668 = vpop.f32.mrf.mxu0
      %v1669 = vadd.f32 0.0, %v1668
      %v1670 = vpop.f32.mrf.mxu0
      %1671 = vmatprep.mubr.f32.mxu0 0.0
      %1672 = vmatmul.mubr.f32.gmra.mxu0 %v1538
      %v1673 = vpop.f32.mrf.mxu0
      %v1674 = vadd.f32 0.0, %v1673
      %v1675 = vpop.f32.mrf.mxu0
      %1676 = vmatprep.mubr.f32.mxu0 0.0
      %1677 = vmatmul.mubr.f32.gmra.mxu0 %v1539
      %v1678 = vpop.f32.mrf.mxu0
      %v1679 = vpop.f32.mrf.mxu0
      %1680 = vmatprep.mubr.f32.mxu0 0.0
      %1681 = vmatmul.mubr.f32.gmra.mxu0 %v1540
      %v1682 = vpop.f32.mrf.mxu0
      %v1683 = vadd.f32 0.0, %v1682
      %v1684 = vpop.f32.mrf.mxu0
      %1685 = vmatprep.mubr.f32.mxu0 0.0
      %1686 = vmatmul.mubr.f32.gmra.mxu0 %v1541
      %v1687 = vpop.f32.mrf.mxu0
      %v1688 = vadd.f32 0.0, %v1687
      %v1689 = vpop.f32.mrf.mxu0
      %1690 = vmatprep.mubr.f32.mxu0 0.0
      %1691 = vmatmul.mubr.f32.gmra.mxu0 %v1542
      %v1692 = vpop.f32.mrf.mxu0
      %v1693 = vpop.f32.mrf.mxu0
      %1694 = vdwg.mxu0
      %v1695 = vadd.f32 %v1518, %v1627
      %v1696 = vadd.f32 %v1519, %v1632
      %v1697 = vadd.f32 %v1520, %v1641
      %v1698 = vadd.f32 %v1521, %v1646
      %v1699 = vadd.f32 %v1522, %v1655
      %v1700 = vadd.f32 %v1523, %v1660
      %v1701 = vadd.f32 %v1524, %v1669
      %v1702 = vadd.f32 %v1525, %v1674
      %v1703 = vadd.f32 %v1526, %v1683
      %v1704 = vadd.f32 %v1527, %v1688
      %v1705 = vld [vmem:[#allocation2 + $0x32] sm:$0xff]
      %v1706 = vld [vmem:[#allocation2 + $0x3a] sm:$0xff]
      %v1707 = vld [vmem:[#allocation2 + $0x42] sm:$0xff]
      %v1708 = vld [vmem:[#allocation2 + $0x4a] sm:$0xff]
      %v1709 = vld [vmem:[#allocation2 + $0x52] sm:$0xff]
      %v1710 = vld [vmem:[#allocation2 + $0x5a] sm:$0xff]
      %v1711 = vld [vmem:[#allocation2 + $0x62] sm:$0xff]
      %v1712 = vld [vmem:[#allocation2 + $0x6a] sm:$0xff]
      %v1713 = vld [vmem:[#allocation2 + $0x72] sm:$0xff]
      %v1714 = vld [vmem:[#allocation2 + $0x7a] sm:$0xff]
      %v1715 = vld [vmem:[#allocation2 + $0x82] sm:$0xff]
      %v1716 = vld [vmem:[#allocation2 + $0x8a] sm:$0xff]
      %v1717 = vld [vmem:[#allocation2 + $0x92] sm:$0xff]
      %v1718 = vld [vmem:[#allocation2 + $0x9a] sm:$0xff]
      %v1719 = vld [vmem:[#allocation2 + $0xa2] sm:$0xff]
      %s1720 = scalar_lea.vmem %s1, 1024
      %v1721 = vld [vmem:[%s1720] sm:$0xff]
      %v1722 = vld [vmem:[%s1720 + $0x8] sm:$0xff]
      %v1723 = vld [vmem:[%s1720 + $0x10] sm:$0xff]
      %v1724 = vld [vmem:[%s1720 + $0x18] sm:$0xff]
      %v1725 = vld [vmem:[%s1720 + $0x20] sm:$0xff]
      %v1726 = vld [vmem:[%s1720 + $0x28] sm:$0xff]
      %v1727 = vld [vmem:[%s1720 + $0x30] sm:$0xff]
      %v1728 = vld [vmem:[%s1720 + $0x38] sm:$0xff]
      %v1729 = vld [vmem:[%s1720 + $0x40] sm:$0xff]
      %v1730 = vld [vmem:[%s1720 + $0x48] sm:$0xff]
      %v1731 = vld [vmem:[%s1720 + $0x50] sm:$0xff]
      %v1732 = vld [vmem:[%s1720 + $0x58] sm:$0xff]
      %v1733 = vld [vmem:[%s1720 + $0x60] sm:$0xff]
      %v1734 = vld [vmem:[%s1720 + $0x68] sm:$0xff]
      %v1735 = vld [vmem:[%s1720 + $0x70] sm:$0xff]
      %v1736 = vld [vmem:[%s1720 + $0x78] sm:$0xff]
      %1737 = vmatprep.subr.mxu0 0.0
      %1738 = vmatpush1.msra.mxu0 %v1736
      %1739 = vmatprep.subr.mxu0 0.0
      %1740 = vmatpush1.msra.mxu0 %v1735
      %1741 = vmatprep.subr.mxu0 0.0
      %1742 = vmatpush1.msra.mxu0 %v1734
      %1743 = vmatprep.subr.mxu0 0.0
      %1744 = vmatpush1.msra.mxu0 %v1733
      %1745 = vmatprep.subr.mxu0 0.0
      %1746 = vmatpush1.msra.mxu0 %v1732
      %1747 = vmatprep.subr.mxu0 0.0
      %1748 = vmatpush1.msra.mxu0 %v1731
      %1749 = vmatprep.subr.mxu0 0.0
      %1750 = vmatpush1.msra.mxu0 %v1730
      %1751 = vmatprep.subr.mxu0 0.0
      %1752 = vmatpush1.msra.mxu0 %v1729
      %1753 = vmatprep.subr.mxu0 0.0
      %1754 = vmatpush1.msra.mxu0 %v1728
      %1755 = vmatprep.subr.mxu0 0.0
      %1756 = vmatpush1.msra.mxu0 %v1727
      %1757 = vmatprep.subr.mxu0 0.0
      %1758 = vmatpush1.msra.mxu0 %v1726
      %1759 = vmatprep.subr.mxu0 0.0
      %1760 = vmatpush1.msra.mxu0 %v1725
      %1761 = vmatprep.subr.mxu0 0.0
      %1762 = vmatpush1.msra.mxu0 %v1724
      %1763 = vmatprep.subr.mxu0 0.0
      %1764 = vmatpush1.msra.mxu0 %v1723
      %1765 = vmatprep.subr.mxu0 0.0
      %1766 = vmatpush1.msra.mxu0 %v1722
      %1767 = vmatprep.subr.mxu0 0.0
      %1768 = vmatpush1.msra.mxu0 %v1721
      %1769 = vmatprep.subr.mxu0 0.0
      %1770 = vmatpush2.msra.mxu0 0.0
      %1771 = vmatprep.subr.mxu0 0.0
      %1772 = vmatpush2.msra.mxu0 0.0
      %1773 = vmatprep.subr.mxu0 0.0
      %1774 = vmatpush2.msra.mxu0 0.0
      %1775 = vmatprep.subr.mxu0 0.0
      %1776 = vmatpush2.msra.mxu0 0.0
      %1777 = vmatprep.subr.mxu0 0.0
      %1778 = vmatpush2.msra.mxu0 0.0
      %1779 = vmatprep.subr.mxu0 0.0
      %1780 = vmatpush2.msra.mxu0 0.0
      %1781 = vmatprep.subr.mxu0 0.0
      %1782 = vmatpush2.msra.mxu0 0.0
      %1783 = vmatprep.subr.mxu0 0.0
      %1784 = vmatpush2.msra.mxu0 0.0
      %1785 = vmatprep.subr.mxu0 0.0
      %1786 = vmatpush2.msra.mxu0 0.0
      %1787 = vmatprep.subr.mxu0 0.0
      %1788 = vmatpush2.msra.mxu0 0.0
      %1789 = vmatprep.subr.mxu0 0.0
      %1790 = vmatpush2.msra.mxu0 0.0
      %1791 = vmatprep.subr.mxu0 0.0
      %1792 = vmatpush2.msra.mxu0 0.0
      %1793 = vmatprep.subr.mxu0 0.0
      %1794 = vmatpush2.msra.mxu0 0.0
      %1795 = vmatprep.subr.mxu0 0.0
      %1796 = vmatpush2.msra.mxu0 0.0
      %1797 = vmatprep.subr.mxu0 0.0
      %1798 = vmatpush2.msra.mxu0 0.0
      %1799 = vmatprep.subr.mxu0 0.0
      %1800 = vmatpush2.msra.mxu0 0.0
      %1801 = vmatprep.mubr.f32.mxu0 0.0
      %1802 = vmatmul.mubr.f32.gmra.mxu0 %v1705
      %v1803 = vpop.f32.mrf.mxu0
      %v1804 = vadd.f32 0.0, %v1803
      %v1805 = vpop.f32.mrf.mxu0
      %1806 = vmatprep.mubr.f32.mxu0 0.0
      %1807 = vmatmul.mubr.f32.gmra.mxu0 %v1706
      %v1808 = vpop.f32.mrf.mxu0
      %v1809 = vadd.f32 0.0, %v1808
      %v1810 = vpop.f32.mrf.mxu0
      %1811 = vmatprep.mubr.f32.mxu0 0.0
      %1812 = vmatmul.mubr.f32.gmra.mxu0 %v1707
      %v1813 = vpop.f32.mrf.mxu0
      %v1814 = vpop.f32.mrf.mxu0
      %1815 = vmatprep.mubr.f32.mxu0 0.0
      %1816 = vmatmul.mubr.f32.gmra.mxu0 %v1708
      %v1817 = vpop.f32.mrf.mxu0
      %v1818 = vadd.f32 0.0, %v1817
      %v1819 = vpop.f32.mrf.mxu0
      %1820 = vmatprep.mubr.f32.mxu0 0.0
      %1821 = vmatmul.mubr.f32.gmra.mxu0 %v1709
      %v1822 = vpop.f32.mrf.mxu0
      %v1823 = vadd.f32 0.0, %v1822
      %v1824 = vpop.f32.mrf.mxu0
      %1825 = vmatprep.mubr.f32.mxu0 0.0
      %1826 = vmatmul.mubr.f32.gmra.mxu0 %v1710
      %v1827 = vpop.f32.mrf.mxu0
      %v1828 = vpop.f32.mrf.mxu0
      %1829 = vmatprep.mubr.f32.mxu0 0.0
      %1830 = vmatmul.mubr.f32.gmra.mxu0 %v1711
      %v1831 = vpop.f32.mrf.mxu0
      %v1832 = vadd.f32 0.0, %v1831
      %v1833 = vpop.f32.mrf.mxu0
      %1834 = vmatprep.mubr.f32.mxu0 0.0
      %1835 = vmatmul.mubr.f32.gmra.mxu0 %v1712
      %v1836 = vpop.f32.mrf.mxu0
      %v1837 = vadd.f32 0.0, %v1836
      %v1838 = vpop.f32.mrf.mxu0
      %1839 = vmatprep.mubr.f32.mxu0 0.0
      %1840 = vmatmul.mubr.f32.gmra.mxu0 %v1713
      %v1841 = vpop.f32.mrf.mxu0
      %v1842 = vpop.f32.mrf.mxu0
      %1843 = vmatprep.mubr.f32.mxu0 0.0
      %1844 = vmatmul.mubr.f32.gmra.mxu0 %v1714
      %v1845 = vpop.f32.mrf.mxu0
      %v1846 = vadd.f32 0.0, %v1845
      %v1847 = vpop.f32.mrf.mxu0
      %1848 = vmatprep.mubr.f32.mxu0 0.0
      %1849 = vmatmul.mubr.f32.gmra.mxu0 %v1715
      %v1850 = vpop.f32.mrf.mxu0
      %v1851 = vadd.f32 0.0, %v1850
      %v1852 = vpop.f32.mrf.mxu0
      %1853 = vmatprep.mubr.f32.mxu0 0.0
      %1854 = vmatmul.mubr.f32.gmra.mxu0 %v1716
      %v1855 = vpop.f32.mrf.mxu0
      %v1856 = vpop.f32.mrf.mxu0
      %1857 = vmatprep.mubr.f32.mxu0 0.0
      %1858 = vmatmul.mubr.f32.gmra.mxu0 %v1717
      %v1859 = vpop.f32.mrf.mxu0
      %v1860 = vadd.f32 0.0, %v1859
      %v1861 = vpop.f32.mrf.mxu0
      %1862 = vmatprep.mubr.f32.mxu0 0.0
      %1863 = vmatmul.mubr.f32.gmra.mxu0 %v1718
      %v1864 = vpop.f32.mrf.mxu0
      %v1865 = vadd.f32 0.0, %v1864
      %v1866 = vpop.f32.mrf.mxu0
      %1867 = vmatprep.mubr.f32.mxu0 0.0
      %1868 = vmatmul.mubr.f32.gmra.mxu0 %v1719
      %v1869 = vpop.f32.mrf.mxu0
      %v1870 = vpop.f32.mrf.mxu0
      %1871 = vdwg.mxu0
      %v1872 = vadd.f32 %v1695, %v1804
      %v1873 = vadd.f32 %v1696, %v1809
      %v1874 = vadd.f32 %v1697, %v1818
      %v1875 = vadd.f32 %v1698, %v1823
      %v1876 = vadd.f32 %v1699, %v1832
      %v1877 = vadd.f32 %v1700, %v1837
      %v1878 = vadd.f32 %v1701, %v1846
      %v1879 = vadd.f32 %v1702, %v1851
      %v1880 = vadd.f32 %v1703, %v1860
      %v1881 = vadd.f32 %v1704, %v1865
      %v1883 = vlaneseq
      %v1884 = vshrl.u32 %v1883, 7
      %v1885 = vsub.s32 0, %v1884
      %v1886 = vrot.slane %v309, %v1885
      %v1888 = vadd.f32 %v1872, %v1886
      %v1889 = vadd.f32 %v1873, %v1886
      %v1890 = vadd.f32 %v1874, %v1886
      %v1891 = vadd.f32 %v1875, %v1886
      %v1892 = vadd.f32 %v1876, %v1886
      %v1893 = vadd.f32 %v1877, %v1886
      %v1894 = vadd.f32 %v1878, %v1886
      %v1895 = vadd.f32 %v1879, %v1886
      %v1896 = vadd.f32 %v1880, %v1886
      %v1897 = vadd.f32 %v1881, %v1886
      %v1898 = vmax.f32 %v1888, 0.0
      %v1899 = vmax.f32 %v1889, 0.0
      %v1900 = vmax.f32 %v1890, 0.0
      %v1901 = vmax.f32 %v1891, 0.0
      %v1902 = vmax.f32 %v1892, 0.0
      %v1903 = vmax.f32 %v1893, 0.0
      %v1904 = vmax.f32 %v1894, 0.0
      %v1905 = vmax.f32 %v1895, 0.0
      %v1906 = vmax.f32 %v1896, 0.0
      %v1907 = vmax.f32 %v1897, 0.0
      %vm1908 = vcmask 31744
      %1909 = vst.msk [vmem:[%s148] sm:$0xff] %vm1908, %v1898
      %1910 = vst.msk [vmem:[%s148 + $0x8] sm:$0xff] %vm1908, %v1899
      %1911 = vst.msk [vmem:[%s148 + $0x10] sm:$0xff] %vm1908, %v1900
      %1912 = vst.msk [vmem:[%s148 + $0x18] sm:$0xff] %vm1908, %v1901
      %1913 = vst.msk [vmem:[%s148 + $0x20] sm:$0xff] %vm1908, %v1902
      %1914 = vst.msk [vmem:[%s148 + $0x28] sm:$0xff] %vm1908, %v1903
      %1915 = vst.msk [vmem:[%s148 + $0x30] sm:$0xff] %vm1908, %v1904
      %1916 = vst.msk [vmem:[%s148 + $0x38] sm:$0xff] %vm1908, %v1905
      %1917 = vst.msk [vmem:[%s148 + $0x40] sm:$0xff] %vm1908, %v1906
      %1918 = vst.msk [vmem:[%s148 + $0x48] sm:$0xff] %vm1908, %v1907
      %v1919 = vld [vmem:[#allocation2 + $0x78] sm:$0xff]
      %v1920 = vld [vmem:[#allocation2 + $0x80] sm:$0xff]
      %v1921 = vld [vmem:[#allocation2 + $0x88] sm:$0xff]
      %v1922 = vld [vmem:[#allocation2 + $0x90] sm:$0xff]
      %v1923 = vld [vmem:[#allocation2 + $0x98] sm:$0xff]
      %v1924 = vld [vmem:[#allocation2 + $0xa0] sm:$0xff]
      %v1925 = vld [vmem:[#allocation2 + $0xa8] sm:$0xff]
      %v1926 = vld [vmem:[#allocation2 + $0xb0] sm:$0xff]
      %v1927 = vld [vmem:[#allocation2 + $0xb8] sm:$0xff]
      %v1928 = vld [vmem:[#allocation2 + $0xc0] sm:$0xff]
      %v1929 = vld [vmem:[#allocation2 + $0xc8] sm:$0xff]
      %v1930 = vld [vmem:[#allocation2 + $0xd0] sm:$0xff]
      %v1931 = vld [vmem:[#allocation2 + $0xd8] sm:$0xff]
      %v1932 = vld [vmem:[#allocation2 + $0xe0] sm:$0xff]
      %v1933 = vld [vmem:[#allocation2 + $0xe8] sm:$0xff]
      %v1934 = vld [vmem:[%s1] sm:$0xff]
      %v1935 = vld [vmem:[%s1 + $0x8] sm:$0xff]
      %v1936 = vld [vmem:[%s1 + $0x10] sm:$0xff]
      %v1937 = vld [vmem:[%s1 + $0x18] sm:$0xff]
      %v1938 = vld [vmem:[%s1 + $0x20] sm:$0xff]
      %v1939 = vld [vmem:[%s1 + $0x28] sm:$0xff]
      %v1940 = vld [vmem:[%s1 + $0x30] sm:$0xff]
      %v1941 = vld [vmem:[%s1 + $0x38] sm:$0xff]
      %v1942 = vld [vmem:[%s1 + $0x40] sm:$0xff]
      %v1943 = vld [vmem:[%s1 + $0x48] sm:$0xff]
      %v1944 = vld [vmem:[%s1 + $0x50] sm:$0xff]
      %v1945 = vld [vmem:[%s1 + $0x58] sm:$0xff]
      %v1946 = vld [vmem:[%s1 + $0x60] sm:$0xff]
      %v1947 = vld [vmem:[%s1 + $0x68] sm:$0xff]
      %v1948 = vld [vmem:[%s1 + $0x70] sm:$0xff]
      %v1949 = vld [vmem:[%s1 + $0x78] sm:$0xff]
      %v1950 = vld [vmem:[#allocation2 + $0x79] sm:$0xff]
      %v1951 = vld [vmem:[#allocation2 + $0x81] sm:$0xff]
      %v1952 = vld [vmem:[#allocation2 + $0x89] sm:$0xff]
      %v1953 = vld [vmem:[#allocation2 + $0x91] sm:$0xff]
      %v1954 = vld [vmem:[#allocation2 + $0x99] sm:$0xff]
      %v1955 = vld [vmem:[#allocation2 + $0xa1] sm:$0xff]
      %v1956 = vld [vmem:[#allocation2 + $0xa9] sm:$0xff]
      %v1957 = vld [vmem:[#allocation2 + $0xb1] sm:$0xff]
      %v1958 = vld [vmem:[#allocation2 + $0xb9] sm:$0xff]
      %v1959 = vld [vmem:[#allocation2 + $0xc1] sm:$0xff]
      %v1960 = vld [vmem:[#allocation2 + $0xc9] sm:$0xff]
      %v1961 = vld [vmem:[#allocation2 + $0xd1] sm:$0xff]
      %v1962 = vld [vmem:[#allocation2 + $0xd9] sm:$0xff]
      %v1963 = vld [vmem:[#allocation2 + $0xe1] sm:$0xff]
      %v1964 = vld [vmem:[#allocation2 + $0xe9] sm:$0xff]
      %v1965 = vld [vmem:[%s356] sm:$0xff]
      %v1966 = vld [vmem:[%s356 + $0x8] sm:$0xff]
      %v1967 = vld [vmem:[%s356 + $0x10] sm:$0xff]
      %v1968 = vld [vmem:[%s356 + $0x18] sm:$0xff]
      %v1969 = vld [vmem:[%s356 + $0x20] sm:$0xff]
      %v1970 = vld [vmem:[%s356 + $0x28] sm:$0xff]
      %v1971 = vld [vmem:[%s356 + $0x30] sm:$0xff]
      %v1972 = vld [vmem:[%s356 + $0x38] sm:$0xff]
      %v1973 = vld [vmem:[%s356 + $0x40] sm:$0xff]
      %v1974 = vld [vmem:[%s356 + $0x48] sm:$0xff]
      %v1975 = vld [vmem:[%s356 + $0x50] sm:$0xff]
      %v1976 = vld [vmem:[%s356 + $0x58] sm:$0xff]
      %v1977 = vld [vmem:[%s356 + $0x60] sm:$0xff]
      %v1978 = vld [vmem:[%s356 + $0x68] sm:$0xff]
      %v1979 = vld [vmem:[%s356 + $0x70] sm:$0xff]
      %v1980 = vld [vmem:[%s356 + $0x78] sm:$0xff]
      %1981 = vmatprep.subr.mxu0 0.0
      %1982 = vmatpush1.msra.mxu0 %v1980
      %1983 = vmatprep.subr.mxu0 0.0
      %1984 = vmatpush1.msra.mxu0 %v1979
      %1985 = vmatprep.subr.mxu0 0.0
      %1986 = vmatpush1.msra.mxu0 %v1978
      %1987 = vmatprep.subr.mxu0 0.0
      %1988 = vmatpush1.msra.mxu0 %v1977
      %1989 = vmatprep.subr.mxu0 0.0
      %1990 = vmatpush1.msra.mxu0 %v1976
      %1991 = vmatprep.subr.mxu0 0.0
      %1992 = vmatpush1.msra.mxu0 %v1975
      %1993 = vmatprep.subr.mxu0 0.0
      %1994 = vmatpush1.msra.mxu0 %v1974
      %1995 = vmatprep.subr.mxu0 0.0
      %1996 = vmatpush1.msra.mxu0 %v1973
      %1997 = vmatprep.subr.mxu0 0.0
      %1998 = vmatpush1.msra.mxu0 %v1972
      %1999 = vmatprep.subr.mxu0 0.0
      %2000 = vmatpush1.msra.mxu0 %v1971
      %2001 = vmatprep.subr.mxu0 0.0
      %2002 = vmatpush1.msra.mxu0 %v1970
      %2003 = vmatprep.subr.mxu0 0.0
      %2004 = vmatpush1.msra.mxu0 %v1969
      %2005 = vmatprep.subr.mxu0 0.0
      %2006 = vmatpush1.msra.mxu0 %v1968
      %2007 = vmatprep.subr.mxu0 0.0
      %2008 = vmatpush1.msra.mxu0 %v1967
      %2009 = vmatprep.subr.mxu0 0.0
      %2010 = vmatpush1.msra.mxu0 %v1966
      %2011 = vmatprep.subr.mxu0 0.0
      %2012 = vmatpush1.msra.mxu0 %v1965
      %2013 = vmatprep.subr.mxu0 0.0
      %2014 = vmatpush2.msra.mxu0 0.0
      %2015 = vmatprep.subr.mxu0 0.0
      %2016 = vmatpush2.msra.mxu0 0.0
      %2017 = vmatprep.subr.mxu0 0.0
      %2018 = vmatpush2.msra.mxu0 0.0
      %2019 = vmatprep.subr.mxu0 0.0
      %2020 = vmatpush2.msra.mxu0 0.0
      %2021 = vmatprep.subr.mxu0 0.0
      %2022 = vmatpush2.msra.mxu0 0.0
      %2023 = vmatprep.subr.mxu0 0.0
      %2024 = vmatpush2.msra.mxu0 0.0
      %2025 = vmatprep.subr.mxu0 0.0
      %2026 = vmatpush2.msra.mxu0 0.0
      %2027 = vmatprep.subr.mxu0 0.0
      %2028 = vmatpush2.msra.mxu0 0.0
      %2029 = vmatprep.subr.mxu0 0.0
      %2030 = vmatpush2.msra.mxu0 0.0
      %2031 = vmatprep.subr.mxu0 0.0
      %2032 = vmatpush2.msra.mxu0 0.0
      %2033 = vmatprep.subr.mxu0 0.0
      %2034 = vmatpush2.msra.mxu0 0.0
      %2035 = vmatprep.subr.mxu0 0.0
      %2036 = vmatpush2.msra.mxu0 0.0
      %2037 = vmatprep.subr.mxu0 0.0
      %2038 = vmatpush2.msra.mxu0 0.0
      %2039 = vmatprep.subr.mxu0 0.0
      %2040 = vmatpush2.msra.mxu0 0.0
      %2041 = vmatprep.subr.mxu0 0.0
      %2042 = vmatpush2.msra.mxu0 0.0
      %2043 = vmatprep.subr.mxu0 0.0
      %2044 = vmatpush2.msra.mxu0 0.0
      %2045 = vmatprep.mubr.f32.mxu0 0.0
      %2046 = vmatmul.mubr.f32.gmra.mxu0 %v1950
      %v2047 = vpop.f32.mrf.mxu0
      %v2048 = vadd.f32 0.0, %v2047
      %v2049 = vpop.f32.mrf.mxu0
      %2050 = vmatprep.mubr.f32.mxu0 0.0
      %2051 = vmatmul.mubr.f32.gmra.mxu0 %v1951
      %v2052 = vpop.f32.mrf.mxu0
      %v2053 = vadd.f32 0.0, %v2052
      %v2054 = vpop.f32.mrf.mxu0
      %2055 = vmatprep.mubr.f32.mxu0 0.0
      %2056 = vmatmul.mubr.f32.gmra.mxu0 %v1952
      %v2057 = vpop.f32.mrf.mxu0
      %v2058 = vpop.f32.mrf.mxu0
      %2059 = vmatprep.mubr.f32.mxu0 0.0
      %2060 = vmatmul.mubr.f32.gmra.mxu0 %v1953
      %v2061 = vpop.f32.mrf.mxu0
      %v2062 = vadd.f32 0.0, %v2061
      %v2063 = vpop.f32.mrf.mxu0
      %2064 = vmatprep.mubr.f32.mxu0 0.0
      %2065 = vmatmul.mubr.f32.gmra.mxu0 %v1954
      %v2066 = vpop.f32.mrf.mxu0
      %v2067 = vadd.f32 0.0, %v2066
      %v2068 = vpop.f32.mrf.mxu0
      %2069 = vmatprep.mubr.f32.mxu0 0.0
      %2070 = vmatmul.mubr.f32.gmra.mxu0 %v1955
      %v2071 = vpop.f32.mrf.mxu0
      %v2072 = vpop.f32.mrf.mxu0
      %2073 = vmatprep.mubr.f32.mxu0 0.0
      %2074 = vmatmul.mubr.f32.gmra.mxu0 %v1956
      %v2075 = vpop.f32.mrf.mxu0
      %v2076 = vadd.f32 0.0, %v2075
      %v2077 = vpop.f32.mrf.mxu0
      %2078 = vmatprep.mubr.f32.mxu0 0.0
      %2079 = vmatmul.mubr.f32.gmra.mxu0 %v1957
      %v2080 = vpop.f32.mrf.mxu0
      %v2081 = vadd.f32 0.0, %v2080
      %v2082 = vpop.f32.mrf.mxu0
      %2083 = vmatprep.mubr.f32.mxu0 0.0
      %2084 = vmatmul.mubr.f32.gmra.mxu0 %v1958
      %v2085 = vpop.f32.mrf.mxu0
      %v2086 = vpop.f32.mrf.mxu0
      %2087 = vmatprep.mubr.f32.mxu0 0.0
      %2088 = vmatmul.mubr.f32.gmra.mxu0 %v1959
      %v2089 = vpop.f32.mrf.mxu0
      %v2090 = vadd.f32 0.0, %v2089
      %v2091 = vpop.f32.mrf.mxu0
      %2092 = vmatprep.mubr.f32.mxu0 0.0
      %2093 = vmatmul.mubr.f32.gmra.mxu0 %v1960
      %v2094 = vpop.f32.mrf.mxu0
      %v2095 = vadd.f32 0.0, %v2094
      %v2096 = vpop.f32.mrf.mxu0
      %2097 = vmatprep.mubr.f32.mxu0 0.0
      %2098 = vmatmul.mubr.f32.gmra.mxu0 %v1961
      %v2099 = vpop.f32.mrf.mxu0
      %v2100 = vpop.f32.mrf.mxu0
      %2101 = vmatprep.mubr.f32.mxu0 0.0
      %2102 = vmatmul.mubr.f32.gmra.mxu0 %v1962
      %v2103 = vpop.f32.mrf.mxu0
      %v2104 = vadd.f32 0.0, %v2103
      %v2105 = vpop.f32.mrf.mxu0
      %2106 = vmatprep.mubr.f32.mxu0 0.0
      %2107 = vmatmul.mubr.f32.gmra.mxu0 %v1963
      %v2108 = vpop.f32.mrf.mxu0
      %v2109 = vadd.f32 0.0, %v2108
      %v2110 = vpop.f32.mrf.mxu0
      %2111 = vmatprep.mubr.f32.mxu0 0.0
      %2112 = vmatmul.mubr.f32.gmra.mxu0 %v1964
      %v2113 = vpop.f32.mrf.mxu0
      %v2114 = vpop.f32.mrf.mxu0
      %2115 = vdwg.mxu0
      %2116 = vmatprep.subr.mxu0 0.0
      %2117 = vmatpush1.msra.mxu0 %v1949
      %2118 = vmatprep.subr.mxu0 0.0
      %2119 = vmatpush1.msra.mxu0 %v1948
      %2120 = vmatprep.subr.mxu0 0.0
      %2121 = vmatpush1.msra.mxu0 %v1947
      %2122 = vmatprep.subr.mxu0 0.0
      %2123 = vmatpush1.msra.mxu0 %v1946
      %2124 = vmatprep.subr.mxu0 0.0
      %2125 = vmatpush1.msra.mxu0 %v1945
      %2126 = vmatprep.subr.mxu0 0.0
      %2127 = vmatpush1.msra.mxu0 %v1944
      %2128 = vmatprep.subr.mxu0 0.0
      %2129 = vmatpush1.msra.mxu0 %v1943
      %2130 = vmatprep.subr.mxu0 0.0
      %2131 = vmatpush1.msra.mxu0 %v1942
      %2132 = vmatprep.subr.mxu0 0.0
      %2133 = vmatpush1.msra.mxu0 %v1941
      %2134 = vmatprep.subr.mxu0 0.0
      %2135 = vmatpush1.msra.mxu0 %v1940
      %2136 = vmatprep.subr.mxu0 0.0
      %2137 = vmatpush1.msra.mxu0 %v1939
      %2138 = vmatprep.subr.mxu0 0.0
      %2139 = vmatpush1.msra.mxu0 %v1938
      %2140 = vmatprep.subr.mxu0 0.0
      %2141 = vmatpush1.msra.mxu0 %v1937
      %2142 = vmatprep.subr.mxu0 0.0
      %2143 = vmatpush1.msra.mxu0 %v1936
      %2144 = vmatprep.subr.mxu0 0.0
      %2145 = vmatpush1.msra.mxu0 %v1935
      %2146 = vmatprep.subr.mxu0 0.0
      %2147 = vmatpush1.msra.mxu0 %v1934
      %2148 = vmatprep.subr.mxu0 0.0
      %2149 = vmatpush2.msra.mxu0 0.0
      %2150 = vmatprep.subr.mxu0 0.0
      %2151 = vmatpush2.msra.mxu0 0.0
      %2152 = vmatprep.subr.mxu0 0.0
      %2153 = vmatpush2.msra.mxu0 0.0
      %2154 = vmatprep.subr.mxu0 0.0
      %2155 = vmatpush2.msra.mxu0 0.0
      %2156 = vmatprep.subr.mxu0 0.0
      %2157 = vmatpush2.msra.mxu0 0.0
      %2158 = vmatprep.subr.mxu0 0.0
      %2159 = vmatpush2.msra.mxu0 0.0
      %2160 = vmatprep.subr.mxu0 0.0
      %2161 = vmatpush2.msra.mxu0 0.0
      %2162 = vmatprep.subr.mxu0 0.0
      %2163 = vmatpush2.msra.mxu0 0.0
      %2164 = vmatprep.subr.mxu0 0.0
      %2165 = vmatpush2.msra.mxu0 0.0
      %2166 = vmatprep.subr.mxu0 0.0
      %2167 = vmatpush2.msra.mxu0 0.0
      %2168 = vmatprep.subr.mxu0 0.0
      %2169 = vmatpush2.msra.mxu0 0.0
      %2170 = vmatprep.subr.mxu0 0.0
      %2171 = vmatpush2.msra.mxu0 0.0
      %2172 = vmatprep.subr.mxu0 0.0
      %2173 = vmatpush2.msra.mxu0 0.0
      %2174 = vmatprep.subr.mxu0 0.0
      %2175 = vmatpush2.msra.mxu0 0.0
      %2176 = vmatprep.subr.mxu0 0.0
      %2177 = vmatpush2.msra.mxu0 0.0
      %2178 = vmatprep.subr.mxu0 0.0
      %2179 = vmatpush2.msra.mxu0 0.0
      %2180 = vmatprep.mubr.f32.mxu0 0.0
      %2181 = vmatmul.mubr.f32.gmra.mxu0 %v1919
      %v2182 = vpop.f32.mrf.mxu0
      %v2183 = vadd.f32 %v2048, %v2182
      %v2184 = vpop.f32.mrf.mxu0
      %2185 = vmatprep.mubr.f32.mxu0 0.0
      %2186 = vmatmul.mubr.f32.gmra.mxu0 %v1920
      %v2187 = vpop.f32.mrf.mxu0
      %v2188 = vadd.f32 %v2053, %v2187
      %v2189 = vpop.f32.mrf.mxu0
      %2190 = vmatprep.mubr.f32.mxu0 0.0
      %2191 = vmatmul.mubr.f32.gmra.mxu0 %v1921
      %v2192 = vpop.f32.mrf.mxu0
      %v2193 = vpop.f32.mrf.mxu0
      %2194 = vmatprep.mubr.f32.mxu0 0.0
      %2195 = vmatmul.mubr.f32.gmra.mxu0 %v1922
      %v2196 = vpop.f32.mrf.mxu0
      %v2197 = vadd.f32 %v2062, %v2196
      %v2198 = vpop.f32.mrf.mxu0
      %2199 = vmatprep.mubr.f32.mxu0 0.0
      %2200 = vmatmul.mubr.f32.gmra.mxu0 %v1923
      %v2201 = vpop.f32.mrf.mxu0
      %v2202 = vadd.f32 %v2067, %v2201
      %v2203 = vpop.f32.mrf.mxu0
      %2204 = vmatprep.mubr.f32.mxu0 0.0
      %2205 = vmatmul.mubr.f32.gmra.mxu0 %v1924
      %v2206 = vpop.f32.mrf.mxu0
      %v2207 = vpop.f32.mrf.mxu0
      %2208 = vmatprep.mubr.f32.mxu0 0.0
      %2209 = vmatmul.mubr.f32.gmra.mxu0 %v1925
      %v2210 = vpop.f32.mrf.mxu0
      %v2211 = vadd.f32 %v2076, %v2210
      %v2212 = vpop.f32.mrf.mxu0
      %2213 = vmatprep.mubr.f32.mxu0 0.0
      %2214 = vmatmul.mubr.f32.gmra.mxu0 %v1926
      %v2215 = vpop.f32.mrf.mxu0
      %v2216 = vadd.f32 %v2081, %v2215
      %v2217 = vpop.f32.mrf.mxu0
      %2218 = vmatprep.mubr.f32.mxu0 0.0
      %2219 = vmatmul.mubr.f32.gmra.mxu0 %v1927
      %v2220 = vpop.f32.mrf.mxu0
      %v2221 = vpop.f32.mrf.mxu0
      %2222 = vmatprep.mubr.f32.mxu0 0.0
      %2223 = vmatmul.mubr.f32.gmra.mxu0 %v1928
      %v2224 = vpop.f32.mrf.mxu0
      %v2225 = vadd.f32 %v2090, %v2224
      %v2226 = vpop.f32.mrf.mxu0
      %2227 = vmatprep.mubr.f32.mxu0 0.0
      %2228 = vmatmul.mubr.f32.gmra.mxu0 %v1929
      %v2229 = vpop.f32.mrf.mxu0
      %v2230 = vadd.f32 %v2095, %v2229
      %v2231 = vpop.f32.mrf.mxu0
      %2232 = vmatprep.mubr.f32.mxu0 0.0
      %2233 = vmatmul.mubr.f32.gmra.mxu0 %v1930
      %v2234 = vpop.f32.mrf.mxu0
      %v2235 = vpop.f32.mrf.mxu0
      %2236 = vmatprep.mubr.f32.mxu0 0.0
      %2237 = vmatmul.mubr.f32.gmra.mxu0 %v1931
      %v2238 = vpop.f32.mrf.mxu0
      %v2239 = vadd.f32 %v2104, %v2238
      %v2240 = vpop.f32.mrf.mxu0
      %2241 = vmatprep.mubr.f32.mxu0 0.0
      %2242 = vmatmul.mubr.f32.gmra.mxu0 %v1932
      %v2243 = vpop.f32.mrf.mxu0
      %v2244 = vadd.f32 %v2109, %v2243
      %v2245 = vpop.f32.mrf.mxu0
      %2246 = vmatprep.mubr.f32.mxu0 0.0
      %2247 = vmatmul.mubr.f32.gmra.mxu0 %v1933
      %v2248 = vpop.f32.mrf.mxu0
      %v2249 = vpop.f32.mrf.mxu0
      %2250 = vdwg.mxu0
      %v2251 = vld [vmem:[#allocation2 + $0x7a] sm:$0xff]
      %v2252 = vld [vmem:[#allocation2 + $0x82] sm:$0xff]
      %v2253 = vld [vmem:[#allocation2 + $0x8a] sm:$0xff]
      %v2254 = vld [vmem:[#allocation2 + $0x92] sm:$0xff]
      %v2255 = vld [vmem:[#allocation2 + $0x9a] sm:$0xff]
      %v2256 = vld [vmem:[#allocation2 + $0xa2] sm:$0xff]
      %v2257 = vld [vmem:[#allocation2 + $0xaa] sm:$0xff]
      %v2258 = vld [vmem:[#allocation2 + $0xb2] sm:$0xff]
      %v2259 = vld [vmem:[#allocation2 + $0xba] sm:$0xff]
      %v2260 = vld [vmem:[#allocation2 + $0xc2] sm:$0xff]
      %v2261 = vld [vmem:[#allocation2 + $0xca] sm:$0xff]
      %v2262 = vld [vmem:[#allocation2 + $0xd2] sm:$0xff]
      %v2263 = vld [vmem:[#allocation2 + $0xda] sm:$0xff]
      %v2264 = vld [vmem:[#allocation2 + $0xe2] sm:$0xff]
      %v2265 = vld [vmem:[#allocation2 + $0xea] sm:$0xff]
      %v2266 = vld [vmem:[%s658] sm:$0xff]
      %v2267 = vld [vmem:[%s658 + $0x8] sm:$0xff]
      %v2268 = vld [vmem:[%s658 + $0x10] sm:$0xff]
      %v2269 = vld [vmem:[%s658 + $0x18] sm:$0xff]
      %v2270 = vld [vmem:[%s658 + $0x20] sm:$0xff]
      %v2271 = vld [vmem:[%s658 + $0x28] sm:$0xff]
      %v2272 = vld [vmem:[%s658 + $0x30] sm:$0xff]
      %v2273 = vld [vmem:[%s658 + $0x38] sm:$0xff]
      %v2274 = vld [vmem:[%s658 + $0x40] sm:$0xff]
      %v2275 = vld [vmem:[%s658 + $0x48] sm:$0xff]
      %v2276 = vld [vmem:[%s658 + $0x50] sm:$0xff]
      %v2277 = vld [vmem:[%s658 + $0x58] sm:$0xff]
      %v2278 = vld [vmem:[%s658 + $0x60] sm:$0xff]
      %v2279 = vld [vmem:[%s658 + $0x68] sm:$0xff]
      %v2280 = vld [vmem:[%s658 + $0x70] sm:$0xff]
      %v2281 = vld [vmem:[%s658 + $0x78] sm:$0xff]
      %2282 = vmatprep.subr.mxu0 0.0
      %2283 = vmatpush1.msra.mxu0 %v2281
      %2284 = vmatprep.subr.mxu0 0.0
      %2285 = vmatpush1.msra.mxu0 %v2280
      %2286 = vmatprep.subr.mxu0 0.0
      %2287 = vmatpush1.msra.mxu0 %v2279
      %2288 = vmatprep.subr.mxu0 0.0
      %2289 = vmatpush1.msra.mxu0 %v2278
      %2290 = vmatprep.subr.mxu0 0.0
      %2291 = vmatpush1.msra.mxu0 %v2277
      %2292 = vmatprep.subr.mxu0 0.0
      %2293 = vmatpush1.msra.mxu0 %v2276
      %2294 = vmatprep.subr.mxu0 0.0
      %2295 = vmatpush1.msra.mxu0 %v2275
      %2296 = vmatprep.subr.mxu0 0.0
      %2297 = vmatpush1.msra.mxu0 %v2274
      %2298 = vmatprep.subr.mxu0 0.0
      %2299 = vmatpush1.msra.mxu0 %v2273
      %2300 = vmatprep.subr.mxu0 0.0
      %2301 = vmatpush1.msra.mxu0 %v2272
      %2302 = vmatprep.subr.mxu0 0.0
      %2303 = vmatpush1.msra.mxu0 %v2271
      %2304 = vmatprep.subr.mxu0 0.0
      %2305 = vmatpush1.msra.mxu0 %v2270
      %2306 = vmatprep.subr.mxu0 0.0
      %2307 = vmatpush1.msra.mxu0 %v2269
      %2308 = vmatprep.subr.mxu0 0.0
      %2309 = vmatpush1.msra.mxu0 %v2268
      %2310 = vmatprep.subr.mxu0 0.0
      %2311 = vmatpush1.msra.mxu0 %v2267
      %2312 = vmatprep.subr.mxu0 0.0
      %2313 = vmatpush1.msra.mxu0 %v2266
      %2314 = vmatprep.subr.mxu0 0.0
      %2315 = vmatpush2.msra.mxu0 0.0
      %2316 = vmatprep.subr.mxu0 0.0
      %2317 = vmatpush2.msra.mxu0 0.0
      %2318 = vmatprep.subr.mxu0 0.0
      %2319 = vmatpush2.msra.mxu0 0.0
      %2320 = vmatprep.subr.mxu0 0.0
      %2321 = vmatpush2.msra.mxu0 0.0
      %2322 = vmatprep.subr.mxu0 0.0
      %2323 = vmatpush2.msra.mxu0 0.0
      %2324 = vmatprep.subr.mxu0 0.0
      %2325 = vmatpush2.msra.mxu0 0.0
      %2326 = vmatprep.subr.mxu0 0.0
      %2327 = vmatpush2.msra.mxu0 0.0
      %2328 = vmatprep.subr.mxu0 0.0
      %2329 = vmatpush2.msra.mxu0 0.0
      %2330 = vmatprep.subr.mxu0 0.0
      %2331 = vmatpush2.msra.mxu0 0.0
      %2332 = vmatprep.subr.mxu0 0.0
      %2333 = vmatpush2.msra.mxu0 0.0
      %2334 = vmatprep.subr.mxu0 0.0
      %2335 = vmatpush2.msra.mxu0 0.0
      %2336 = vmatprep.subr.mxu0 0.0
      %2337 = vmatpush2.msra.mxu0 0.0
      %2338 = vmatprep.subr.mxu0 0.0
      %2339 = vmatpush2.msra.mxu0 0.0
      %2340 = vmatprep.subr.mxu0 0.0
      %2341 = vmatpush2.msra.mxu0 0.0
      %2342 = vmatprep.subr.mxu0 0.0
      %2343 = vmatpush2.msra.mxu0 0.0
      %2344 = vmatprep.subr.mxu0 0.0
      %2345 = vmatpush2.msra.mxu0 0.0
      %2346 = vmatprep.mubr.f32.mxu0 0.0
      %2347 = vmatmul.mubr.f32.gmra.mxu0 %v2251
      %v2348 = vpop.f32.mrf.mxu0
      %v2349 = vadd.f32 0.0, %v2348
      %v2350 = vpop.f32.mrf.mxu0
      %2351 = vmatprep.mubr.f32.mxu0 0.0
      %2352 = vmatmul.mubr.f32.gmra.mxu0 %v2252
      %v2353 = vpop.f32.mrf.mxu0
      %v2354 = vadd.f32 0.0, %v2353
      %v2355 = vpop.f32.mrf.mxu0
      %2356 = vmatprep.mubr.f32.mxu0 0.0
      %2357 = vmatmul.mubr.f32.gmra.mxu0 %v2253
      %v2358 = vpop.f32.mrf.mxu0
      %v2359 = vpop.f32.mrf.mxu0
      %2360 = vmatprep.mubr.f32.mxu0 0.0
      %2361 = vmatmul.mubr.f32.gmra.mxu0 %v2254
      %v2362 = vpop.f32.mrf.mxu0
      %v2363 = vadd.f32 0.0, %v2362
      %v2364 = vpop.f32.mrf.mxu0
      %2365 = vmatprep.mubr.f32.mxu0 0.0
      %2366 = vmatmul.mubr.f32.gmra.mxu0 %v2255
      %v2367 = vpop.f32.mrf.mxu0
      %v2368 = vadd.f32 0.0, %v2367
      %v2369 = vpop.f32.mrf.mxu0
      %2370 = vmatprep.mubr.f32.mxu0 0.0
      %2371 = vmatmul.mubr.f32.gmra.mxu0 %v2256
      %v2372 = vpop.f32.mrf.mxu0
      %v2373 = vpop.f32.mrf.mxu0
      %2374 = vmatprep.mubr.f32.mxu0 0.0
      %2375 = vmatmul.mubr.f32.gmra.mxu0 %v2257
      %v2376 = vpop.f32.mrf.mxu0
      %v2377 = vadd.f32 0.0, %v2376
      %v2378 = vpop.f32.mrf.mxu0
      %2379 = vmatprep.mubr.f32.mxu0 0.0
      %2380 = vmatmul.mubr.f32.gmra.mxu0 %v2258
      %v2381 = vpop.f32.mrf.mxu0
      %v2382 = vadd.f32 0.0, %v2381
      %v2383 = vpop.f32.mrf.mxu0
      %2384 = vmatprep.mubr.f32.mxu0 0.0
      %2385 = vmatmul.mubr.f32.gmra.mxu0 %v2259
      %v2386 = vpop.f32.mrf.mxu0
      %v2387 = vpop.f32.mrf.mxu0
      %2388 = vmatprep.mubr.f32.mxu0 0.0
      %2389 = vmatmul.mubr.f32.gmra.mxu0 %v2260
      %v2390 = vpop.f32.mrf.mxu0
      %v2391 = vadd.f32 0.0, %v2390
      %v2392 = vpop.f32.mrf.mxu0
      %2393 = vmatprep.mubr.f32.mxu0 0.0
      %2394 = vmatmul.mubr.f32.gmra.mxu0 %v2261
      %v2395 = vpop.f32.mrf.mxu0
      %v2396 = vadd.f32 0.0, %v2395
      %v2397 = vpop.f32.mrf.mxu0
      %2398 = vmatprep.mubr.f32.mxu0 0.0
      %2399 = vmatmul.mubr.f32.gmra.mxu0 %v2262
      %v2400 = vpop.f32.mrf.mxu0
      %v2401 = vpop.f32.mrf.mxu0
      %2402 = vmatprep.mubr.f32.mxu0 0.0
      %2403 = vmatmul.mubr.f32.gmra.mxu0 %v2263
      %v2404 = vpop.f32.mrf.mxu0
      %v2405 = vadd.f32 0.0, %v2404
      %v2406 = vpop.f32.mrf.mxu0
      %2407 = vmatprep.mubr.f32.mxu0 0.0
      %2408 = vmatmul.mubr.f32.gmra.mxu0 %v2264
      %v2409 = vpop.f32.mrf.mxu0
      %v2410 = vadd.f32 0.0, %v2409
      %v2411 = vpop.f32.mrf.mxu0
      %2412 = vmatprep.mubr.f32.mxu0 0.0
      %2413 = vmatmul.mubr.f32.gmra.mxu0 %v2265
      %v2414 = vpop.f32.mrf.mxu0
      %v2415 = vpop.f32.mrf.mxu0
      %2416 = vdwg.mxu0
      %v2417 = vadd.f32 %v2183, %v2349
      %v2418 = vadd.f32 %v2188, %v2354
      %v2419 = vadd.f32 %v2197, %v2363
      %v2420 = vadd.f32 %v2202, %v2368
      %v2421 = vadd.f32 %v2211, %v2377
      %v2422 = vadd.f32 %v2216, %v2382
      %v2423 = vadd.f32 %v2225, %v2391
      %v2424 = vadd.f32 %v2230, %v2396
      %v2425 = vadd.f32 %v2239, %v2405
      %v2426 = vadd.f32 %v2244, %v2410
      %v2427 = vld [vmem:[#allocation2 + $0x90] sm:$0xff]
      %v2428 = vld [vmem:[#allocation2 + $0x98] sm:$0xff]
      %v2429 = vld [vmem:[#allocation2 + $0xa0] sm:$0xff]
      %v2430 = vld [vmem:[#allocation2 + $0xa8] sm:$0xff]
      %v2431 = vld [vmem:[#allocation2 + $0xb0] sm:$0xff]
      %v2432 = vld [vmem:[#allocation2 + $0xb8] sm:$0xff]
      %v2433 = vld [vmem:[#allocation2 + $0xc0] sm:$0xff]
      %v2434 = vld [vmem:[#allocation2 + $0xc8] sm:$0xff]
      %v2435 = vld [vmem:[#allocation2 + $0xd0] sm:$0xff]
      %v2436 = vld [vmem:[#allocation2 + $0xd8] sm:$0xff]
      %v2437 = vld [vmem:[#allocation2 + $0xe0] sm:$0xff]
      %v2438 = vld [vmem:[#allocation2 + $0xe8] sm:$0xff]
      %v2439 = vld [vmem:[#allocation2 + $0xf0] sm:$0xff]
      %v2440 = vld [vmem:[#allocation2 + $0xf8] sm:$0xff]
      %v2441 = vld [vmem:[#allocation2 + $0x100] sm:$0xff]
      %v2442 = vld [vmem:[%s835] sm:$0xff]
      %v2443 = vld [vmem:[%s835 + $0x8] sm:$0xff]
      %v2444 = vld [vmem:[%s835 + $0x10] sm:$0xff]
      %v2445 = vld [vmem:[%s835 + $0x18] sm:$0xff]
      %v2446 = vld [vmem:[%s835 + $0x20] sm:$0xff]
      %v2447 = vld [vmem:[%s835 + $0x28] sm:$0xff]
      %v2448 = vld [vmem:[%s835 + $0x30] sm:$0xff]
      %v2449 = vld [vmem:[%s835 + $0x38] sm:$0xff]
      %v2450 = vld [vmem:[%s835 + $0x40] sm:$0xff]
      %v2451 = vld [vmem:[%s835 + $0x48] sm:$0xff]
      %v2452 = vld [vmem:[%s835 + $0x50] sm:$0xff]
      %v2453 = vld [vmem:[%s835 + $0x58] sm:$0xff]
      %v2454 = vld [vmem:[%s835 + $0x60] sm:$0xff]
      %v2455 = vld [vmem:[%s835 + $0x68] sm:$0xff]
      %v2456 = vld [vmem:[%s835 + $0x70] sm:$0xff]
      %v2457 = vld [vmem:[%s835 + $0x78] sm:$0xff]
      %2458 = vmatprep.subr.mxu0 0.0
      %2459 = vmatpush1.msra.mxu0 %v2457
      %2460 = vmatprep.subr.mxu0 0.0
      %2461 = vmatpush1.msra.mxu0 %v2456
      %2462 = vmatprep.subr.mxu0 0.0
      %2463 = vmatpush1.msra.mxu0 %v2455
      %2464 = vmatprep.subr.mxu0 0.0
      %2465 = vmatpush1.msra.mxu0 %v2454
      %2466 = vmatprep.subr.mxu0 0.0
      %2467 = vmatpush1.msra.mxu0 %v2453
      %2468 = vmatprep.subr.mxu0 0.0
      %2469 = vmatpush1.msra.mxu0 %v2452
      %2470 = vmatprep.subr.mxu0 0.0
      %2471 = vmatpush1.msra.mxu0 %v2451
      %2472 = vmatprep.subr.mxu0 0.0
      %2473 = vmatpush1.msra.mxu0 %v2450
      %2474 = vmatprep.subr.mxu0 0.0
      %2475 = vmatpush1.msra.mxu0 %v2449
      %2476 = vmatprep.subr.mxu0 0.0
      %2477 = vmatpush1.msra.mxu0 %v2448
      %2478 = vmatprep.subr.mxu0 0.0
      %2479 = vmatpush1.msra.mxu0 %v2447
      %2480 = vmatprep.subr.mxu0 0.0
      %2481 = vmatpush1.msra.mxu0 %v2446
      %2482 = vmatprep.subr.mxu0 0.0
      %2483 = vmatpush1.msra.mxu0 %v2445
      %2484 = vmatprep.subr.mxu0 0.0
      %2485 = vmatpush1.msra.mxu0 %v2444
      %2486 = vmatprep.subr.mxu0 0.0
      %2487 = vmatpush1.msra.mxu0 %v2443
      %2488 = vmatprep.subr.mxu0 0.0
      %2489 = vmatpush1.msra.mxu0 %v2442
      %2490 = vmatprep.subr.mxu0 0.0
      %2491 = vmatpush2.msra.mxu0 0.0
      %2492 = vmatprep.subr.mxu0 0.0
      %2493 = vmatpush2.msra.mxu0 0.0
      %2494 = vmatprep.subr.mxu0 0.0
      %2495 = vmatpush2.msra.mxu0 0.0
      %2496 = vmatprep.subr.mxu0 0.0
      %2497 = vmatpush2.msra.mxu0 0.0
      %2498 = vmatprep.subr.mxu0 0.0
      %2499 = vmatpush2.msra.mxu0 0.0
      %2500 = vmatprep.subr.mxu0 0.0
      %2501 = vmatpush2.msra.mxu0 0.0
      %2502 = vmatprep.subr.mxu0 0.0
      %2503 = vmatpush2.msra.mxu0 0.0
      %2504 = vmatprep.subr.mxu0 0.0
      %2505 = vmatpush2.msra.mxu0 0.0
      %2506 = vmatprep.subr.mxu0 0.0
      %2507 = vmatpush2.msra.mxu0 0.0
      %2508 = vmatprep.subr.mxu0 0.0
      %2509 = vmatpush2.msra.mxu0 0.0
      %2510 = vmatprep.subr.mxu0 0.0
      %2511 = vmatpush2.msra.mxu0 0.0
      %2512 = vmatprep.subr.mxu0 0.0
      %2513 = vmatpush2.msra.mxu0 0.0
      %2514 = vmatprep.subr.mxu0 0.0
      %2515 = vmatpush2.msra.mxu0 0.0
      %2516 = vmatprep.subr.mxu0 0.0
      %2517 = vmatpush2.msra.mxu0 0.0
      %2518 = vmatprep.subr.mxu0 0.0
      %2519 = vmatpush2.msra.mxu0 0.0
      %2520 = vmatprep.subr.mxu0 0.0
      %2521 = vmatpush2.msra.mxu0 0.0
      %2522 = vmatprep.mubr.f32.mxu0 0.0
      %2523 = vmatmul.mubr.f32.gmra.mxu0 %v2427
      %v2524 = vpop.f32.mrf.mxu0
      %v2525 = vadd.f32 0.0, %v2524
      %v2526 = vpop.f32.mrf.mxu0
      %2527 = vmatprep.mubr.f32.mxu0 0.0
      %2528 = vmatmul.mubr.f32.gmra.mxu0 %v2428
      %v2529 = vpop.f32.mrf.mxu0
      %v2530 = vadd.f32 0.0, %v2529
      %v2531 = vpop.f32.mrf.mxu0
      %2532 = vmatprep.mubr.f32.mxu0 0.0
      %2533 = vmatmul.mubr.f32.gmra.mxu0 %v2429
      %v2534 = vpop.f32.mrf.mxu0
      %v2535 = vpop.f32.mrf.mxu0
      %2536 = vmatprep.mubr.f32.mxu0 0.0
      %2537 = vmatmul.mubr.f32.gmra.mxu0 %v2430
      %v2538 = vpop.f32.mrf.mxu0
      %v2539 = vadd.f32 0.0, %v2538
      %v2540 = vpop.f32.mrf.mxu0
      %2541 = vmatprep.mubr.f32.mxu0 0.0
      %2542 = vmatmul.mubr.f32.gmra.mxu0 %v2431
      %v2543 = vpop.f32.mrf.mxu0
      %v2544 = vadd.f32 0.0, %v2543
      %v2545 = vpop.f32.mrf.mxu0
      %2546 = vmatprep.mubr.f32.mxu0 0.0
      %2547 = vmatmul.mubr.f32.gmra.mxu0 %v2432
      %v2548 = vpop.f32.mrf.mxu0
      %v2549 = vpop.f32.mrf.mxu0
      %2550 = vmatprep.mubr.f32.mxu0 0.0
      %2551 = vmatmul.mubr.f32.gmra.mxu0 %v2433
      %v2552 = vpop.f32.mrf.mxu0
      %v2553 = vadd.f32 0.0, %v2552
      %v2554 = vpop.f32.mrf.mxu0
      %2555 = vmatprep.mubr.f32.mxu0 0.0
      %2556 = vmatmul.mubr.f32.gmra.mxu0 %v2434
      %v2557 = vpop.f32.mrf.mxu0
      %v2558 = vadd.f32 0.0, %v2557
      %v2559 = vpop.f32.mrf.mxu0
      %2560 = vmatprep.mubr.f32.mxu0 0.0
      %2561 = vmatmul.mubr.f32.gmra.mxu0 %v2435
      %v2562 = vpop.f32.mrf.mxu0
      %v2563 = vpop.f32.mrf.mxu0
      %2564 = vmatprep.mubr.f32.mxu0 0.0
      %2565 = vmatmul.mubr.f32.gmra.mxu0 %v2436
      %v2566 = vpop.f32.mrf.mxu0
      %v2567 = vadd.f32 0.0, %v2566
      %v2568 = vpop.f32.mrf.mxu0
      %2569 = vmatprep.mubr.f32.mxu0 0.0
      %2570 = vmatmul.mubr.f32.gmra.mxu0 %v2437
      %v2571 = vpop.f32.mrf.mxu0
      %v2572 = vadd.f32 0.0, %v2571
      %v2573 = vpop.f32.mrf.mxu0
      %2574 = vmatprep.mubr.f32.mxu0 0.0
      %2575 = vmatmul.mubr.f32.gmra.mxu0 %v2438
      %v2576 = vpop.f32.mrf.mxu0
      %v2577 = vpop.f32.mrf.mxu0
      %2578 = vmatprep.mubr.f32.mxu0 0.0
      %2579 = vmatmul.mubr.f32.gmra.mxu0 %v2439
      %v2580 = vpop.f32.mrf.mxu0
      %v2581 = vadd.f32 0.0, %v2580
      %v2582 = vpop.f32.mrf.mxu0
      %2583 = vmatprep.mubr.f32.mxu0 0.0
      %2584 = vmatmul.mubr.f32.gmra.mxu0 %v2440
      %v2585 = vpop.f32.mrf.mxu0
      %v2586 = vadd.f32 0.0, %v2585
      %v2587 = vpop.f32.mrf.mxu0
      %2588 = vmatprep.mubr.f32.mxu0 0.0
      %2589 = vmatmul.mubr.f32.gmra.mxu0 %v2441
      %v2590 = vpop.f32.mrf.mxu0
      %v2591 = vpop.f32.mrf.mxu0
      %2592 = vdwg.mxu0
      %v2593 = vadd.f32 %v2417, %v2525
      %v2594 = vadd.f32 %v2418, %v2530
      %v2595 = vadd.f32 %v2419, %v2539
      %v2596 = vadd.f32 %v2420, %v2544
      %v2597 = vadd.f32 %v2421, %v2553
      %v2598 = vadd.f32 %v2422, %v2558
      %v2599 = vadd.f32 %v2423, %v2567
      %v2600 = vadd.f32 %v2424, %v2572
      %v2601 = vadd.f32 %v2425, %v2581
      %v2602 = vadd.f32 %v2426, %v2586
      %v2603 = vld [vmem:[#allocation2 + $0x91] sm:$0xff]
      %v2604 = vld [vmem:[#allocation2 + $0x99] sm:$0xff]
      %v2605 = vld [vmem:[#allocation2 + $0xa1] sm:$0xff]
      %v2606 = vld [vmem:[#allocation2 + $0xa9] sm:$0xff]
      %v2607 = vld [vmem:[#allocation2 + $0xb1] sm:$0xff]
      %v2608 = vld [vmem:[#allocation2 + $0xb9] sm:$0xff]
      %v2609 = vld [vmem:[#allocation2 + $0xc1] sm:$0xff]
      %v2610 = vld [vmem:[#allocation2 + $0xc9] sm:$0xff]
      %v2611 = vld [vmem:[#allocation2 + $0xd1] sm:$0xff]
      %v2612 = vld [vmem:[#allocation2 + $0xd9] sm:$0xff]
      %v2613 = vld [vmem:[#allocation2 + $0xe1] sm:$0xff]
      %v2614 = vld [vmem:[#allocation2 + $0xe9] sm:$0xff]
      %v2615 = vld [vmem:[#allocation2 + $0xf1] sm:$0xff]
      %v2616 = vld [vmem:[#allocation2 + $0xf9] sm:$0xff]
      %v2617 = vld [vmem:[#allocation2 + $0x101] sm:$0xff]
      %v2618 = vld [vmem:[%s1012] sm:$0xff]
      %v2619 = vld [vmem:[%s1012 + $0x8] sm:$0xff]
      %v2620 = vld [vmem:[%s1012 + $0x10] sm:$0xff]
      %v2621 = vld [vmem:[%s1012 + $0x18] sm:$0xff]
      %v2622 = vld [vmem:[%s1012 + $0x20] sm:$0xff]
      %v2623 = vld [vmem:[%s1012 + $0x28] sm:$0xff]
      %v2624 = vld [vmem:[%s1012 + $0x30] sm:$0xff]
      %v2625 = vld [vmem:[%s1012 + $0x38] sm:$0xff]
      %v2626 = vld [vmem:[%s1012 + $0x40] sm:$0xff]
      %v2627 = vld [vmem:[%s1012 + $0x48] sm:$0xff]
      %v2628 = vld [vmem:[%s1012 + $0x50] sm:$0xff]
      %v2629 = vld [vmem:[%s1012 + $0x58] sm:$0xff]
      %v2630 = vld [vmem:[%s1012 + $0x60] sm:$0xff]
      %v2631 = vld [vmem:[%s1012 + $0x68] sm:$0xff]
      %v2632 = vld [vmem:[%s1012 + $0x70] sm:$0xff]
      %v2633 = vld [vmem:[%s1012 + $0x78] sm:$0xff]
      %2634 = vmatprep.subr.mxu0 0.0
      %2635 = vmatpush1.msra.mxu0 %v2633
      %2636 = vmatprep.subr.mxu0 0.0
      %2637 = vmatpush1.msra.mxu0 %v2632
      %2638 = vmatprep.subr.mxu0 0.0
      %2639 = vmatpush1.msra.mxu0 %v2631
      %2640 = vmatprep.subr.mxu0 0.0
      %2641 = vmatpush1.msra.mxu0 %v2630
      %2642 = vmatprep.subr.mxu0 0.0
      %2643 = vmatpush1.msra.mxu0 %v2629
      %2644 = vmatprep.subr.mxu0 0.0
      %2645 = vmatpush1.msra.mxu0 %v2628
      %2646 = vmatprep.subr.mxu0 0.0
      %2647 = vmatpush1.msra.mxu0 %v2627
      %2648 = vmatprep.subr.mxu0 0.0
      %2649 = vmatpush1.msra.mxu0 %v2626
      %2650 = vmatprep.subr.mxu0 0.0
      %2651 = vmatpush1.msra.mxu0 %v2625
      %2652 = vmatprep.subr.mxu0 0.0
      %2653 = vmatpush1.msra.mxu0 %v2624
      %2654 = vmatprep.subr.mxu0 0.0
      %2655 = vmatpush1.msra.mxu0 %v2623
      %2656 = vmatprep.subr.mxu0 0.0
      %2657 = vmatpush1.msra.mxu0 %v2622
      %2658 = vmatprep.subr.mxu0 0.0
      %2659 = vmatpush1.msra.mxu0 %v2621
      %2660 = vmatprep.subr.mxu0 0.0
      %2661 = vmatpush1.msra.mxu0 %v2620
      %2662 = vmatprep.subr.mxu0 0.0
      %2663 = vmatpush1.msra.mxu0 %v2619
      %2664 = vmatprep.subr.mxu0 0.0
      %2665 = vmatpush1.msra.mxu0 %v2618
      %2666 = vmatprep.subr.mxu0 0.0
      %2667 = vmatpush2.msra.mxu0 0.0
      %2668 = vmatprep.subr.mxu0 0.0
      %2669 = vmatpush2.msra.mxu0 0.0
      %2670 = vmatprep.subr.mxu0 0.0
      %2671 = vmatpush2.msra.mxu0 0.0
      %2672 = vmatprep.subr.mxu0 0.0
      %2673 = vmatpush2.msra.mxu0 0.0
      %2674 = vmatprep.subr.mxu0 0.0
      %2675 = vmatpush2.msra.mxu0 0.0
      %2676 = vmatprep.subr.mxu0 0.0
      %2677 = vmatpush2.msra.mxu0 0.0
      %2678 = vmatprep.subr.mxu0 0.0
      %2679 = vmatpush2.msra.mxu0 0.0
      %2680 = vmatprep.subr.mxu0 0.0
      %2681 = vmatpush2.msra.mxu0 0.0
      %2682 = vmatprep.subr.mxu0 0.0
      %2683 = vmatpush2.msra.mxu0 0.0
      %2684 = vmatprep.subr.mxu0 0.0
      %2685 = vmatpush2.msra.mxu0 0.0
      %2686 = vmatprep.subr.mxu0 0.0
      %2687 = vmatpush2.msra.mxu0 0.0
      %2688 = vmatprep.subr.mxu0 0.0
      %2689 = vmatpush2.msra.mxu0 0.0
      %2690 = vmatprep.subr.mxu0 0.0
      %2691 = vmatpush2.msra.mxu0 0.0
      %2692 = vmatprep.subr.mxu0 0.0
      %2693 = vmatpush2.msra.mxu0 0.0
      %2694 = vmatprep.subr.mxu0 0.0
      %2695 = vmatpush2.msra.mxu0 0.0
      %2696 = vmatprep.subr.mxu0 0.0
      %2697 = vmatpush2.msra.mxu0 0.0
      %2698 = vmatprep.mubr.f32.mxu0 0.0
      %2699 = vmatmul.mubr.f32.gmra.mxu0 %v2603
      %v2700 = vpop.f32.mrf.mxu0
      %v2701 = vadd.f32 0.0, %v2700
      %v2702 = vpop.f32.mrf.mxu0
      %2703 = vmatprep.mubr.f32.mxu0 0.0
      %2704 = vmatmul.mubr.f32.gmra.mxu0 %v2604
      %v2705 = vpop.f32.mrf.mxu0
      %v2706 = vadd.f32 0.0, %v2705
      %v2707 = vpop.f32.mrf.mxu0
      %2708 = vmatprep.mubr.f32.mxu0 0.0
      %2709 = vmatmul.mubr.f32.gmra.mxu0 %v2605
      %v2710 = vpop.f32.mrf.mxu0
      %v2711 = vpop.f32.mrf.mxu0
      %2712 = vmatprep.mubr.f32.mxu0 0.0
      %2713 = vmatmul.mubr.f32.gmra.mxu0 %v2606
      %v2714 = vpop.f32.mrf.mxu0
      %v2715 = vadd.f32 0.0, %v2714
      %v2716 = vpop.f32.mrf.mxu0
      %2717 = vmatprep.mubr.f32.mxu0 0.0
      %2718 = vmatmul.mubr.f32.gmra.mxu0 %v2607
      %v2719 = vpop.f32.mrf.mxu0
      %v2720 = vadd.f32 0.0, %v2719
      %v2721 = vpop.f32.mrf.mxu0
      %2722 = vmatprep.mubr.f32.mxu0 0.0
      %2723 = vmatmul.mubr.f32.gmra.mxu0 %v2608
      %v2724 = vpop.f32.mrf.mxu0
      %v2725 = vpop.f32.mrf.mxu0
      %2726 = vmatprep.mubr.f32.mxu0 0.0
      %2727 = vmatmul.mubr.f32.gmra.mxu0 %v2609
      %v2728 = vpop.f32.mrf.mxu0
      %v2729 = vadd.f32 0.0, %v2728
      %v2730 = vpop.f32.mrf.mxu0
      %2731 = vmatprep.mubr.f32.mxu0 0.0
      %2732 = vmatmul.mubr.f32.gmra.mxu0 %v2610
      %v2733 = vpop.f32.mrf.mxu0
      %v2734 = vadd.f32 0.0, %v2733
      %v2735 = vpop.f32.mrf.mxu0
      %2736 = vmatprep.mubr.f32.mxu0 0.0
      %2737 = vmatmul.mubr.f32.gmra.mxu0 %v2611
      %v2738 = vpop.f32.mrf.mxu0
      %v2739 = vpop.f32.mrf.mxu0
      %2740 = vmatprep.mubr.f32.mxu0 0.0
      %2741 = vmatmul.mubr.f32.gmra.mxu0 %v2612
      %v2742 = vpop.f32.mrf.mxu0
      %v2743 = vadd.f32 0.0, %v2742
      %v2744 = vpop.f32.mrf.mxu0
      %2745 = vmatprep.mubr.f32.mxu0 0.0
      %2746 = vmatmul.mubr.f32.gmra.mxu0 %v2613
      %v2747 = vpop.f32.mrf.mxu0
      %v2748 = vadd.f32 0.0, %v2747
      %v2749 = vpop.f32.mrf.mxu0
      %2750 = vmatprep.mubr.f32.mxu0 0.0
      %2751 = vmatmul.mubr.f32.gmra.mxu0 %v2614
      %v2752 = vpop.f32.mrf.mxu0
      %v2753 = vpop.f32.mrf.mxu0
      %2754 = vmatprep.mubr.f32.mxu0 0.0
      %2755 = vmatmul.mubr.f32.gmra.mxu0 %v2615
      %v2756 = vpop.f32.mrf.mxu0
      %v2757 = vadd.f32 0.0, %v2756
      %v2758 = vpop.f32.mrf.mxu0
      %2759 = vmatprep.mubr.f32.mxu0 0.0
      %2760 = vmatmul.mubr.f32.gmra.mxu0 %v2616
      %v2761 = vpop.f32.mrf.mxu0
      %v2762 = vadd.f32 0.0, %v2761
      %v2763 = vpop.f32.mrf.mxu0
      %2764 = vmatprep.mubr.f32.mxu0 0.0
      %2765 = vmatmul.mubr.f32.gmra.mxu0 %v2617
      %v2766 = vpop.f32.mrf.mxu0
      %v2767 = vpop.f32.mrf.mxu0
      %2768 = vdwg.mxu0
      %v2769 = vadd.f32 %v2593, %v2701
      %v2770 = vadd.f32 %v2594, %v2706
      %v2771 = vadd.f32 %v2595, %v2715
      %v2772 = vadd.f32 %v2596, %v2720
      %v2773 = vadd.f32 %v2597, %v2729
      %v2774 = vadd.f32 %v2598, %v2734
      %v2775 = vadd.f32 %v2599, %v2743
      %v2776 = vadd.f32 %v2600, %v2748
      %v2777 = vadd.f32 %v2601, %v2757
      %v2778 = vadd.f32 %v2602, %v2762
      %v2779 = vld [vmem:[#allocation2 + $0x92] sm:$0xff]
      %v2780 = vld [vmem:[#allocation2 + $0x9a] sm:$0xff]
      %v2781 = vld [vmem:[#allocation2 + $0xa2] sm:$0xff]
      %v2782 = vld [vmem:[#allocation2 + $0xaa] sm:$0xff]
      %v2783 = vld [vmem:[#allocation2 + $0xb2] sm:$0xff]
      %v2784 = vld [vmem:[#allocation2 + $0xba] sm:$0xff]
      %v2785 = vld [vmem:[#allocation2 + $0xc2] sm:$0xff]
      %v2786 = vld [vmem:[#allocation2 + $0xca] sm:$0xff]
      %v2787 = vld [vmem:[#allocation2 + $0xd2] sm:$0xff]
      %v2788 = vld [vmem:[#allocation2 + $0xda] sm:$0xff]
      %v2789 = vld [vmem:[#allocation2 + $0xe2] sm:$0xff]
      %v2790 = vld [vmem:[#allocation2 + $0xea] sm:$0xff]
      %v2791 = vld [vmem:[#allocation2 + $0xf2] sm:$0xff]
      %v2792 = vld [vmem:[#allocation2 + $0xfa] sm:$0xff]
      %v2793 = vld [vmem:[#allocation2 + $0x102] sm:$0xff]
      %v2794 = vld [vmem:[%s1189] sm:$0xff]
      %v2795 = vld [vmem:[%s1189 + $0x8] sm:$0xff]
      %v2796 = vld [vmem:[%s1189 + $0x10] sm:$0xff]
      %v2797 = vld [vmem:[%s1189 + $0x18] sm:$0xff]
      %v2798 = vld [vmem:[%s1189 + $0x20] sm:$0xff]
      %v2799 = vld [vmem:[%s1189 + $0x28] sm:$0xff]
      %v2800 = vld [vmem:[%s1189 + $0x30] sm:$0xff]
      %v2801 = vld [vmem:[%s1189 + $0x38] sm:$0xff]
      %v2802 = vld [vmem:[%s1189 + $0x40] sm:$0xff]
      %v2803 = vld [vmem:[%s1189 + $0x48] sm:$0xff]
      %v2804 = vld [vmem:[%s1189 + $0x50] sm:$0xff]
      %v2805 = vld [vmem:[%s1189 + $0x58] sm:$0xff]
      %v2806 = vld [vmem:[%s1189 + $0x60] sm:$0xff]
      %v2807 = vld [vmem:[%s1189 + $0x68] sm:$0xff]
      %v2808 = vld [vmem:[%s1189 + $0x70] sm:$0xff]
      %v2809 = vld [vmem:[%s1189 + $0x78] sm:$0xff]
      %2810 = vmatprep.subr.mxu0 0.0
      %2811 = vmatpush1.msra.mxu0 %v2809
      %2812 = vmatprep.subr.mxu0 0.0
      %2813 = vmatpush1.msra.mxu0 %v2808
      %2814 = vmatprep.subr.mxu0 0.0
      %2815 = vmatpush1.msra.mxu0 %v2807
      %2816 = vmatprep.subr.mxu0 0.0
      %2817 = vmatpush1.msra.mxu0 %v2806
      %2818 = vmatprep.subr.mxu0 0.0
      %2819 = vmatpush1.msra.mxu0 %v2805
      %2820 = vmatprep.subr.mxu0 0.0
      %2821 = vmatpush1.msra.mxu0 %v2804
      %2822 = vmatprep.subr.mxu0 0.0
      %2823 = vmatpush1.msra.mxu0 %v2803
      %2824 = vmatprep.subr.mxu0 0.0
      %2825 = vmatpush1.msra.mxu0 %v2802
      %2826 = vmatprep.subr.mxu0 0.0
      %2827 = vmatpush1.msra.mxu0 %v2801
      %2828 = vmatprep.subr.mxu0 0.0
      %2829 = vmatpush1.msra.mxu0 %v2800
      %2830 = vmatprep.subr.mxu0 0.0
      %2831 = vmatpush1.msra.mxu0 %v2799
      %2832 = vmatprep.subr.mxu0 0.0
      %2833 = vmatpush1.msra.mxu0 %v2798
      %2834 = vmatprep.subr.mxu0 0.0
      %2835 = vmatpush1.msra.mxu0 %v2797
      %2836 = vmatprep.subr.mxu0 0.0
      %2837 = vmatpush1.msra.mxu0 %v2796
      %2838 = vmatprep.subr.mxu0 0.0
      %2839 = vmatpush1.msra.mxu0 %v2795
      %2840 = vmatprep.subr.mxu0 0.0
      %2841 = vmatpush1.msra.mxu0 %v2794
      %2842 = vmatprep.subr.mxu0 0.0
      %2843 = vmatpush2.msra.mxu0 0.0
      %2844 = vmatprep.subr.mxu0 0.0
      %2845 = vmatpush2.msra.mxu0 0.0
      %2846 = vmatprep.subr.mxu0 0.0
      %2847 = vmatpush2.msra.mxu0 0.0
      %2848 = vmatprep.subr.mxu0 0.0
      %2849 = vmatpush2.msra.mxu0 0.0
      %2850 = vmatprep.subr.mxu0 0.0
      %2851 = vmatpush2.msra.mxu0 0.0
      %2852 = vmatprep.subr.mxu0 0.0
      %2853 = vmatpush2.msra.mxu0 0.0
      %2854 = vmatprep.subr.mxu0 0.0
      %2855 = vmatpush2.msra.mxu0 0.0
      %2856 = vmatprep.subr.mxu0 0.0
      %2857 = vmatpush2.msra.mxu0 0.0
      %2858 = vmatprep.subr.mxu0 0.0
      %2859 = vmatpush2.msra.mxu0 0.0
      %2860 = vmatprep.subr.mxu0 0.0
      %2861 = vmatpush2.msra.mxu0 0.0
      %2862 = vmatprep.subr.mxu0 0.0
      %2863 = vmatpush2.msra.mxu0 0.0
      %2864 = vmatprep.subr.mxu0 0.0
      %2865 = vmatpush2.msra.mxu0 0.0
      %2866 = vmatprep.subr.mxu0 0.0
      %2867 = vmatpush2.msra.mxu0 0.0
      %2868 = vmatprep.subr.mxu0 0.0
      %2869 = vmatpush2.msra.mxu0 0.0
      %2870 = vmatprep.subr.mxu0 0.0
      %2871 = vmatpush2.msra.mxu0 0.0
      %2872 = vmatprep.subr.mxu0 0.0
      %2873 = vmatpush2.msra.mxu0 0.0
      %2874 = vmatprep.mubr.f32.mxu0 0.0
      %2875 = vmatmul.mubr.f32.gmra.mxu0 %v2779
      %v2876 = vpop.f32.mrf.mxu0
      %v2877 = vadd.f32 0.0, %v2876
      %v2878 = vpop.f32.mrf.mxu0
      %2879 = vmatprep.mubr.f32.mxu0 0.0
      %2880 = vmatmul.mubr.f32.gmra.mxu0 %v2780
      %v2881 = vpop.f32.mrf.mxu0
      %v2882 = vadd.f32 0.0, %v2881
      %v2883 = vpop.f32.mrf.mxu0
      %2884 = vmatprep.mubr.f32.mxu0 0.0
      %2885 = vmatmul.mubr.f32.gmra.mxu0 %v2781
      %v2886 = vpop.f32.mrf.mxu0
      %v2887 = vpop.f32.mrf.mxu0
      %2888 = vmatprep.mubr.f32.mxu0 0.0
      %2889 = vmatmul.mubr.f32.gmra.mxu0 %v2782
      %v2890 = vpop.f32.mrf.mxu0
      %v2891 = vadd.f32 0.0, %v2890
      %v2892 = vpop.f32.mrf.mxu0
      %2893 = vmatprep.mubr.f32.mxu0 0.0
      %2894 = vmatmul.mubr.f32.gmra.mxu0 %v2783
      %v2895 = vpop.f32.mrf.mxu0
      %v2896 = vadd.f32 0.0, %v2895
      %v2897 = vpop.f32.mrf.mxu0
      %2898 = vmatprep.mubr.f32.mxu0 0.0
      %2899 = vmatmul.mubr.f32.gmra.mxu0 %v2784
      %v2900 = vpop.f32.mrf.mxu0
      %v2901 = vpop.f32.mrf.mxu0
      %2902 = vmatprep.mubr.f32.mxu0 0.0
      %2903 = vmatmul.mubr.f32.gmra.mxu0 %v2785
      %v2904 = vpop.f32.mrf.mxu0
      %v2905 = vadd.f32 0.0, %v2904
      %v2906 = vpop.f32.mrf.mxu0
      %2907 = vmatprep.mubr.f32.mxu0 0.0
      %2908 = vmatmul.mubr.f32.gmra.mxu0 %v2786
      %v2909 = vpop.f32.mrf.mxu0
      %v2910 = vadd.f32 0.0, %v2909
      %v2911 = vpop.f32.mrf.mxu0
      %2912 = vmatprep.mubr.f32.mxu0 0.0
      %2913 = vmatmul.mubr.f32.gmra.mxu0 %v2787
      %v2914 = vpop.f32.mrf.mxu0
      %v2915 = vpop.f32.mrf.mxu0
      %2916 = vmatprep.mubr.f32.mxu0 0.0
      %2917 = vmatmul.mubr.f32.gmra.mxu0 %v2788
      %v2918 = vpop.f32.mrf.mxu0
      %v2919 = vadd.f32 0.0, %v2918
      %v2920 = vpop.f32.mrf.mxu0
      %2921 = vmatprep.mubr.f32.mxu0 0.0
      %2922 = vmatmul.mubr.f32.gmra.mxu0 %v2789
      %v2923 = vpop.f32.mrf.mxu0
      %v2924 = vadd.f32 0.0, %v2923
      %v2925 = vpop.f32.mrf.mxu0
      %2926 = vmatprep.mubr.f32.mxu0 0.0
      %2927 = vmatmul.mubr.f32.gmra.mxu0 %v2790
      %v2928 = vpop.f32.mrf.mxu0
      %v2929 = vpop.f32.mrf.mxu0
      %2930 = vmatprep.mubr.f32.mxu0 0.0
      %2931 = vmatmul.mubr.f32.gmra.mxu0 %v2791
      %v2932 = vpop.f32.mrf.mxu0
      %v2933 = vadd.f32 0.0, %v2932
      %v2934 = vpop.f32.mrf.mxu0
      %2935 = vmatprep.mubr.f32.mxu0 0.0
      %2936 = vmatmul.mubr.f32.gmra.mxu0 %v2792
      %v2937 = vpop.f32.mrf.mxu0
      %v2938 = vadd.f32 0.0, %v2937
      %v2939 = vpop.f32.mrf.mxu0
      %2940 = vmatprep.mubr.f32.mxu0 0.0
      %2941 = vmatmul.mubr.f32.gmra.mxu0 %v2793
      %v2942 = vpop.f32.mrf.mxu0
      %v2943 = vpop.f32.mrf.mxu0
      %2944 = vdwg.mxu0
      %v2945 = vadd.f32 %v2769, %v2877
      %v2946 = vadd.f32 %v2770, %v2882
      %v2947 = vadd.f32 %v2771, %v2891
      %v2948 = vadd.f32 %v2772, %v2896
      %v2949 = vadd.f32 %v2773, %v2905
      %v2950 = vadd.f32 %v2774, %v2910
      %v2951 = vadd.f32 %v2775, %v2919
      %v2952 = vadd.f32 %v2776, %v2924
      %v2953 = vadd.f32 %v2777, %v2933
      %v2954 = vadd.f32 %v2778, %v2938
      %v2955 = vld [vmem:[#allocation2 + $0xa8] sm:$0xff]
      %v2956 = vld [vmem:[#allocation2 + $0xb0] sm:$0xff]
      %v2957 = vld [vmem:[#allocation2 + $0xb8] sm:$0xff]
      %v2958 = vld [vmem:[#allocation2 + $0xc0] sm:$0xff]
      %v2959 = vld [vmem:[#allocation2 + $0xc8] sm:$0xff]
      %v2960 = vld [vmem:[#allocation2 + $0xd0] sm:$0xff]
      %v2961 = vld [vmem:[#allocation2 + $0xd8] sm:$0xff]
      %v2962 = vld [vmem:[#allocation2 + $0xe0] sm:$0xff]
      %v2963 = vld [vmem:[#allocation2 + $0xe8] sm:$0xff]
      %v2964 = vld [vmem:[#allocation2 + $0xf0] sm:$0xff]
      %v2965 = vld [vmem:[#allocation2 + $0xf8] sm:$0xff]
      %v2966 = vld [vmem:[#allocation2 + $0x100] sm:$0xff]
      %v2967 = vld [vmem:[#allocation2 + $0x108] sm:$0xff]
      %v2968 = vld [vmem:[#allocation2 + $0x110] sm:$0xff]
      %v2969 = vld [vmem:[#allocation2 + $0x118] sm:$0xff]
      %v2970 = vld [vmem:[%s1366] sm:$0xff]
      %v2971 = vld [vmem:[%s1366 + $0x8] sm:$0xff]
      %v2972 = vld [vmem:[%s1366 + $0x10] sm:$0xff]
      %v2973 = vld [vmem:[%s1366 + $0x18] sm:$0xff]
      %v2974 = vld [vmem:[%s1366 + $0x20] sm:$0xff]
      %v2975 = vld [vmem:[%s1366 + $0x28] sm:$0xff]
      %v2976 = vld [vmem:[%s1366 + $0x30] sm:$0xff]
      %v2977 = vld [vmem:[%s1366 + $0x38] sm:$0xff]
      %v2978 = vld [vmem:[%s1366 + $0x40] sm:$0xff]
      %v2979 = vld [vmem:[%s1366 + $0x48] sm:$0xff]
      %v2980 = vld [vmem:[%s1366 + $0x50] sm:$0xff]
      %v2981 = vld [vmem:[%s1366 + $0x58] sm:$0xff]
      %v2982 = vld [vmem:[%s1366 + $0x60] sm:$0xff]
      %v2983 = vld [vmem:[%s1366 + $0x68] sm:$0xff]
      %v2984 = vld [vmem:[%s1366 + $0x70] sm:$0xff]
      %v2985 = vld [vmem:[%s1366 + $0x78] sm:$0xff]
      %2986 = vmatprep.subr.mxu0 0.0
      %2987 = vmatpush1.msra.mxu0 %v2985
      %2988 = vmatprep.subr.mxu0 0.0
      %2989 = vmatpush1.msra.mxu0 %v2984
      %2990 = vmatprep.subr.mxu0 0.0
      %2991 = vmatpush1.msra.mxu0 %v2983
      %2992 = vmatprep.subr.mxu0 0.0
      %2993 = vmatpush1.msra.mxu0 %v2982
      %2994 = vmatprep.subr.mxu0 0.0
      %2995 = vmatpush1.msra.mxu0 %v2981
      %2996 = vmatprep.subr.mxu0 0.0
      %2997 = vmatpush1.msra.mxu0 %v2980
      %2998 = vmatprep.subr.mxu0 0.0
      %2999 = vmatpush1.msra.mxu0 %v2979
      %3000 = vmatprep.subr.mxu0 0.0
      %3001 = vmatpush1.msra.mxu0 %v2978
      %3002 = vmatprep.subr.mxu0 0.0
      %3003 = vmatpush1.msra.mxu0 %v2977
      %3004 = vmatprep.subr.mxu0 0.0
      %3005 = vmatpush1.msra.mxu0 %v2976
      %3006 = vmatprep.subr.mxu0 0.0
      %3007 = vmatpush1.msra.mxu0 %v2975
      %3008 = vmatprep.subr.mxu0 0.0
      %3009 = vmatpush1.msra.mxu0 %v2974
      %3010 = vmatprep.subr.mxu0 0.0
      %3011 = vmatpush1.msra.mxu0 %v2973
      %3012 = vmatprep.subr.mxu0 0.0
      %3013 = vmatpush1.msra.mxu0 %v2972
      %3014 = vmatprep.subr.mxu0 0.0
      %3015 = vmatpush1.msra.mxu0 %v2971
      %3016 = vmatprep.subr.mxu0 0.0
      %3017 = vmatpush1.msra.mxu0 %v2970
      %3018 = vmatprep.subr.mxu0 0.0
      %3019 = vmatpush2.msra.mxu0 0.0
      %3020 = vmatprep.subr.mxu0 0.0
      %3021 = vmatpush2.msra.mxu0 0.0
      %3022 = vmatprep.subr.mxu0 0.0
      %3023 = vmatpush2.msra.mxu0 0.0
      %3024 = vmatprep.subr.mxu0 0.0
      %3025 = vmatpush2.msra.mxu0 0.0
      %3026 = vmatprep.subr.mxu0 0.0
      %3027 = vmatpush2.msra.mxu0 0.0
      %3028 = vmatprep.subr.mxu0 0.0
      %3029 = vmatpush2.msra.mxu0 0.0
      %3030 = vmatprep.subr.mxu0 0.0
      %3031 = vmatpush2.msra.mxu0 0.0
      %3032 = vmatprep.subr.mxu0 0.0
      %3033 = vmatpush2.msra.mxu0 0.0
      %3034 = vmatprep.subr.mxu0 0.0
      %3035 = vmatpush2.msra.mxu0 0.0
      %3036 = vmatprep.subr.mxu0 0.0
      %3037 = vmatpush2.msra.mxu0 0.0
      %3038 = vmatprep.subr.mxu0 0.0
      %3039 = vmatpush2.msra.mxu0 0.0
      %3040 = vmatprep.subr.mxu0 0.0
      %3041 = vmatpush2.msra.mxu0 0.0
      %3042 = vmatprep.subr.mxu0 0.0
      %3043 = vmatpush2.msra.mxu0 0.0
      %3044 = vmatprep.subr.mxu0 0.0
      %3045 = vmatpush2.msra.mxu0 0.0
      %3046 = vmatprep.subr.mxu0 0.0
      %3047 = vmatpush2.msra.mxu0 0.0
      %3048 = vmatprep.subr.mxu0 0.0
      %3049 = vmatpush2.msra.mxu0 0.0
      %3050 = vmatprep.mubr.f32.mxu0 0.0
      %3051 = vmatmul.mubr.f32.gmra.mxu0 %v2955
      %v3052 = vpop.f32.mrf.mxu0
      %v3053 = vadd.f32 0.0, %v3052
      %v3054 = vpop.f32.mrf.mxu0
      %3055 = vmatprep.mubr.f32.mxu0 0.0
      %3056 = vmatmul.mubr.f32.gmra.mxu0 %v2956
      %v3057 = vpop.f32.mrf.mxu0
      %v3058 = vadd.f32 0.0, %v3057
      %v3059 = vpop.f32.mrf.mxu0
      %3060 = vmatprep.mubr.f32.mxu0 0.0
      %3061 = vmatmul.mubr.f32.gmra.mxu0 %v2957
      %v3062 = vpop.f32.mrf.mxu0
      %v3063 = vpop.f32.mrf.mxu0
      %3064 = vmatprep.mubr.f32.mxu0 0.0
      %3065 = vmatmul.mubr.f32.gmra.mxu0 %v2958
      %v3066 = vpop.f32.mrf.mxu0
      %v3067 = vadd.f32 0.0, %v3066
      %v3068 = vpop.f32.mrf.mxu0
      %3069 = vmatprep.mubr.f32.mxu0 0.0
      %3070 = vmatmul.mubr.f32.gmra.mxu0 %v2959
      %v3071 = vpop.f32.mrf.mxu0
      %v3072 = vadd.f32 0.0, %v3071
      %v3073 = vpop.f32.mrf.mxu0
      %3074 = vmatprep.mubr.f32.mxu0 0.0
      %3075 = vmatmul.mubr.f32.gmra.mxu0 %v2960
      %v3076 = vpop.f32.mrf.mxu0
      %v3077 = vpop.f32.mrf.mxu0
      %3078 = vmatprep.mubr.f32.mxu0 0.0
      %3079 = vmatmul.mubr.f32.gmra.mxu0 %v2961
      %v3080 = vpop.f32.mrf.mxu0
      %v3081 = vadd.f32 0.0, %v3080
      %v3082 = vpop.f32.mrf.mxu0
      %3083 = vmatprep.mubr.f32.mxu0 0.0
      %3084 = vmatmul.mubr.f32.gmra.mxu0 %v2962
      %v3085 = vpop.f32.mrf.mxu0
      %v3086 = vadd.f32 0.0, %v3085
      %v3087 = vpop.f32.mrf.mxu0
      %3088 = vmatprep.mubr.f32.mxu0 0.0
      %3089 = vmatmul.mubr.f32.gmra.mxu0 %v2963
      %v3090 = vpop.f32.mrf.mxu0
      %v3091 = vpop.f32.mrf.mxu0
      %3092 = vmatprep.mubr.f32.mxu0 0.0
      %3093 = vmatmul.mubr.f32.gmra.mxu0 %v2964
      %v3094 = vpop.f32.mrf.mxu0
      %v3095 = vadd.f32 0.0, %v3094
      %v3096 = vpop.f32.mrf.mxu0
      %3097 = vmatprep.mubr.f32.mxu0 0.0
      %3098 = vmatmul.mubr.f32.gmra.mxu0 %v2965
      %v3099 = vpop.f32.mrf.mxu0
      %v3100 = vadd.f32 0.0, %v3099
      %v3101 = vpop.f32.mrf.mxu0
      %3102 = vmatprep.mubr.f32.mxu0 0.0
      %3103 = vmatmul.mubr.f32.gmra.mxu0 %v2966
      %v3104 = vpop.f32.mrf.mxu0
      %v3105 = vpop.f32.mrf.mxu0
      %3106 = vmatprep.mubr.f32.mxu0 0.0
      %3107 = vmatmul.mubr.f32.gmra.mxu0 %v2967
      %v3108 = vpop.f32.mrf.mxu0
      %v3109 = vadd.f32 0.0, %v3108
      %v3110 = vpop.f32.mrf.mxu0
      %3111 = vmatprep.mubr.f32.mxu0 0.0
      %3112 = vmatmul.mubr.f32.gmra.mxu0 %v2968
      %v3113 = vpop.f32.mrf.mxu0
      %v3114 = vadd.f32 0.0, %v3113
      %v3115 = vpop.f32.mrf.mxu0
      %3116 = vmatprep.mubr.f32.mxu0 0.0
      %3117 = vmatmul.mubr.f32.gmra.mxu0 %v2969
      %v3118 = vpop.f32.mrf.mxu0
      %v3119 = vpop.f32.mrf.mxu0
      %3120 = vdwg.mxu0
      %v3121 = vadd.f32 %v2945, %v3053
      %v3122 = vadd.f32 %v2946, %v3058
      %v3123 = vadd.f32 %v2947, %v3067
      %v3124 = vadd.f32 %v2948, %v3072
      %v3125 = vadd.f32 %v2949, %v3081
      %v3126 = vadd.f32 %v2950, %v3086
      %v3127 = vadd.f32 %v2951, %v3095
      %v3128 = vadd.f32 %v2952, %v3100
      %v3129 = vadd.f32 %v2953, %v3109
      %v3130 = vadd.f32 %v2954, %v3114
      %v3131 = vld [vmem:[#allocation2 + $0xa9] sm:$0xff]
      %v3132 = vld [vmem:[#allocation2 + $0xb1] sm:$0xff]
      %v3133 = vld [vmem:[#allocation2 + $0xb9] sm:$0xff]
      %v3134 = vld [vmem:[#allocation2 + $0xc1] sm:$0xff]
      %v3135 = vld [vmem:[#allocation2 + $0xc9] sm:$0xff]
      %v3136 = vld [vmem:[#allocation2 + $0xd1] sm:$0xff]
      %v3137 = vld [vmem:[#allocation2 + $0xd9] sm:$0xff]
      %v3138 = vld [vmem:[#allocation2 + $0xe1] sm:$0xff]
      %v3139 = vld [vmem:[#allocation2 + $0xe9] sm:$0xff]
      %v3140 = vld [vmem:[#allocation2 + $0xf1] sm:$0xff]
      %v3141 = vld [vmem:[#allocation2 + $0xf9] sm:$0xff]
      %v3142 = vld [vmem:[#allocation2 + $0x101] sm:$0xff]
      %v3143 = vld [vmem:[#allocation2 + $0x109] sm:$0xff]
      %v3144 = vld [vmem:[#allocation2 + $0x111] sm:$0xff]
      %v3145 = vld [vmem:[#allocation2 + $0x119] sm:$0xff]
      %v3146 = vld [vmem:[%s1543] sm:$0xff]
      %v3147 = vld [vmem:[%s1543 + $0x8] sm:$0xff]
      %v3148 = vld [vmem:[%s1543 + $0x10] sm:$0xff]
      %v3149 = vld [vmem:[%s1543 + $0x18] sm:$0xff]
      %v3150 = vld [vmem:[%s1543 + $0x20] sm:$0xff]
      %v3151 = vld [vmem:[%s1543 + $0x28] sm:$0xff]
      %v3152 = vld [vmem:[%s1543 + $0x30] sm:$0xff]
      %v3153 = vld [vmem:[%s1543 + $0x38] sm:$0xff]
      %v3154 = vld [vmem:[%s1543 + $0x40] sm:$0xff]
      %v3155 = vld [vmem:[%s1543 + $0x48] sm:$0xff]
      %v3156 = vld [vmem:[%s1543 + $0x50] sm:$0xff]
      %v3157 = vld [vmem:[%s1543 + $0x58] sm:$0xff]
      %v3158 = vld [vmem:[%s1543 + $0x60] sm:$0xff]
      %v3159 = vld [vmem:[%s1543 + $0x68] sm:$0xff]
      %v3160 = vld [vmem:[%s1543 + $0x70] sm:$0xff]
      %v3161 = vld [vmem:[%s1543 + $0x78] sm:$0xff]
      %3162 = vmatprep.subr.mxu0 0.0
      %3163 = vmatpush1.msra.mxu0 %v3161
      %3164 = vmatprep.subr.mxu0 0.0
      %3165 = vmatpush1.msra.mxu0 %v3160
      %3166 = vmatprep.subr.mxu0 0.0
      %3167 = vmatpush1.msra.mxu0 %v3159
      %3168 = vmatprep.subr.mxu0 0.0
      %3169 = vmatpush1.msra.mxu0 %v3158
      %3170 = vmatprep.subr.mxu0 0.0
      %3171 = vmatpush1.msra.mxu0 %v3157
      %3172 = vmatprep.subr.mxu0 0.0
      %3173 = vmatpush1.msra.mxu0 %v3156
      %3174 = vmatprep.subr.mxu0 0.0
      %3175 = vmatpush1.msra.mxu0 %v3155
      %3176 = vmatprep.subr.mxu0 0.0
      %3177 = vmatpush1.msra.mxu0 %v3154
      %3178 = vmatprep.subr.mxu0 0.0
      %3179 = vmatpush1.msra.mxu0 %v3153
      %3180 = vmatprep.subr.mxu0 0.0
      %3181 = vmatpush1.msra.mxu0 %v3152
      %3182 = vmatprep.subr.mxu0 0.0
      %3183 = vmatpush1.msra.mxu0 %v3151
      %3184 = vmatprep.subr.mxu0 0.0
      %3185 = vmatpush1.msra.mxu0 %v3150
      %3186 = vmatprep.subr.mxu0 0.0
      %3187 = vmatpush1.msra.mxu0 %v3149
      %3188 = vmatprep.subr.mxu0 0.0
      %3189 = vmatpush1.msra.mxu0 %v3148
      %3190 = vmatprep.subr.mxu0 0.0
      %3191 = vmatpush1.msra.mxu0 %v3147
      %3192 = vmatprep.subr.mxu0 0.0
      %3193 = vmatpush1.msra.mxu0 %v3146
      %3194 = vmatprep.subr.mxu0 0.0
      %3195 = vmatpush2.msra.mxu0 0.0
      %3196 = vmatprep.subr.mxu0 0.0
      %3197 = vmatpush2.msra.mxu0 0.0
      %3198 = vmatprep.subr.mxu0 0.0
      %3199 = vmatpush2.msra.mxu0 0.0
      %3200 = vmatprep.subr.mxu0 0.0
      %3201 = vmatpush2.msra.mxu0 0.0
      %3202 = vmatprep.subr.mxu0 0.0
      %3203 = vmatpush2.msra.mxu0 0.0
      %3204 = vmatprep.subr.mxu0 0.0
      %3205 = vmatpush2.msra.mxu0 0.0
      %3206 = vmatprep.subr.mxu0 0.0
      %3207 = vmatpush2.msra.mxu0 0.0
      %3208 = vmatprep.subr.mxu0 0.0
      %3209 = vmatpush2.msra.mxu0 0.0
      %3210 = vmatprep.subr.mxu0 0.0
      %3211 = vmatpush2.msra.mxu0 0.0
      %3212 = vmatprep.subr.mxu0 0.0
      %3213 = vmatpush2.msra.mxu0 0.0
      %3214 = vmatprep.subr.mxu0 0.0
      %3215 = vmatpush2.msra.mxu0 0.0
      %3216 = vmatprep.subr.mxu0 0.0
      %3217 = vmatpush2.msra.mxu0 0.0
      %3218 = vmatprep.subr.mxu0 0.0
      %3219 = vmatpush2.msra.mxu0 0.0
      %3220 = vmatprep.subr.mxu0 0.0
      %3221 = vmatpush2.msra.mxu0 0.0
      %3222 = vmatprep.subr.mxu0 0.0
      %3223 = vmatpush2.msra.mxu0 0.0
      %3224 = vmatprep.subr.mxu0 0.0
      %3225 = vmatpush2.msra.mxu0 0.0
      %3226 = vmatprep.mubr.f32.mxu0 0.0
      %3227 = vmatmul.mubr.f32.gmra.mxu0 %v3131
      %v3228 = vpop.f32.mrf.mxu0
      %v3229 = vadd.f32 0.0, %v3228
      %v3230 = vpop.f32.mrf.mxu0
      %3231 = vmatprep.mubr.f32.mxu0 0.0
      %3232 = vmatmul.mubr.f32.gmra.mxu0 %v3132
      %v3233 = vpop.f32.mrf.mxu0
      %v3234 = vadd.f32 0.0, %v3233
      %v3235 = vpop.f32.mrf.mxu0
      %3236 = vmatprep.mubr.f32.mxu0 0.0
      %3237 = vmatmul.mubr.f32.gmra.mxu0 %v3133
      %v3238 = vpop.f32.mrf.mxu0
      %v3239 = vpop.f32.mrf.mxu0
      %3240 = vmatprep.mubr.f32.mxu0 0.0
      %3241 = vmatmul.mubr.f32.gmra.mxu0 %v3134
      %v3242 = vpop.f32.mrf.mxu0
      %v3243 = vadd.f32 0.0, %v3242
      %v3244 = vpop.f32.mrf.mxu0
      %3245 = vmatprep.mubr.f32.mxu0 0.0
      %3246 = vmatmul.mubr.f32.gmra.mxu0 %v3135
      %v3247 = vpop.f32.mrf.mxu0
      %v3248 = vadd.f32 0.0, %v3247
      %v3249 = vpop.f32.mrf.mxu0
      %3250 = vmatprep.mubr.f32.mxu0 0.0
      %3251 = vmatmul.mubr.f32.gmra.mxu0 %v3136
      %v3252 = vpop.f32.mrf.mxu0
      %v3253 = vpop.f32.mrf.mxu0
      %3254 = vmatprep.mubr.f32.mxu0 0.0
      %3255 = vmatmul.mubr.f32.gmra.mxu0 %v3137
      %v3256 = vpop.f32.mrf.mxu0
      %v3257 = vadd.f32 0.0, %v3256
      %v3258 = vpop.f32.mrf.mxu0
      %3259 = vmatprep.mubr.f32.mxu0 0.0
      %3260 = vmatmul.mubr.f32.gmra.mxu0 %v3138
      %v3261 = vpop.f32.mrf.mxu0
      %v3262 = vadd.f32 0.0, %v3261
      %v3263 = vpop.f32.mrf.mxu0
      %3264 = vmatprep.mubr.f32.mxu0 0.0
      %3265 = vmatmul.mubr.f32.gmra.mxu0 %v3139
      %v3266 = vpop.f32.mrf.mxu0
      %v3267 = vpop.f32.mrf.mxu0
      %3268 = vmatprep.mubr.f32.mxu0 0.0
      %3269 = vmatmul.mubr.f32.gmra.mxu0 %v3140
      %v3270 = vpop.f32.mrf.mxu0
      %v3271 = vadd.f32 0.0, %v3270
      %v3272 = vpop.f32.mrf.mxu0
      %3273 = vmatprep.mubr.f32.mxu0 0.0
      %3274 = vmatmul.mubr.f32.gmra.mxu0 %v3141
      %v3275 = vpop.f32.mrf.mxu0
      %v3276 = vadd.f32 0.0, %v3275
      %v3277 = vpop.f32.mrf.mxu0
      %3278 = vmatprep.mubr.f32.mxu0 0.0
      %3279 = vmatmul.mubr.f32.gmra.mxu0 %v3142
      %v3280 = vpop.f32.mrf.mxu0
      %v3281 = vpop.f32.mrf.mxu0
      %3282 = vmatprep.mubr.f32.mxu0 0.0
      %3283 = vmatmul.mubr.f32.gmra.mxu0 %v3143
      %v3284 = vpop.f32.mrf.mxu0
      %v3285 = vadd.f32 0.0, %v3284
      %v3286 = vpop.f32.mrf.mxu0
      %3287 = vmatprep.mubr.f32.mxu0 0.0
      %3288 = vmatmul.mubr.f32.gmra.mxu0 %v3144
      %v3289 = vpop.f32.mrf.mxu0
      %v3290 = vadd.f32 0.0, %v3289
      %v3291 = vpop.f32.mrf.mxu0
      %3292 = vmatprep.mubr.f32.mxu0 0.0
      %3293 = vmatmul.mubr.f32.gmra.mxu0 %v3145
      %v3294 = vpop.f32.mrf.mxu0
      %v3295 = vpop.f32.mrf.mxu0
      %3296 = vdwg.mxu0
      %v3297 = vadd.f32 %v3121, %v3229
      %v3298 = vadd.f32 %v3122, %v3234
      %v3299 = vadd.f32 %v3123, %v3243
      %v3300 = vadd.f32 %v3124, %v3248
      %v3301 = vadd.f32 %v3125, %v3257
      %v3302 = vadd.f32 %v3126, %v3262
      %v3303 = vadd.f32 %v3127, %v3271
      %v3304 = vadd.f32 %v3128, %v3276
      %v3305 = vadd.f32 %v3129, %v3285
      %v3306 = vadd.f32 %v3130, %v3290
      %v3307 = vld [vmem:[#allocation2 + $0xaa] sm:$0xff]
      %v3308 = vld [vmem:[#allocation2 + $0xb2] sm:$0xff]
      %v3309 = vld [vmem:[#allocation2 + $0xba] sm:$0xff]
      %v3310 = vld [vmem:[#allocation2 + $0xc2] sm:$0xff]
      %v3311 = vld [vmem:[#allocation2 + $0xca] sm:$0xff]
      %v3312 = vld [vmem:[#allocation2 + $0xd2] sm:$0xff]
      %v3313 = vld [vmem:[#allocation2 + $0xda] sm:$0xff]
      %v3314 = vld [vmem:[#allocation2 + $0xe2] sm:$0xff]
      %v3315 = vld [vmem:[#allocation2 + $0xea] sm:$0xff]
      %v3316 = vld [vmem:[#allocation2 + $0xf2] sm:$0xff]
      %v3317 = vld [vmem:[#allocation2 + $0xfa] sm:$0xff]
      %v3318 = vld [vmem:[#allocation2 + $0x102] sm:$0xff]
      %v3319 = vld [vmem:[#allocation2 + $0x10a] sm:$0xff]
      %v3320 = vld [vmem:[#allocation2 + $0x112] sm:$0xff]
      %v3321 = vld [vmem:[#allocation2 + $0x11a] sm:$0xff]
      %v3322 = vld [vmem:[%s1720] sm:$0xff]
      %v3323 = vld [vmem:[%s1720 + $0x8] sm:$0xff]
      %v3324 = vld [vmem:[%s1720 + $0x10] sm:$0xff]
      %v3325 = vld [vmem:[%s1720 + $0x18] sm:$0xff]
      %v3326 = vld [vmem:[%s1720 + $0x20] sm:$0xff]
      %v3327 = vld [vmem:[%s1720 + $0x28] sm:$0xff]
      %v3328 = vld [vmem:[%s1720 + $0x30] sm:$0xff]
      %v3329 = vld [vmem:[%s1720 + $0x38] sm:$0xff]
      %v3330 = vld [vmem:[%s1720 + $0x40] sm:$0xff]
      %v3331 = vld [vmem:[%s1720 + $0x48] sm:$0xff]
      %v3332 = vld [vmem:[%s1720 + $0x50] sm:$0xff]
      %v3333 = vld [vmem:[%s1720 + $0x58] sm:$0xff]
      %v3334 = vld [vmem:[%s1720 + $0x60] sm:$0xff]
      %v3335 = vld [vmem:[%s1720 + $0x68] sm:$0xff]
      %v3336 = vld [vmem:[%s1720 + $0x70] sm:$0xff]
      %v3337 = vld [vmem:[%s1720 + $0x78] sm:$0xff]
      %3338 = vmatprep.subr.mxu0 0.0
      %3339 = vmatpush1.msra.mxu0 %v3337
      %3340 = vmatprep.subr.mxu0 0.0
      %3341 = vmatpush1.msra.mxu0 %v3336
      %3342 = vmatprep.subr.mxu0 0.0
      %3343 = vmatpush1.msra.mxu0 %v3335
      %3344 = vmatprep.subr.mxu0 0.0
      %3345 = vmatpush1.msra.mxu0 %v3334
      %3346 = vmatprep.subr.mxu0 0.0
      %3347 = vmatpush1.msra.mxu0 %v3333
      %3348 = vmatprep.subr.mxu0 0.0
      %3349 = vmatpush1.msra.mxu0 %v3332
      %3350 = vmatprep.subr.mxu0 0.0
      %3351 = vmatpush1.msra.mxu0 %v3331
      %3352 = vmatprep.subr.mxu0 0.0
      %3353 = vmatpush1.msra.mxu0 %v3330
      %3354 = vmatprep.subr.mxu0 0.0
      %3355 = vmatpush1.msra.mxu0 %v3329
      %3356 = vmatprep.subr.mxu0 0.0
      %3357 = vmatpush1.msra.mxu0 %v3328
      %3358 = vmatprep.subr.mxu0 0.0
      %3359 = vmatpush1.msra.mxu0 %v3327
      %3360 = vmatprep.subr.mxu0 0.0
      %3361 = vmatpush1.msra.mxu0 %v3326
      %3362 = vmatprep.subr.mxu0 0.0
      %3363 = vmatpush1.msra.mxu0 %v3325
      %3364 = vmatprep.subr.mxu0 0.0
      %3365 = vmatpush1.msra.mxu0 %v3324
      %3366 = vmatprep.subr.mxu0 0.0
      %3367 = vmatpush1.msra.mxu0 %v3323
      %3368 = vmatprep.subr.mxu0 0.0
      %3369 = vmatpush1.msra.mxu0 %v3322
      %3370 = vmatprep.subr.mxu0 0.0
      %3371 = vmatpush2.msra.mxu0 0.0
      %3372 = vmatprep.subr.mxu0 0.0
      %3373 = vmatpush2.msra.mxu0 0.0
      %3374 = vmatprep.subr.mxu0 0.0
      %3375 = vmatpush2.msra.mxu0 0.0
      %3376 = vmatprep.subr.mxu0 0.0
      %3377 = vmatpush2.msra.mxu0 0.0
      %3378 = vmatprep.subr.mxu0 0.0
      %3379 = vmatpush2.msra.mxu0 0.0
      %3380 = vmatprep.subr.mxu0 0.0
      %3381 = vmatpush2.msra.mxu0 0.0
      %3382 = vmatprep.subr.mxu0 0.0
      %3383 = vmatpush2.msra.mxu0 0.0
      %3384 = vmatprep.subr.mxu0 0.0
      %3385 = vmatpush2.msra.mxu0 0.0
      %3386 = vmatprep.subr.mxu0 0.0
      %3387 = vmatpush2.msra.mxu0 0.0
      %3388 = vmatprep.subr.mxu0 0.0
      %3389 = vmatpush2.msra.mxu0 0.0
      %3390 = vmatprep.subr.mxu0 0.0
      %3391 = vmatpush2.msra.mxu0 0.0
      %3392 = vmatprep.subr.mxu0 0.0
      %3393 = vmatpush2.msra.mxu0 0.0
      %3394 = vmatprep.subr.mxu0 0.0
      %3395 = vmatpush2.msra.mxu0 0.0
      %3396 = vmatprep.subr.mxu0 0.0
      %3397 = vmatpush2.msra.mxu0 0.0
      %3398 = vmatprep.subr.mxu0 0.0
      %3399 = vmatpush2.msra.mxu0 0.0
      %3400 = vmatprep.subr.mxu0 0.0
      %3401 = vmatpush2.msra.mxu0 0.0
      %3402 = vmatprep.mubr.f32.mxu0 0.0
      %3403 = vmatmul.mubr.f32.gmra.mxu0 %v3307
      %v3404 = vpop.f32.mrf.mxu0
      %v3405 = vadd.f32 0.0, %v3404
      %v3406 = vpop.f32.mrf.mxu0
      %3407 = vmatprep.mubr.f32.mxu0 0.0
      %3408 = vmatmul.mubr.f32.gmra.mxu0 %v3308
      %v3409 = vpop.f32.mrf.mxu0
      %v3410 = vadd.f32 0.0, %v3409
      %v3411 = vpop.f32.mrf.mxu0
      %3412 = vmatprep.mubr.f32.mxu0 0.0
      %3413 = vmatmul.mubr.f32.gmra.mxu0 %v3309
      %v3414 = vpop.f32.mrf.mxu0
      %v3415 = vpop.f32.mrf.mxu0
      %3416 = vmatprep.mubr.f32.mxu0 0.0
      %3417 = vmatmul.mubr.f32.gmra.mxu0 %v3310
      %v3418 = vpop.f32.mrf.mxu0
      %v3419 = vadd.f32 0.0, %v3418
      %v3420 = vpop.f32.mrf.mxu0
      %3421 = vmatprep.mubr.f32.mxu0 0.0
      %3422 = vmatmul.mubr.f32.gmra.mxu0 %v3311
      %v3423 = vpop.f32.mrf.mxu0
      %v3424 = vadd.f32 0.0, %v3423
      %v3425 = vpop.f32.mrf.mxu0
      %3426 = vmatprep.mubr.f32.mxu0 0.0
      %3427 = vmatmul.mubr.f32.gmra.mxu0 %v3312
      %v3428 = vpop.f32.mrf.mxu0
      %v3429 = vpop.f32.mrf.mxu0
      %3430 = vmatprep.mubr.f32.mxu0 0.0
      %3431 = vmatmul.mubr.f32.gmra.mxu0 %v3313
      %v3432 = vpop.f32.mrf.mxu0
      %v3433 = vadd.f32 0.0, %v3432
      %v3434 = vpop.f32.mrf.mxu0
      %3435 = vmatprep.mubr.f32.mxu0 0.0
      %3436 = vmatmul.mubr.f32.gmra.mxu0 %v3314
      %v3437 = vpop.f32.mrf.mxu0
      %v3438 = vadd.f32 0.0, %v3437
      %v3439 = vpop.f32.mrf.mxu0
      %3440 = vmatprep.mubr.f32.mxu0 0.0
      %3441 = vmatmul.mubr.f32.gmra.mxu0 %v3315
      %v3442 = vpop.f32.mrf.mxu0
      %v3443 = vpop.f32.mrf.mxu0
      %3444 = vmatprep.mubr.f32.mxu0 0.0
      %3445 = vmatmul.mubr.f32.gmra.mxu0 %v3316
      %v3446 = vpop.f32.mrf.mxu0
      %v3447 = vadd.f32 0.0, %v3446
      %v3448 = vpop.f32.mrf.mxu0
      %3449 = vmatprep.mubr.f32.mxu0 0.0
      %3450 = vmatmul.mubr.f32.gmra.mxu0 %v3317
      %v3451 = vpop.f32.mrf.mxu0
      %v3452 = vadd.f32 0.0, %v3451
      %v3453 = vpop.f32.mrf.mxu0
      %3454 = vmatprep.mubr.f32.mxu0 0.0
      %3455 = vmatmul.mubr.f32.gmra.mxu0 %v3318
      %v3456 = vpop.f32.mrf.mxu0
      %v3457 = vpop.f32.mrf.mxu0
      %3458 = vmatprep.mubr.f32.mxu0 0.0
      %3459 = vmatmul.mubr.f32.gmra.mxu0 %v3319
      %v3460 = vpop.f32.mrf.mxu0
      %v3461 = vadd.f32 0.0, %v3460
      %v3462 = vpop.f32.mrf.mxu0
      %3463 = vmatprep.mubr.f32.mxu0 0.0
      %3464 = vmatmul.mubr.f32.gmra.mxu0 %v3320
      %v3465 = vpop.f32.mrf.mxu0
      %v3466 = vadd.f32 0.0, %v3465
      %v3467 = vpop.f32.mrf.mxu0
      %3468 = vmatprep.mubr.f32.mxu0 0.0
      %3469 = vmatmul.mubr.f32.gmra.mxu0 %v3321
      %v3470 = vpop.f32.mrf.mxu0
      %v3471 = vpop.f32.mrf.mxu0
      %3472 = vdwg.mxu0
      %v3473 = vadd.f32 %v3297, %v3405
      %v3474 = vadd.f32 %v3298, %v3410
      %v3475 = vadd.f32 %v3299, %v3419
      %v3476 = vadd.f32 %v3300, %v3424
      %v3477 = vadd.f32 %v3301, %v3433
      %v3478 = vadd.f32 %v3302, %v3438
      %v3479 = vadd.f32 %v3303, %v3447
      %v3480 = vadd.f32 %v3304, %v3452
      %v3481 = vadd.f32 %v3305, %v3461
      %v3482 = vadd.f32 %v3306, %v3466
      %v3483 = vadd.f32 %v3473, %v1886
      %v3484 = vadd.f32 %v3474, %v1886
      %v3485 = vadd.f32 %v3475, %v1886
      %v3486 = vadd.f32 %v3476, %v1886
      %v3487 = vadd.f32 %v3477, %v1886
      %v3488 = vadd.f32 %v3478, %v1886
      %v3489 = vadd.f32 %v3479, %v1886
      %v3490 = vadd.f32 %v3480, %v1886
      %v3491 = vadd.f32 %v3481, %v1886
      %v3492 = vadd.f32 %v3482, %v1886
      %v3493 = vmax.f32 %v3483, 0.0
      %v3494 = vmax.f32 %v3484, 0.0
      %v3495 = vmax.f32 %v3485, 0.0
      %v3496 = vmax.f32 %v3486, 0.0
      %v3497 = vmax.f32 %v3487, 0.0
      %v3498 = vmax.f32 %v3488, 0.0
      %v3499 = vmax.f32 %v3489, 0.0
      %v3500 = vmax.f32 %v3490, 0.0
      %v3501 = vmax.f32 %v3491, 0.0
      %v3502 = vmax.f32 %v3492, 0.0
      %s3503 = scalar_lea.vmem %s148, 80
      %3504 = vst.msk [vmem:[%s3503] sm:$0xff] %vm1908, %v3493
      %3505 = vst.msk [vmem:[%s3503 + $0x8] sm:$0xff] %vm1908, %v3494
      %3506 = vst.msk [vmem:[%s3503 + $0x10] sm:$0xff] %vm1908, %v3495
      %3507 = vst.msk [vmem:[%s3503 + $0x18] sm:$0xff] %vm1908, %v3496
      %3508 = vst.msk [vmem:[%s3503 + $0x20] sm:$0xff] %vm1908, %v3497
      %3509 = vst.msk [vmem:[%s3503 + $0x28] sm:$0xff] %vm1908, %v3498
      %3510 = vst.msk [vmem:[%s3503 + $0x30] sm:$0xff] %vm1908, %v3499
      %3511 = vst.msk [vmem:[%s3503 + $0x38] sm:$0xff] %vm1908, %v3500
      %3512 = vst.msk [vmem:[%s3503 + $0x40] sm:$0xff] %vm1908, %v3501
      %3513 = vst.msk [vmem:[%s3503 + $0x48] sm:$0xff] %vm1908, %v3502
      %v3514 = vld [vmem:[#allocation2 + $0xf0] sm:$0xff]
      %v3515 = vld [vmem:[#allocation2 + $0xf8] sm:$0xff]
      %v3516 = vld [vmem:[#allocation2 + $0x100] sm:$0xff]
      %v3517 = vld [vmem:[#allocation2 + $0x108] sm:$0xff]
      %v3518 = vld [vmem:[#allocation2 + $0x110] sm:$0xff]
      %v3519 = vld [vmem:[#allocation2 + $0x118] sm:$0xff]
      %v3520 = vld [vmem:[#allocation2 + $0x120] sm:$0xff]
      %v3521 = vld [vmem:[#allocation2 + $0x128] sm:$0xff]
      %v3522 = vld [vmem:[#allocation2 + $0x130] sm:$0xff]
      %v3523 = vld [vmem:[#allocation2 + $0x138] sm:$0xff]
      %v3524 = vld [vmem:[#allocation2 + $0x140] sm:$0xff]
      %v3525 = vld [vmem:[#allocation2 + $0x148] sm:$0xff]
      %v3526 = vld [vmem:[#allocation2 + $0x150] sm:$0xff]
      %v3527 = vld [vmem:[#allocation2 + $0x158] sm:$0xff]
      %v3528 = vld [vmem:[#allocation2 + $0x160] sm:$0xff]
      %v3529 = vld [vmem:[%s1] sm:$0xff]
      %v3530 = vld [vmem:[%s1 + $0x8] sm:$0xff]
      %v3531 = vld [vmem:[%s1 + $0x10] sm:$0xff]
      %v3532 = vld [vmem:[%s1 + $0x18] sm:$0xff]
      %v3533 = vld [vmem:[%s1 + $0x20] sm:$0xff]
      %v3534 = vld [vmem:[%s1 + $0x28] sm:$0xff]
      %v3535 = vld [vmem:[%s1 + $0x30] sm:$0xff]
      %v3536 = vld [vmem:[%s1 + $0x38] sm:$0xff]
      %v3537 = vld [vmem:[%s1 + $0x40] sm:$0xff]
      %v3538 = vld [vmem:[%s1 + $0x48] sm:$0xff]
      %v3539 = vld [vmem:[%s1 + $0x50] sm:$0xff]
      %v3540 = vld [vmem:[%s1 + $0x58] sm:$0xff]
      %v3541 = vld [vmem:[%s1 + $0x60] sm:$0xff]
      %v3542 = vld [vmem:[%s1 + $0x68] sm:$0xff]
      %v3543 = vld [vmem:[%s1 + $0x70] sm:$0xff]
      %v3544 = vld [vmem:[%s1 + $0x78] sm:$0xff]
      %v3545 = vld [vmem:[#allocation2 + $0xf1] sm:$0xff]
      %v3546 = vld [vmem:[#allocation2 + $0xf9] sm:$0xff]
      %v3547 = vld [vmem:[#allocation2 + $0x101] sm:$0xff]
      %v3548 = vld [vmem:[#allocation2 + $0x109] sm:$0xff]
      %v3549 = vld [vmem:[#allocation2 + $0x111] sm:$0xff]
      %v3550 = vld [vmem:[#allocation2 + $0x119] sm:$0xff]
      %v3551 = vld [vmem:[#allocation2 + $0x121] sm:$0xff]
      %v3552 = vld [vmem:[#allocation2 + $0x129] sm:$0xff]
      %v3553 = vld [vmem:[#allocation2 + $0x131] sm:$0xff]
      %v3554 = vld [vmem:[#allocation2 + $0x139] sm:$0xff]
      %v3555 = vld [vmem:[#allocation2 + $0x141] sm:$0xff]
      %v3556 = vld [vmem:[#allocation2 + $0x149] sm:$0xff]
      %v3557 = vld [vmem:[#allocation2 + $0x151] sm:$0xff]
      %v3558 = vld [vmem:[#allocation2 + $0x159] sm:$0xff]
      %v3559 = vld [vmem:[#allocation2 + $0x161] sm:$0xff]
      %v3560 = vld [vmem:[%s356] sm:$0xff]
      %v3561 = vld [vmem:[%s356 + $0x8] sm:$0xff]
      %v3562 = vld [vmem:[%s356 + $0x10] sm:$0xff]
      %v3563 = vld [vmem:[%s356 + $0x18] sm:$0xff]
      %v3564 = vld [vmem:[%s356 + $0x20] sm:$0xff]
      %v3565 = vld [vmem:[%s356 + $0x28] sm:$0xff]
      %v3566 = vld [vmem:[%s356 + $0x30] sm:$0xff]
      %v3567 = vld [vmem:[%s356 + $0x38] sm:$0xff]
      %v3568 = vld [vmem:[%s356 + $0x40] sm:$0xff]
      %v3569 = vld [vmem:[%s356 + $0x48] sm:$0xff]
      %v3570 = vld [vmem:[%s356 + $0x50] sm:$0xff]
      %v3571 = vld [vmem:[%s356 + $0x58] sm:$0xff]
      %v3572 = vld [vmem:[%s356 + $0x60] sm:$0xff]
      %v3573 = vld [vmem:[%s356 + $0x68] sm:$0xff]
      %v3574 = vld [vmem:[%s356 + $0x70] sm:$0xff]
      %v3575 = vld [vmem:[%s356 + $0x78] sm:$0xff]
      %3576 = vmatprep.subr.mxu0 0.0
      %3577 = vmatpush1.msra.mxu0 %v3575
      %3578 = vmatprep.subr.mxu0 0.0
      %3579 = vmatpush1.msra.mxu0 %v3574
      %3580 = vmatprep.subr.mxu0 0.0
      %3581 = vmatpush1.msra.mxu0 %v3573
      %3582 = vmatprep.subr.mxu0 0.0
      %3583 = vmatpush1.msra.mxu0 %v3572
      %3584 = vmatprep.subr.mxu0 0.0
      %3585 = vmatpush1.msra.mxu0 %v3571
      %3586 = vmatprep.subr.mxu0 0.0
      %3587 = vmatpush1.msra.mxu0 %v3570
      %3588 = vmatprep.subr.mxu0 0.0
      %3589 = vmatpush1.msra.mxu0 %v3569
      %3590 = vmatprep.subr.mxu0 0.0
      %3591 = vmatpush1.msra.mxu0 %v3568
      %3592 = vmatprep.subr.mxu0 0.0
      %3593 = vmatpush1.msra.mxu0 %v3567
      %3594 = vmatprep.subr.mxu0 0.0
      %3595 = vmatpush1.msra.mxu0 %v3566
      %3596 = vmatprep.subr.mxu0 0.0
      %3597 = vmatpush1.msra.mxu0 %v3565
      %3598 = vmatprep.subr.mxu0 0.0
      %3599 = vmatpush1.msra.mxu0 %v3564
      %3600 = vmatprep.subr.mxu0 0.0
      %3601 = vmatpush1.msra.mxu0 %v3563
      %3602 = vmatprep.subr.mxu0 0.0
      %3603 = vmatpush1.msra.mxu0 %v3562
      %3604 = vmatprep.subr.mxu0 0.0
      %3605 = vmatpush1.msra.mxu0 %v3561
      %3606 = vmatprep.subr.mxu0 0.0
      %3607 = vmatpush1.msra.mxu0 %v3560
      %3608 = vmatprep.subr.mxu0 0.0
      %3609 = vmatpush2.msra.mxu0 0.0
      %3610 = vmatprep.subr.mxu0 0.0
      %3611 = vmatpush2.msra.mxu0 0.0
      %3612 = vmatprep.subr.mxu0 0.0
      %3613 = vmatpush2.msra.mxu0 0.0
      %3614 = vmatprep.subr.mxu0 0.0
      %3615 = vmatpush2.msra.mxu0 0.0
      %3616 = vmatprep.subr.mxu0 0.0
      %3617 = vmatpush2.msra.mxu0 0.0
      %3618 = vmatprep.subr.mxu0 0.0
      %3619 = vmatpush2.msra.mxu0 0.0
      %3620 = vmatprep.subr.mxu0 0.0
      %3621 = vmatpush2.msra.mxu0 0.0
      %3622 = vmatprep.subr.mxu0 0.0
      %3623 = vmatpush2.msra.mxu0 0.0
      %3624 = vmatprep.subr.mxu0 0.0
      %3625 = vmatpush2.msra.mxu0 0.0
      %3626 = vmatprep.subr.mxu0 0.0
      %3627 = vmatpush2.msra.mxu0 0.0
      %3628 = vmatprep.subr.mxu0 0.0
      %3629 = vmatpush2.msra.mxu0 0.0
      %3630 = vmatprep.subr.mxu0 0.0
      %3631 = vmatpush2.msra.mxu0 0.0
      %3632 = vmatprep.subr.mxu0 0.0
      %3633 = vmatpush2.msra.mxu0 0.0
      %3634 = vmatprep.subr.mxu0 0.0
      %3635 = vmatpush2.msra.mxu0 0.0
      %3636 = vmatprep.subr.mxu0 0.0
      %3637 = vmatpush2.msra.mxu0 0.0
      %3638 = vmatprep.subr.mxu0 0.0
      %3639 = vmatpush2.msra.mxu0 0.0
      %3640 = vmatprep.mubr.f32.mxu0 0.0
      %3641 = vmatmul.mubr.f32.gmra.mxu0 %v3545
      %v3642 = vpop.f32.mrf.mxu0
      %v3643 = vadd.f32 0.0, %v3642
      %v3644 = vpop.f32.mrf.mxu0
      %3645 = vmatprep.mubr.f32.mxu0 0.0
      %3646 = vmatmul.mubr.f32.gmra.mxu0 %v3546
      %v3647 = vpop.f32.mrf.mxu0
      %v3648 = vadd.f32 0.0, %v3647
      %v3649 = vpop.f32.mrf.mxu0
      %3650 = vmatprep.mubr.f32.mxu0 0.0
      %3651 = vmatmul.mubr.f32.gmra.mxu0 %v3547
      %v3652 = vpop.f32.mrf.mxu0
      %v3653 = vpop.f32.mrf.mxu0
      %3654 = vmatprep.mubr.f32.mxu0 0.0
      %3655 = vmatmul.mubr.f32.gmra.mxu0 %v3548
      %v3656 = vpop.f32.mrf.mxu0
      %v3657 = vadd.f32 0.0, %v3656
      %v3658 = vpop.f32.mrf.mxu0
      %3659 = vmatprep.mubr.f32.mxu0 0.0
      %3660 = vmatmul.mubr.f32.gmra.mxu0 %v3549
      %v3661 = vpop.f32.mrf.mxu0
      %v3662 = vadd.f32 0.0, %v3661
      %v3663 = vpop.f32.mrf.mxu0
      %3664 = vmatprep.mubr.f32.mxu0 0.0
      %3665 = vmatmul.mubr.f32.gmra.mxu0 %v3550
      %v3666 = vpop.f32.mrf.mxu0
      %v3667 = vpop.f32.mrf.mxu0
      %3668 = vmatprep.mubr.f32.mxu0 0.0
      %3669 = vmatmul.mubr.f32.gmra.mxu0 %v3551
      %v3670 = vpop.f32.mrf.mxu0
      %v3671 = vadd.f32 0.0, %v3670
      %v3672 = vpop.f32.mrf.mxu0
      %3673 = vmatprep.mubr.f32.mxu0 0.0
      %3674 = vmatmul.mubr.f32.gmra.mxu0 %v3552
      %v3675 = vpop.f32.mrf.mxu0
      %v3676 = vadd.f32 0.0, %v3675
      %v3677 = vpop.f32.mrf.mxu0
      %3678 = vmatprep.mubr.f32.mxu0 0.0
      %3679 = vmatmul.mubr.f32.gmra.mxu0 %v3553
      %v3680 = vpop.f32.mrf.mxu0
      %v3681 = vpop.f32.mrf.mxu0
      %3682 = vmatprep.mubr.f32.mxu0 0.0
      %3683 = vmatmul.mubr.f32.gmra.mxu0 %v3554
      %v3684 = vpop.f32.mrf.mxu0
      %v3685 = vadd.f32 0.0, %v3684
      %v3686 = vpop.f32.mrf.mxu0
      %3687 = vmatprep.mubr.f32.mxu0 0.0
      %3688 = vmatmul.mubr.f32.gmra.mxu0 %v3555
      %v3689 = vpop.f32.mrf.mxu0
      %v3690 = vadd.f32 0.0, %v3689
      %v3691 = vpop.f32.mrf.mxu0
      %3692 = vmatprep.mubr.f32.mxu0 0.0
      %3693 = vmatmul.mubr.f32.gmra.mxu0 %v3556
      %v3694 = vpop.f32.mrf.mxu0
      %v3695 = vpop.f32.mrf.mxu0
      %3696 = vmatprep.mubr.f32.mxu0 0.0
      %3697 = vmatmul.mubr.f32.gmra.mxu0 %v3557
      %v3698 = vpop.f32.mrf.mxu0
      %v3699 = vadd.f32 0.0, %v3698
      %v3700 = vpop.f32.mrf.mxu0
      %3701 = vmatprep.mubr.f32.mxu0 0.0
      %3702 = vmatmul.mubr.f32.gmra.mxu0 %v3558
      %v3703 = vpop.f32.mrf.mxu0
      %v3704 = vadd.f32 0.0, %v3703
      %v3705 = vpop.f32.mrf.mxu0
      %3706 = vmatprep.mubr.f32.mxu0 0.0
      %3707 = vmatmul.mubr.f32.gmra.mxu0 %v3559
      %v3708 = vpop.f32.mrf.mxu0
      %v3709 = vpop.f32.mrf.mxu0
      %3710 = vdwg.mxu0
      %3711 = vmatprep.subr.mxu0 0.0
      %3712 = vmatpush1.msra.mxu0 %v3544
      %3713 = vmatprep.subr.mxu0 0.0
      %3714 = vmatpush1.msra.mxu0 %v3543
      %3715 = vmatprep.subr.mxu0 0.0
      %3716 = vmatpush1.msra.mxu0 %v3542
      %3717 = vmatprep.subr.mxu0 0.0
      %3718 = vmatpush1.msra.mxu0 %v3541
      %3719 = vmatprep.subr.mxu0 0.0
      %3720 = vmatpush1.msra.mxu0 %v3540
      %3721 = vmatprep.subr.mxu0 0.0
      %3722 = vmatpush1.msra.mxu0 %v3539
      %3723 = vmatprep.subr.mxu0 0.0
      %3724 = vmatpush1.msra.mxu0 %v3538
      %3725 = vmatprep.subr.mxu0 0.0
      %3726 = vmatpush1.msra.mxu0 %v3537
      %3727 = vmatprep.subr.mxu0 0.0
      %3728 = vmatpush1.msra.mxu0 %v3536
      %3729 = vmatprep.subr.mxu0 0.0
      %3730 = vmatpush1.msra.mxu0 %v3535
      %3731 = vmatprep.subr.mxu0 0.0
      %3732 = vmatpush1.msra.mxu0 %v3534
      %3733 = vmatprep.subr.mxu0 0.0
      %3734 = vmatpush1.msra.mxu0 %v3533
      %3735 = vmatprep.subr.mxu0 0.0
      %3736 = vmatpush1.msra.mxu0 %v3532
      %3737 = vmatprep.subr.mxu0 0.0
      %3738 = vmatpush1.msra.mxu0 %v3531
      %3739 = vmatprep.subr.mxu0 0.0
      %3740 = vmatpush1.msra.mxu0 %v3530
      %3741 = vmatprep.subr.mxu0 0.0
      %3742 = vmatpush1.msra.mxu0 %v3529
      %3743 = vmatprep.subr.mxu0 0.0
      %3744 = vmatpush2.msra.mxu0 0.0
      %3745 = vmatprep.subr.mxu0 0.0
      %3746 = vmatpush2.msra.mxu0 0.0
      %3747 = vmatprep.subr.mxu0 0.0
      %3748 = vmatpush2.msra.mxu0 0.0
      %3749 = vmatprep.subr.mxu0 0.0
      %3750 = vmatpush2.msra.mxu0 0.0
      %3751 = vmatprep.subr.mxu0 0.0
      %3752 = vmatpush2.msra.mxu0 0.0
      %3753 = vmatprep.subr.mxu0 0.0
      %3754 = vmatpush2.msra.mxu0 0.0
      %3755 = vmatprep.subr.mxu0 0.0
      %3756 = vmatpush2.msra.mxu0 0.0
      %3757 = vmatprep.subr.mxu0 0.0
      %3758 = vmatpush2.msra.mxu0 0.0
      %3759 = vmatprep.subr.mxu0 0.0
      %3760 = vmatpush2.msra.mxu0 0.0
      %3761 = vmatprep.subr.mxu0 0.0
      %3762 = vmatpush2.msra.mxu0 0.0
      %3763 = vmatprep.subr.mxu0 0.0
      %3764 = vmatpush2.msra.mxu0 0.0
      %3765 = vmatprep.subr.mxu0 0.0
      %3766 = vmatpush2.msra.mxu0 0.0
      %3767 = vmatprep.subr.mxu0 0.0
      %3768 = vmatpush2.msra.mxu0 0.0
      %3769 = vmatprep.subr.mxu0 0.0
      %3770 = vmatpush2.msra.mxu0 0.0
      %3771 = vmatprep.subr.mxu0 0.0
      %3772 = vmatpush2.msra.mxu0 0.0
      %3773 = vmatprep.subr.mxu0 0.0
      %3774 = vmatpush2.msra.mxu0 0.0
      %3775 = vmatprep.mubr.f32.mxu0 0.0
      %3776 = vmatmul.mubr.f32.gmra.mxu0 %v3514
      %v3777 = vpop.f32.mrf.mxu0
      %v3778 = vadd.f32 %v3643, %v3777
      %v3779 = vpop.f32.mrf.mxu0
      %3780 = vmatprep.mubr.f32.mxu0 0.0
      %3781 = vmatmul.mubr.f32.gmra.mxu0 %v3515
      %v3782 = vpop.f32.mrf.mxu0
      %v3783 = vadd.f32 %v3648, %v3782
      %v3784 = vpop.f32.mrf.mxu0
      %3785 = vmatprep.mubr.f32.mxu0 0.0
      %3786 = vmatmul.mubr.f32.gmra.mxu0 %v3516
      %v3787 = vpop.f32.mrf.mxu0
      %v3788 = vpop.f32.mrf.mxu0
      %3789 = vmatprep.mubr.f32.mxu0 0.0
      %3790 = vmatmul.mubr.f32.gmra.mxu0 %v3517
      %v3791 = vpop.f32.mrf.mxu0
      %v3792 = vadd.f32 %v3657, %v3791
      %v3793 = vpop.f32.mrf.mxu0
      %3794 = vmatprep.mubr.f32.mxu0 0.0
      %3795 = vmatmul.mubr.f32.gmra.mxu0 %v3518
      %v3796 = vpop.f32.mrf.mxu0
      %v3797 = vadd.f32 %v3662, %v3796
      %v3798 = vpop.f32.mrf.mxu0
      %3799 = vmatprep.mubr.f32.mxu0 0.0
      %3800 = vmatmul.mubr.f32.gmra.mxu0 %v3519
      %v3801 = vpop.f32.mrf.mxu0
      %v3802 = vpop.f32.mrf.mxu0
      %3803 = vmatprep.mubr.f32.mxu0 0.0
      %3804 = vmatmul.mubr.f32.gmra.mxu0 %v3520
      %v3805 = vpop.f32.mrf.mxu0
      %v3806 = vadd.f32 %v3671, %v3805
      %v3807 = vpop.f32.mrf.mxu0
      %3808 = vmatprep.mubr.f32.mxu0 0.0
      %3809 = vmatmul.mubr.f32.gmra.mxu0 %v3521
      %v3810 = vpop.f32.mrf.mxu0
      %v3811 = vadd.f32 %v3676, %v3810
      %v3812 = vpop.f32.mrf.mxu0
      %3813 = vmatprep.mubr.f32.mxu0 0.0
      %3814 = vmatmul.mubr.f32.gmra.mxu0 %v3522
      %v3815 = vpop.f32.mrf.mxu0
      %v3816 = vpop.f32.mrf.mxu0
      %3817 = vmatprep.mubr.f32.mxu0 0.0
      %3818 = vmatmul.mubr.f32.gmra.mxu0 %v3523
      %v3819 = vpop.f32.mrf.mxu0
      %v3820 = vadd.f32 %v3685, %v3819
      %v3821 = vpop.f32.mrf.mxu0
      %3822 = vmatprep.mubr.f32.mxu0 0.0
      %3823 = vmatmul.mubr.f32.gmra.mxu0 %v3524
      %v3824 = vpop.f32.mrf.mxu0
      %v3825 = vadd.f32 %v3690, %v3824
      %v3826 = vpop.f32.mrf.mxu0
      %3827 = vmatprep.mubr.f32.mxu0 0.0
      %3828 = vmatmul.mubr.f32.gmra.mxu0 %v3525
      %v3829 = vpop.f32.mrf.mxu0
      %v3830 = vpop.f32.mrf.mxu0
      %3831 = vmatprep.mubr.f32.mxu0 0.0
      %3832 = vmatmul.mubr.f32.gmra.mxu0 %v3526
      %v3833 = vpop.f32.mrf.mxu0
      %v3834 = vadd.f32 %v3699, %v3833
      %v3835 = vpop.f32.mrf.mxu0
      %3836 = vmatprep.mubr.f32.mxu0 0.0
      %3837 = vmatmul.mubr.f32.gmra.mxu0 %v3527
      %v3838 = vpop.f32.mrf.mxu0
      %v3839 = vadd.f32 %v3704, %v3838
      %v3840 = vpop.f32.mrf.mxu0
      %3841 = vmatprep.mubr.f32.mxu0 0.0
      %3842 = vmatmul.mubr.f32.gmra.mxu0 %v3528
      %v3843 = vpop.f32.mrf.mxu0
      %v3844 = vpop.f32.mrf.mxu0
      %3845 = vdwg.mxu0
      %v3846 = vld [vmem:[#allocation2 + $0xf2] sm:$0xff]
      %v3847 = vld [vmem:[#allocation2 + $0xfa] sm:$0xff]
      %v3848 = vld [vmem:[#allocation2 + $0x102] sm:$0xff]
      %v3849 = vld [vmem:[#allocation2 + $0x10a] sm:$0xff]
      %v3850 = vld [vmem:[#allocation2 + $0x112] sm:$0xff]
      %v3851 = vld [vmem:[#allocation2 + $0x11a] sm:$0xff]
      %v3852 = vld [vmem:[#allocation2 + $0x122] sm:$0xff]
      %v3853 = vld [vmem:[#allocation2 + $0x12a] sm:$0xff]
      %v3854 = vld [vmem:[#allocation2 + $0x132] sm:$0xff]
      %v3855 = vld [vmem:[#allocation2 + $0x13a] sm:$0xff]
      %v3856 = vld [vmem:[#allocation2 + $0x142] sm:$0xff]
      %v3857 = vld [vmem:[#allocation2 + $0x14a] sm:$0xff]
      %v3858 = vld [vmem:[#allocation2 + $0x152] sm:$0xff]
      %v3859 = vld [vmem:[#allocation2 + $0x15a] sm:$0xff]
      %v3860 = vld [vmem:[#allocation2 + $0x162] sm:$0xff]
      %v3861 = vld [vmem:[%s658] sm:$0xff]
      %v3862 = vld [vmem:[%s658 + $0x8] sm:$0xff]
      %v3863 = vld [vmem:[%s658 + $0x10] sm:$0xff]
      %v3864 = vld [vmem:[%s658 + $0x18] sm:$0xff]
      %v3865 = vld [vmem:[%s658 + $0x20] sm:$0xff]
      %v3866 = vld [vmem:[%s658 + $0x28] sm:$0xff]
      %v3867 = vld [vmem:[%s658 + $0x30] sm:$0xff]
      %v3868 = vld [vmem:[%s658 + $0x38] sm:$0xff]
      %v3869 = vld [vmem:[%s658 + $0x40] sm:$0xff]
      %v3870 = vld [vmem:[%s658 + $0x48] sm:$0xff]
      %v3871 = vld [vmem:[%s658 + $0x50] sm:$0xff]
      %v3872 = vld [vmem:[%s658 + $0x58] sm:$0xff]
      %v3873 = vld [vmem:[%s658 + $0x60] sm:$0xff]
      %v3874 = vld [vmem:[%s658 + $0x68] sm:$0xff]
      %v3875 = vld [vmem:[%s658 + $0x70] sm:$0xff]
      %v3876 = vld [vmem:[%s658 + $0x78] sm:$0xff]
      %3877 = vmatprep.subr.mxu0 0.0
      %3878 = vmatpush1.msra.mxu0 %v3876
      %3879 = vmatprep.subr.mxu0 0.0
      %3880 = vmatpush1.msra.mxu0 %v3875
      %3881 = vmatprep.subr.mxu0 0.0
      %3882 = vmatpush1.msra.mxu0 %v3874
      %3883 = vmatprep.subr.mxu0 0.0
      %3884 = vmatpush1.msra.mxu0 %v3873
      %3885 = vmatprep.subr.mxu0 0.0
      %3886 = vmatpush1.msra.mxu0 %v3872
      %3887 = vmatprep.subr.mxu0 0.0
      %3888 = vmatpush1.msra.mxu0 %v3871
      %3889 = vmatprep.subr.mxu0 0.0
      %3890 = vmatpush1.msra.mxu0 %v3870
      %3891 = vmatprep.subr.mxu0 0.0
      %3892 = vmatpush1.msra.mxu0 %v3869
      %3893 = vmatprep.subr.mxu0 0.0
      %3894 = vmatpush1.msra.mxu0 %v3868
      %3895 = vmatprep.subr.mxu0 0.0
      %3896 = vmatpush1.msra.mxu0 %v3867
      %3897 = vmatprep.subr.mxu0 0.0
      %3898 = vmatpush1.msra.mxu0 %v3866
      %3899 = vmatprep.subr.mxu0 0.0
      %3900 = vmatpush1.msra.mxu0 %v3865
      %3901 = vmatprep.subr.mxu0 0.0
      %3902 = vmatpush1.msra.mxu0 %v3864
      %3903 = vmatprep.subr.mxu0 0.0
      %3904 = vmatpush1.msra.mxu0 %v3863
      %3905 = vmatprep.subr.mxu0 0.0
      %3906 = vmatpush1.msra.mxu0 %v3862
      %3907 = vmatprep.subr.mxu0 0.0
      %3908 = vmatpush1.msra.mxu0 %v3861
      %3909 = vmatprep.subr.mxu0 0.0
      %3910 = vmatpush2.msra.mxu0 0.0
      %3911 = vmatprep.subr.mxu0 0.0
      %3912 = vmatpush2.msra.mxu0 0.0
      %3913 = vmatprep.subr.mxu0 0.0
      %3914 = vmatpush2.msra.mxu0 0.0
      %3915 = vmatprep.subr.mxu0 0.0
      %3916 = vmatpush2.msra.mxu0 0.0
      %3917 = vmatprep.subr.mxu0 0.0
      %3918 = vmatpush2.msra.mxu0 0.0
      %3919 = vmatprep.subr.mxu0 0.0
      %3920 = vmatpush2.msra.mxu0 0.0
      %3921 = vmatprep.subr.mxu0 0.0
      %3922 = vmatpush2.msra.mxu0 0.0
      %3923 = vmatprep.subr.mxu0 0.0
      %3924 = vmatpush2.msra.mxu0 0.0
      %3925 = vmatprep.subr.mxu0 0.0
      %3926 = vmatpush2.msra.mxu0 0.0
      %3927 = vmatprep.subr.mxu0 0.0
      %3928 = vmatpush2.msra.mxu0 0.0
      %3929 = vmatprep.subr.mxu0 0.0
      %3930 = vmatpush2.msra.mxu0 0.0
      %3931 = vmatprep.subr.mxu0 0.0
      %3932 = vmatpush2.msra.mxu0 0.0
      %3933 = vmatprep.subr.mxu0 0.0
      %3934 = vmatpush2.msra.mxu0 0.0
      %3935 = vmatprep.subr.mxu0 0.0
      %3936 = vmatpush2.msra.mxu0 0.0
      %3937 = vmatprep.subr.mxu0 0.0
      %3938 = vmatpush2.msra.mxu0 0.0
      %3939 = vmatprep.subr.mxu0 0.0
      %3940 = vmatpush2.msra.mxu0 0.0
      %3941 = vmatprep.mubr.f32.mxu0 0.0
      %3942 = vmatmul.mubr.f32.gmra.mxu0 %v3846
      %v3943 = vpop.f32.mrf.mxu0
      %v3944 = vadd.f32 0.0, %v3943
      %v3945 = vpop.f32.mrf.mxu0
      %3946 = vmatprep.mubr.f32.mxu0 0.0
      %3947 = vmatmul.mubr.f32.gmra.mxu0 %v3847
      %v3948 = vpop.f32.mrf.mxu0
      %v3949 = vadd.f32 0.0, %v3948
      %v3950 = vpop.f32.mrf.mxu0
      %3951 = vmatprep.mubr.f32.mxu0 0.0
      %3952 = vmatmul.mubr.f32.gmra.mxu0 %v3848
      %v3953 = vpop.f32.mrf.mxu0
      %v3954 = vpop.f32.mrf.mxu0
      %3955 = vmatprep.mubr.f32.mxu0 0.0
      %3956 = vmatmul.mubr.f32.gmra.mxu0 %v3849
      %v3957 = vpop.f32.mrf.mxu0
      %v3958 = vadd.f32 0.0, %v3957
      %v3959 = vpop.f32.mrf.mxu0
      %3960 = vmatprep.mubr.f32.mxu0 0.0
      %3961 = vmatmul.mubr.f32.gmra.mxu0 %v3850
      %v3962 = vpop.f32.mrf.mxu0
      %v3963 = vadd.f32 0.0, %v3962
      %v3964 = vpop.f32.mrf.mxu0
      %3965 = vmatprep.mubr.f32.mxu0 0.0
      %3966 = vmatmul.mubr.f32.gmra.mxu0 %v3851
      %v3967 = vpop.f32.mrf.mxu0
      %v3968 = vpop.f32.mrf.mxu0
      %3969 = vmatprep.mubr.f32.mxu0 0.0
      %3970 = vmatmul.mubr.f32.gmra.mxu0 %v3852
      %v3971 = vpop.f32.mrf.mxu0
      %v3972 = vadd.f32 0.0, %v3971
      %v3973 = vpop.f32.mrf.mxu0
      %3974 = vmatprep.mubr.f32.mxu0 0.0
      %3975 = vmatmul.mubr.f32.gmra.mxu0 %v3853
      %v3976 = vpop.f32.mrf.mxu0
      %v3977 = vadd.f32 0.0, %v3976
      %v3978 = vpop.f32.mrf.mxu0
      %3979 = vmatprep.mubr.f32.mxu0 0.0
      %3980 = vmatmul.mubr.f32.gmra.mxu0 %v3854
      %v3981 = vpop.f32.mrf.mxu0
      %v3982 = vpop.f32.mrf.mxu0
      %3983 = vmatprep.mubr.f32.mxu0 0.0
      %3984 = vmatmul.mubr.f32.gmra.mxu0 %v3855
      %v3985 = vpop.f32.mrf.mxu0
      %v3986 = vadd.f32 0.0, %v3985
      %v3987 = vpop.f32.mrf.mxu0
      %3988 = vmatprep.mubr.f32.mxu0 0.0
      %3989 = vmatmul.mubr.f32.gmra.mxu0 %v3856
      %v3990 = vpop.f32.mrf.mxu0
      %v3991 = vadd.f32 0.0, %v3990
      %v3992 = vpop.f32.mrf.mxu0
      %3993 = vmatprep.mubr.f32.mxu0 0.0
      %3994 = vmatmul.mubr.f32.gmra.mxu0 %v3857
      %v3995 = vpop.f32.mrf.mxu0
      %v3996 = vpop.f32.mrf.mxu0
      %3997 = vmatprep.mubr.f32.mxu0 0.0
      %3998 = vmatmul.mubr.f32.gmra.mxu0 %v3858
      %v3999 = vpop.f32.mrf.mxu0
      %v4000 = vadd.f32 0.0, %v3999
      %v4001 = vpop.f32.mrf.mxu0
      %4002 = vmatprep.mubr.f32.mxu0 0.0
      %4003 = vmatmul.mubr.f32.gmra.mxu0 %v3859
      %v4004 = vpop.f32.mrf.mxu0
      %v4005 = vadd.f32 0.0, %v4004
      %v4006 = vpop.f32.mrf.mxu0
      %4007 = vmatprep.mubr.f32.mxu0 0.0
      %4008 = vmatmul.mubr.f32.gmra.mxu0 %v3860
      %v4009 = vpop.f32.mrf.mxu0
      %v4010 = vpop.f32.mrf.mxu0
      %4011 = vdwg.mxu0
      %v4012 = vadd.f32 %v3778, %v3944
      %v4013 = vadd.f32 %v3783, %v3949
      %v4014 = vadd.f32 %v3792, %v3958
      %v4015 = vadd.f32 %v3797, %v3963
      %v4016 = vadd.f32 %v3806, %v3972
      %v4017 = vadd.f32 %v3811, %v3977
      %v4018 = vadd.f32 %v3820, %v3986
      %v4019 = vadd.f32 %v3825, %v3991
      %v4020 = vadd.f32 %v3834, %v4000
      %v4021 = vadd.f32 %v3839, %v4005
      %v4022 = vld [vmem:[#allocation2 + $0x108] sm:$0xff]
      %v4023 = vld [vmem:[#allocation2 + $0x110] sm:$0xff]
      %v4024 = vld [vmem:[#allocation2 + $0x118] sm:$0xff]
      %v4025 = vld [vmem:[#allocation2 + $0x120] sm:$0xff]
      %v4026 = vld [vmem:[#allocation2 + $0x128] sm:$0xff]
      %v4027 = vld [vmem:[#allocation2 + $0x130] sm:$0xff]
      %v4028 = vld [vmem:[#allocation2 + $0x138] sm:$0xff]
      %v4029 = vld [vmem:[#allocation2 + $0x140] sm:$0xff]
      %v4030 = vld [vmem:[#allocation2 + $0x148] sm:$0xff]
      %v4031 = vld [vmem:[#allocation2 + $0x150] sm:$0xff]
      %v4032 = vld [vmem:[#allocation2 + $0x158] sm:$0xff]
      %v4033 = vld [vmem:[#allocation2 + $0x160] sm:$0xff]
      %v4034 = vld [vmem:[#allocation2 + $0x168] sm:$0xff]
      %v4035 = vld [vmem:[#allocation2 + $0x170] sm:$0xff]
      %v4036 = vld [vmem:[#allocation2 + $0x178] sm:$0xff]
      %v4037 = vld [vmem:[%s835] sm:$0xff]
      %v4038 = vld [vmem:[%s835 + $0x8] sm:$0xff]
      %v4039 = vld [vmem:[%s835 + $0x10] sm:$0xff]
      %v4040 = vld [vmem:[%s835 + $0x18] sm:$0xff]
      %v4041 = vld [vmem:[%s835 + $0x20] sm:$0xff]
      %v4042 = vld [vmem:[%s835 + $0x28] sm:$0xff]
      %v4043 = vld [vmem:[%s835 + $0x30] sm:$0xff]
      %v4044 = vld [vmem:[%s835 + $0x38] sm:$0xff]
      %v4045 = vld [vmem:[%s835 + $0x40] sm:$0xff]
      %v4046 = vld [vmem:[%s835 + $0x48] sm:$0xff]
      %v4047 = vld [vmem:[%s835 + $0x50] sm:$0xff]
      %v4048 = vld [vmem:[%s835 + $0x58] sm:$0xff]
      %v4049 = vld [vmem:[%s835 + $0x60] sm:$0xff]
      %v4050 = vld [vmem:[%s835 + $0x68] sm:$0xff]
      %v4051 = vld [vmem:[%s835 + $0x70] sm:$0xff]
      %v4052 = vld [vmem:[%s835 + $0x78] sm:$0xff]
      %4053 = vmatprep.subr.mxu0 0.0
      %4054 = vmatpush1.msra.mxu0 %v4052
      %4055 = vmatprep.subr.mxu0 0.0
      %4056 = vmatpush1.msra.mxu0 %v4051
      %4057 = vmatprep.subr.mxu0 0.0
      %4058 = vmatpush1.msra.mxu0 %v4050
      %4059 = vmatprep.subr.mxu0 0.0
      %4060 = vmatpush1.msra.mxu0 %v4049
      %4061 = vmatprep.subr.mxu0 0.0
      %4062 = vmatpush1.msra.mxu0 %v4048
      %4063 = vmatprep.subr.mxu0 0.0
      %4064 = vmatpush1.msra.mxu0 %v4047
      %4065 = vmatprep.subr.mxu0 0.0
      %4066 = vmatpush1.msra.mxu0 %v4046
      %4067 = vmatprep.subr.mxu0 0.0
      %4068 = vmatpush1.msra.mxu0 %v4045
      %4069 = vmatprep.subr.mxu0 0.0
      %4070 = vmatpush1.msra.mxu0 %v4044
      %4071 = vmatprep.subr.mxu0 0.0
      %4072 = vmatpush1.msra.mxu0 %v4043
      %4073 = vmatprep.subr.mxu0 0.0
      %4074 = vmatpush1.msra.mxu0 %v4042
      %4075 = vmatprep.subr.mxu0 0.0
      %4076 = vmatpush1.msra.mxu0 %v4041
      %4077 = vmatprep.subr.mxu0 0.0
      %4078 = vmatpush1.msra.mxu0 %v4040
      %4079 = vmatprep.subr.mxu0 0.0
      %4080 = vmatpush1.msra.mxu0 %v4039
      %4081 = vmatprep.subr.mxu0 0.0
      %4082 = vmatpush1.msra.mxu0 %v4038
      %4083 = vmatprep.subr.mxu0 0.0
      %4084 = vmatpush1.msra.mxu0 %v4037
      %4085 = vmatprep.subr.mxu0 0.0
      %4086 = vmatpush2.msra.mxu0 0.0
      %4087 = vmatprep.subr.mxu0 0.0
      %4088 = vmatpush2.msra.mxu0 0.0
      %4089 = vmatprep.subr.mxu0 0.0
      %4090 = vmatpush2.msra.mxu0 0.0
      %4091 = vmatprep.subr.mxu0 0.0
      %4092 = vmatpush2.msra.mxu0 0.0
      %4093 = vmatprep.subr.mxu0 0.0
      %4094 = vmatpush2.msra.mxu0 0.0
      %4095 = vmatprep.subr.mxu0 0.0
      %4096 = vmatpush2.msra.mxu0 0.0
      %4097 = vmatprep.subr.mxu0 0.0
      %4098 = vmatpush2.msra.mxu0 0.0
      %4099 = vmatprep.subr.mxu0 0.0
      %4100 = vmatpush2.msra.mxu0 0.0
      %4101 = vmatprep.subr.mxu0 0.0
      %4102 = vmatpush2.msra.mxu0 0.0
      %4103 = vmatprep.subr.mxu0 0.0
      %4104 = vmatpush2.msra.mxu0 0.0
      %4105 = vmatprep.subr.mxu0 0.0
      %4106 = vmatpush2.msra.mxu0 0.0
      %4107 = vmatprep.subr.mxu0 0.0
      %4108 = vmatpush2.msra.mxu0 0.0
      %4109 = vmatprep.subr.mxu0 0.0
      %4110 = vmatpush2.msra.mxu0 0.0
      %4111 = vmatprep.subr.mxu0 0.0
      %4112 = vmatpush2.msra.mxu0 0.0
      %4113 = vmatprep.subr.mxu0 0.0
      %4114 = vmatpush2.msra.mxu0 0.0
      %4115 = vmatprep.subr.mxu0 0.0
      %4116 = vmatpush2.msra.mxu0 0.0
      %4117 = vmatprep.mubr.f32.mxu0 0.0
      %4118 = vmatmul.mubr.f32.gmra.mxu0 %v4022
      %v4119 = vpop.f32.mrf.mxu0
      %v4120 = vadd.f32 0.0, %v4119
      %v4121 = vpop.f32.mrf.mxu0
      %4122 = vmatprep.mubr.f32.mxu0 0.0
      %4123 = vmatmul.mubr.f32.gmra.mxu0 %v4023
      %v4124 = vpop.f32.mrf.mxu0
      %v4125 = vadd.f32 0.0, %v4124
      %v4126 = vpop.f32.mrf.mxu0
      %4127 = vmatprep.mubr.f32.mxu0 0.0
      %4128 = vmatmul.mubr.f32.gmra.mxu0 %v4024
      %v4129 = vpop.f32.mrf.mxu0
      %v4130 = vpop.f32.mrf.mxu0
      %4131 = vmatprep.mubr.f32.mxu0 0.0
      %4132 = vmatmul.mubr.f32.gmra.mxu0 %v4025
      %v4133 = vpop.f32.mrf.mxu0
      %v4134 = vadd.f32 0.0, %v4133
      %v4135 = vpop.f32.mrf.mxu0
      %4136 = vmatprep.mubr.f32.mxu0 0.0
      %4137 = vmatmul.mubr.f32.gmra.mxu0 %v4026
      %v4138 = vpop.f32.mrf.mxu0
      %v4139 = vadd.f32 0.0, %v4138
      %v4140 = vpop.f32.mrf.mxu0
      %4141 = vmatprep.mubr.f32.mxu0 0.0
      %4142 = vmatmul.mubr.f32.gmra.mxu0 %v4027
      %v4143 = vpop.f32.mrf.mxu0
      %v4144 = vpop.f32.mrf.mxu0
      %4145 = vmatprep.mubr.f32.mxu0 0.0
      %4146 = vmatmul.mubr.f32.gmra.mxu0 %v4028
      %v4147 = vpop.f32.mrf.mxu0
      %v4148 = vadd.f32 0.0, %v4147
      %v4149 = vpop.f32.mrf.mxu0
      %4150 = vmatprep.mubr.f32.mxu0 0.0
      %4151 = vmatmul.mubr.f32.gmra.mxu0 %v4029
      %v4152 = vpop.f32.mrf.mxu0
      %v4153 = vadd.f32 0.0, %v4152
      %v4154 = vpop.f32.mrf.mxu0
      %4155 = vmatprep.mubr.f32.mxu0 0.0
      %4156 = vmatmul.mubr.f32.gmra.mxu0 %v4030
      %v4157 = vpop.f32.mrf.mxu0
      %v4158 = vpop.f32.mrf.mxu0
      %4159 = vmatprep.mubr.f32.mxu0 0.0
      %4160 = vmatmul.mubr.f32.gmra.mxu0 %v4031
      %v4161 = vpop.f32.mrf.mxu0
      %v4162 = vadd.f32 0.0, %v4161
      %v4163 = vpop.f32.mrf.mxu0
      %4164 = vmatprep.mubr.f32.mxu0 0.0
      %4165 = vmatmul.mubr.f32.gmra.mxu0 %v4032
      %v4166 = vpop.f32.mrf.mxu0
      %v4167 = vadd.f32 0.0, %v4166
      %v4168 = vpop.f32.mrf.mxu0
      %4169 = vmatprep.mubr.f32.mxu0 0.0
      %4170 = vmatmul.mubr.f32.gmra.mxu0 %v4033
      %v4171 = vpop.f32.mrf.mxu0
      %v4172 = vpop.f32.mrf.mxu0
      %4173 = vmatprep.mubr.f32.mxu0 0.0
      %4174 = vmatmul.mubr.f32.gmra.mxu0 %v4034
      %v4175 = vpop.f32.mrf.mxu0
      %v4176 = vadd.f32 0.0, %v4175
      %v4177 = vpop.f32.mrf.mxu0
      %4178 = vmatprep.mubr.f32.mxu0 0.0
      %4179 = vmatmul.mubr.f32.gmra.mxu0 %v4035
      %v4180 = vpop.f32.mrf.mxu0
      %v4181 = vadd.f32 0.0, %v4180
      %v4182 = vpop.f32.mrf.mxu0
      %4183 = vmatprep.mubr.f32.mxu0 0.0
      %4184 = vmatmul.mubr.f32.gmra.mxu0 %v4036
      %v4185 = vpop.f32.mrf.mxu0
      %v4186 = vpop.f32.mrf.mxu0
      %4187 = vdwg.mxu0
      %v4188 = vadd.f32 %v4012, %v4120
      %v4189 = vadd.f32 %v4013, %v4125
      %v4190 = vadd.f32 %v4014, %v4134
      %v4191 = vadd.f32 %v4015, %v4139
      %v4192 = vadd.f32 %v4016, %v4148
      %v4193 = vadd.f32 %v4017, %v4153
      %v4194 = vadd.f32 %v4018, %v4162
      %v4195 = vadd.f32 %v4019, %v4167
      %v4196 = vadd.f32 %v4020, %v4176
      %v4197 = vadd.f32 %v4021, %v4181
      %v4198 = vld [vmem:[#allocation2 + $0x109] sm:$0xff]
      %v4199 = vld [vmem:[#allocation2 + $0x111] sm:$0xff]
      %v4200 = vld [vmem:[#allocation2 + $0x119] sm:$0xff]
      %v4201 = vld [vmem:[#allocation2 + $0x121] sm:$0xff]
      %v4202 = vld [vmem:[#allocation2 + $0x129] sm:$0xff]
      %v4203 = vld [vmem:[#allocation2 + $0x131] sm:$0xff]
      %v4204 = vld [vmem:[#allocation2 + $0x139] sm:$0xff]
      %v4205 = vld [vmem:[#allocation2 + $0x141] sm:$0xff]
      %v4206 = vld [vmem:[#allocation2 + $0x149] sm:$0xff]
      %v4207 = vld [vmem:[#allocation2 + $0x151] sm:$0xff]
      %v4208 = vld [vmem:[#allocation2 + $0x159] sm:$0xff]
      %v4209 = vld [vmem:[#allocation2 + $0x161] sm:$0xff]
      %v4210 = vld [vmem:[#allocation2 + $0x169] sm:$0xff]
      %v4211 = vld [vmem:[#allocation2 + $0x171] sm:$0xff]
      %v4212 = vld [vmem:[#allocation2 + $0x179] sm:$0xff]
      %v4213 = vld [vmem:[%s1012] sm:$0xff]
      %v4214 = vld [vmem:[%s1012 + $0x8] sm:$0xff]
      %v4215 = vld [vmem:[%s1012 + $0x10] sm:$0xff]
      %v4216 = vld [vmem:[%s1012 + $0x18] sm:$0xff]
      %v4217 = vld [vmem:[%s1012 + $0x20] sm:$0xff]
      %v4218 = vld [vmem:[%s1012 + $0x28] sm:$0xff]
      %v4219 = vld [vmem:[%s1012 + $0x30] sm:$0xff]
      %v4220 = vld [vmem:[%s1012 + $0x38] sm:$0xff]
      %v4221 = vld [vmem:[%s1012 + $0x40] sm:$0xff]
      %v4222 = vld [vmem:[%s1012 + $0x48] sm:$0xff]
      %v4223 = vld [vmem:[%s1012 + $0x50] sm:$0xff]
      %v4224 = vld [vmem:[%s1012 + $0x58] sm:$0xff]
      %v4225 = vld [vmem:[%s1012 + $0x60] sm:$0xff]
      %v4226 = vld [vmem:[%s1012 + $0x68] sm:$0xff]
      %v4227 = vld [vmem:[%s1012 + $0x70] sm:$0xff]
      %v4228 = vld [vmem:[%s1012 + $0x78] sm:$0xff]
      %4229 = vmatprep.subr.mxu0 0.0
      %4230 = vmatpush1.msra.mxu0 %v4228
      %4231 = vmatprep.subr.mxu0 0.0
      %4232 = vmatpush1.msra.mxu0 %v4227
      %4233 = vmatprep.subr.mxu0 0.0
      %4234 = vmatpush1.msra.mxu0 %v4226
      %4235 = vmatprep.subr.mxu0 0.0
      %4236 = vmatpush1.msra.mxu0 %v4225
      %4237 = vmatprep.subr.mxu0 0.0
      %4238 = vmatpush1.msra.mxu0 %v4224
      %4239 = vmatprep.subr.mxu0 0.0
      %4240 = vmatpush1.msra.mxu0 %v4223
      %4241 = vmatprep.subr.mxu0 0.0
      %4242 = vmatpush1.msra.mxu0 %v4222
      %4243 = vmatprep.subr.mxu0 0.0
      %4244 = vmatpush1.msra.mxu0 %v4221
      %4245 = vmatprep.subr.mxu0 0.0
      %4246 = vmatpush1.msra.mxu0 %v4220
      %4247 = vmatprep.subr.mxu0 0.0
      %4248 = vmatpush1.msra.mxu0 %v4219
      %4249 = vmatprep.subr.mxu0 0.0
      %4250 = vmatpush1.msra.mxu0 %v4218
      %4251 = vmatprep.subr.mxu0 0.0
      %4252 = vmatpush1.msra.mxu0 %v4217
      %4253 = vmatprep.subr.mxu0 0.0
      %4254 = vmatpush1.msra.mxu0 %v4216
      %4255 = vmatprep.subr.mxu0 0.0
      %4256 = vmatpush1.msra.mxu0 %v4215
      %4257 = vmatprep.subr.mxu0 0.0
      %4258 = vmatpush1.msra.mxu0 %v4214
      %4259 = vmatprep.subr.mxu0 0.0
      %4260 = vmatpush1.msra.mxu0 %v4213
      %4261 = vmatprep.subr.mxu0 0.0
      %4262 = vmatpush2.msra.mxu0 0.0
      %4263 = vmatprep.subr.mxu0 0.0
      %4264 = vmatpush2.msra.mxu0 0.0
      %4265 = vmatprep.subr.mxu0 0.0
      %4266 = vmatpush2.msra.mxu0 0.0
      %4267 = vmatprep.subr.mxu0 0.0
      %4268 = vmatpush2.msra.mxu0 0.0
      %4269 = vmatprep.subr.mxu0 0.0
      %4270 = vmatpush2.msra.mxu0 0.0
      %4271 = vmatprep.subr.mxu0 0.0
      %4272 = vmatpush2.msra.mxu0 0.0
      %4273 = vmatprep.subr.mxu0 0.0
      %4274 = vmatpush2.msra.mxu0 0.0
      %4275 = vmatprep.subr.mxu0 0.0
      %4276 = vmatpush2.msra.mxu0 0.0
      %4277 = vmatprep.subr.mxu0 0.0
      %4278 = vmatpush2.msra.mxu0 0.0
      %4279 = vmatprep.subr.mxu0 0.0
      %4280 = vmatpush2.msra.mxu0 0.0
      %4281 = vmatprep.subr.mxu0 0.0
      %4282 = vmatpush2.msra.mxu0 0.0
      %4283 = vmatprep.subr.mxu0 0.0
      %4284 = vmatpush2.msra.mxu0 0.0
      %4285 = vmatprep.subr.mxu0 0.0
      %4286 = vmatpush2.msra.mxu0 0.0
      %4287 = vmatprep.subr.mxu0 0.0
      %4288 = vmatpush2.msra.mxu0 0.0
      %4289 = vmatprep.subr.mxu0 0.0
      %4290 = vmatpush2.msra.mxu0 0.0
      %4291 = vmatprep.subr.mxu0 0.0
      %4292 = vmatpush2.msra.mxu0 0.0
      %4293 = vmatprep.mubr.f32.mxu0 0.0
      %4294 = vmatmul.mubr.f32.gmra.mxu0 %v4198
      %v4295 = vpop.f32.mrf.mxu0
      %v4296 = vadd.f32 0.0, %v4295
      %v4297 = vpop.f32.mrf.mxu0
      %4298 = vmatprep.mubr.f32.mxu0 0.0
      %4299 = vmatmul.mubr.f32.gmra.mxu0 %v4199
      %v4300 = vpop.f32.mrf.mxu0
      %v4301 = vadd.f32 0.0, %v4300
      %v4302 = vpop.f32.mrf.mxu0
      %4303 = vmatprep.mubr.f32.mxu0 0.0
      %4304 = vmatmul.mubr.f32.gmra.mxu0 %v4200
      %v4305 = vpop.f32.mrf.mxu0
      %v4306 = vpop.f32.mrf.mxu0
      %4307 = vmatprep.mubr.f32.mxu0 0.0
      %4308 = vmatmul.mubr.f32.gmra.mxu0 %v4201
      %v4309 = vpop.f32.mrf.mxu0
      %v4310 = vadd.f32 0.0, %v4309
      %v4311 = vpop.f32.mrf.mxu0
      %4312 = vmatprep.mubr.f32.mxu0 0.0
      %4313 = vmatmul.mubr.f32.gmra.mxu0 %v4202
      %v4314 = vpop.f32.mrf.mxu0
      %v4315 = vadd.f32 0.0, %v4314
      %v4316 = vpop.f32.mrf.mxu0
      %4317 = vmatprep.mubr.f32.mxu0 0.0
      %4318 = vmatmul.mubr.f32.gmra.mxu0 %v4203
      %v4319 = vpop.f32.mrf.mxu0
      %v4320 = vpop.f32.mrf.mxu0
      %4321 = vmatprep.mubr.f32.mxu0 0.0
      %4322 = vmatmul.mubr.f32.gmra.mxu0 %v4204
      %v4323 = vpop.f32.mrf.mxu0
      %v4324 = vadd.f32 0.0, %v4323
      %v4325 = vpop.f32.mrf.mxu0
      %4326 = vmatprep.mubr.f32.mxu0 0.0
      %4327 = vmatmul.mubr.f32.gmra.mxu0 %v4205
      %v4328 = vpop.f32.mrf.mxu0
      %v4329 = vadd.f32 0.0, %v4328
      %v4330 = vpop.f32.mrf.mxu0
      %4331 = vmatprep.mubr.f32.mxu0 0.0
      %4332 = vmatmul.mubr.f32.gmra.mxu0 %v4206
      %v4333 = vpop.f32.mrf.mxu0
      %v4334 = vpop.f32.mrf.mxu0
      %4335 = vmatprep.mubr.f32.mxu0 0.0
      %4336 = vmatmul.mubr.f32.gmra.mxu0 %v4207
      %v4337 = vpop.f32.mrf.mxu0
      %v4338 = vadd.f32 0.0, %v4337
      %v4339 = vpop.f32.mrf.mxu0
      %4340 = vmatprep.mubr.f32.mxu0 0.0
      %4341 = vmatmul.mubr.f32.gmra.mxu0 %v4208
      %v4342 = vpop.f32.mrf.mxu0
      %v4343 = vadd.f32 0.0, %v4342
      %v4344 = vpop.f32.mrf.mxu0
      %4345 = vmatprep.mubr.f32.mxu0 0.0
      %4346 = vmatmul.mubr.f32.gmra.mxu0 %v4209
      %v4347 = vpop.f32.mrf.mxu0
      %v4348 = vpop.f32.mrf.mxu0
      %4349 = vmatprep.mubr.f32.mxu0 0.0
      %4350 = vmatmul.mubr.f32.gmra.mxu0 %v4210
      %v4351 = vpop.f32.mrf.mxu0
      %v4352 = vadd.f32 0.0, %v4351
      %v4353 = vpop.f32.mrf.mxu0
      %4354 = vmatprep.mubr.f32.mxu0 0.0
      %4355 = vmatmul.mubr.f32.gmra.mxu0 %v4211
      %v4356 = vpop.f32.mrf.mxu0
      %v4357 = vadd.f32 0.0, %v4356
      %v4358 = vpop.f32.mrf.mxu0
      %4359 = vmatprep.mubr.f32.mxu0 0.0
      %4360 = vmatmul.mubr.f32.gmra.mxu0 %v4212
      %v4361 = vpop.f32.mrf.mxu0
      %v4362 = vpop.f32.mrf.mxu0
      %4363 = vdwg.mxu0
      %v4364 = vadd.f32 %v4188, %v4296
      %v4365 = vadd.f32 %v4189, %v4301
      %v4366 = vadd.f32 %v4190, %v4310
      %v4367 = vadd.f32 %v4191, %v4315
      %v4368 = vadd.f32 %v4192, %v4324
      %v4369 = vadd.f32 %v4193, %v4329
      %v4370 = vadd.f32 %v4194, %v4338
      %v4371 = vadd.f32 %v4195, %v4343
      %v4372 = vadd.f32 %v4196, %v4352
      %v4373 = vadd.f32 %v4197, %v4357
      %v4374 = vld [vmem:[#allocation2 + $0x10a] sm:$0xff]
      %v4375 = vld [vmem:[#allocation2 + $0x112] sm:$0xff]
      %v4376 = vld [vmem:[#allocation2 + $0x11a] sm:$0xff]
      %v4377 = vld [vmem:[#allocation2 + $0x122] sm:$0xff]
      %v4378 = vld [vmem:[#allocation2 + $0x12a] sm:$0xff]
      %v4379 = vld [vmem:[#allocation2 + $0x132] sm:$0xff]
      %v4380 = vld [vmem:[#allocation2 + $0x13a] sm:$0xff]
      %v4381 = vld [vmem:[#allocation2 + $0x142] sm:$0xff]
      %v4382 = vld [vmem:[#allocation2 + $0x14a] sm:$0xff]
      %v4383 = vld [vmem:[#allocation2 + $0x152] sm:$0xff]
      %v4384 = vld [vmem:[#allocation2 + $0x15a] sm:$0xff]
      %v4385 = vld [vmem:[#allocation2 + $0x162] sm:$0xff]
      %v4386 = vld [vmem:[#allocation2 + $0x16a] sm:$0xff]
      %v4387 = vld [vmem:[#allocation2 + $0x172] sm:$0xff]
      %v4388 = vld [vmem:[#allocation2 + $0x17a] sm:$0xff]
      %v4389 = vld [vmem:[%s1189] sm:$0xff]
      %v4390 = vld [vmem:[%s1189 + $0x8] sm:$0xff]
      %v4391 = vld [vmem:[%s1189 + $0x10] sm:$0xff]
      %v4392 = vld [vmem:[%s1189 + $0x18] sm:$0xff]
      %v4393 = vld [vmem:[%s1189 + $0x20] sm:$0xff]
      %v4394 = vld [vmem:[%s1189 + $0x28] sm:$0xff]
      %v4395 = vld [vmem:[%s1189 + $0x30] sm:$0xff]
      %v4396 = vld [vmem:[%s1189 + $0x38] sm:$0xff]
      %v4397 = vld [vmem:[%s1189 + $0x40] sm:$0xff]
      %v4398 = vld [vmem:[%s1189 + $0x48] sm:$0xff]
      %v4399 = vld [vmem:[%s1189 + $0x50] sm:$0xff]
      %v4400 = vld [vmem:[%s1189 + $0x58] sm:$0xff]
      %v4401 = vld [vmem:[%s1189 + $0x60] sm:$0xff]
      %v4402 = vld [vmem:[%s1189 + $0x68] sm:$0xff]
      %v4403 = vld [vmem:[%s1189 + $0x70] sm:$0xff]
      %v4404 = vld [vmem:[%s1189 + $0x78] sm:$0xff]
      %4405 = vmatprep.subr.mxu0 0.0
      %4406 = vmatpush1.msra.mxu0 %v4404
      %4407 = vmatprep.subr.mxu0 0.0
      %4408 = vmatpush1.msra.mxu0 %v4403
      %4409 = vmatprep.subr.mxu0 0.0
      %4410 = vmatpush1.msra.mxu0 %v4402
      %4411 = vmatprep.subr.mxu0 0.0
      %4412 = vmatpush1.msra.mxu0 %v4401
      %4413 = vmatprep.subr.mxu0 0.0
      %4414 = vmatpush1.msra.mxu0 %v4400
      %4415 = vmatprep.subr.mxu0 0.0
      %4416 = vmatpush1.msra.mxu0 %v4399
      %4417 = vmatprep.subr.mxu0 0.0
      %4418 = vmatpush1.msra.mxu0 %v4398
      %4419 = vmatprep.subr.mxu0 0.0
      %4420 = vmatpush1.msra.mxu0 %v4397
      %4421 = vmatprep.subr.mxu0 0.0
      %4422 = vmatpush1.msra.mxu0 %v4396
      %4423 = vmatprep.subr.mxu0 0.0
      %4424 = vmatpush1.msra.mxu0 %v4395
      %4425 = vmatprep.subr.mxu0 0.0
      %4426 = vmatpush1.msra.mxu0 %v4394
      %4427 = vmatprep.subr.mxu0 0.0
      %4428 = vmatpush1.msra.mxu0 %v4393
      %4429 = vmatprep.subr.mxu0 0.0
      %4430 = vmatpush1.msra.mxu0 %v4392
      %4431 = vmatprep.subr.mxu0 0.0
      %4432 = vmatpush1.msra.mxu0 %v4391
      %4433 = vmatprep.subr.mxu0 0.0
      %4434 = vmatpush1.msra.mxu0 %v4390
      %4435 = vmatprep.subr.mxu0 0.0
      %4436 = vmatpush1.msra.mxu0 %v4389
      %4437 = vmatprep.subr.mxu0 0.0
      %4438 = vmatpush2.msra.mxu0 0.0
      %4439 = vmatprep.subr.mxu0 0.0
      %4440 = vmatpush2.msra.mxu0 0.0
      %4441 = vmatprep.subr.mxu0 0.0
      %4442 = vmatpush2.msra.mxu0 0.0
      %4443 = vmatprep.subr.mxu0 0.0
      %4444 = vmatpush2.msra.mxu0 0.0
      %4445 = vmatprep.subr.mxu0 0.0
      %4446 = vmatpush2.msra.mxu0 0.0
      %4447 = vmatprep.subr.mxu0 0.0
      %4448 = vmatpush2.msra.mxu0 0.0
      %4449 = vmatprep.subr.mxu0 0.0
      %4450 = vmatpush2.msra.mxu0 0.0
      %4451 = vmatprep.subr.mxu0 0.0
      %4452 = vmatpush2.msra.mxu0 0.0
      %4453 = vmatprep.subr.mxu0 0.0
      %4454 = vmatpush2.msra.mxu0 0.0
      %4455 = vmatprep.subr.mxu0 0.0
      %4456 = vmatpush2.msra.mxu0 0.0
      %4457 = vmatprep.subr.mxu0 0.0
      %4458 = vmatpush2.msra.mxu0 0.0
      %4459 = vmatprep.subr.mxu0 0.0
      %4460 = vmatpush2.msra.mxu0 0.0
      %4461 = vmatprep.subr.mxu0 0.0
      %4462 = vmatpush2.msra.mxu0 0.0
      %4463 = vmatprep.subr.mxu0 0.0
      %4464 = vmatpush2.msra.mxu0 0.0
      %4465 = vmatprep.subr.mxu0 0.0
      %4466 = vmatpush2.msra.mxu0 0.0
      %4467 = vmatprep.subr.mxu0 0.0
      %4468 = vmatpush2.msra.mxu0 0.0
      %4469 = vmatprep.mubr.f32.mxu0 0.0
      %4470 = vmatmul.mubr.f32.gmra.mxu0 %v4374
      %v4471 = vpop.f32.mrf.mxu0
      %v4472 = vadd.f32 0.0, %v4471
      %v4473 = vpop.f32.mrf.mxu0
      %4474 = vmatprep.mubr.f32.mxu0 0.0
      %4475 = vmatmul.mubr.f32.gmra.mxu0 %v4375
      %v4476 = vpop.f32.mrf.mxu0
      %v4477 = vadd.f32 0.0, %v4476
      %v4478 = vpop.f32.mrf.mxu0
      %4479 = vmatprep.mubr.f32.mxu0 0.0
      %4480 = vmatmul.mubr.f32.gmra.mxu0 %v4376
      %v4481 = vpop.f32.mrf.mxu0
      %v4482 = vpop.f32.mrf.mxu0
      %4483 = vmatprep.mubr.f32.mxu0 0.0
      %4484 = vmatmul.mubr.f32.gmra.mxu0 %v4377
      %v4485 = vpop.f32.mrf.mxu0
      %v4486 = vadd.f32 0.0, %v4485
      %v4487 = vpop.f32.mrf.mxu0
      %4488 = vmatprep.mubr.f32.mxu0 0.0
      %4489 = vmatmul.mubr.f32.gmra.mxu0 %v4378
      %v4490 = vpop.f32.mrf.mxu0
      %v4491 = vadd.f32 0.0, %v4490
      %v4492 = vpop.f32.mrf.mxu0
      %4493 = vmatprep.mubr.f32.mxu0 0.0
      %4494 = vmatmul.mubr.f32.gmra.mxu0 %v4379
      %v4495 = vpop.f32.mrf.mxu0
      %v4496 = vpop.f32.mrf.mxu0
      %4497 = vmatprep.mubr.f32.mxu0 0.0
      %4498 = vmatmul.mubr.f32.gmra.mxu0 %v4380
      %v4499 = vpop.f32.mrf.mxu0
      %v4500 = vadd.f32 0.0, %v4499
      %v4501 = vpop.f32.mrf.mxu0
      %4502 = vmatprep.mubr.f32.mxu0 0.0
      %4503 = vmatmul.mubr.f32.gmra.mxu0 %v4381
      %v4504 = vpop.f32.mrf.mxu0
      %v4505 = vadd.f32 0.0, %v4504
      %v4506 = vpop.f32.mrf.mxu0
      %4507 = vmatprep.mubr.f32.mxu0 0.0
      %4508 = vmatmul.mubr.f32.gmra.mxu0 %v4382
      %v4509 = vpop.f32.mrf.mxu0
      %v4510 = vpop.f32.mrf.mxu0
      %4511 = vmatprep.mubr.f32.mxu0 0.0
      %4512 = vmatmul.mubr.f32.gmra.mxu0 %v4383
      %v4513 = vpop.f32.mrf.mxu0
      %v4514 = vadd.f32 0.0, %v4513
      %v4515 = vpop.f32.mrf.mxu0
      %4516 = vmatprep.mubr.f32.mxu0 0.0
      %4517 = vmatmul.mubr.f32.gmra.mxu0 %v4384
      %v4518 = vpop.f32.mrf.mxu0
      %v4519 = vadd.f32 0.0, %v4518
      %v4520 = vpop.f32.mrf.mxu0
      %4521 = vmatprep.mubr.f32.mxu0 0.0
      %4522 = vmatmul.mubr.f32.gmra.mxu0 %v4385
      %v4523 = vpop.f32.mrf.mxu0
      %v4524 = vpop.f32.mrf.mxu0
      %4525 = vmatprep.mubr.f32.mxu0 0.0
      %4526 = vmatmul.mubr.f32.gmra.mxu0 %v4386
      %v4527 = vpop.f32.mrf.mxu0
      %v4528 = vadd.f32 0.0, %v4527
      %v4529 = vpop.f32.mrf.mxu0
      %4530 = vmatprep.mubr.f32.mxu0 0.0
      %4531 = vmatmul.mubr.f32.gmra.mxu0 %v4387
      %v4532 = vpop.f32.mrf.mxu0
      %v4533 = vadd.f32 0.0, %v4532
      %v4534 = vpop.f32.mrf.mxu0
      %4535 = vmatprep.mubr.f32.mxu0 0.0
      %4536 = vmatmul.mubr.f32.gmra.mxu0 %v4388
      %v4537 = vpop.f32.mrf.mxu0
      %v4538 = vpop.f32.mrf.mxu0
      %4539 = vdwg.mxu0
      %v4540 = vadd.f32 %v4364, %v4472
      %v4541 = vadd.f32 %v4365, %v4477
      %v4542 = vadd.f32 %v4366, %v4486
      %v4543 = vadd.f32 %v4367, %v4491
      %v4544 = vadd.f32 %v4368, %v4500
      %v4545 = vadd.f32 %v4369, %v4505
      %v4546 = vadd.f32 %v4370, %v4514
      %v4547 = vadd.f32 %v4371, %v4519
      %v4548 = vadd.f32 %v4372, %v4528
      %v4549 = vadd.f32 %v4373, %v4533
      %v4550 = vld [vmem:[#allocation2 + $0x120] sm:$0xff]
      %v4551 = vld [vmem:[#allocation2 + $0x128] sm:$0xff]
      %v4552 = vld [vmem:[#allocation2 + $0x130] sm:$0xff]
      %v4553 = vld [vmem:[#allocation2 + $0x138] sm:$0xff]
      %v4554 = vld [vmem:[#allocation2 + $0x140] sm:$0xff]
      %v4555 = vld [vmem:[#allocation2 + $0x148] sm:$0xff]
      %v4556 = vld [vmem:[#allocation2 + $0x150] sm:$0xff]
      %v4557 = vld [vmem:[#allocation2 + $0x158] sm:$0xff]
      %v4558 = vld [vmem:[#allocation2 + $0x160] sm:$0xff]
      %v4559 = vld [vmem:[#allocation2 + $0x168] sm:$0xff]
      %v4560 = vld [vmem:[#allocation2 + $0x170] sm:$0xff]
      %v4561 = vld [vmem:[#allocation2 + $0x178] sm:$0xff]
      %v4562 = vld [vmem:[#allocation2 + $0x180] sm:$0xff]
      %v4563 = vld [vmem:[#allocation2 + $0x188] sm:$0xff]
      %v4564 = vld [vmem:[#allocation2 + $0x190] sm:$0xff]
      %v4565 = vld [vmem:[%s1366] sm:$0xff]
      %v4566 = vld [vmem:[%s1366 + $0x8] sm:$0xff]
      %v4567 = vld [vmem:[%s1366 + $0x10] sm:$0xff]
      %v4568 = vld [vmem:[%s1366 + $0x18] sm:$0xff]
      %v4569 = vld [vmem:[%s1366 + $0x20] sm:$0xff]
      %v4570 = vld [vmem:[%s1366 + $0x28] sm:$0xff]
      %v4571 = vld [vmem:[%s1366 + $0x30] sm:$0xff]
      %v4572 = vld [vmem:[%s1366 + $0x38] sm:$0xff]
      %v4573 = vld [vmem:[%s1366 + $0x40] sm:$0xff]
      %v4574 = vld [vmem:[%s1366 + $0x48] sm:$0xff]
      %v4575 = vld [vmem:[%s1366 + $0x50] sm:$0xff]
      %v4576 = vld [vmem:[%s1366 + $0x58] sm:$0xff]
      %v4577 = vld [vmem:[%s1366 + $0x60] sm:$0xff]
      %v4578 = vld [vmem:[%s1366 + $0x68] sm:$0xff]
      %v4579 = vld [vmem:[%s1366 + $0x70] sm:$0xff]
      %v4580 = vld [vmem:[%s1366 + $0x78] sm:$0xff]
      %4581 = vmatprep.subr.mxu0 0.0
      %4582 = vmatpush1.msra.mxu0 %v4580
      %4583 = vmatprep.subr.mxu0 0.0
      %4584 = vmatpush1.msra.mxu0 %v4579
      %4585 = vmatprep.subr.mxu0 0.0
      %4586 = vmatpush1.msra.mxu0 %v4578
      %4587 = vmatprep.subr.mxu0 0.0
      %4588 = vmatpush1.msra.mxu0 %v4577
      %4589 = vmatprep.subr.mxu0 0.0
      %4590 = vmatpush1.msra.mxu0 %v4576
      %4591 = vmatprep.subr.mxu0 0.0
      %4592 = vmatpush1.msra.mxu0 %v4575
      %4593 = vmatprep.subr.mxu0 0.0
      %4594 = vmatpush1.msra.mxu0 %v4574
      %4595 = vmatprep.subr.mxu0 0.0
      %4596 = vmatpush1.msra.mxu0 %v4573
      %4597 = vmatprep.subr.mxu0 0.0
      %4598 = vmatpush1.msra.mxu0 %v4572
      %4599 = vmatprep.subr.mxu0 0.0
      %4600 = vmatpush1.msra.mxu0 %v4571
      %4601 = vmatprep.subr.mxu0 0.0
      %4602 = vmatpush1.msra.mxu0 %v4570
      %4603 = vmatprep.subr.mxu0 0.0
      %4604 = vmatpush1.msra.mxu0 %v4569
      %4605 = vmatprep.subr.mxu0 0.0
      %4606 = vmatpush1.msra.mxu0 %v4568
      %4607 = vmatprep.subr.mxu0 0.0
      %4608 = vmatpush1.msra.mxu0 %v4567
      %4609 = vmatprep.subr.mxu0 0.0
      %4610 = vmatpush1.msra.mxu0 %v4566
      %4611 = vmatprep.subr.mxu0 0.0
      %4612 = vmatpush1.msra.mxu0 %v4565
      %4613 = vmatprep.subr.mxu0 0.0
      %4614 = vmatpush2.msra.mxu0 0.0
      %4615 = vmatprep.subr.mxu0 0.0
      %4616 = vmatpush2.msra.mxu0 0.0
      %4617 = vmatprep.subr.mxu0 0.0
      %4618 = vmatpush2.msra.mxu0 0.0
      %4619 = vmatprep.subr.mxu0 0.0
      %4620 = vmatpush2.msra.mxu0 0.0
      %4621 = vmatprep.subr.mxu0 0.0
      %4622 = vmatpush2.msra.mxu0 0.0
      %4623 = vmatprep.subr.mxu0 0.0
      %4624 = vmatpush2.msra.mxu0 0.0
      %4625 = vmatprep.subr.mxu0 0.0
      %4626 = vmatpush2.msra.mxu0 0.0
      %4627 = vmatprep.subr.mxu0 0.0
      %4628 = vmatpush2.msra.mxu0 0.0
      %4629 = vmatprep.subr.mxu0 0.0
      %4630 = vmatpush2.msra.mxu0 0.0
      %4631 = vmatprep.subr.mxu0 0.0
      %4632 = vmatpush2.msra.mxu0 0.0
      %4633 = vmatprep.subr.mxu0 0.0
      %4634 = vmatpush2.msra.mxu0 0.0
      %4635 = vmatprep.subr.mxu0 0.0
      %4636 = vmatpush2.msra.mxu0 0.0
      %4637 = vmatprep.subr.mxu0 0.0
      %4638 = vmatpush2.msra.mxu0 0.0
      %4639 = vmatprep.subr.mxu0 0.0
      %4640 = vmatpush2.msra.mxu0 0.0
      %4641 = vmatprep.subr.mxu0 0.0
      %4642 = vmatpush2.msra.mxu0 0.0
      %4643 = vmatprep.subr.mxu0 0.0
      %4644 = vmatpush2.msra.mxu0 0.0
      %4645 = vmatprep.mubr.f32.mxu0 0.0
      %4646 = vmatmul.mubr.f32.gmra.mxu0 %v4550
      %v4647 = vpop.f32.mrf.mxu0
      %v4648 = vadd.f32 0.0, %v4647
      %v4649 = vpop.f32.mrf.mxu0
      %4650 = vmatprep.mubr.f32.mxu0 0.0
      %4651 = vmatmul.mubr.f32.gmra.mxu0 %v4551
      %v4652 = vpop.f32.mrf.mxu0
      %v4653 = vadd.f32 0.0, %v4652
      %v4654 = vpop.f32.mrf.mxu0
      %4655 = vmatprep.mubr.f32.mxu0 0.0
      %4656 = vmatmul.mubr.f32.gmra.mxu0 %v4552
      %v4657 = vpop.f32.mrf.mxu0
      %v4658 = vpop.f32.mrf.mxu0
      %4659 = vmatprep.mubr.f32.mxu0 0.0
      %4660 = vmatmul.mubr.f32.gmra.mxu0 %v4553
      %v4661 = vpop.f32.mrf.mxu0
      %v4662 = vadd.f32 0.0, %v4661
      %v4663 = vpop.f32.mrf.mxu0
      %4664 = vmatprep.mubr.f32.mxu0 0.0
      %4665 = vmatmul.mubr.f32.gmra.mxu0 %v4554
      %v4666 = vpop.f32.mrf.mxu0
      %v4667 = vadd.f32 0.0, %v4666
      %v4668 = vpop.f32.mrf.mxu0
      %4669 = vmatprep.mubr.f32.mxu0 0.0
      %4670 = vmatmul.mubr.f32.gmra.mxu0 %v4555
      %v4671 = vpop.f32.mrf.mxu0
      %v4672 = vpop.f32.mrf.mxu0
      %4673 = vmatprep.mubr.f32.mxu0 0.0
      %4674 = vmatmul.mubr.f32.gmra.mxu0 %v4556
      %v4675 = vpop.f32.mrf.mxu0
      %v4676 = vadd.f32 0.0, %v4675
      %v4677 = vpop.f32.mrf.mxu0
      %4678 = vmatprep.mubr.f32.mxu0 0.0
      %4679 = vmatmul.mubr.f32.gmra.mxu0 %v4557
      %v4680 = vpop.f32.mrf.mxu0
      %v4681 = vadd.f32 0.0, %v4680
      %v4682 = vpop.f32.mrf.mxu0
      %4683 = vmatprep.mubr.f32.mxu0 0.0
      %4684 = vmatmul.mubr.f32.gmra.mxu0 %v4558
      %v4685 = vpop.f32.mrf.mxu0
      %v4686 = vpop.f32.mrf.mxu0
      %4687 = vmatprep.mubr.f32.mxu0 0.0
      %4688 = vmatmul.mubr.f32.gmra.mxu0 %v4559
      %v4689 = vpop.f32.mrf.mxu0
      %v4690 = vadd.f32 0.0, %v4689
      %v4691 = vpop.f32.mrf.mxu0
      %4692 = vmatprep.mubr.f32.mxu0 0.0
      %4693 = vmatmul.mubr.f32.gmra.mxu0 %v4560
      %v4694 = vpop.f32.mrf.mxu0
      %v4695 = vadd.f32 0.0, %v4694
      %v4696 = vpop.f32.mrf.mxu0
      %4697 = vmatprep.mubr.f32.mxu0 0.0
      %4698 = vmatmul.mubr.f32.gmra.mxu0 %v4561
      %v4699 = vpop.f32.mrf.mxu0
      %v4700 = vpop.f32.mrf.mxu0
      %4701 = vmatprep.mubr.f32.mxu0 0.0
      %4702 = vmatmul.mubr.f32.gmra.mxu0 %v4562
      %v4703 = vpop.f32.mrf.mxu0
      %v4704 = vadd.f32 0.0, %v4703
      %v4705 = vpop.f32.mrf.mxu0
      %4706 = vmatprep.mubr.f32.mxu0 0.0
      %4707 = vmatmul.mubr.f32.gmra.mxu0 %v4563
      %v4708 = vpop.f32.mrf.mxu0
      %v4709 = vadd.f32 0.0, %v4708
      %v4710 = vpop.f32.mrf.mxu0
      %4711 = vmatprep.mubr.f32.mxu0 0.0
      %4712 = vmatmul.mubr.f32.gmra.mxu0 %v4564
      %v4713 = vpop.f32.mrf.mxu0
      %v4714 = vpop.f32.mrf.mxu0
      %4715 = vdwg.mxu0
      %v4716 = vadd.f32 %v4540, %v4648
      %v4717 = vadd.f32 %v4541, %v4653
      %v4718 = vadd.f32 %v4542, %v4662
      %v4719 = vadd.f32 %v4543, %v4667
      %v4720 = vadd.f32 %v4544, %v4676
      %v4721 = vadd.f32 %v4545, %v4681
      %v4722 = vadd.f32 %v4546, %v4690
      %v4723 = vadd.f32 %v4547, %v4695
      %v4724 = vadd.f32 %v4548, %v4704
      %v4725 = vadd.f32 %v4549, %v4709
      %v4726 = vld [vmem:[#allocation2 + $0x121] sm:$0xff]
      %v4727 = vld [vmem:[#allocation2 + $0x129] sm:$0xff]
      %v4728 = vld [vmem:[#allocation2 + $0x131] sm:$0xff]
      %v4729 = vld [vmem:[#allocation2 + $0x139] sm:$0xff]
      %v4730 = vld [vmem:[#allocation2 + $0x141] sm:$0xff]
      %v4731 = vld [vmem:[#allocation2 + $0x149] sm:$0xff]
      %v4732 = vld [vmem:[#allocation2 + $0x151] sm:$0xff]
      %v4733 = vld [vmem:[#allocation2 + $0x159] sm:$0xff]
      %v4734 = vld [vmem:[#allocation2 + $0x161] sm:$0xff]
      %v4735 = vld [vmem:[#allocation2 + $0x169] sm:$0xff]
      %v4736 = vld [vmem:[#allocation2 + $0x171] sm:$0xff]
      %v4737 = vld [vmem:[#allocation2 + $0x179] sm:$0xff]
      %v4738 = vld [vmem:[#allocation2 + $0x181] sm:$0xff]
      %v4739 = vld [vmem:[#allocation2 + $0x189] sm:$0xff]
      %v4740 = vld [vmem:[#allocation2 + $0x191] sm:$0xff]
      %v4741 = vld [vmem:[%s1543] sm:$0xff]
      %v4742 = vld [vmem:[%s1543 + $0x8] sm:$0xff]
      %v4743 = vld [vmem:[%s1543 + $0x10] sm:$0xff]
      %v4744 = vld [vmem:[%s1543 + $0x18] sm:$0xff]
      %v4745 = vld [vmem:[%s1543 + $0x20] sm:$0xff]
      %v4746 = vld [vmem:[%s1543 + $0x28] sm:$0xff]
      %v4747 = vld [vmem:[%s1543 + $0x30] sm:$0xff]
      %v4748 = vld [vmem:[%s1543 + $0x38] sm:$0xff]
      %v4749 = vld [vmem:[%s1543 + $0x40] sm:$0xff]
      %v4750 = vld [vmem:[%s1543 + $0x48] sm:$0xff]
      %v4751 = vld [vmem:[%s1543 + $0x50] sm:$0xff]
      %v4752 = vld [vmem:[%s1543 + $0x58] sm:$0xff]
      %v4753 = vld [vmem:[%s1543 + $0x60] sm:$0xff]
      %v4754 = vld [vmem:[%s1543 + $0x68] sm:$0xff]
      %v4755 = vld [vmem:[%s1543 + $0x70] sm:$0xff]
      %v4756 = vld [vmem:[%s1543 + $0x78] sm:$0xff]
      %4757 = vmatprep.subr.mxu0 0.0
      %4758 = vmatpush1.msra.mxu0 %v4756
      %4759 = vmatprep.subr.mxu0 0.0
      %4760 = vmatpush1.msra.mxu0 %v4755
      %4761 = vmatprep.subr.mxu0 0.0
      %4762 = vmatpush1.msra.mxu0 %v4754
      %4763 = vmatprep.subr.mxu0 0.0
      %4764 = vmatpush1.msra.mxu0 %v4753
      %4765 = vmatprep.subr.mxu0 0.0
      %4766 = vmatpush1.msra.mxu0 %v4752
      %4767 = vmatprep.subr.mxu0 0.0
      %4768 = vmatpush1.msra.mxu0 %v4751
      %4769 = vmatprep.subr.mxu0 0.0
      %4770 = vmatpush1.msra.mxu0 %v4750
      %4771 = vmatprep.subr.mxu0 0.0
      %4772 = vmatpush1.msra.mxu0 %v4749
      %4773 = vmatprep.subr.mxu0 0.0
      %4774 = vmatpush1.msra.mxu0 %v4748
      %4775 = vmatprep.subr.mxu0 0.0
      %4776 = vmatpush1.msra.mxu0 %v4747
      %4777 = vmatprep.subr.mxu0 0.0
      %4778 = vmatpush1.msra.mxu0 %v4746
      %4779 = vmatprep.subr.mxu0 0.0
      %4780 = vmatpush1.msra.mxu0 %v4745
      %4781 = vmatprep.subr.mxu0 0.0
      %4782 = vmatpush1.msra.mxu0 %v4744
      %4783 = vmatprep.subr.mxu0 0.0
      %4784 = vmatpush1.msra.mxu0 %v4743
      %4785 = vmatprep.subr.mxu0 0.0
      %4786 = vmatpush1.msra.mxu0 %v4742
      %4787 = vmatprep.subr.mxu0 0.0
      %4788 = vmatpush1.msra.mxu0 %v4741
      %4789 = vmatprep.subr.mxu0 0.0
      %4790 = vmatpush2.msra.mxu0 0.0
      %4791 = vmatprep.subr.mxu0 0.0
      %4792 = vmatpush2.msra.mxu0 0.0
      %4793 = vmatprep.subr.mxu0 0.0
      %4794 = vmatpush2.msra.mxu0 0.0
      %4795 = vmatprep.subr.mxu0 0.0
      %4796 = vmatpush2.msra.mxu0 0.0
      %4797 = vmatprep.subr.mxu0 0.0
      %4798 = vmatpush2.msra.mxu0 0.0
      %4799 = vmatprep.subr.mxu0 0.0
      %4800 = vmatpush2.msra.mxu0 0.0
      %4801 = vmatprep.subr.mxu0 0.0
      %4802 = vmatpush2.msra.mxu0 0.0
      %4803 = vmatprep.subr.mxu0 0.0
      %4804 = vmatpush2.msra.mxu0 0.0
      %4805 = vmatprep.subr.mxu0 0.0
      %4806 = vmatpush2.msra.mxu0 0.0
      %4807 = vmatprep.subr.mxu0 0.0
      %4808 = vmatpush2.msra.mxu0 0.0
      %4809 = vmatprep.subr.mxu0 0.0
      %4810 = vmatpush2.msra.mxu0 0.0
      %4811 = vmatprep.subr.mxu0 0.0
      %4812 = vmatpush2.msra.mxu0 0.0
      %4813 = vmatprep.subr.mxu0 0.0
      %4814 = vmatpush2.msra.mxu0 0.0
      %4815 = vmatprep.subr.mxu0 0.0
      %4816 = vmatpush2.msra.mxu0 0.0
      %4817 = vmatprep.subr.mxu0 0.0
      %4818 = vmatpush2.msra.mxu0 0.0
      %4819 = vmatprep.subr.mxu0 0.0
      %4820 = vmatpush2.msra.mxu0 0.0
      %4821 = vmatprep.mubr.f32.mxu0 0.0
      %4822 = vmatmul.mubr.f32.gmra.mxu0 %v4726
      %v4823 = vpop.f32.mrf.mxu0
      %v4824 = vadd.f32 0.0, %v4823
      %v4825 = vpop.f32.mrf.mxu0
      %4826 = vmatprep.mubr.f32.mxu0 0.0
      %4827 = vmatmul.mubr.f32.gmra.mxu0 %v4727
      %v4828 = vpop.f32.mrf.mxu0
      %v4829 = vadd.f32 0.0, %v4828
      %v4830 = vpop.f32.mrf.mxu0
      %4831 = vmatprep.mubr.f32.mxu0 0.0
      %4832 = vmatmul.mubr.f32.gmra.mxu0 %v4728
      %v4833 = vpop.f32.mrf.mxu0
      %v4834 = vpop.f32.mrf.mxu0
      %4835 = vmatprep.mubr.f32.mxu0 0.0
      %4836 = vmatmul.mubr.f32.gmra.mxu0 %v4729
      %v4837 = vpop.f32.mrf.mxu0
      %v4838 = vadd.f32 0.0, %v4837
      %v4839 = vpop.f32.mrf.mxu0
      %4840 = vmatprep.mubr.f32.mxu0 0.0
      %4841 = vmatmul.mubr.f32.gmra.mxu0 %v4730
      %v4842 = vpop.f32.mrf.mxu0
      %v4843 = vadd.f32 0.0, %v4842
      %v4844 = vpop.f32.mrf.mxu0
      %4845 = vmatprep.mubr.f32.mxu0 0.0
      %4846 = vmatmul.mubr.f32.gmra.mxu0 %v4731
      %v4847 = vpop.f32.mrf.mxu0
      %v4848 = vpop.f32.mrf.mxu0
      %4849 = vmatprep.mubr.f32.mxu0 0.0
      %4850 = vmatmul.mubr.f32.gmra.mxu0 %v4732
      %v4851 = vpop.f32.mrf.mxu0
      %v4852 = vadd.f32 0.0, %v4851
      %v4853 = vpop.f32.mrf.mxu0
      %4854 = vmatprep.mubr.f32.mxu0 0.0
      %4855 = vmatmul.mubr.f32.gmra.mxu0 %v4733
      %v4856 = vpop.f32.mrf.mxu0
      %v4857 = vadd.f32 0.0, %v4856
      %v4858 = vpop.f32.mrf.mxu0
      %4859 = vmatprep.mubr.f32.mxu0 0.0
      %4860 = vmatmul.mubr.f32.gmra.mxu0 %v4734
      %v4861 = vpop.f32.mrf.mxu0
      %v4862 = vpop.f32.mrf.mxu0
      %4863 = vmatprep.mubr.f32.mxu0 0.0
      %4864 = vmatmul.mubr.f32.gmra.mxu0 %v4735
      %v4865 = vpop.f32.mrf.mxu0
      %v4866 = vadd.f32 0.0, %v4865
      %v4867 = vpop.f32.mrf.mxu0
      %4868 = vmatprep.mubr.f32.mxu0 0.0
      %4869 = vmatmul.mubr.f32.gmra.mxu0 %v4736
      %v4870 = vpop.f32.mrf.mxu0
      %v4871 = vadd.f32 0.0, %v4870
      %v4872 = vpop.f32.mrf.mxu0
      %4873 = vmatprep.mubr.f32.mxu0 0.0
      %4874 = vmatmul.mubr.f32.gmra.mxu0 %v4737
      %v4875 = vpop.f32.mrf.mxu0
      %v4876 = vpop.f32.mrf.mxu0
      %4877 = vmatprep.mubr.f32.mxu0 0.0
      %4878 = vmatmul.mubr.f32.gmra.mxu0 %v4738
      %v4879 = vpop.f32.mrf.mxu0
      %v4880 = vadd.f32 0.0, %v4879
      %v4881 = vpop.f32.mrf.mxu0
      %4882 = vmatprep.mubr.f32.mxu0 0.0
      %4883 = vmatmul.mubr.f32.gmra.mxu0 %v4739
      %v4884 = vpop.f32.mrf.mxu0
      %v4885 = vadd.f32 0.0, %v4884
      %v4886 = vpop.f32.mrf.mxu0
      %4887 = vmatprep.mubr.f32.mxu0 0.0
      %4888 = vmatmul.mubr.f32.gmra.mxu0 %v4740
      %v4889 = vpop.f32.mrf.mxu0
      %v4890 = vpop.f32.mrf.mxu0
      %4891 = vdwg.mxu0
      %v4892 = vadd.f32 %v4716, %v4824
      %v4893 = vadd.f32 %v4717, %v4829
      %v4894 = vadd.f32 %v4718, %v4838
      %v4895 = vadd.f32 %v4719, %v4843
      %v4896 = vadd.f32 %v4720, %v4852
      %v4897 = vadd.f32 %v4721, %v4857
      %v4898 = vadd.f32 %v4722, %v4866
      %v4899 = vadd.f32 %v4723, %v4871
      %v4900 = vadd.f32 %v4724, %v4880
      %v4901 = vadd.f32 %v4725, %v4885
      %v4902 = vld [vmem:[#allocation2 + $0x122] sm:$0xff]
      %v4903 = vld [vmem:[#allocation2 + $0x12a] sm:$0xff]
      %v4904 = vld [vmem:[#allocation2 + $0x132] sm:$0xff]
      %v4905 = vld [vmem:[#allocation2 + $0x13a] sm:$0xff]
      %v4906 = vld [vmem:[#allocation2 + $0x142] sm:$0xff]
      %v4907 = vld [vmem:[#allocation2 + $0x14a] sm:$0xff]
      %v4908 = vld [vmem:[#allocation2 + $0x152] sm:$0xff]
      %v4909 = vld [vmem:[#allocation2 + $0x15a] sm:$0xff]
      %v4910 = vld [vmem:[#allocation2 + $0x162] sm:$0xff]
      %v4911 = vld [vmem:[#allocation2 + $0x16a] sm:$0xff]
      %v4912 = vld [vmem:[#allocation2 + $0x172] sm:$0xff]
      %v4913 = vld [vmem:[#allocation2 + $0x17a] sm:$0xff]
      %v4914 = vld [vmem:[#allocation2 + $0x182] sm:$0xff]
      %v4915 = vld [vmem:[#allocation2 + $0x18a] sm:$0xff]
      %v4916 = vld [vmem:[#allocation2 + $0x192] sm:$0xff]
      %v4917 = vld [vmem:[%s1720] sm:$0xff]
      %v4918 = vld [vmem:[%s1720 + $0x8] sm:$0xff]
      %v4919 = vld [vmem:[%s1720 + $0x10] sm:$0xff]
      %v4920 = vld [vmem:[%s1720 + $0x18] sm:$0xff]
      %v4921 = vld [vmem:[%s1720 + $0x20] sm:$0xff]
      %v4922 = vld [vmem:[%s1720 + $0x28] sm:$0xff]
      %v4923 = vld [vmem:[%s1720 + $0x30] sm:$0xff]
      %v4924 = vld [vmem:[%s1720 + $0x38] sm:$0xff]
      %v4925 = vld [vmem:[%s1720 + $0x40] sm:$0xff]
      %v4926 = vld [vmem:[%s1720 + $0x48] sm:$0xff]
      %v4927 = vld [vmem:[%s1720 + $0x50] sm:$0xff]
      %v4928 = vld [vmem:[%s1720 + $0x58] sm:$0xff]
      %v4929 = vld [vmem:[%s1720 + $0x60] sm:$0xff]
      %v4930 = vld [vmem:[%s1720 + $0x68] sm:$0xff]
      %v4931 = vld [vmem:[%s1720 + $0x70] sm:$0xff]
      %v4932 = vld [vmem:[%s1720 + $0x78] sm:$0xff]
      %4933 = vmatprep.subr.mxu0 0.0
      %4934 = vmatpush1.msra.mxu0 %v4932
      %4935 = vmatprep.subr.mxu0 0.0
      %4936 = vmatpush1.msra.mxu0 %v4931
      %4937 = vmatprep.subr.mxu0 0.0
      %4938 = vmatpush1.msra.mxu0 %v4930
      %4939 = vmatprep.subr.mxu0 0.0
      %4940 = vmatpush1.msra.mxu0 %v4929
      %4941 = vmatprep.subr.mxu0 0.0
      %4942 = vmatpush1.msra.mxu0 %v4928
      %4943 = vmatprep.subr.mxu0 0.0
      %4944 = vmatpush1.msra.mxu0 %v4927
      %4945 = vmatprep.subr.mxu0 0.0
      %4946 = vmatpush1.msra.mxu0 %v4926
      %4947 = vmatprep.subr.mxu0 0.0
      %4948 = vmatpush1.msra.mxu0 %v4925
      %4949 = vmatprep.subr.mxu0 0.0
      %4950 = vmatpush1.msra.mxu0 %v4924
      %4951 = vmatprep.subr.mxu0 0.0
      %4952 = vmatpush1.msra.mxu0 %v4923
      %4953 = vmatprep.subr.mxu0 0.0
      %4954 = vmatpush1.msra.mxu0 %v4922
      %4955 = vmatprep.subr.mxu0 0.0
      %4956 = vmatpush1.msra.mxu0 %v4921
      %4957 = vmatprep.subr.mxu0 0.0
      %4958 = vmatpush1.msra.mxu0 %v4920
      %4959 = vmatprep.subr.mxu0 0.0
      %4960 = vmatpush1.msra.mxu0 %v4919
      %4961 = vmatprep.subr.mxu0 0.0
      %4962 = vmatpush1.msra.mxu0 %v4918
      %4963 = vmatprep.subr.mxu0 0.0
      %4964 = vmatpush1.msra.mxu0 %v4917
      %4965 = vmatprep.subr.mxu0 0.0
      %4966 = vmatpush2.msra.mxu0 0.0
      %4967 = vmatprep.subr.mxu0 0.0
      %4968 = vmatpush2.msra.mxu0 0.0
      %4969 = vmatprep.subr.mxu0 0.0
      %4970 = vmatpush2.msra.mxu0 0.0
      %4971 = vmatprep.subr.mxu0 0.0
      %4972 = vmatpush2.msra.mxu0 0.0
      %4973 = vmatprep.subr.mxu0 0.0
      %4974 = vmatpush2.msra.mxu0 0.0
      %4975 = vmatprep.subr.mxu0 0.0
      %4976 = vmatpush2.msra.mxu0 0.0
      %4977 = vmatprep.subr.mxu0 0.0
      %4978 = vmatpush2.msra.mxu0 0.0
      %4979 = vmatprep.subr.mxu0 0.0
      %4980 = vmatpush2.msra.mxu0 0.0
      %4981 = vmatprep.subr.mxu0 0.0
      %4982 = vmatpush2.msra.mxu0 0.0
      %4983 = vmatprep.subr.mxu0 0.0
      %4984 = vmatpush2.msra.mxu0 0.0
      %4985 = vmatprep.subr.mxu0 0.0
      %4986 = vmatpush2.msra.mxu0 0.0
      %4987 = vmatprep.subr.mxu0 0.0
      %4988 = vmatpush2.msra.mxu0 0.0
      %4989 = vmatprep.subr.mxu0 0.0
      %4990 = vmatpush2.msra.mxu0 0.0
      %4991 = vmatprep.subr.mxu0 0.0
      %4992 = vmatpush2.msra.mxu0 0.0
      %4993 = vmatprep.subr.mxu0 0.0
      %4994 = vmatpush2.msra.mxu0 0.0
      %4995 = vmatprep.subr.mxu0 0.0
      %4996 = vmatpush2.msra.mxu0 0.0
      %4997 = vmatprep.mubr.f32.mxu0 0.0
      %4998 = vmatmul.mubr.f32.gmra.mxu0 %v4902
      %v4999 = vpop.f32.mrf.mxu0
      %v5000 = vadd.f32 0.0, %v4999
      %v5001 = vpop.f32.mrf.mxu0
      %5002 = vmatprep.mubr.f32.mxu0 0.0
      %5003 = vmatmul.mubr.f32.gmra.mxu0 %v4903
      %v5004 = vpop.f32.mrf.mxu0
      %v5005 = vadd.f32 0.0, %v5004
      %v5006 = vpop.f32.mrf.mxu0
      %5007 = vmatprep.mubr.f32.mxu0 0.0
      %5008 = vmatmul.mubr.f32.gmra.mxu0 %v4904
      %v5009 = vpop.f32.mrf.mxu0
      %v5010 = vpop.f32.mrf.mxu0
      %5011 = vmatprep.mubr.f32.mxu0 0.0
      %5012 = vmatmul.mubr.f32.gmra.mxu0 %v4905
      %v5013 = vpop.f32.mrf.mxu0
      %v5014 = vadd.f32 0.0, %v5013
      %v5015 = vpop.f32.mrf.mxu0
      %5016 = vmatprep.mubr.f32.mxu0 0.0
      %5017 = vmatmul.mubr.f32.gmra.mxu0 %v4906
      %v5018 = vpop.f32.mrf.mxu0
      %v5019 = vadd.f32 0.0, %v5018
      %v5020 = vpop.f32.mrf.mxu0
      %5021 = vmatprep.mubr.f32.mxu0 0.0
      %5022 = vmatmul.mubr.f32.gmra.mxu0 %v4907
      %v5023 = vpop.f32.mrf.mxu0
      %v5024 = vpop.f32.mrf.mxu0
      %5025 = vmatprep.mubr.f32.mxu0 0.0
      %5026 = vmatmul.mubr.f32.gmra.mxu0 %v4908
      %v5027 = vpop.f32.mrf.mxu0
      %v5028 = vadd.f32 0.0, %v5027
      %v5029 = vpop.f32.mrf.mxu0
      %5030 = vmatprep.mubr.f32.mxu0 0.0
      %5031 = vmatmul.mubr.f32.gmra.mxu0 %v4909
      %v5032 = vpop.f32.mrf.mxu0
      %v5033 = vadd.f32 0.0, %v5032
      %v5034 = vpop.f32.mrf.mxu0
      %5035 = vmatprep.mubr.f32.mxu0 0.0
      %5036 = vmatmul.mubr.f32.gmra.mxu0 %v4910
      %v5037 = vpop.f32.mrf.mxu0
      %v5038 = vpop.f32.mrf.mxu0
      %5039 = vmatprep.mubr.f32.mxu0 0.0
      %5040 = vmatmul.mubr.f32.gmra.mxu0 %v4911
      %v5041 = vpop.f32.mrf.mxu0
      %v5042 = vadd.f32 0.0, %v5041
      %v5043 = vpop.f32.mrf.mxu0
      %5044 = vmatprep.mubr.f32.mxu0 0.0
      %5045 = vmatmul.mubr.f32.gmra.mxu0 %v4912
      %v5046 = vpop.f32.mrf.mxu0
      %v5047 = vadd.f32 0.0, %v5046
      %v5048 = vpop.f32.mrf.mxu0
      %5049 = vmatprep.mubr.f32.mxu0 0.0
      %5050 = vmatmul.mubr.f32.gmra.mxu0 %v4913
      %v5051 = vpop.f32.mrf.mxu0
      %v5052 = vpop.f32.mrf.mxu0
      %5053 = vmatprep.mubr.f32.mxu0 0.0
      %5054 = vmatmul.mubr.f32.gmra.mxu0 %v4914
      %v5055 = vpop.f32.mrf.mxu0
      %v5056 = vadd.f32 0.0, %v5055
      %v5057 = vpop.f32.mrf.mxu0
      %5058 = vmatprep.mubr.f32.mxu0 0.0
      %5059 = vmatmul.mubr.f32.gmra.mxu0 %v4915
      %v5060 = vpop.f32.mrf.mxu0
      %v5061 = vadd.f32 0.0, %v5060
      %v5062 = vpop.f32.mrf.mxu0
      %5063 = vmatprep.mubr.f32.mxu0 0.0
      %5064 = vmatmul.mubr.f32.gmra.mxu0 %v4916
      %v5065 = vpop.f32.mrf.mxu0
      %v5066 = vpop.f32.mrf.mxu0
      %5067 = vdwg.mxu0
      %v5068 = vadd.f32 %v4892, %v5000
      %v5069 = vadd.f32 %v4893, %v5005
      %v5070 = vadd.f32 %v4894, %v5014
      %v5071 = vadd.f32 %v4895, %v5019
      %v5072 = vadd.f32 %v4896, %v5028
      %v5073 = vadd.f32 %v4897, %v5033
      %v5074 = vadd.f32 %v4898, %v5042
      %v5075 = vadd.f32 %v4899, %v5047
      %v5076 = vadd.f32 %v4900, %v5056
      %v5077 = vadd.f32 %v4901, %v5061
      %v5078 = vadd.f32 %v5068, %v1886
      %v5079 = vadd.f32 %v5069, %v1886
      %v5080 = vadd.f32 %v5070, %v1886
      %v5081 = vadd.f32 %v5071, %v1886
      %v5082 = vadd.f32 %v5072, %v1886
      %v5083 = vadd.f32 %v5073, %v1886
      %v5084 = vadd.f32 %v5074, %v1886
      %v5085 = vadd.f32 %v5075, %v1886
      %v5086 = vadd.f32 %v5076, %v1886
      %v5087 = vadd.f32 %v5077, %v1886
      %v5088 = vmax.f32 %v5078, 0.0
      %v5089 = vmax.f32 %v5079, 0.0
      %v5090 = vmax.f32 %v5080, 0.0
      %v5091 = vmax.f32 %v5081, 0.0
      %v5092 = vmax.f32 %v5082, 0.0
      %v5093 = vmax.f32 %v5083, 0.0
      %v5094 = vmax.f32 %v5084, 0.0
      %v5095 = vmax.f32 %v5085, 0.0
      %v5096 = vmax.f32 %v5086, 0.0
      %v5097 = vmax.f32 %v5087, 0.0
      %s5098 = scalar_lea.vmem %s148, 160
      %5099 = vst.msk [vmem:[%s5098] sm:$0xff] %vm1908, %v5088
      %5100 = vst.msk [vmem:[%s5098 + $0x8] sm:$0xff] %vm1908, %v5089
      %5101 = vst.msk [vmem:[%s5098 + $0x10] sm:$0xff] %vm1908, %v5090
      %5102 = vst.msk [vmem:[%s5098 + $0x18] sm:$0xff] %vm1908, %v5091
      %5103 = vst.msk [vmem:[%s5098 + $0x20] sm:$0xff] %vm1908, %v5092
      %5104 = vst.msk [vmem:[%s5098 + $0x28] sm:$0xff] %vm1908, %v5093
      %5105 = vst.msk [vmem:[%s5098 + $0x30] sm:$0xff] %vm1908, %v5094
      %5106 = vst.msk [vmem:[%s5098 + $0x38] sm:$0xff] %vm1908, %v5095
      %5107 = vst.msk [vmem:[%s5098 + $0x40] sm:$0xff] %vm1908, %v5096
      %5108 = vst.msk [vmem:[%s5098 + $0x48] sm:$0xff] %vm1908, %v5097
      %v5109 = vld [vmem:[#allocation2 + $0x168] sm:$0xff]
      %v5110 = vld [vmem:[#allocation2 + $0x170] sm:$0xff]
      %v5111 = vld [vmem:[#allocation2 + $0x178] sm:$0xff]
      %v5112 = vld [vmem:[%s1] sm:$0xff]
      %v5113 = vld [vmem:[%s1 + $0x8] sm:$0xff]
      %v5114 = vld [vmem:[%s1 + $0x10] sm:$0xff]
      %v5115 = vld [vmem:[%s1 + $0x18] sm:$0xff]
      %v5116 = vld [vmem:[%s1 + $0x20] sm:$0xff]
      %v5117 = vld [vmem:[%s1 + $0x28] sm:$0xff]
      %v5118 = vld [vmem:[%s1 + $0x30] sm:$0xff]
      %v5119 = vld [vmem:[%s1 + $0x38] sm:$0xff]
      %v5120 = vld [vmem:[%s1 + $0x40] sm:$0xff]
      %v5121 = vld [vmem:[%s1 + $0x48] sm:$0xff]
      %v5122 = vld [vmem:[%s1 + $0x50] sm:$0xff]
      %v5123 = vld [vmem:[%s1 + $0x58] sm:$0xff]
      %v5124 = vld [vmem:[%s1 + $0x60] sm:$0xff]
      %v5125 = vld [vmem:[%s1 + $0x68] sm:$0xff]
      %v5126 = vld [vmem:[%s1 + $0x70] sm:$0xff]
      %v5127 = vld [vmem:[%s1 + $0x78] sm:$0xff]
      %v5128 = vld [vmem:[#allocation2 + $0x169] sm:$0xff]
      %v5129 = vld [vmem:[#allocation2 + $0x171] sm:$0xff]
      %v5130 = vld [vmem:[#allocation2 + $0x179] sm:$0xff]
      %v5131 = vld [vmem:[%s356] sm:$0xff]
      %v5132 = vld [vmem:[%s356 + $0x8] sm:$0xff]
      %v5133 = vld [vmem:[%s356 + $0x10] sm:$0xff]
      %v5134 = vld [vmem:[%s356 + $0x18] sm:$0xff]
      %v5135 = vld [vmem:[%s356 + $0x20] sm:$0xff]
      %v5136 = vld [vmem:[%s356 + $0x28] sm:$0xff]
      %v5137 = vld [vmem:[%s356 + $0x30] sm:$0xff]
      %v5138 = vld [vmem:[%s356 + $0x38] sm:$0xff]
      %v5139 = vld [vmem:[%s356 + $0x40] sm:$0xff]
      %v5140 = vld [vmem:[%s356 + $0x48] sm:$0xff]
      %v5141 = vld [vmem:[%s356 + $0x50] sm:$0xff]
      %v5142 = vld [vmem:[%s356 + $0x58] sm:$0xff]
      %v5143 = vld [vmem:[%s356 + $0x60] sm:$0xff]
      %v5144 = vld [vmem:[%s356 + $0x68] sm:$0xff]
      %v5145 = vld [vmem:[%s356 + $0x70] sm:$0xff]
      %v5146 = vld [vmem:[%s356 + $0x78] sm:$0xff]
      %5147 = vmatprep.subr.mxu0 0.0
      %5148 = vmatpush1.msra.mxu0 %v5146
      %5149 = vmatprep.subr.mxu0 0.0
      %5150 = vmatpush1.msra.mxu0 %v5145
      %5151 = vmatprep.subr.mxu0 0.0
      %5152 = vmatpush1.msra.mxu0 %v5144
      %5153 = vmatprep.subr.mxu0 0.0
      %5154 = vmatpush1.msra.mxu0 %v5143
      %5155 = vmatprep.subr.mxu0 0.0
      %5156 = vmatpush1.msra.mxu0 %v5142
      %5157 = vmatprep.subr.mxu0 0.0
      %5158 = vmatpush1.msra.mxu0 %v5141
      %5159 = vmatprep.subr.mxu0 0.0
      %5160 = vmatpush1.msra.mxu0 %v5140
      %5161 = vmatprep.subr.mxu0 0.0
      %5162 = vmatpush1.msra.mxu0 %v5139
      %5163 = vmatprep.subr.mxu0 0.0
      %5164 = vmatpush1.msra.mxu0 %v5138
      %5165 = vmatprep.subr.mxu0 0.0
      %5166 = vmatpush1.msra.mxu0 %v5137
      %5167 = vmatprep.subr.mxu0 0.0
      %5168 = vmatpush1.msra.mxu0 %v5136
      %5169 = vmatprep.subr.mxu0 0.0
      %5170 = vmatpush1.msra.mxu0 %v5135
      %5171 = vmatprep.subr.mxu0 0.0
      %5172 = vmatpush1.msra.mxu0 %v5134
      %5173 = vmatprep.subr.mxu0 0.0
      %5174 = vmatpush1.msra.mxu0 %v5133
      %5175 = vmatprep.subr.mxu0 0.0
      %5176 = vmatpush1.msra.mxu0 %v5132
      %5177 = vmatprep.subr.mxu0 0.0
      %5178 = vmatpush1.msra.mxu0 %v5131
      %5179 = vmatprep.subr.mxu0 0.0
      %5180 = vmatpush2.msra.mxu0 0.0
      %5181 = vmatprep.subr.mxu0 0.0
      %5182 = vmatpush2.msra.mxu0 0.0
      %5183 = vmatprep.subr.mxu0 0.0
      %5184 = vmatpush2.msra.mxu0 0.0
      %5185 = vmatprep.subr.mxu0 0.0
      %5186 = vmatpush2.msra.mxu0 0.0
      %5187 = vmatprep.subr.mxu0 0.0
      %5188 = vmatpush2.msra.mxu0 0.0
      %5189 = vmatprep.subr.mxu0 0.0
      %5190 = vmatpush2.msra.mxu0 0.0
      %5191 = vmatprep.subr.mxu0 0.0
      %5192 = vmatpush2.msra.mxu0 0.0
      %5193 = vmatprep.subr.mxu0 0.0
      %5194 = vmatpush2.msra.mxu0 0.0
      %5195 = vmatprep.subr.mxu0 0.0
      %5196 = vmatpush2.msra.mxu0 0.0
      %5197 = vmatprep.subr.mxu0 0.0
      %5198 = vmatpush2.msra.mxu0 0.0
      %5199 = vmatprep.subr.mxu0 0.0
      %5200 = vmatpush2.msra.mxu0 0.0
      %5201 = vmatprep.subr.mxu0 0.0
      %5202 = vmatpush2.msra.mxu0 0.0
      %5203 = vmatprep.subr.mxu0 0.0
      %5204 = vmatpush2.msra.mxu0 0.0
      %5205 = vmatprep.subr.mxu0 0.0
      %5206 = vmatpush2.msra.mxu0 0.0
      %5207 = vmatprep.subr.mxu0 0.0
      %5208 = vmatpush2.msra.mxu0 0.0
      %5209 = vmatprep.subr.mxu0 0.0
      %5210 = vmatpush2.msra.mxu0 0.0
      %5211 = vmatprep.mubr.f32.mxu0 0.0
      %5212 = vmatmul.mubr.f32.gmra.mxu0 %v5128
      %v5213 = vpop.f32.mrf.mxu0
      %v5214 = vadd.f32 0.0, %v5213
      %v5215 = vpop.f32.mrf.mxu0
      %5216 = vmatprep.mubr.f32.mxu0 0.0
      %5217 = vmatmul.mubr.f32.gmra.mxu0 %v5129
      %v5218 = vpop.f32.mrf.mxu0
      %v5219 = vadd.f32 0.0, %v5218
      %v5220 = vpop.f32.mrf.mxu0
      %5221 = vmatprep.mubr.f32.mxu0 0.0
      %5222 = vmatmul.mubr.f32.gmra.mxu0 %v5130
      %v5223 = vpop.f32.mrf.mxu0
      %v5224 = vpop.f32.mrf.mxu0
      %5225 = vdwg.mxu0
      %5226 = vmatprep.subr.mxu0 0.0
      %5227 = vmatpush1.msra.mxu0 %v5127
      %5228 = vmatprep.subr.mxu0 0.0
      %5229 = vmatpush1.msra.mxu0 %v5126
      %5230 = vmatprep.subr.mxu0 0.0
      %5231 = vmatpush1.msra.mxu0 %v5125
      %5232 = vmatprep.subr.mxu0 0.0
      %5233 = vmatpush1.msra.mxu0 %v5124
      %5234 = vmatprep.subr.mxu0 0.0
      %5235 = vmatpush1.msra.mxu0 %v5123
      %5236 = vmatprep.subr.mxu0 0.0
      %5237 = vmatpush1.msra.mxu0 %v5122
      %5238 = vmatprep.subr.mxu0 0.0
      %5239 = vmatpush1.msra.mxu0 %v5121
      %5240 = vmatprep.subr.mxu0 0.0
      %5241 = vmatpush1.msra.mxu0 %v5120
      %5242 = vmatprep.subr.mxu0 0.0
      %5243 = vmatpush1.msra.mxu0 %v5119
      %5244 = vmatprep.subr.mxu0 0.0
      %5245 = vmatpush1.msra.mxu0 %v5118
      %5246 = vmatprep.subr.mxu0 0.0
      %5247 = vmatpush1.msra.mxu0 %v5117
      %5248 = vmatprep.subr.mxu0 0.0
      %5249 = vmatpush1.msra.mxu0 %v5116
      %5250 = vmatprep.subr.mxu0 0.0
      %5251 = vmatpush1.msra.mxu0 %v5115
      %5252 = vmatprep.subr.mxu0 0.0
      %5253 = vmatpush1.msra.mxu0 %v5114
      %5254 = vmatprep.subr.mxu0 0.0
      %5255 = vmatpush1.msra.mxu0 %v5113
      %5256 = vmatprep.subr.mxu0 0.0
      %5257 = vmatpush1.msra.mxu0 %v5112
      %5258 = vmatprep.subr.mxu0 0.0
      %5259 = vmatpush2.msra.mxu0 0.0
      %5260 = vmatprep.subr.mxu0 0.0
      %5261 = vmatpush2.msra.mxu0 0.0
      %5262 = vmatprep.subr.mxu0 0.0
      %5263 = vmatpush2.msra.mxu0 0.0
      %5264 = vmatprep.subr.mxu0 0.0
      %5265 = vmatpush2.msra.mxu0 0.0
      %5266 = vmatprep.subr.mxu0 0.0
      %5267 = vmatpush2.msra.mxu0 0.0
      %5268 = vmatprep.subr.mxu0 0.0
      %5269 = vmatpush2.msra.mxu0 0.0
      %5270 = vmatprep.subr.mxu0 0.0
      %5271 = vmatpush2.msra.mxu0 0.0
      %5272 = vmatprep.subr.mxu0 0.0
      %5273 = vmatpush2.msra.mxu0 0.0
      %5274 = vmatprep.subr.mxu0 0.0
      %5275 = vmatpush2.msra.mxu0 0.0
      %5276 = vmatprep.subr.mxu0 0.0
      %5277 = vmatpush2.msra.mxu0 0.0
      %5278 = vmatprep.subr.mxu0 0.0
      %5279 = vmatpush2.msra.mxu0 0.0
      %5280 = vmatprep.subr.mxu0 0.0
      %5281 = vmatpush2.msra.mxu0 0.0
      %5282 = vmatprep.subr.mxu0 0.0
      %5283 = vmatpush2.msra.mxu0 0.0
      %5284 = vmatprep.subr.mxu0 0.0
      %5285 = vmatpush2.msra.mxu0 0.0
      %5286 = vmatprep.subr.mxu0 0.0
      %5287 = vmatpush2.msra.mxu0 0.0
      %5288 = vmatprep.subr.mxu0 0.0
      %5289 = vmatpush2.msra.mxu0 0.0
      %5290 = vmatprep.mubr.f32.mxu0 0.0
      %5291 = vmatmul.mubr.f32.gmra.mxu0 %v5109
      %v5292 = vpop.f32.mrf.mxu0
      %v5293 = vadd.f32 %v5214, %v5292
      %v5294 = vpop.f32.mrf.mxu0
      %5295 = vmatprep.mubr.f32.mxu0 0.0
      %5296 = vmatmul.mubr.f32.gmra.mxu0 %v5110
      %v5297 = vpop.f32.mrf.mxu0
      %v5298 = vadd.f32 %v5219, %v5297
      %v5299 = vpop.f32.mrf.mxu0
      %5300 = vmatprep.mubr.f32.mxu0 0.0
      %5301 = vmatmul.mubr.f32.gmra.mxu0 %v5111
      %v5302 = vpop.f32.mrf.mxu0
      %v5303 = vpop.f32.mrf.mxu0
      %5304 = vdwg.mxu0
      %v5305 = vld [vmem:[#allocation2 + $0x16a] sm:$0xff]
      %v5306 = vld [vmem:[#allocation2 + $0x172] sm:$0xff]
      %v5307 = vld [vmem:[#allocation2 + $0x17a] sm:$0xff]
      %v5308 = vld [vmem:[%s658] sm:$0xff]
      %v5309 = vld [vmem:[%s658 + $0x8] sm:$0xff]
      %v5310 = vld [vmem:[%s658 + $0x10] sm:$0xff]
      %v5311 = vld [vmem:[%s658 + $0x18] sm:$0xff]
      %v5312 = vld [vmem:[%s658 + $0x20] sm:$0xff]
      %v5313 = vld [vmem:[%s658 + $0x28] sm:$0xff]
      %v5314 = vld [vmem:[%s658 + $0x30] sm:$0xff]
      %v5315 = vld [vmem:[%s658 + $0x38] sm:$0xff]
      %v5316 = vld [vmem:[%s658 + $0x40] sm:$0xff]
      %v5317 = vld [vmem:[%s658 + $0x48] sm:$0xff]
      %v5318 = vld [vmem:[%s658 + $0x50] sm:$0xff]
      %v5319 = vld [vmem:[%s658 + $0x58] sm:$0xff]
      %v5320 = vld [vmem:[%s658 + $0x60] sm:$0xff]
      %v5321 = vld [vmem:[%s658 + $0x68] sm:$0xff]
      %v5322 = vld [vmem:[%s658 + $0x70] sm:$0xff]
      %v5323 = vld [vmem:[%s658 + $0x78] sm:$0xff]
      %5324 = vmatprep.subr.mxu0 0.0
      %5325 = vmatpush1.msra.mxu0 %v5323
      %5326 = vmatprep.subr.mxu0 0.0
      %5327 = vmatpush1.msra.mxu0 %v5322
      %5328 = vmatprep.subr.mxu0 0.0
      %5329 = vmatpush1.msra.mxu0 %v5321
      %5330 = vmatprep.subr.mxu0 0.0
      %5331 = vmatpush1.msra.mxu0 %v5320
      %5332 = vmatprep.subr.mxu0 0.0
      %5333 = vmatpush1.msra.mxu0 %v5319
      %5334 = vmatprep.subr.mxu0 0.0
      %5335 = vmatpush1.msra.mxu0 %v5318
      %5336 = vmatprep.subr.mxu0 0.0
      %5337 = vmatpush1.msra.mxu0 %v5317
      %5338 = vmatprep.subr.mxu0 0.0
      %5339 = vmatpush1.msra.mxu0 %v5316
      %5340 = vmatprep.subr.mxu0 0.0
      %5341 = vmatpush1.msra.mxu0 %v5315
      %5342 = vmatprep.subr.mxu0 0.0
      %5343 = vmatpush1.msra.mxu0 %v5314
      %5344 = vmatprep.subr.mxu0 0.0
      %5345 = vmatpush1.msra.mxu0 %v5313
      %5346 = vmatprep.subr.mxu0 0.0
      %5347 = vmatpush1.msra.mxu0 %v5312
      %5348 = vmatprep.subr.mxu0 0.0
      %5349 = vmatpush1.msra.mxu0 %v5311
      %5350 = vmatprep.subr.mxu0 0.0
      %5351 = vmatpush1.msra.mxu0 %v5310
      %5352 = vmatprep.subr.mxu0 0.0
      %5353 = vmatpush1.msra.mxu0 %v5309
      %5354 = vmatprep.subr.mxu0 0.0
      %5355 = vmatpush1.msra.mxu0 %v5308
      %5356 = vmatprep.subr.mxu0 0.0
      %5357 = vmatpush2.msra.mxu0 0.0
      %5358 = vmatprep.subr.mxu0 0.0
      %5359 = vmatpush2.msra.mxu0 0.0
      %5360 = vmatprep.subr.mxu0 0.0
      %5361 = vmatpush2.msra.mxu0 0.0
      %5362 = vmatprep.subr.mxu0 0.0
      %5363 = vmatpush2.msra.mxu0 0.0
      %5364 = vmatprep.subr.mxu0 0.0
      %5365 = vmatpush2.msra.mxu0 0.0
      %5366 = vmatprep.subr.mxu0 0.0
      %5367 = vmatpush2.msra.mxu0 0.0
      %5368 = vmatprep.subr.mxu0 0.0
      %5369 = vmatpush2.msra.mxu0 0.0
      %5370 = vmatprep.subr.mxu0 0.0
      %5371 = vmatpush2.msra.mxu0 0.0
      %5372 = vmatprep.subr.mxu0 0.0
      %5373 = vmatpush2.msra.mxu0 0.0
      %5374 = vmatprep.subr.mxu0 0.0
      %5375 = vmatpush2.msra.mxu0 0.0
      %5376 = vmatprep.subr.mxu0 0.0
      %5377 = vmatpush2.msra.mxu0 0.0
      %5378 = vmatprep.subr.mxu0 0.0
      %5379 = vmatpush2.msra.mxu0 0.0
      %5380 = vmatprep.subr.mxu0 0.0
      %5381 = vmatpush2.msra.mxu0 0.0
      %5382 = vmatprep.subr.mxu0 0.0
      %5383 = vmatpush2.msra.mxu0 0.0
      %5384 = vmatprep.subr.mxu0 0.0
      %5385 = vmatpush2.msra.mxu0 0.0
      %5386 = vmatprep.subr.mxu0 0.0
      %5387 = vmatpush2.msra.mxu0 0.0
      %5388 = vmatprep.mubr.f32.mxu0 0.0
      %5389 = vmatmul.mubr.f32.gmra.mxu0 %v5305
      %v5390 = vpop.f32.mrf.mxu0
      %v5391 = vadd.f32 0.0, %v5390
      %v5392 = vpop.f32.mrf.mxu0
      %5393 = vmatprep.mubr.f32.mxu0 0.0
      %5394 = vmatmul.mubr.f32.gmra.mxu0 %v5306
      %v5395 = vpop.f32.mrf.mxu0
      %v5396 = vadd.f32 0.0, %v5395
      %v5397 = vpop.f32.mrf.mxu0
      %5398 = vmatprep.mubr.f32.mxu0 0.0
      %5399 = vmatmul.mubr.f32.gmra.mxu0 %v5307
      %v5400 = vpop.f32.mrf.mxu0
      %v5401 = vpop.f32.mrf.mxu0
      %5402 = vdwg.mxu0
      %v5403 = vadd.f32 %v5293, %v5391
      %v5404 = vadd.f32 %v5298, %v5396
      %v5405 = vld [vmem:[#allocation2 + $0x180] sm:$0xff]
      %v5406 = vld [vmem:[#allocation2 + $0x188] sm:$0xff]
      %v5407 = vld [vmem:[#allocation2 + $0x190] sm:$0xff]
      %v5408 = vld [vmem:[%s835] sm:$0xff]
      %v5409 = vld [vmem:[%s835 + $0x8] sm:$0xff]
      %v5410 = vld [vmem:[%s835 + $0x10] sm:$0xff]
      %v5411 = vld [vmem:[%s835 + $0x18] sm:$0xff]
      %v5412 = vld [vmem:[%s835 + $0x20] sm:$0xff]
      %v5413 = vld [vmem:[%s835 + $0x28] sm:$0xff]
      %v5414 = vld [vmem:[%s835 + $0x30] sm:$0xff]
      %v5415 = vld [vmem:[%s835 + $0x38] sm:$0xff]
      %v5416 = vld [vmem:[%s835 + $0x40] sm:$0xff]
      %v5417 = vld [vmem:[%s835 + $0x48] sm:$0xff]
      %v5418 = vld [vmem:[%s835 + $0x50] sm:$0xff]
      %v5419 = vld [vmem:[%s835 + $0x58] sm:$0xff]
      %v5420 = vld [vmem:[%s835 + $0x60] sm:$0xff]
      %v5421 = vld [vmem:[%s835 + $0x68] sm:$0xff]
      %v5422 = vld [vmem:[%s835 + $0x70] sm:$0xff]
      %v5423 = vld [vmem:[%s835 + $0x78] sm:$0xff]
      %5424 = vmatprep.subr.mxu0 0.0
      %5425 = vmatpush1.msra.mxu0 %v5423
      %5426 = vmatprep.subr.mxu0 0.0
      %5427 = vmatpush1.msra.mxu0 %v5422
      %5428 = vmatprep.subr.mxu0 0.0
      %5429 = vmatpush1.msra.mxu0 %v5421
      %5430 = vmatprep.subr.mxu0 0.0
      %5431 = vmatpush1.msra.mxu0 %v5420
      %5432 = vmatprep.subr.mxu0 0.0
      %5433 = vmatpush1.msra.mxu0 %v5419
      %5434 = vmatprep.subr.mxu0 0.0
      %5435 = vmatpush1.msra.mxu0 %v5418
      %5436 = vmatprep.subr.mxu0 0.0
      %5437 = vmatpush1.msra.mxu0 %v5417
      %5438 = vmatprep.subr.mxu0 0.0
      %5439 = vmatpush1.msra.mxu0 %v5416
      %5440 = vmatprep.subr.mxu0 0.0
      %5441 = vmatpush1.msra.mxu0 %v5415
      %5442 = vmatprep.subr.mxu0 0.0
      %5443 = vmatpush1.msra.mxu0 %v5414
      %5444 = vmatprep.subr.mxu0 0.0
      %5445 = vmatpush1.msra.mxu0 %v5413
      %5446 = vmatprep.subr.mxu0 0.0
      %5447 = vmatpush1.msra.mxu0 %v5412
      %5448 = vmatprep.subr.mxu0 0.0
      %5449 = vmatpush1.msra.mxu0 %v5411
      %5450 = vmatprep.subr.mxu0 0.0
      %5451 = vmatpush1.msra.mxu0 %v5410
      %5452 = vmatprep.subr.mxu0 0.0
      %5453 = vmatpush1.msra.mxu0 %v5409
      %5454 = vmatprep.subr.mxu0 0.0
      %5455 = vmatpush1.msra.mxu0 %v5408
      %5456 = vmatprep.subr.mxu0 0.0
      %5457 = vmatpush2.msra.mxu0 0.0
      %5458 = vmatprep.subr.mxu0 0.0
      %5459 = vmatpush2.msra.mxu0 0.0
      %5460 = vmatprep.subr.mxu0 0.0
      %5461 = vmatpush2.msra.mxu0 0.0
      %5462 = vmatprep.subr.mxu0 0.0
      %5463 = vmatpush2.msra.mxu0 0.0
      %5464 = vmatprep.subr.mxu0 0.0
      %5465 = vmatpush2.msra.mxu0 0.0
      %5466 = vmatprep.subr.mxu0 0.0
      %5467 = vmatpush2.msra.mxu0 0.0
      %5468 = vmatprep.subr.mxu0 0.0
      %5469 = vmatpush2.msra.mxu0 0.0
      %5470 = vmatprep.subr.mxu0 0.0
      %5471 = vmatpush2.msra.mxu0 0.0
      %5472 = vmatprep.subr.mxu0 0.0
      %5473 = vmatpush2.msra.mxu0 0.0
      %5474 = vmatprep.subr.mxu0 0.0
      %5475 = vmatpush2.msra.mxu0 0.0
      %5476 = vmatprep.subr.mxu0 0.0
      %5477 = vmatpush2.msra.mxu0 0.0
      %5478 = vmatprep.subr.mxu0 0.0
      %5479 = vmatpush2.msra.mxu0 0.0
      %5480 = vmatprep.subr.mxu0 0.0
      %5481 = vmatpush2.msra.mxu0 0.0
      %5482 = vmatprep.subr.mxu0 0.0
      %5483 = vmatpush2.msra.mxu0 0.0
      %5484 = vmatprep.subr.mxu0 0.0
      %5485 = vmatpush2.msra.mxu0 0.0
      %5486 = vmatprep.subr.mxu0 0.0
      %5487 = vmatpush2.msra.mxu0 0.0
      %5488 = vmatprep.mubr.f32.mxu0 0.0
      %5489 = vmatmul.mubr.f32.gmra.mxu0 %v5405
      %v5490 = vpop.f32.mrf.mxu0
      %v5491 = vadd.f32 0.0, %v5490
      %v5492 = vpop.f32.mrf.mxu0
      %5493 = vmatprep.mubr.f32.mxu0 0.0
      %5494 = vmatmul.mubr.f32.gmra.mxu0 %v5406
      %v5495 = vpop.f32.mrf.mxu0
      %v5496 = vadd.f32 0.0, %v5495
      %v5497 = vpop.f32.mrf.mxu0
      %5498 = vmatprep.mubr.f32.mxu0 0.0
      %5499 = vmatmul.mubr.f32.gmra.mxu0 %v5407
      %v5500 = vpop.f32.mrf.mxu0
      %v5501 = vpop.f32.mrf.mxu0
      %5502 = vdwg.mxu0
      %v5503 = vadd.f32 %v5403, %v5491
      %v5504 = vadd.f32 %v5404, %v5496
      %v5505 = vld [vmem:[#allocation2 + $0x181] sm:$0xff]
      %v5506 = vld [vmem:[#allocation2 + $0x189] sm:$0xff]
      %v5507 = vld [vmem:[#allocation2 + $0x191] sm:$0xff]
      %v5508 = vld [vmem:[%s1012] sm:$0xff]
      %v5509 = vld [vmem:[%s1012 + $0x8] sm:$0xff]
      %v5510 = vld [vmem:[%s1012 + $0x10] sm:$0xff]
      %v5511 = vld [vmem:[%s1012 + $0x18] sm:$0xff]
      %v5512 = vld [vmem:[%s1012 + $0x20] sm:$0xff]
      %v5513 = vld [vmem:[%s1012 + $0x28] sm:$0xff]
      %v5514 = vld [vmem:[%s1012 + $0x30] sm:$0xff]
      %v5515 = vld [vmem:[%s1012 + $0x38] sm:$0xff]
      %v5516 = vld [vmem:[%s1012 + $0x40] sm:$0xff]
      %v5517 = vld [vmem:[%s1012 + $0x48] sm:$0xff]
      %v5518 = vld [vmem:[%s1012 + $0x50] sm:$0xff]
      %v5519 = vld [vmem:[%s1012 + $0x58] sm:$0xff]
      %v5520 = vld [vmem:[%s1012 + $0x60] sm:$0xff]
      %v5521 = vld [vmem:[%s1012 + $0x68] sm:$0xff]
      %v5522 = vld [vmem:[%s1012 + $0x70] sm:$0xff]
      %v5523 = vld [vmem:[%s1012 + $0x78] sm:$0xff]
      %5524 = vmatprep.subr.mxu0 0.0
      %5525 = vmatpush1.msra.mxu0 %v5523
      %5526 = vmatprep.subr.mxu0 0.0
      %5527 = vmatpush1.msra.mxu0 %v5522
      %5528 = vmatprep.subr.mxu0 0.0
      %5529 = vmatpush1.msra.mxu0 %v5521
      %5530 = vmatprep.subr.mxu0 0.0
      %5531 = vmatpush1.msra.mxu0 %v5520
      %5532 = vmatprep.subr.mxu0 0.0
      %5533 = vmatpush1.msra.mxu0 %v5519
      %5534 = vmatprep.subr.mxu0 0.0
      %5535 = vmatpush1.msra.mxu0 %v5518
      %5536 = vmatprep.subr.mxu0 0.0
      %5537 = vmatpush1.msra.mxu0 %v5517
      %5538 = vmatprep.subr.mxu0 0.0
      %5539 = vmatpush1.msra.mxu0 %v5516
      %5540 = vmatprep.subr.mxu0 0.0
      %5541 = vmatpush1.msra.mxu0 %v5515
      %5542 = vmatprep.subr.mxu0 0.0
      %5543 = vmatpush1.msra.mxu0 %v5514
      %5544 = vmatprep.subr.mxu0 0.0
      %5545 = vmatpush1.msra.mxu0 %v5513
      %5546 = vmatprep.subr.mxu0 0.0
      %5547 = vmatpush1.msra.mxu0 %v5512
      %5548 = vmatprep.subr.mxu0 0.0
      %5549 = vmatpush1.msra.mxu0 %v5511
      %5550 = vmatprep.subr.mxu0 0.0
      %5551 = vmatpush1.msra.mxu0 %v5510
      %5552 = vmatprep.subr.mxu0 0.0
      %5553 = vmatpush1.msra.mxu0 %v5509
      %5554 = vmatprep.subr.mxu0 0.0
      %5555 = vmatpush1.msra.mxu0 %v5508
      %5556 = vmatprep.subr.mxu0 0.0
      %5557 = vmatpush2.msra.mxu0 0.0
      %5558 = vmatprep.subr.mxu0 0.0
      %5559 = vmatpush2.msra.mxu0 0.0
      %5560 = vmatprep.subr.mxu0 0.0
      %5561 = vmatpush2.msra.mxu0 0.0
      %5562 = vmatprep.subr.mxu0 0.0
      %5563 = vmatpush2.msra.mxu0 0.0
      %5564 = vmatprep.subr.mxu0 0.0
      %5565 = vmatpush2.msra.mxu0 0.0
      %5566 = vmatprep.subr.mxu0 0.0
      %5567 = vmatpush2.msra.mxu0 0.0
      %5568 = vmatprep.subr.mxu0 0.0
      %5569 = vmatpush2.msra.mxu0 0.0
      %5570 = vmatprep.subr.mxu0 0.0
      %5571 = vmatpush2.msra.mxu0 0.0
      %5572 = vmatprep.subr.mxu0 0.0
      %5573 = vmatpush2.msra.mxu0 0.0
      %5574 = vmatprep.subr.mxu0 0.0
      %5575 = vmatpush2.msra.mxu0 0.0
      %5576 = vmatprep.subr.mxu0 0.0
      %5577 = vmatpush2.msra.mxu0 0.0
      %5578 = vmatprep.subr.mxu0 0.0
      %5579 = vmatpush2.msra.mxu0 0.0
      %5580 = vmatprep.subr.mxu0 0.0
      %5581 = vmatpush2.msra.mxu0 0.0
      %5582 = vmatprep.subr.mxu0 0.0
      %5583 = vmatpush2.msra.mxu0 0.0
      %5584 = vmatprep.subr.mxu0 0.0
      %5585 = vmatpush2.msra.mxu0 0.0
      %5586 = vmatprep.subr.mxu0 0.0
      %5587 = vmatpush2.msra.mxu0 0.0
      %5588 = vmatprep.mubr.f32.mxu0 0.0
      %5589 = vmatmul.mubr.f32.gmra.mxu0 %v5505
      %v5590 = vpop.f32.mrf.mxu0
      %v5591 = vadd.f32 0.0, %v5590
      %v5592 = vpop.f32.mrf.mxu0
      %5593 = vmatprep.mubr.f32.mxu0 0.0
      %5594 = vmatmul.mubr.f32.gmra.mxu0 %v5506
      %v5595 = vpop.f32.mrf.mxu0
      %v5596 = vadd.f32 0.0, %v5595
      %v5597 = vpop.f32.mrf.mxu0
      %5598 = vmatprep.mubr.f32.mxu0 0.0
      %5599 = vmatmul.mubr.f32.gmra.mxu0 %v5507
      %v5600 = vpop.f32.mrf.mxu0
      %v5601 = vpop.f32.mrf.mxu0
      %5602 = vdwg.mxu0
      %v5603 = vadd.f32 %v5503, %v5591
      %v5604 = vadd.f32 %v5504, %v5596
      %v5605 = vld [vmem:[#allocation2 + $0x182] sm:$0xff]
      %v5606 = vld [vmem:[#allocation2 + $0x18a] sm:$0xff]
      %v5607 = vld [vmem:[#allocation2 + $0x192] sm:$0xff]
      %v5608 = vld [vmem:[%s1189] sm:$0xff]
      %v5609 = vld [vmem:[%s1189 + $0x8] sm:$0xff]
      %v5610 = vld [vmem:[%s1189 + $0x10] sm:$0xff]
      %v5611 = vld [vmem:[%s1189 + $0x18] sm:$0xff]
      %v5612 = vld [vmem:[%s1189 + $0x20] sm:$0xff]
      %v5613 = vld [vmem:[%s1189 + $0x28] sm:$0xff]
      %v5614 = vld [vmem:[%s1189 + $0x30] sm:$0xff]
      %v5615 = vld [vmem:[%s1189 + $0x38] sm:$0xff]
      %v5616 = vld [vmem:[%s1189 + $0x40] sm:$0xff]
      %v5617 = vld [vmem:[%s1189 + $0x48] sm:$0xff]
      %v5618 = vld [vmem:[%s1189 + $0x50] sm:$0xff]
      %v5619 = vld [vmem:[%s1189 + $0x58] sm:$0xff]
      %v5620 = vld [vmem:[%s1189 + $0x60] sm:$0xff]
      %v5621 = vld [vmem:[%s1189 + $0x68] sm:$0xff]
      %v5622 = vld [vmem:[%s1189 + $0x70] sm:$0xff]
      %v5623 = vld [vmem:[%s1189 + $0x78] sm:$0xff]
      %5624 = vmatprep.subr.mxu0 0.0
      %5625 = vmatpush1.msra.mxu0 %v5623
      %5626 = vmatprep.subr.mxu0 0.0
      %5627 = vmatpush1.msra.mxu0 %v5622
      %5628 = vmatprep.subr.mxu0 0.0
      %5629 = vmatpush1.msra.mxu0 %v5621
      %5630 = vmatprep.subr.mxu0 0.0
      %5631 = vmatpush1.msra.mxu0 %v5620
      %5632 = vmatprep.subr.mxu0 0.0
      %5633 = vmatpush1.msra.mxu0 %v5619
      %5634 = vmatprep.subr.mxu0 0.0
      %5635 = vmatpush1.msra.mxu0 %v5618
      %5636 = vmatprep.subr.mxu0 0.0
      %5637 = vmatpush1.msra.mxu0 %v5617
      %5638 = vmatprep.subr.mxu0 0.0
      %5639 = vmatpush1.msra.mxu0 %v5616
      %5640 = vmatprep.subr.mxu0 0.0
      %5641 = vmatpush1.msra.mxu0 %v5615
      %5642 = vmatprep.subr.mxu0 0.0
      %5643 = vmatpush1.msra.mxu0 %v5614
      %5644 = vmatprep.subr.mxu0 0.0
      %5645 = vmatpush1.msra.mxu0 %v5613
      %5646 = vmatprep.subr.mxu0 0.0
      %5647 = vmatpush1.msra.mxu0 %v5612
      %5648 = vmatprep.subr.mxu0 0.0
      %5649 = vmatpush1.msra.mxu0 %v5611
      %5650 = vmatprep.subr.mxu0 0.0
      %5651 = vmatpush1.msra.mxu0 %v5610
      %5652 = vmatprep.subr.mxu0 0.0
      %5653 = vmatpush1.msra.mxu0 %v5609
      %5654 = vmatprep.subr.mxu0 0.0
      %5655 = vmatpush1.msra.mxu0 %v5608
      %5656 = vmatprep.subr.mxu0 0.0
      %5657 = vmatpush2.msra.mxu0 0.0
      %5658 = vmatprep.subr.mxu0 0.0
      %5659 = vmatpush2.msra.mxu0 0.0
      %5660 = vmatprep.subr.mxu0 0.0
      %5661 = vmatpush2.msra.mxu0 0.0
      %5662 = vmatprep.subr.mxu0 0.0
      %5663 = vmatpush2.msra.mxu0 0.0
      %5664 = vmatprep.subr.mxu0 0.0
      %5665 = vmatpush2.msra.mxu0 0.0
      %5666 = vmatprep.subr.mxu0 0.0
      %5667 = vmatpush2.msra.mxu0 0.0
      %5668 = vmatprep.subr.mxu0 0.0
      %5669 = vmatpush2.msra.mxu0 0.0
      %5670 = vmatprep.subr.mxu0 0.0
      %5671 = vmatpush2.msra.mxu0 0.0
      %5672 = vmatprep.subr.mxu0 0.0
      %5673 = vmatpush2.msra.mxu0 0.0
      %5674 = vmatprep.subr.mxu0 0.0
      %5675 = vmatpush2.msra.mxu0 0.0
      %5676 = vmatprep.subr.mxu0 0.0
      %5677 = vmatpush2.msra.mxu0 0.0
      %5678 = vmatprep.subr.mxu0 0.0
      %5679 = vmatpush2.msra.mxu0 0.0
      %5680 = vmatprep.subr.mxu0 0.0
      %5681 = vmatpush2.msra.mxu0 0.0
      %5682 = vmatprep.subr.mxu0 0.0
      %5683 = vmatpush2.msra.mxu0 0.0
      %5684 = vmatprep.subr.mxu0 0.0
      %5685 = vmatpush2.msra.mxu0 0.0
      %5686 = vmatprep.subr.mxu0 0.0
      %5687 = vmatpush2.msra.mxu0 0.0
      %5688 = vmatprep.mubr.f32.mxu0 0.0
      %5689 = vmatmul.mubr.f32.gmra.mxu0 %v5605
      %v5690 = vpop.f32.mrf.mxu0
      %v5691 = vadd.f32 0.0, %v5690
      %v5692 = vpop.f32.mrf.mxu0
      %5693 = vmatprep.mubr.f32.mxu0 0.0
      %5694 = vmatmul.mubr.f32.gmra.mxu0 %v5606
      %v5695 = vpop.f32.mrf.mxu0
      %v5696 = vadd.f32 0.0, %v5695
      %v5697 = vpop.f32.mrf.mxu0
      %5698 = vmatprep.mubr.f32.mxu0 0.0
      %5699 = vmatmul.mubr.f32.gmra.mxu0 %v5607
      %v5700 = vpop.f32.mrf.mxu0
      %v5701 = vpop.f32.mrf.mxu0
      %5702 = vdwg.mxu0
      %v5703 = vadd.f32 %v5603, %v5691
      %v5704 = vadd.f32 %v5604, %v5696
      %v5705 = vld [vmem:[#allocation2 + $0x198] sm:$0xff]
      %v5706 = vld [vmem:[#allocation2 + $0x1a0] sm:$0xff]
      %v5707 = vld [vmem:[#allocation2 + $0x1a8] sm:$0xff]
      %v5708 = vld [vmem:[%s1366] sm:$0xff]
      %v5709 = vld [vmem:[%s1366 + $0x8] sm:$0xff]
      %v5710 = vld [vmem:[%s1366 + $0x10] sm:$0xff]
      %v5711 = vld [vmem:[%s1366 + $0x18] sm:$0xff]
      %v5712 = vld [vmem:[%s1366 + $0x20] sm:$0xff]
      %v5713 = vld [vmem:[%s1366 + $0x28] sm:$0xff]
      %v5714 = vld [vmem:[%s1366 + $0x30] sm:$0xff]
      %v5715 = vld [vmem:[%s1366 + $0x38] sm:$0xff]
      %v5716 = vld [vmem:[%s1366 + $0x40] sm:$0xff]
      %v5717 = vld [vmem:[%s1366 + $0x48] sm:$0xff]
      %v5718 = vld [vmem:[%s1366 + $0x50] sm:$0xff]
      %v5719 = vld [vmem:[%s1366 + $0x58] sm:$0xff]
      %v5720 = vld [vmem:[%s1366 + $0x60] sm:$0xff]
      %v5721 = vld [vmem:[%s1366 + $0x68] sm:$0xff]
      %v5722 = vld [vmem:[%s1366 + $0x70] sm:$0xff]
      %v5723 = vld [vmem:[%s1366 + $0x78] sm:$0xff]
      %5724 = vmatprep.subr.mxu0 0.0
      %5725 = vmatpush1.msra.mxu0 %v5723
      %5726 = vmatprep.subr.mxu0 0.0
      %5727 = vmatpush1.msra.mxu0 %v5722
      %5728 = vmatprep.subr.mxu0 0.0
      %5729 = vmatpush1.msra.mxu0 %v5721
      %5730 = vmatprep.subr.mxu0 0.0
      %5731 = vmatpush1.msra.mxu0 %v5720
      %5732 = vmatprep.subr.mxu0 0.0
      %5733 = vmatpush1.msra.mxu0 %v5719
      %5734 = vmatprep.subr.mxu0 0.0
      %5735 = vmatpush1.msra.mxu0 %v5718
      %5736 = vmatprep.subr.mxu0 0.0
      %5737 = vmatpush1.msra.mxu0 %v5717
      %5738 = vmatprep.subr.mxu0 0.0
      %5739 = vmatpush1.msra.mxu0 %v5716
      %5740 = vmatprep.subr.mxu0 0.0
      %5741 = vmatpush1.msra.mxu0 %v5715
      %5742 = vmatprep.subr.mxu0 0.0
      %5743 = vmatpush1.msra.mxu0 %v5714
      %5744 = vmatprep.subr.mxu0 0.0
      %5745 = vmatpush1.msra.mxu0 %v5713
      %5746 = vmatprep.subr.mxu0 0.0
      %5747 = vmatpush1.msra.mxu0 %v5712
      %5748 = vmatprep.subr.mxu0 0.0
      %5749 = vmatpush1.msra.mxu0 %v5711
      %5750 = vmatprep.subr.mxu0 0.0
      %5751 = vmatpush1.msra.mxu0 %v5710
      %5752 = vmatprep.subr.mxu0 0.0
      %5753 = vmatpush1.msra.mxu0 %v5709
      %5754 = vmatprep.subr.mxu0 0.0
      %5755 = vmatpush1.msra.mxu0 %v5708
      %5756 = vmatprep.subr.mxu0 0.0
      %5757 = vmatpush2.msra.mxu0 0.0
      %5758 = vmatprep.subr.mxu0 0.0
      %5759 = vmatpush2.msra.mxu0 0.0
      %5760 = vmatprep.subr.mxu0 0.0
      %5761 = vmatpush2.msra.mxu0 0.0
      %5762 = vmatprep.subr.mxu0 0.0
      %5763 = vmatpush2.msra.mxu0 0.0
      %5764 = vmatprep.subr.mxu0 0.0
      %5765 = vmatpush2.msra.mxu0 0.0
      %5766 = vmatprep.subr.mxu0 0.0
      %5767 = vmatpush2.msra.mxu0 0.0
      %5768 = vmatprep.subr.mxu0 0.0
      %5769 = vmatpush2.msra.mxu0 0.0
      %5770 = vmatprep.subr.mxu0 0.0
      %5771 = vmatpush2.msra.mxu0 0.0
      %5772 = vmatprep.subr.mxu0 0.0
      %5773 = vmatpush2.msra.mxu0 0.0
      %5774 = vmatprep.subr.mxu0 0.0
      %5775 = vmatpush2.msra.mxu0 0.0
      %5776 = vmatprep.subr.mxu0 0.0
      %5777 = vmatpush2.msra.mxu0 0.0
      %5778 = vmatprep.subr.mxu0 0.0
      %5779 = vmatpush2.msra.mxu0 0.0
      %5780 = vmatprep.subr.mxu0 0.0
      %5781 = vmatpush2.msra.mxu0 0.0
      %5782 = vmatprep.subr.mxu0 0.0
      %5783 = vmatpush2.msra.mxu0 0.0
      %5784 = vmatprep.subr.mxu0 0.0
      %5785 = vmatpush2.msra.mxu0 0.0
      %5786 = vmatprep.subr.mxu0 0.0
      %5787 = vmatpush2.msra.mxu0 0.0
      %5788 = vmatprep.mubr.f32.mxu0 0.0
      %5789 = vmatmul.mubr.f32.gmra.mxu0 %v5705
      %v5790 = vpop.f32.mrf.mxu0
      %v5791 = vadd.f32 0.0, %v5790
      %v5792 = vpop.f32.mrf.mxu0
      %5793 = vmatprep.mubr.f32.mxu0 0.0
      %5794 = vmatmul.mubr.f32.gmra.mxu0 %v5706
      %v5795 = vpop.f32.mrf.mxu0
      %v5796 = vadd.f32 0.0, %v5795
      %v5797 = vpop.f32.mrf.mxu0
      %5798 = vmatprep.mubr.f32.mxu0 0.0
      %5799 = vmatmul.mubr.f32.gmra.mxu0 %v5707
      %v5800 = vpop.f32.mrf.mxu0
      %v5801 = vpop.f32.mrf.mxu0
      %5802 = vdwg.mxu0
      %v5803 = vadd.f32 %v5703, %v5791
      %v5804 = vadd.f32 %v5704, %v5796
      %v5805 = vld [vmem:[#allocation2 + $0x199] sm:$0xff]
      %v5806 = vld [vmem:[#allocation2 + $0x1a1] sm:$0xff]
      %v5807 = vld [vmem:[#allocation2 + $0x1a9] sm:$0xff]
      %v5808 = vld [vmem:[%s1543] sm:$0xff]
      %v5809 = vld [vmem:[%s1543 + $0x8] sm:$0xff]
      %v5810 = vld [vmem:[%s1543 + $0x10] sm:$0xff]
      %v5811 = vld [vmem:[%s1543 + $0x18] sm:$0xff]
      %v5812 = vld [vmem:[%s1543 + $0x20] sm:$0xff]
      %v5813 = vld [vmem:[%s1543 + $0x28] sm:$0xff]
      %v5814 = vld [vmem:[%s1543 + $0x30] sm:$0xff]
      %v5815 = vld [vmem:[%s1543 + $0x38] sm:$0xff]
      %v5816 = vld [vmem:[%s1543 + $0x40] sm:$0xff]
      %v5817 = vld [vmem:[%s1543 + $0x48] sm:$0xff]
      %v5818 = vld [vmem:[%s1543 + $0x50] sm:$0xff]
      %v5819 = vld [vmem:[%s1543 + $0x58] sm:$0xff]
      %v5820 = vld [vmem:[%s1543 + $0x60] sm:$0xff]
      %v5821 = vld [vmem:[%s1543 + $0x68] sm:$0xff]
      %v5822 = vld [vmem:[%s1543 + $0x70] sm:$0xff]
      %v5823 = vld [vmem:[%s1543 + $0x78] sm:$0xff]
      %5824 = vmatprep.subr.mxu0 0.0
      %5825 = vmatpush1.msra.mxu0 %v5823
      %5826 = vmatprep.subr.mxu0 0.0
      %5827 = vmatpush1.msra.mxu0 %v5822
      %5828 = vmatprep.subr.mxu0 0.0
      %5829 = vmatpush1.msra.mxu0 %v5821
      %5830 = vmatprep.subr.mxu0 0.0
      %5831 = vmatpush1.msra.mxu0 %v5820
      %5832 = vmatprep.subr.mxu0 0.0
      %5833 = vmatpush1.msra.mxu0 %v5819
      %5834 = vmatprep.subr.mxu0 0.0
      %5835 = vmatpush1.msra.mxu0 %v5818
      %5836 = vmatprep.subr.mxu0 0.0
      %5837 = vmatpush1.msra.mxu0 %v5817
      %5838 = vmatprep.subr.mxu0 0.0
      %5839 = vmatpush1.msra.mxu0 %v5816
      %5840 = vmatprep.subr.mxu0 0.0
      %5841 = vmatpush1.msra.mxu0 %v5815
      %5842 = vmatprep.subr.mxu0 0.0
      %5843 = vmatpush1.msra.mxu0 %v5814
      %5844 = vmatprep.subr.mxu0 0.0
      %5845 = vmatpush1.msra.mxu0 %v5813
      %5846 = vmatprep.subr.mxu0 0.0
      %5847 = vmatpush1.msra.mxu0 %v5812
      %5848 = vmatprep.subr.mxu0 0.0
      %5849 = vmatpush1.msra.mxu0 %v5811
      %5850 = vmatprep.subr.mxu0 0.0
      %5851 = vmatpush1.msra.mxu0 %v5810
      %5852 = vmatprep.subr.mxu0 0.0
      %5853 = vmatpush1.msra.mxu0 %v5809
      %5854 = vmatprep.subr.mxu0 0.0
      %5855 = vmatpush1.msra.mxu0 %v5808
      %5856 = vmatprep.subr.mxu0 0.0
      %5857 = vmatpush2.msra.mxu0 0.0
      %5858 = vmatprep.subr.mxu0 0.0
      %5859 = vmatpush2.msra.mxu0 0.0
      %5860 = vmatprep.subr.mxu0 0.0
      %5861 = vmatpush2.msra.mxu0 0.0
      %5862 = vmatprep.subr.mxu0 0.0
      %5863 = vmatpush2.msra.mxu0 0.0
      %5864 = vmatprep.subr.mxu0 0.0
      %5865 = vmatpush2.msra.mxu0 0.0
      %5866 = vmatprep.subr.mxu0 0.0
      %5867 = vmatpush2.msra.mxu0 0.0
      %5868 = vmatprep.subr.mxu0 0.0
      %5869 = vmatpush2.msra.mxu0 0.0
      %5870 = vmatprep.subr.mxu0 0.0
      %5871 = vmatpush2.msra.mxu0 0.0
      %5872 = vmatprep.subr.mxu0 0.0
      %5873 = vmatpush2.msra.mxu0 0.0
      %5874 = vmatprep.subr.mxu0 0.0
      %5875 = vmatpush2.msra.mxu0 0.0
      %5876 = vmatprep.subr.mxu0 0.0
      %5877 = vmatpush2.msra.mxu0 0.0
      %5878 = vmatprep.subr.mxu0 0.0
      %5879 = vmatpush2.msra.mxu0 0.0
      %5880 = vmatprep.subr.mxu0 0.0
      %5881 = vmatpush2.msra.mxu0 0.0
      %5882 = vmatprep.subr.mxu0 0.0
      %5883 = vmatpush2.msra.mxu0 0.0
      %5884 = vmatprep.subr.mxu0 0.0
      %5885 = vmatpush2.msra.mxu0 0.0
      %5886 = vmatprep.subr.mxu0 0.0
      %5887 = vmatpush2.msra.mxu0 0.0
      %5888 = vmatprep.mubr.f32.mxu0 0.0
      %5889 = vmatmul.mubr.f32.gmra.mxu0 %v5805
      %v5890 = vpop.f32.mrf.mxu0
      %v5891 = vadd.f32 0.0, %v5890
      %v5892 = vpop.f32.mrf.mxu0
      %5893 = vmatprep.mubr.f32.mxu0 0.0
      %5894 = vmatmul.mubr.f32.gmra.mxu0 %v5806
      %v5895 = vpop.f32.mrf.mxu0
      %v5896 = vadd.f32 0.0, %v5895
      %v5897 = vpop.f32.mrf.mxu0
      %5898 = vmatprep.mubr.f32.mxu0 0.0
      %5899 = vmatmul.mubr.f32.gmra.mxu0 %v5807
      %v5900 = vpop.f32.mrf.mxu0
      %v5901 = vpop.f32.mrf.mxu0
      %5902 = vdwg.mxu0
      %v5903 = vadd.f32 %v5803, %v5891
      %v5904 = vadd.f32 %v5804, %v5896
      %v5905 = vld [vmem:[#allocation2 + $0x19a] sm:$0xff]
      %v5906 = vld [vmem:[#allocation2 + $0x1a2] sm:$0xff]
      %v5907 = vld [vmem:[#allocation2 + $0x1aa] sm:$0xff]
      %v5908 = vld [vmem:[%s1720] sm:$0xff]
      %v5909 = vld [vmem:[%s1720 + $0x8] sm:$0xff]
      %v5910 = vld [vmem:[%s1720 + $0x10] sm:$0xff]
      %v5911 = vld [vmem:[%s1720 + $0x18] sm:$0xff]
      %v5912 = vld [vmem:[%s1720 + $0x20] sm:$0xff]
      %v5913 = vld [vmem:[%s1720 + $0x28] sm:$0xff]
      %v5914 = vld [vmem:[%s1720 + $0x30] sm:$0xff]
      %v5915 = vld [vmem:[%s1720 + $0x38] sm:$0xff]
      %v5916 = vld [vmem:[%s1720 + $0x40] sm:$0xff]
      %v5917 = vld [vmem:[%s1720 + $0x48] sm:$0xff]
      %v5918 = vld [vmem:[%s1720 + $0x50] sm:$0xff]
      %v5919 = vld [vmem:[%s1720 + $0x58] sm:$0xff]
      %v5920 = vld [vmem:[%s1720 + $0x60] sm:$0xff]
      %v5921 = vld [vmem:[%s1720 + $0x68] sm:$0xff]
      %v5922 = vld [vmem:[%s1720 + $0x70] sm:$0xff]
      %v5923 = vld [vmem:[%s1720 + $0x78] sm:$0xff]
      %5924 = vmatprep.subr.mxu0 0.0
      %5925 = vmatpush1.msra.mxu0 %v5923
      %5926 = vmatprep.subr.mxu0 0.0
      %5927 = vmatpush1.msra.mxu0 %v5922
      %5928 = vmatprep.subr.mxu0 0.0
      %5929 = vmatpush1.msra.mxu0 %v5921
      %5930 = vmatprep.subr.mxu0 0.0
      %5931 = vmatpush1.msra.mxu0 %v5920
      %5932 = vmatprep.subr.mxu0 0.0
      %5933 = vmatpush1.msra.mxu0 %v5919
      %5934 = vmatprep.subr.mxu0 0.0
      %5935 = vmatpush1.msra.mxu0 %v5918
      %5936 = vmatprep.subr.mxu0 0.0
      %5937 = vmatpush1.msra.mxu0 %v5917
      %5938 = vmatprep.subr.mxu0 0.0
      %5939 = vmatpush1.msra.mxu0 %v5916
      %5940 = vmatprep.subr.mxu0 0.0
      %5941 = vmatpush1.msra.mxu0 %v5915
      %5942 = vmatprep.subr.mxu0 0.0
      %5943 = vmatpush1.msra.mxu0 %v5914
      %5944 = vmatprep.subr.mxu0 0.0
      %5945 = vmatpush1.msra.mxu0 %v5913
      %5946 = vmatprep.subr.mxu0 0.0
      %5947 = vmatpush1.msra.mxu0 %v5912
      %5948 = vmatprep.subr.mxu0 0.0
      %5949 = vmatpush1.msra.mxu0 %v5911
      %5950 = vmatprep.subr.mxu0 0.0
      %5951 = vmatpush1.msra.mxu0 %v5910
      %5952 = vmatprep.subr.mxu0 0.0
      %5953 = vmatpush1.msra.mxu0 %v5909
      %5954 = vmatprep.subr.mxu0 0.0
      %5955 = vmatpush1.msra.mxu0 %v5908
      %5956 = vmatprep.subr.mxu0 0.0
      %5957 = vmatpush2.msra.mxu0 0.0
      %5958 = vmatprep.subr.mxu0 0.0
      %5959 = vmatpush2.msra.mxu0 0.0
      %5960 = vmatprep.subr.mxu0 0.0
      %5961 = vmatpush2.msra.mxu0 0.0
      %5962 = vmatprep.subr.mxu0 0.0
      %5963 = vmatpush2.msra.mxu0 0.0
      %5964 = vmatprep.subr.mxu0 0.0
      %5965 = vmatpush2.msra.mxu0 0.0
      %5966 = vmatprep.subr.mxu0 0.0
      %5967 = vmatpush2.msra.mxu0 0.0
      %5968 = vmatprep.subr.mxu0 0.0
      %5969 = vmatpush2.msra.mxu0 0.0
      %5970 = vmatprep.subr.mxu0 0.0
      %5971 = vmatpush2.msra.mxu0 0.0
      %5972 = vmatprep.subr.mxu0 0.0
      %5973 = vmatpush2.msra.mxu0 0.0
      %5974 = vmatprep.subr.mxu0 0.0
      %5975 = vmatpush2.msra.mxu0 0.0
      %5976 = vmatprep.subr.mxu0 0.0
      %5977 = vmatpush2.msra.mxu0 0.0
      %5978 = vmatprep.subr.mxu0 0.0
      %5979 = vmatpush2.msra.mxu0 0.0
      %5980 = vmatprep.subr.mxu0 0.0
      %5981 = vmatpush2.msra.mxu0 0.0
      %5982 = vmatprep.subr.mxu0 0.0
      %5983 = vmatpush2.msra.mxu0 0.0
      %5984 = vmatprep.subr.mxu0 0.0
      %5985 = vmatpush2.msra.mxu0 0.0
      %5986 = vmatprep.subr.mxu0 0.0
      %5987 = vmatpush2.msra.mxu0 0.0
      %5988 = vmatprep.mubr.f32.mxu0 0.0
      %5989 = vmatmul.mubr.f32.gmra.mxu0 %v5905
      %v5990 = vpop.f32.mrf.mxu0
      %v5991 = vadd.f32 0.0, %v5990
      %v5992 = vpop.f32.mrf.mxu0
      %5993 = vmatprep.mubr.f32.mxu0 0.0
      %5994 = vmatmul.mubr.f32.gmra.mxu0 %v5906
      %v5995 = vpop.f32.mrf.mxu0
      %v5996 = vadd.f32 0.0, %v5995
      %v5997 = vpop.f32.mrf.mxu0
      %5998 = vmatprep.mubr.f32.mxu0 0.0
      %5999 = vmatmul.mubr.f32.gmra.mxu0 %v5907
      %v6000 = vpop.f32.mrf.mxu0
      %v6001 = vpop.f32.mrf.mxu0
      %6002 = vdwg.mxu0
      %v6003 = vadd.f32 %v5903, %v5991
      %v6004 = vadd.f32 %v5904, %v5996
      %v6005 = vadd.f32 %v6003, %v1886
      %v6006 = vadd.f32 %v6004, %v1886
      %v6007 = vmax.f32 %v6005, 0.0
      %v6008 = vmax.f32 %v6006, 0.0
      %s6009 = scalar_lea.vmem %s148, 240
      %6010 = vst.msk [vmem:[%s6009] sm:$0xff] %vm1908, %v6007
      %6011 = vst.msk [vmem:[%s6009 + $0x8] sm:$0xff] %vm1908, %v6008
      %s6012 = smul.u32 16, %s19
      %p6013 = scmp.lt.s32.totalorder %s18, 1
      %s6014 = scalar_select %p6013, %s18, 1
      %p6015 = scmp.lt.s32.totalorder %s6012, 15
      %s6016 = scalar_select %p6015, %s6012, 15
      %s6017 = smul.addr %s6016, 2
      %s6018 = smul.addr %s6014, 32
      %s6019 = sadd.s32 %s6017, %s6018
      %s6020 = smul.addr %s6019, 8
      %s6021 = scalar_lea.vmem %s3, %s6020
      // Predicated region
      $region63: #{conv_block_forward.1} parent=27 // pred_check
        %p6022 = pneg %p88
      $region64: #{conv_block_forward.1} parent=27 // pred_check_branch
        %6024 = sbr.rel (%p6022) target = $region66
      $region65: #{conv_block_forward.1} parent=27 // pred_region
        %s6025 = smul.u32 16, %s19
      $region66: #{conv_block_forward.1} parent=27 // pred_fallthru
        _
    $region28: #{conv_block_forward.1} parent=5 // pred_fallthru
      _
    %p6026 = scmp.le.s32.totalorder 2, %s9
    // Predicated region
    $region67: #{conv_block_forward.1} parent=5 // pred_check
      %p6027 = pneg %p6026
    $region68: #{conv_block_forward.1} parent=5 // pred_check_branch
      %6029 = sbr.rel (%p6027) target = $region70
    $region69: #{conv_block_forward.1} parent=5 // pred_region
      %s6030 = ssub.s32 %s9, 2
      // Predicated region
      $region71: #{conv_block_forward.1} parent=69 // pred_check
        %p6031 = pneg %p94
      $region72: #{conv_block_forward.1} parent=69 // pred_check_branch
        %6033 = sbr.rel (%p6031) target = $region74
      $region73: #{conv_block_forward.1} parent=69 // pred_region
        %s6034 = smul.u32 16, %s21
        %p6035 = scmp.lt.s32.totalorder %s20, 1
        %s6036 = scalar_select %p6035, %s20, 1
        %p6037 = scmp.lt.s32.totalorder %s6034, 15
        %s6038 = scalar_select %p6037, %s6034, 15
        %s6039 = smul.addr %s6038, 2
        %s6040 = smul.addr %s6036, 32
        %s6041 = sadd.s32 %s6039, %s6040
        %s6042 = smul.addr %s6041, 8
        %s6043 = scalar_lea.vmem %s3, %s6042
      $region74: #{conv_block_forward.1} parent=69 // pred_fallthru
        _
    $region70: #{conv_block_forward.1} parent=5 // pred_fallthru
      _
  $region6: #{conv_block_forward.1} parent=0 // loop_footer
    %s13 = sadd.s32 1, %s9
  $region7: #{conv_block_forward.1} parent=0 // loop_footer_branch
    %8 = sbr.rel target = $region3
  $region8: #{conv_block_forward.1} parent=0 // loop_exit
    _
  %6044 = vsyncmov [#allocation3]
  %s6045 = vpop.sfrf %6044
  %p6046 = scmp.eq.s32.totalorder %s6045, 0
  %p6047 = pneg %p6046
  %6049 = shalt.err (%p6047)

</llo_original>
